<compile_context>
chip_gen: v5e
topology: v5e:2x2
jax: 0.10.0
libtpu: 0.0.40
codegen_flags: <defaults>
</compile_context>

<pallas_src>
import functools

import jax
import jax.numpy as jnp
from jax import lax
from jax.experimental import pallas as pl
from jax.experimental.pallas import tpu as pltpu

D_MODEL = 512
D_FF = 2048
LN_EPS = 1e-5


def _ffn_ln_kernel(x_ref, w1_ref, w2_ref, o_ref, *, sub_m):
    """One row tile: LayerNorm(ReLU(x @ W1) @ W2 + x).

    The tile is processed in `sub_m`-row chunks (static Python loop, static
    slices) so the VPU/XLU epilogue (ReLU, casts, LN reductions, rsqrt) of
    chunk j can be scheduled under the MXU work of chunk j+1.
    """
    tm = x_ref.shape[0]
    for j in range(tm // sub_m):
        rows = pl.ds(j * sub_m, sub_m)          # static start -> free slicing
        x = x_ref[rows, :].astype(jnp.float32)

        # Linear 1: bf16 MXU operands, f32 accumulation.  ReLU on the bf16 copy
        # (mathematically identical; uses bf16 VPU lanes on v6e/v7x).
        h = jnp.dot(x.astype(jnp.bfloat16), w1_ref[...],
                    preferred_element_type=jnp.float32)
        h16 = jnp.maximum(h.astype(jnp.bfloat16), 0)

        # Linear 2 (no bias) + residual, in f32.
        y = jnp.dot(h16, w2_ref[...], preferred_element_type=jnp.float32) + x

        # LayerNorm over last dim, centered (two-pass) variance.  gamma=1, beta=0.
        mean = jnp.mean(y, axis=-1, keepdims=True)
        c = y - mean
        var = jnp.mean(c * c, axis=-1, keepdims=True)
        o_ref[rows, :] = (c * lax.rsqrt(var + LN_EPS)).astype(o_ref.dtype)


def _round_up(x: int, m: int) -> int:
    return ((x + m - 1) // m) * m


def _chip_config():
    """Generation-aware tiling parameters (safe fallback for unknown chips).

    v5e/v6e: 1 TensorCore, 128 MiB VMEM -> big tiles, never force a grid split.
    v7x    : 2 TensorCores, 64 MiB VMEM -> cap 1024-row tiles / 48 MiB limit.
    """
    kind = ""
    try:
        kind = jax.devices()[0].device_kind.lower()
    except Exception:
        pass
    if "v5e" in kind or "v5 lite" in kind or "v5lite" in kind:
        return dict(cap=2048, mxu_align=128, num_tc=1, vmem_limit=96 << 20)
    if "v6" in kind:
        return dict(cap=2048, mxu_align=256, num_tc=1, vmem_limit=96 << 20)
    if "v7" in kind or "7x" in kind:
        return dict(cap=1024, mxu_align=256, num_tc=2, vmem_limit=48 << 20)
    # Unknown (v4/v5p/...): conservative config that fits every generation.
    return dict(cap=1024, mxu_align=256, num_tc=1, vmem_limit=48 << 20)


def _choose_tile_m(m: int, *, cap: int, mxu_align: int, num_tc: int) -> int:
    """Row-tile size.

    Small/medium M: a single grid step with minimal (sublane) padding.  Only
    split when (a) M exceeds the VMEM-driven cap, or (b) the chip has 2
    TensorCores AND each core's tile would still be >= 256 rows.
    """
    if m <= cap and (num_tc < 2 or m < 2 * 256):
        return _round_up(m, 8)
    steps = max(-(-m // cap), num_tc)            # cdiv(m, cap), >= num_tc
    tile = _round_up(-(-m // steps), mxu_align)  # MXU-aligned per-step tile
    return min(cap, tile)


@functools.partial(jax.jit, static_argnames=("tile_m",))
def poswise_ffn(x, w1, w2, *, tile_m=None):
    """y = LayerNorm(ReLU(x @ w1) @ w2 + x).  x: [B, S, D_MODEL]; weights [in, out]."""
    b, s, d = x.shape
    assert d == D_MODEL
    assert w1.shape == (D_MODEL, D_FF) and w2.shape == (D_FF, D_MODEL)
    m = b * s

    cfg = _chip_config()
    if tile_m is None:
        tile_m = _choose_tile_m(m, cap=cfg["cap"], mxu_align=cfg["mxu_align"],
                                num_tc=cfg["num_tc"])
    assert tile_m % 8 == 0
    m_pad = _round_up(m, tile_m)

    x2d = x.reshape(m, d)
    if m_pad != m:
        x2d = jnp.pad(x2d, ((0, m_pad - m), (0, 0)))

    # Weights are expected pre-cast to bf16 by the caller (cast once, outside the
    # per-call path); astype is a no-op in that case.
    # TODO(synk): int8 (v6e) / fp8-e4m3 (v7x) weight quantization would halve weight
    # DMA and double MXU rate, but changes numerics vs the f32 PyTorch reference.
    w1_bf = w1.astype(jnp.bfloat16)
    w2_bf = w2.astype(jnp.bfloat16)

    # 256-row sub-chunks inside the body when the tile allows it.
    sub_m = 256 if tile_m % 256 == 0 else tile_m
    kernel = functools.partial(_ffn_ln_kernel, sub_m=sub_m)

    out2d = pl.pallas_call(
        kernel,
        out_shape=jax.ShapeDtypeStruct((m_pad, d), x.dtype),
        grid_spec=pltpu.PrefetchScalarGridSpec(
            num_scalar_prefetch=0,
            grid=(m_pad // tile_m,),
            in_specs=[
                # Row tile of activations: default double-buffering.
                pl.BlockSpec((tile_m, D_MODEL), lambda i: (i, 0)),
                # Weights: constant block index -> fetched once and held resident;
                # single-buffered to halve their VMEM footprint.
                # TODO(synk): confirm via a bundle dump that Mosaic hoists this DMA
                # out of the grid loop; if not, switch to memory_space=pl.ANY plus
                # one manual pltpu.make_async_copy into VMEM scratch.
                pl.BlockSpec((D_MODEL, D_FF), lambda i: (0, 0),
                             pipeline_mode=pl.Buffered(buffer_count=1)),
                pl.BlockSpec((D_FF, D_MODEL), lambda i: (0, 0),
                             pipeline_mode=pl.Buffered(buffer_count=1)),
            ],
            out_specs=pl.BlockSpec((tile_m, D_MODEL), lambda i: (i, 0)),
        ),
        compiler_params=pltpu.CompilerParams(
            dimension_semantics=("parallel",),
            vmem_limit_bytes=cfg["vmem_limit"],
        ),
    )(x2d, w1_bf, w2_bf)

    return out2d[:m].reshape(b, s, d)


def reference(x, w1, w2):
    h = jnp.maximum(jnp.einsum("bsd,df->bsf", x, w1), 0.0)
    y = jnp.einsum("bsf,fd->bsd", h, w2) + x
    mean = jnp.mean(y, axis=-1, keepdims=True)
    var = jnp.mean((y - mean) ** 2, axis=-1, keepdims=True)
    return (y - mean) / jnp.sqrt(var + LN_EPS)


if __name__ == "__main__":
    key = jax.random.PRNGKey(0)
    k_x, k_w1, k_w2 = jax.random.split(key, 3)

    batch, seq = 2, 8
    x = jax.random.normal(k_x, (batch, seq, D_MODEL), dtype=jnp.float32)
    # Weights stored [in, out]: x @ W here == PyTorch's x @ W_pt.T (nn.Linear stores
    # [out, in]).  Kaiming-uniform-ish scale.
    w1 = jax.random.uniform(k_w1, (D_MODEL, D_FF), jnp.float32,
                            minval=-1.0, maxval=1.0) / jnp.sqrt(D_MODEL)
    w2 = jax.random.uniform(k_w2, (D_FF, D_MODEL), jnp.float32,
                            minval=-1.0, maxval=1.0) / jnp.sqrt(D_FF)

    # Cast weights to bf16 ONCE, outside the per-call path (halves weight DMA,
    # MXU-native operands, no per-call cast ops).
    w1_bf = jnp.asarray(w1, dtype=jnp.bfloat16)
    w2_bf = jnp.asarray(w2, dtype=jnp.bfloat16)

    out = poswise_ffn(x, w1_bf, w2_bf)
    out = jax.block_until_ready(out)

    ref = reference(x, w1, w2)
    assert out.shape == (batch, seq, D_MODEL)
    assert bool(jnp.all(jnp.isfinite(out)))
    # bf16 MXU operands with f32 accumulation + f32 residual/LayerNorm: small,
    # bounded drift vs the pure-f32 reference.
    assert jnp.allclose(out, ref, atol=3e-2, rtol=3e-2), \
        float(jnp.max(jnp.abs(out - ref)))
    print("KERNEL_OK")
</pallas_src>

<mosaic_0001>
module attributes {stable_mosaic.version = 11 : i64} {
  func.func @_ffn_ln_kernel(%arg0: i32, %arg1: memref<16x512xf32, #tpu.memory_space<vmem>>, %arg2: memref<512x2048xbf16, #tpu.memory_space<vmem>>, %arg3: memref<2048x512xbf16, #tpu.memory_space<vmem>>, %arg4: memref<16x512xf32, #tpu.memory_space<vmem>>) attributes {dimension_semantics = [#tpu.dimension_semantics<parallel>], iteration_bounds = array<i64: 1>, scalar_prefetch = 0 : i64, scratch_operands = 0 : i64, tpu.core_type = #tpu.core_type<tc>, window_params = [{transform_indices = @transform_0, window_bounds = array<i64: 16, 512>}, {pipeline_mode = #tpu.pipeline_mode<synchronous>, transform_indices = @transform_1, window_bounds = array<i64: 512, 2048>}, {pipeline_mode = #tpu.pipeline_mode<synchronous>, transform_indices = @transform_2, window_bounds = array<i64: 2048, 512>}, {transform_indices = @transform_3, window_bounds = array<i64: 16, 512>}]} {
    %c0 = arith.constant 0 : index
    %c0_0 = arith.constant 0 : index
    %0 = vector.load %arg1[%c0, %c0_0] : memref<16x512xf32, #tpu.memory_space<vmem>>, vector<16x512xf32>
    %1 = arith.truncf %0 : vector<16x512xf32> to vector<16x512xbf16>
    %c0_1 = arith.constant 0 : index
    %c0_2 = arith.constant 0 : index
    %2 = vector.load %arg2[%c0_1, %c0_2] : memref<512x2048xbf16, #tpu.memory_space<vmem>>, vector<512x2048xbf16>
    %cst = arith.constant dense<0.000000e+00> : vector<16x2048xf32>
    %3 = tpu.matmul %1, %2, %cst {dimension_numbers = #tpu.dot_dimension_numbers<[1], [0], [0], [1], [0, 0, 1, 1], [], []>} : vector<16x512xbf16>, vector<512x2048xbf16>, vector<16x2048xf32> -> vector<16x2048xf32>
    %4 = arith.truncf %3 : vector<16x2048xf32> to vector<16x2048xbf16>
    %cst_3 = arith.constant 0.000000e+00 : bf16
    %5 = vector.broadcast %cst_3 : bf16 to vector<16x2048xbf16>
    %6 = arith.maximumf %4, %5 : vector<16x2048xbf16>
    %c0_4 = arith.constant 0 : index
    %c0_5 = arith.constant 0 : index
    %7 = vector.load %arg3[%c0_4, %c0_5] : memref<2048x512xbf16, #tpu.memory_space<vmem>>, vector<2048x512xbf16>
    %cst_6 = arith.constant dense<0.000000e+00> : vector<16x512xf32>
    %8 = tpu.matmul %6, %7, %cst_6 {dimension_numbers = #tpu.dot_dimension_numbers<[1], [0], [0], [1], [0, 0, 1, 1], [], []>} : vector<16x2048xbf16>, vector<2048x512xbf16>, vector<16x512xf32> -> vector<16x512xf32>
    %9 = arith.addf %8, %0 : vector<16x512xf32>
    %cst_7 = arith.constant dense<0.000000e+00> : vector<16xf32>
    %10 = vector.multi_reduction <add>, %9, %cst_7 [1] : vector<16x512xf32> to vector<16xf32>
    %11 = vector.shape_cast %10 : vector<16xf32> to vector<16x1xf32>
    %cst_8 = arith.constant 5.120000e+02 : f32
    %12 = vector.broadcast %cst_8 : f32 to vector<16x1xf32>
    %13 = arith.divf %11, %12 : vector<16x1xf32>
    %14 = vector.broadcast %13 : vector<16x1xf32> to vector<16x512xf32>
    %15 = arith.subf %9, %14 : vector<16x512xf32>
    %16 = arith.mulf %15, %15 : vector<16x512xf32>
    %cst_9 = arith.constant dense<0.000000e+00> : vector<16xf32>
    %17 = vector.multi_reduction <add>, %16, %cst_9 [1] : vector<16x512xf32> to vector<16xf32>
    %18 = vector.shape_cast %17 : vector<16xf32> to vector<16x1xf32>
    %cst_10 = arith.constant 5.120000e+02 : f32
    %19 = vector.broadcast %cst_10 : f32 to vector<16x1xf32>
    %20 = arith.divf %18, %19 : vector<16x1xf32>
    %cst_11 = arith.constant 9.99999974E-6 : f32
    %21 = vector.broadcast %cst_11 : f32 to vector<16x1xf32>
    %22 = arith.addf %20, %21 : vector<16x1xf32>
    %23 = math.rsqrt %22 : vector<16x1xf32>
    %24 = vector.broadcast %23 : vector<16x1xf32> to vector<16x512xf32>
    %25 = arith.mulf %15, %24 : vector<16x512xf32>
    %c0_12 = arith.constant 0 : index
    %c0_13 = arith.constant 0 : index
    %26 = vector.load %arg4[%c0_12, %c0_13] : memref<16x512xf32, #tpu.memory_space<vmem>>, vector<16x512xf32>
    tpu.vector_store %arg4[%c0_12, %c0_13], %25 {strides = array<i32>} : memref<16x512xf32, #tpu.memory_space<vmem>>, vector<16x512xf32>,
    return
  }
  func.func @transform_0(%arg0: i32) -> (i32, i32) {
    %c0_i32 = arith.constant 0 : i32
    %c0_i32_0 = arith.constant 0 : i32
    return %arg0, %c0_i32 : i32, i32
  }
  func.func @transform_1(%arg0: i32) -> (i32, i32) {
    %c0_i32 = arith.constant 0 : i32
    %c0_i32_0 = arith.constant 0 : i32
    %c0_i32_1 = arith.constant 0 : i32
    return %c0_i32, %c0_i32_0 : i32, i32
  }
  func.func @transform_2(%arg0: i32) -> (i32, i32) {
    %c0_i32 = arith.constant 0 : i32
    %c0_i32_0 = arith.constant 0 : i32
    %c0_i32_1 = arith.constant 0 : i32
    return %c0_i32, %c0_i32_0 : i32, i32
  }
  func.func @transform_3(%arg0: i32) -> (i32, i32) {
    %c0_i32 = arith.constant 0 : i32
    %c0_i32_0 = arith.constant 0 : i32
    return %arg0, %c0_i32 : i32, i32
  }
}

</mosaic_0001>

<llo_original>
// kernel: poswise_ffn.1
$region0: #{poswise_ffn.1}
  #allocation0 [shape = 'u32[]', space=smem, size = 0x4, offset = 0x4, fixed_abs, tag = 'smem constant byte address 0x4 - core index']
  #allocation1 [shape = 'u32[72,128]{1,0:T(1,128)}', space=vmem, size = 0x9000, scoped, tag = 'internal scratch']
  %s0 = inlined_call_operand.hbm [shape: f32[16,512], index: 0, kind: input, shape index: {}]
  %s1 = inlined_call_operand.hbm [shape: bf16[512,2048], index: 1, kind: input, shape index: {}]
  %s2 = inlined_call_operand.hbm [shape: bf16[2048,512], index: 2, kind: input, shape index: {}]
  %s3 = inlined_call_operand.hbm [shape: f32[16,512], index: 3, kind: output, shape index: {}]
  %s4 = sld [smem:[#allocation0]]
  $region34: #{poswise_ffn.1} parent=0
    _
  %s6 = ssub.s32 1, %s4
  %s7 = scalar_select 0, %s6, %s4
  $region1: #{poswise_ffn.1} parent=0
    #allocation2 [shape = 'u8[32768]{0}', space=vmem, size = 0x8000, scoped, tag = 'input window, operand 0, single buffered']
    #allocation3 [shape = 's32[1]{0}', space=sflag, size = 0x4, scoped, tag = 'scoped memory for poswise_ffn.1']
    #allocation4 [shape = 's32[1]{0}', space=sflag, size = 0x4, scoped, tag = 'scoped memory for poswise_ffn.1']
    #allocation5 [shape = 'u8[2097152]{0}', space=vmem, size = 0x200000, scoped, tag = 'input window, operand 1, single buffered']
    #allocation6 [shape = 's32[1]{0}', space=sflag, size = 0x4, scoped, tag = 'scoped memory for poswise_ffn.1']
    #allocation7 [shape = 'u8[2097152]{0}', space=vmem, size = 0x200000, scoped, tag = 'input window, operand 2, single buffered']
    #allocation8 [shape = 'u8[32768]{0}', space=vmem, size = 0x8000, scoped, tag = 'output window, operand 0, single buffered']
    %8 = vsyncpa [#allocation3], 0
    %9 = vsyncpa [#allocation6], 0
    %10 = vsyncpa [#allocation4], 0
    // Predicated region
    $region2: #{poswise_ffn.1} parent=1 // pred_check
      _
    $region3: #{poswise_ffn.1} parent=1 // pred_check_branch
      %12 = sbr.rel (0) target = $region5
    $region4: #{poswise_ffn.1} parent=1 // pred_region
      %14 = vsyncadd [#allocation3], 0
      %s15 = sshll.u32 %s0, 4
      %s16 = int_to_ptr.hbm [resolvable:$true] %s15
      %s17 = sshll.u32 [#allocation2], 4
      %s18 = int_to_ptr.vmem [resolvable:$true] %s17
      %23 = dma.hbm_to_vmem [thread:$0]  %s16, 1024, %s18, [#allocation3], 512, 512, 32
    $region5: #{poswise_ffn.1} parent=1 // pred_fallthru
      _
    // Predicated region
    $region6: #{poswise_ffn.1} parent=1 // pred_check
      _
    $region7: #{poswise_ffn.1} parent=1 // pred_check_branch
      %25 = sbr.rel (0) target = $region9
    $region8: #{poswise_ffn.1} parent=1 // pred_region
      %27 = vsyncadd [#allocation6], 0
      %s28 = sshll.u32 %s1, 4
      %s29 = int_to_ptr.hbm [resolvable:$true] %s28
      %s30 = sshll.u32 [#allocation5], 4
      %s31 = int_to_ptr.vmem [resolvable:$true] %s30
      %36 = dma.hbm_to_vmem [thread:$0]  %s29, 65536, %s31, [#allocation6], 1024, 1024, 64
    $region9: #{poswise_ffn.1} parent=1 // pred_fallthru
      _
    // Predicated region
    $region10: #{poswise_ffn.1} parent=1 // pred_check
      _
    $region11: #{poswise_ffn.1} parent=1 // pred_check_branch
      %38 = sbr.rel (0) target = $region13
    $region12: #{poswise_ffn.1} parent=1 // pred_region
      %40 = vsyncadd [#allocation6], 0
      %s41 = sshll.u32 %s2, 4
      %s42 = int_to_ptr.hbm [resolvable:$true] %s41
      %s43 = sshll.u32 [#allocation7], 4
      %s44 = int_to_ptr.vmem [resolvable:$true] %s43
      %49 = dma.hbm_to_vmem [thread:$0]  %s42, 65536, %s44, [#allocation6], 256, 256, 16
    $region13: #{poswise_ffn.1} parent=1 // pred_fallthru
      _
    // Predicated region
    $region14: #{poswise_ffn.1} parent=1 // pred_check
      _
    $region15: #{poswise_ffn.1} parent=1 // pred_check_branch
      %51 = sbr.rel (0) target = $region17
    $region16: #{poswise_ffn.1} parent=1 // pred_region
      %53 = dma.done [#allocation3], 1024
    $region17: #{poswise_ffn.1} parent=1 // pred_fallthru
      _
    // Predicated region
    $region18: #{poswise_ffn.1} parent=1 // pred_check
      _
    $region19: #{poswise_ffn.1} parent=1 // pred_check_branch
      %55 = sbr.rel (0) target = $region21
    $region20: #{poswise_ffn.1} parent=1 // pred_region
      %57 = dma.done [#allocation6], 65536
    $region21: #{poswise_ffn.1} parent=1 // pred_fallthru
      _
    // Predicated region
    $region22: #{poswise_ffn.1} parent=1 // pred_check
      _
    $region23: #{poswise_ffn.1} parent=1 // pred_check_branch
      %59 = sbr.rel (0) target = $region25
    $region24: #{poswise_ffn.1} parent=1 // pred_region
      %61 = dma.done [#allocation6], 65536
    $region25: #{poswise_ffn.1} parent=1 // pred_fallthru
      _
    %v62 = vld [vmem:[#allocation2] sm:$0xff]
    %v63 = vld [vmem:[#allocation2 + $0x8] sm:$0xff]
    %v64 = vld [vmem:[#allocation2 + $0x10] sm:$0xff]
    %v65 = vld [vmem:[#allocation2 + $0x18] sm:$0xff]
    %v66 = vld [vmem:[#allocation2 + $0x20] sm:$0xff]
    %v67 = vld [vmem:[#allocation2 + $0x28] sm:$0xff]
    %v68 = vld [vmem:[#allocation2 + $0x30] sm:$0xff]
    %v69 = vld [vmem:[#allocation2 + $0x38] sm:$0xff]
    %v70 = vpack.c.bf16 %v66, %v62
    %v71 = vpack.c.bf16 %v67, %v63
    %v72 = vpack.c.bf16 %v68, %v64
    %v73 = vpack.c.bf16 %v69, %v65
    %v74 = vld [vmem:[#allocation5] sm:$0xff]
    %v75 = vld [vmem:[#allocation5 + $0x8] sm:$0xff]
    %v76 = vld [vmem:[#allocation5 + $0x10] sm:$0xff]
    %v77 = vld [vmem:[#allocation5 + $0x18] sm:$0xff]
    %v78 = vld [vmem:[#allocation5 + $0x20] sm:$0xff]
    %v79 = vld [vmem:[#allocation5 + $0x28] sm:$0xff]
    %v80 = vld [vmem:[#allocation5 + $0x30] sm:$0xff]
    %v81 = vld [vmem:[#allocation5 + $0x38] sm:$0xff]
    %v82 = vld [vmem:[#allocation5 + $0x40] sm:$0xff]
    %v83 = vld [vmem:[#allocation5 + $0x48] sm:$0xff]
    %v84 = vld [vmem:[#allocation5 + $0x50] sm:$0xff]
    %v85 = vld [vmem:[#allocation5 + $0x58] sm:$0xff]
    %v86 = vld [vmem:[#allocation5 + $0x60] sm:$0xff]
    %v87 = vld [vmem:[#allocation5 + $0x68] sm:$0xff]
    %v88 = vld [vmem:[#allocation5 + $0x70] sm:$0xff]
    %v89 = vld [vmem:[#allocation5 + $0x78] sm:$0xff]
    %v90 = vld [vmem:[#allocation5 + $0x80] sm:$0xff]
    %v91 = vld [vmem:[#allocation5 + $0x88] sm:$0xff]
    %v92 = vld [vmem:[#allocation5 + $0x90] sm:$0xff]
    %v93 = vld [vmem:[#allocation5 + $0x98] sm:$0xff]
    %v94 = vld [vmem:[#allocation5 + $0xa0] sm:$0xff]
    %v95 = vld [vmem:[#allocation5 + $0xa8] sm:$0xff]
    %v96 = vld [vmem:[#allocation5 + $0xb0] sm:$0xff]
    %v97 = vld [vmem:[#allocation5 + $0xb8] sm:$0xff]
    %v98 = vld [vmem:[#allocation5 + $0xc0] sm:$0xff]
    %v99 = vld [vmem:[#allocation5 + $0xc8] sm:$0xff]
    %v100 = vld [vmem:[#allocation5 + $0xd0] sm:$0xff]
    %v101 = vld [vmem:[#allocation5 + $0xd8] sm:$0xff]
    %v102 = vld [vmem:[#allocation5 + $0xe0] sm:$0xff]
    %v103 = vld [vmem:[#allocation5 + $0xe8] sm:$0xff]
    %v104 = vld [vmem:[#allocation5 + $0xf0] sm:$0xff]
    %v105 = vld [vmem:[#allocation5 + $0xf8] sm:$0xff]
    %v106 = vld [vmem:[#allocation5 + $0x100] sm:$0xff]
    %v107 = vld [vmem:[#allocation5 + $0x108] sm:$0xff]
    %v108 = vld [vmem:[#allocation5 + $0x110] sm:$0xff]
    %v109 = vld [vmem:[#allocation5 + $0x118] sm:$0xff]
    %v110 = vld [vmem:[#allocation5 + $0x120] sm:$0xff]
    %v111 = vld [vmem:[#allocation5 + $0x128] sm:$0xff]
    %v112 = vld [vmem:[#allocation5 + $0x130] sm:$0xff]
    %v113 = vld [vmem:[#allocation5 + $0x138] sm:$0xff]
    %v114 = vld [vmem:[#allocation5 + $0x140] sm:$0xff]
    %v115 = vld [vmem:[#allocation5 + $0x148] sm:$0xff]
    %v116 = vld [vmem:[#allocation5 + $0x150] sm:$0xff]
    %v117 = vld [vmem:[#allocation5 + $0x158] sm:$0xff]
    %v118 = vld [vmem:[#allocation5 + $0x160] sm:$0xff]
    %v119 = vld [vmem:[#allocation5 + $0x168] sm:$0xff]
    %v120 = vld [vmem:[#allocation5 + $0x170] sm:$0xff]
    %v121 = vld [vmem:[#allocation5 + $0x178] sm:$0xff]
    %v122 = vld [vmem:[#allocation5 + $0x180] sm:$0xff]
    %v123 = vld [vmem:[#allocation5 + $0x188] sm:$0xff]
    %v124 = vld [vmem:[#allocation5 + $0x190] sm:$0xff]
    %v125 = vld [vmem:[#allocation5 + $0x198] sm:$0xff]
    %v126 = vld [vmem:[#allocation5 + $0x1a0] sm:$0xff]
    %v127 = vld [vmem:[#allocation5 + $0x1a8] sm:$0xff]
    %v128 = vld [vmem:[#allocation5 + $0x1b0] sm:$0xff]
    %v129 = vld [vmem:[#allocation5 + $0x1b8] sm:$0xff]
    %v130 = vld [vmem:[#allocation5 + $0x1c0] sm:$0xff]
    %v131 = vld [vmem:[#allocation5 + $0x1c8] sm:$0xff]
    %v132 = vld [vmem:[#allocation5 + $0x1d0] sm:$0xff]
    %v133 = vld [vmem:[#allocation5 + $0x1d8] sm:$0xff]
    %v134 = vld [vmem:[#allocation5 + $0x1e0] sm:$0xff]
    %v135 = vld [vmem:[#allocation5 + $0x1e8] sm:$0xff]
    %v136 = vld [vmem:[#allocation5 + $0x1f0] sm:$0xff]
    %v137 = vld [vmem:[#allocation5 + $0x1f8] sm:$0xff]
    %v138 = vld [vmem:[#allocation5 + $0x200] sm:$0xff]
    %v139 = vld [vmem:[#allocation5 + $0x208] sm:$0xff]
    %v140 = vld [vmem:[#allocation5 + $0x210] sm:$0xff]
    %v141 = vld [vmem:[#allocation5 + $0x218] sm:$0xff]
    %v142 = vld [vmem:[#allocation5 + $0x220] sm:$0xff]
    %v143 = vld [vmem:[#allocation5 + $0x228] sm:$0xff]
    %v144 = vld [vmem:[#allocation5 + $0x230] sm:$0xff]
    %v145 = vld [vmem:[#allocation5 + $0x238] sm:$0xff]
    %v146 = vld [vmem:[#allocation5 + $0x240] sm:$0xff]
    %v147 = vld [vmem:[#allocation5 + $0x248] sm:$0xff]
    %v148 = vld [vmem:[#allocation5 + $0x250] sm:$0xff]
    %v149 = vld [vmem:[#allocation5 + $0x258] sm:$0xff]
    %v150 = vld [vmem:[#allocation5 + $0x260] sm:$0xff]
    %v151 = vld [vmem:[#allocation5 + $0x268] sm:$0xff]
    %v152 = vld [vmem:[#allocation5 + $0x270] sm:$0xff]
    %v153 = vld [vmem:[#allocation5 + $0x278] sm:$0xff]
    %v154 = vld [vmem:[#allocation5 + $0x280] sm:$0xff]
    %v155 = vld [vmem:[#allocation5 + $0x288] sm:$0xff]
    %v156 = vld [vmem:[#allocation5 + $0x290] sm:$0xff]
    %v157 = vld [vmem:[#allocation5 + $0x298] sm:$0xff]
    %v158 = vld [vmem:[#allocation5 + $0x2a0] sm:$0xff]
    %v159 = vld [vmem:[#allocation5 + $0x2a8] sm:$0xff]
    %v160 = vld [vmem:[#allocation5 + $0x2b0] sm:$0xff]
    %v161 = vld [vmem:[#allocation5 + $0x2b8] sm:$0xff]
    %v162 = vld [vmem:[#allocation5 + $0x2c0] sm:$0xff]
    %v163 = vld [vmem:[#allocation5 + $0x2c8] sm:$0xff]
    %v164 = vld [vmem:[#allocation5 + $0x2d0] sm:$0xff]
    %v165 = vld [vmem:[#allocation5 + $0x2d8] sm:$0xff]
    %v166 = vld [vmem:[#allocation5 + $0x2e0] sm:$0xff]
    %v167 = vld [vmem:[#allocation5 + $0x2e8] sm:$0xff]
    %v168 = vld [vmem:[#allocation5 + $0x2f0] sm:$0xff]
    %v169 = vld [vmem:[#allocation5 + $0x2f8] sm:$0xff]
    %v170 = vld [vmem:[#allocation5 + $0x300] sm:$0xff]
    %v171 = vld [vmem:[#allocation5 + $0x308] sm:$0xff]
    %v172 = vld [vmem:[#allocation5 + $0x310] sm:$0xff]
    %v173 = vld [vmem:[#allocation5 + $0x318] sm:$0xff]
    %v174 = vld [vmem:[#allocation5 + $0x320] sm:$0xff]
    %v175 = vld [vmem:[#allocation5 + $0x328] sm:$0xff]
    %v176 = vld [vmem:[#allocation5 + $0x330] sm:$0xff]
    %v177 = vld [vmem:[#allocation5 + $0x338] sm:$0xff]
    %v178 = vld [vmem:[#allocation5 + $0x340] sm:$0xff]
    %v179 = vld [vmem:[#allocation5 + $0x348] sm:$0xff]
    %v180 = vld [vmem:[#allocation5 + $0x350] sm:$0xff]
    %v181 = vld [vmem:[#allocation5 + $0x358] sm:$0xff]
    %v182 = vld [vmem:[#allocation5 + $0x360] sm:$0xff]
    %v183 = vld [vmem:[#allocation5 + $0x368] sm:$0xff]
    %v184 = vld [vmem:[#allocation5 + $0x370] sm:$0xff]
    %v185 = vld [vmem:[#allocation5 + $0x378] sm:$0xff]
    %v186 = vld [vmem:[#allocation5 + $0x380] sm:$0xff]
    %v187 = vld [vmem:[#allocation5 + $0x388] sm:$0xff]
    %v188 = vld [vmem:[#allocation5 + $0x390] sm:$0xff]
    %v189 = vld [vmem:[#allocation5 + $0x398] sm:$0xff]
    %v190 = vld [vmem:[#allocation5 + $0x3a0] sm:$0xff]
    %v191 = vld [vmem:[#allocation5 + $0x3a8] sm:$0xff]
    %v192 = vld [vmem:[#allocation5 + $0x3b0] sm:$0xff]
    %v193 = vld [vmem:[#allocation5 + $0x3b8] sm:$0xff]
    %v194 = vld [vmem:[#allocation5 + $0x3c0] sm:$0xff]
    %v195 = vld [vmem:[#allocation5 + $0x3c8] sm:$0xff]
    %v196 = vld [vmem:[#allocation5 + $0x3d0] sm:$0xff]
    %v197 = vld [vmem:[#allocation5 + $0x3d8] sm:$0xff]
    %v198 = vld [vmem:[#allocation5 + $0x3e0] sm:$0xff]
    %v199 = vld [vmem:[#allocation5 + $0x3e8] sm:$0xff]
    %v200 = vld [vmem:[#allocation5 + $0x3f0] sm:$0xff]
    %v201 = vld [vmem:[#allocation5 + $0x3f8] sm:$0xff]
    %v202 = vld [vmem:[#allocation5 + $0x400] sm:$0xff]
    %v203 = vld [vmem:[#allocation5 + $0x408] sm:$0xff]
    %v204 = vld [vmem:[#allocation5 + $0x410] sm:$0xff]
    %v205 = vld [vmem:[#allocation5 + $0x418] sm:$0xff]
    %v206 = vld [vmem:[#allocation5 + $0x420] sm:$0xff]
    %v207 = vld [vmem:[#allocation5 + $0x428] sm:$0xff]
    %v208 = vld [vmem:[#allocation5 + $0x430] sm:$0xff]
    %v209 = vld [vmem:[#allocation5 + $0x438] sm:$0xff]
    %v210 = vld [vmem:[#allocation5 + $0x440] sm:$0xff]
    %v211 = vld [vmem:[#allocation5 + $0x448] sm:$0xff]
    %v212 = vld [vmem:[#allocation5 + $0x450] sm:$0xff]
    %v213 = vld [vmem:[#allocation5 + $0x458] sm:$0xff]
    %v214 = vld [vmem:[#allocation5 + $0x460] sm:$0xff]
    %v215 = vld [vmem:[#allocation5 + $0x468] sm:$0xff]
    %v216 = vld [vmem:[#allocation5 + $0x470] sm:$0xff]
    %v217 = vld [vmem:[#allocation5 + $0x478] sm:$0xff]
    %v218 = vld [vmem:[#allocation5 + $0x480] sm:$0xff]
    %v219 = vld [vmem:[#allocation5 + $0x488] sm:$0xff]
    %v220 = vld [vmem:[#allocation5 + $0x490] sm:$0xff]
    %v221 = vld [vmem:[#allocation5 + $0x498] sm:$0xff]
    %v222 = vld [vmem:[#allocation5 + $0x4a0] sm:$0xff]
    %v223 = vld [vmem:[#allocation5 + $0x4a8] sm:$0xff]
    %v224 = vld [vmem:[#allocation5 + $0x4b0] sm:$0xff]
    %v225 = vld [vmem:[#allocation5 + $0x4b8] sm:$0xff]
    %v226 = vld [vmem:[#allocation5 + $0x4c0] sm:$0xff]
    %v227 = vld [vmem:[#allocation5 + $0x4c8] sm:$0xff]
    %v228 = vld [vmem:[#allocation5 + $0x4d0] sm:$0xff]
    %v229 = vld [vmem:[#allocation5 + $0x4d8] sm:$0xff]
    %v230 = vld [vmem:[#allocation5 + $0x4e0] sm:$0xff]
    %v231 = vld [vmem:[#allocation5 + $0x4e8] sm:$0xff]
    %v232 = vld [vmem:[#allocation5 + $0x4f0] sm:$0xff]
    %v233 = vld [vmem:[#allocation5 + $0x4f8] sm:$0xff]
    %v234 = vld [vmem:[#allocation5 + $0x500] sm:$0xff]
    %v235 = vld [vmem:[#allocation5 + $0x508] sm:$0xff]
    %v236 = vld [vmem:[#allocation5 + $0x510] sm:$0xff]
    %v237 = vld [vmem:[#allocation5 + $0x518] sm:$0xff]
    %v238 = vld [vmem:[#allocation5 + $0x520] sm:$0xff]
    %v239 = vld [vmem:[#allocation5 + $0x528] sm:$0xff]
    %v240 = vld [vmem:[#allocation5 + $0x530] sm:$0xff]
    %v241 = vld [vmem:[#allocation5 + $0x538] sm:$0xff]
    %v242 = vld [vmem:[#allocation5 + $0x540] sm:$0xff]
    %v243 = vld [vmem:[#allocation5 + $0x548] sm:$0xff]
    %v244 = vld [vmem:[#allocation5 + $0x550] sm:$0xff]
    %v245 = vld [vmem:[#allocation5 + $0x558] sm:$0xff]
    %v246 = vld [vmem:[#allocation5 + $0x560] sm:$0xff]
    %v247 = vld [vmem:[#allocation5 + $0x568] sm:$0xff]
    %v248 = vld [vmem:[#allocation5 + $0x570] sm:$0xff]
    %v249 = vld [vmem:[#allocation5 + $0x578] sm:$0xff]
    %v250 = vld [vmem:[#allocation5 + $0x580] sm:$0xff]
    %v251 = vld [vmem:[#allocation5 + $0x588] sm:$0xff]
    %v252 = vld [vmem:[#allocation5 + $0x590] sm:$0xff]
    %v253 = vld [vmem:[#allocation5 + $0x598] sm:$0xff]
    %v254 = vld [vmem:[#allocation5 + $0x5a0] sm:$0xff]
    %v255 = vld [vmem:[#allocation5 + $0x5a8] sm:$0xff]
    %v256 = vld [vmem:[#allocation5 + $0x5b0] sm:$0xff]
    %v257 = vld [vmem:[#allocation5 + $0x5b8] sm:$0xff]
    %v258 = vld [vmem:[#allocation5 + $0x5c0] sm:$0xff]
    %v259 = vld [vmem:[#allocation5 + $0x5c8] sm:$0xff]
    %v260 = vld [vmem:[#allocation5 + $0x5d0] sm:$0xff]
    %v261 = vld [vmem:[#allocation5 + $0x5d8] sm:$0xff]
    %v262 = vld [vmem:[#allocation5 + $0x5e0] sm:$0xff]
    %v263 = vld [vmem:[#allocation5 + $0x5e8] sm:$0xff]
    %v264 = vld [vmem:[#allocation5 + $0x5f0] sm:$0xff]
    %v265 = vld [vmem:[#allocation5 + $0x5f8] sm:$0xff]
    %v266 = vld [vmem:[#allocation5 + $0x600] sm:$0xff]
    %v267 = vld [vmem:[#allocation5 + $0x608] sm:$0xff]
    %v268 = vld [vmem:[#allocation5 + $0x610] sm:$0xff]
    %v269 = vld [vmem:[#allocation5 + $0x618] sm:$0xff]
    %v270 = vld [vmem:[#allocation5 + $0x620] sm:$0xff]
    %v271 = vld [vmem:[#allocation5 + $0x628] sm:$0xff]
    %v272 = vld [vmem:[#allocation5 + $0x630] sm:$0xff]
    %v273 = vld [vmem:[#allocation5 + $0x638] sm:$0xff]
    %v274 = vld [vmem:[#allocation5 + $0x640] sm:$0xff]
    %v275 = vld [vmem:[#allocation5 + $0x648] sm:$0xff]
    %v276 = vld [vmem:[#allocation5 + $0x650] sm:$0xff]
    %v277 = vld [vmem:[#allocation5 + $0x658] sm:$0xff]
    %v278 = vld [vmem:[#allocation5 + $0x660] sm:$0xff]
    %v279 = vld [vmem:[#allocation5 + $0x668] sm:$0xff]
    %v280 = vld [vmem:[#allocation5 + $0x670] sm:$0xff]
    %v281 = vld [vmem:[#allocation5 + $0x678] sm:$0xff]
    %v282 = vld [vmem:[#allocation5 + $0x680] sm:$0xff]
    %v283 = vld [vmem:[#allocation5 + $0x688] sm:$0xff]
    %v284 = vld [vmem:[#allocation5 + $0x690] sm:$0xff]
    %v285 = vld [vmem:[#allocation5 + $0x698] sm:$0xff]
    %v286 = vld [vmem:[#allocation5 + $0x6a0] sm:$0xff]
    %v287 = vld [vmem:[#allocation5 + $0x6a8] sm:$0xff]
    %v288 = vld [vmem:[#allocation5 + $0x6b0] sm:$0xff]
    %v289 = vld [vmem:[#allocation5 + $0x6b8] sm:$0xff]
    %v290 = vld [vmem:[#allocation5 + $0x6c0] sm:$0xff]
    %v291 = vld [vmem:[#allocation5 + $0x6c8] sm:$0xff]
    %v292 = vld [vmem:[#allocation5 + $0x6d0] sm:$0xff]
    %v293 = vld [vmem:[#allocation5 + $0x6d8] sm:$0xff]
    %v294 = vld [vmem:[#allocation5 + $0x6e0] sm:$0xff]
    %v295 = vld [vmem:[#allocation5 + $0x6e8] sm:$0xff]
    %v296 = vld [vmem:[#allocation5 + $0x6f0] sm:$0xff]
    %v297 = vld [vmem:[#allocation5 + $0x6f8] sm:$0xff]
    %v298 = vld [vmem:[#allocation5 + $0x700] sm:$0xff]
    %v299 = vld [vmem:[#allocation5 + $0x708] sm:$0xff]
    %v300 = vld [vmem:[#allocation5 + $0x710] sm:$0xff]
    %v301 = vld [vmem:[#allocation5 + $0x718] sm:$0xff]
    %v302 = vld [vmem:[#allocation5 + $0x720] sm:$0xff]
    %v303 = vld [vmem:[#allocation5 + $0x728] sm:$0xff]
    %v304 = vld [vmem:[#allocation5 + $0x730] sm:$0xff]
    %v305 = vld [vmem:[#allocation5 + $0x738] sm:$0xff]
    %v306 = vld [vmem:[#allocation5 + $0x740] sm:$0xff]
    %v307 = vld [vmem:[#allocation5 + $0x748] sm:$0xff]
    %v308 = vld [vmem:[#allocation5 + $0x750] sm:$0xff]
    %v309 = vld [vmem:[#allocation5 + $0x758] sm:$0xff]
    %v310 = vld [vmem:[#allocation5 + $0x760] sm:$0xff]
    %v311 = vld [vmem:[#allocation5 + $0x768] sm:$0xff]
    %v312 = vld [vmem:[#allocation5 + $0x770] sm:$0xff]
    %v313 = vld [vmem:[#allocation5 + $0x778] sm:$0xff]
    %v314 = vld [vmem:[#allocation5 + $0x780] sm:$0xff]
    %v315 = vld [vmem:[#allocation5 + $0x788] sm:$0xff]
    %v316 = vld [vmem:[#allocation5 + $0x790] sm:$0xff]
    %v317 = vld [vmem:[#allocation5 + $0x798] sm:$0xff]
    %v318 = vld [vmem:[#allocation5 + $0x7a0] sm:$0xff]
    %v319 = vld [vmem:[#allocation5 + $0x7a8] sm:$0xff]
    %v320 = vld [vmem:[#allocation5 + $0x7b0] sm:$0xff]
    %v321 = vld [vmem:[#allocation5 + $0x7b8] sm:$0xff]
    %v322 = vld [vmem:[#allocation5 + $0x7c0] sm:$0xff]
    %v323 = vld [vmem:[#allocation5 + $0x7c8] sm:$0xff]
    %v324 = vld [vmem:[#allocation5 + $0x7d0] sm:$0xff]
    %v325 = vld [vmem:[#allocation5 + $0x7d8] sm:$0xff]
    %v326 = vld [vmem:[#allocation5 + $0x7e0] sm:$0xff]
    %v327 = vld [vmem:[#allocation5 + $0x7e8] sm:$0xff]
    %v328 = vld [vmem:[#allocation5 + $0x7f0] sm:$0xff]
    %v329 = vld [vmem:[#allocation5 + $0x7f8] sm:$0xff]
    %v330 = vld [vmem:[#allocation5 + $0x800] sm:$0xff]
    %v331 = vld [vmem:[#allocation5 + $0x808] sm:$0xff]
    %v332 = vld [vmem:[#allocation5 + $0x810] sm:$0xff]
    %v333 = vld [vmem:[#allocation5 + $0x818] sm:$0xff]
    %v334 = vld [vmem:[#allocation5 + $0x820] sm:$0xff]
    %v335 = vld [vmem:[#allocation5 + $0x828] sm:$0xff]
    %v336 = vld [vmem:[#allocation5 + $0x830] sm:$0xff]
    %v337 = vld [vmem:[#allocation5 + $0x838] sm:$0xff]
    %v338 = vld [vmem:[#allocation5 + $0x840] sm:$0xff]
    %v339 = vld [vmem:[#allocation5 + $0x848] sm:$0xff]
    %v340 = vld [vmem:[#allocation5 + $0x850] sm:$0xff]
    %v341 = vld [vmem:[#allocation5 + $0x858] sm:$0xff]
    %v342 = vld [vmem:[#allocation5 + $0x860] sm:$0xff]
    %v343 = vld [vmem:[#allocation5 + $0x868] sm:$0xff]
    %v344 = vld [vmem:[#allocation5 + $0x870] sm:$0xff]
    %v345 = vld [vmem:[#allocation5 + $0x878] sm:$0xff]
    %v346 = vld [vmem:[#allocation5 + $0x880] sm:$0xff]
    %v347 = vld [vmem:[#allocation5 + $0x888] sm:$0xff]
    %v348 = vld [vmem:[#allocation5 + $0x890] sm:$0xff]
    %v349 = vld [vmem:[#allocation5 + $0x898] sm:$0xff]
    %v350 = vld [vmem:[#allocation5 + $0x8a0] sm:$0xff]
    %v351 = vld [vmem:[#allocation5 + $0x8a8] sm:$0xff]
    %v352 = vld [vmem:[#allocation5 + $0x8b0] sm:$0xff]
    %v353 = vld [vmem:[#allocation5 + $0x8b8] sm:$0xff]
    %v354 = vld [vmem:[#allocation5 + $0x8c0] sm:$0xff]
    %v355 = vld [vmem:[#allocation5 + $0x8c8] sm:$0xff]
    %v356 = vld [vmem:[#allocation5 + $0x8d0] sm:$0xff]
    %v357 = vld [vmem:[#allocation5 + $0x8d8] sm:$0xff]
    %v358 = vld [vmem:[#allocation5 + $0x8e0] sm:$0xff]
    %v359 = vld [vmem:[#allocation5 + $0x8e8] sm:$0xff]
    %v360 = vld [vmem:[#allocation5 + $0x8f0] sm:$0xff]
    %v361 = vld [vmem:[#allocation5 + $0x8f8] sm:$0xff]
    %v362 = vld [vmem:[#allocation5 + $0x900] sm:$0xff]
    %v363 = vld [vmem:[#allocation5 + $0x908] sm:$0xff]
    %v364 = vld [vmem:[#allocation5 + $0x910] sm:$0xff]
    %v365 = vld [vmem:[#allocation5 + $0x918] sm:$0xff]
    %v366 = vld [vmem:[#allocation5 + $0x920] sm:$0xff]
    %v367 = vld [vmem:[#allocation5 + $0x928] sm:$0xff]
    %v368 = vld [vmem:[#allocation5 + $0x930] sm:$0xff]
    %v369 = vld [vmem:[#allocation5 + $0x938] sm:$0xff]
    %v370 = vld [vmem:[#allocation5 + $0x940] sm:$0xff]
    %v371 = vld [vmem:[#allocation5 + $0x948] sm:$0xff]
    %v372 = vld [vmem:[#allocation5 + $0x950] sm:$0xff]
    %v373 = vld [vmem:[#allocation5 + $0x958] sm:$0xff]
    %v374 = vld [vmem:[#allocation5 + $0x960] sm:$0xff]
    %v375 = vld [vmem:[#allocation5 + $0x968] sm:$0xff]
    %v376 = vld [vmem:[#allocation5 + $0x970] sm:$0xff]
    %v377 = vld [vmem:[#allocation5 + $0x978] sm:$0xff]
    %v378 = vld [vmem:[#allocation5 + $0x980] sm:$0xff]
    %v379 = vld [vmem:[#allocation5 + $0x988] sm:$0xff]
    %v380 = vld [vmem:[#allocation5 + $0x990] sm:$0xff]
    %v381 = vld [vmem:[#allocation5 + $0x998] sm:$0xff]
    %v382 = vld [vmem:[#allocation5 + $0x9a0] sm:$0xff]
    %v383 = vld [vmem:[#allocation5 + $0x9a8] sm:$0xff]
    %v384 = vld [vmem:[#allocation5 + $0x9b0] sm:$0xff]
    %v385 = vld [vmem:[#allocation5 + $0x9b8] sm:$0xff]
    %v386 = vld [vmem:[#allocation5 + $0x9c0] sm:$0xff]
    %v387 = vld [vmem:[#allocation5 + $0x9c8] sm:$0xff]
    %v388 = vld [vmem:[#allocation5 + $0x9d0] sm:$0xff]
    %v389 = vld [vmem:[#allocation5 + $0x9d8] sm:$0xff]
    %v390 = vld [vmem:[#allocation5 + $0x9e0] sm:$0xff]
    %v391 = vld [vmem:[#allocation5 + $0x9e8] sm:$0xff]
    %v392 = vld [vmem:[#allocation5 + $0x9f0] sm:$0xff]
    %v393 = vld [vmem:[#allocation5 + $0x9f8] sm:$0xff]
    %v394 = vld [vmem:[#allocation5 + $0xa00] sm:$0xff]
    %v395 = vld [vmem:[#allocation5 + $0xa08] sm:$0xff]
    %v396 = vld [vmem:[#allocation5 + $0xa10] sm:$0xff]
    %v397 = vld [vmem:[#allocation5 + $0xa18] sm:$0xff]
    %v398 = vld [vmem:[#allocation5 + $0xa20] sm:$0xff]
    %v399 = vld [vmem:[#allocation5 + $0xa28] sm:$0xff]
    %v400 = vld [vmem:[#allocation5 + $0xa30] sm:$0xff]
    %v401 = vld [vmem:[#allocation5 + $0xa38] sm:$0xff]
    %v402 = vld [vmem:[#allocation5 + $0xa40] sm:$0xff]
    %v403 = vld [vmem:[#allocation5 + $0xa48] sm:$0xff]
    %v404 = vld [vmem:[#allocation5 + $0xa50] sm:$0xff]
    %v405 = vld [vmem:[#allocation5 + $0xa58] sm:$0xff]
    %v406 = vld [vmem:[#allocation5 + $0xa60] sm:$0xff]
    %v407 = vld [vmem:[#allocation5 + $0xa68] sm:$0xff]
    %v408 = vld [vmem:[#allocation5 + $0xa70] sm:$0xff]
    %v409 = vld [vmem:[#allocation5 + $0xa78] sm:$0xff]
    %v410 = vld [vmem:[#allocation5 + $0xa80] sm:$0xff]
    %v411 = vld [vmem:[#allocation5 + $0xa88] sm:$0xff]
    %v412 = vld [vmem:[#allocation5 + $0xa90] sm:$0xff]
    %v413 = vld [vmem:[#allocation5 + $0xa98] sm:$0xff]
    %v414 = vld [vmem:[#allocation5 + $0xaa0] sm:$0xff]
    %v415 = vld [vmem:[#allocation5 + $0xaa8] sm:$0xff]
    %v416 = vld [vmem:[#allocation5 + $0xab0] sm:$0xff]
    %v417 = vld [vmem:[#allocation5 + $0xab8] sm:$0xff]
    %v418 = vld [vmem:[#allocation5 + $0xac0] sm:$0xff]
    %v419 = vld [vmem:[#allocation5 + $0xac8] sm:$0xff]
    %v420 = vld [vmem:[#allocation5 + $0xad0] sm:$0xff]
    %v421 = vld [vmem:[#allocation5 + $0xad8] sm:$0xff]
    %v422 = vld [vmem:[#allocation5 + $0xae0] sm:$0xff]
    %v423 = vld [vmem:[#allocation5 + $0xae8] sm:$0xff]
    %v424 = vld [vmem:[#allocation5 + $0xaf0] sm:$0xff]
    %v425 = vld [vmem:[#allocation5 + $0xaf8] sm:$0xff]
    %v426 = vld [vmem:[#allocation5 + $0xb00] sm:$0xff]
    %v427 = vld [vmem:[#allocation5 + $0xb08] sm:$0xff]
    %v428 = vld [vmem:[#allocation5 + $0xb10] sm:$0xff]
    %v429 = vld [vmem:[#allocation5 + $0xb18] sm:$0xff]
    %v430 = vld [vmem:[#allocation5 + $0xb20] sm:$0xff]
    %v431 = vld [vmem:[#allocation5 + $0xb28] sm:$0xff]
    %v432 = vld [vmem:[#allocation5 + $0xb30] sm:$0xff]
    %v433 = vld [vmem:[#allocation5 + $0xb38] sm:$0xff]
    %v434 = vld [vmem:[#allocation5 + $0xb40] sm:$0xff]
    %v435 = vld [vmem:[#allocation5 + $0xb48] sm:$0xff]
    %v436 = vld [vmem:[#allocation5 + $0xb50] sm:$0xff]
    %v437 = vld [vmem:[#allocation5 + $0xb58] sm:$0xff]
    %v438 = vld [vmem:[#allocation5 + $0xb60] sm:$0xff]
    %v439 = vld [vmem:[#allocation5 + $0xb68] sm:$0xff]
    %v440 = vld [vmem:[#allocation5 + $0xb70] sm:$0xff]
    %v441 = vld [vmem:[#allocation5 + $0xb78] sm:$0xff]
    %v442 = vld [vmem:[#allocation5 + $0xb80] sm:$0xff]
    %v443 = vld [vmem:[#allocation5 + $0xb88] sm:$0xff]
    %v444 = vld [vmem:[#allocation5 + $0xb90] sm:$0xff]
    %v445 = vld [vmem:[#allocation5 + $0xb98] sm:$0xff]
    %v446 = vld [vmem:[#allocation5 + $0xba0] sm:$0xff]
    %v447 = vld [vmem:[#allocation5 + $0xba8] sm:$0xff]
    %v448 = vld [vmem:[#allocation5 + $0xbb0] sm:$0xff]
    %v449 = vld [vmem:[#allocation5 + $0xbb8] sm:$0xff]
    %v450 = vld [vmem:[#allocation5 + $0xbc0] sm:$0xff]
    %v451 = vld [vmem:[#allocation5 + $0xbc8] sm:$0xff]
    %v452 = vld [vmem:[#allocation5 + $0xbd0] sm:$0xff]
    %v453 = vld [vmem:[#allocation5 + $0xbd8] sm:$0xff]
    %v454 = vld [vmem:[#allocation5 + $0xbe0] sm:$0xff]
    %v455 = vld [vmem:[#allocation5 + $0xbe8] sm:$0xff]
    %v456 = vld [vmem:[#allocation5 + $0xbf0] sm:$0xff]
    %v457 = vld [vmem:[#allocation5 + $0xbf8] sm:$0xff]
    %v458 = vld [vmem:[#allocation5 + $0xc00] sm:$0xff]
    %v459 = vld [vmem:[#allocation5 + $0xc08] sm:$0xff]
    %v460 = vld [vmem:[#allocation5 + $0xc10] sm:$0xff]
    %v461 = vld [vmem:[#allocation5 + $0xc18] sm:$0xff]
    %v462 = vld [vmem:[#allocation5 + $0xc20] sm:$0xff]
    %v463 = vld [vmem:[#allocation5 + $0xc28] sm:$0xff]
    %v464 = vld [vmem:[#allocation5 + $0xc30] sm:$0xff]
    %v465 = vld [vmem:[#allocation5 + $0xc38] sm:$0xff]
    %v466 = vld [vmem:[#allocation5 + $0xc40] sm:$0xff]
    %v467 = vld [vmem:[#allocation5 + $0xc48] sm:$0xff]
    %v468 = vld [vmem:[#allocation5 + $0xc50] sm:$0xff]
    %v469 = vld [vmem:[#allocation5 + $0xc58] sm:$0xff]
    %v470 = vld [vmem:[#allocation5 + $0xc60] sm:$0xff]
    %v471 = vld [vmem:[#allocation5 + $0xc68] sm:$0xff]
    %v472 = vld [vmem:[#allocation5 + $0xc70] sm:$0xff]
    %v473 = vld [vmem:[#allocation5 + $0xc78] sm:$0xff]
    %v474 = vld [vmem:[#allocation5 + $0xc80] sm:$0xff]
    %v475 = vld [vmem:[#allocation5 + $0xc88] sm:$0xff]
    %v476 = vld [vmem:[#allocation5 + $0xc90] sm:$0xff]
    %v477 = vld [vmem:[#allocation5 + $0xc98] sm:$0xff]
    %v478 = vld [vmem:[#allocation5 + $0xca0] sm:$0xff]
    %v479 = vld [vmem:[#allocation5 + $0xca8] sm:$0xff]
    %v480 = vld [vmem:[#allocation5 + $0xcb0] sm:$0xff]
    %v481 = vld [vmem:[#allocation5 + $0xcb8] sm:$0xff]
    %v482 = vld [vmem:[#allocation5 + $0xcc0] sm:$0xff]
    %v483 = vld [vmem:[#allocation5 + $0xcc8] sm:$0xff]
    %v484 = vld [vmem:[#allocation5 + $0xcd0] sm:$0xff]
    %v485 = vld [vmem:[#allocation5 + $0xcd8] sm:$0xff]
    %v486 = vld [vmem:[#allocation5 + $0xce0] sm:$0xff]
    %v487 = vld [vmem:[#allocation5 + $0xce8] sm:$0xff]
    %v488 = vld [vmem:[#allocation5 + $0xcf0] sm:$0xff]
    %v489 = vld [vmem:[#allocation5 + $0xcf8] sm:$0xff]
    %v490 = vld [vmem:[#allocation5 + $0xd00] sm:$0xff]
    %v491 = vld [vmem:[#allocation5 + $0xd08] sm:$0xff]
    %v492 = vld [vmem:[#allocation5 + $0xd10] sm:$0xff]
    %v493 = vld [vmem:[#allocation5 + $0xd18] sm:$0xff]
    %v494 = vld [vmem:[#allocation5 + $0xd20] sm:$0xff]
    %v495 = vld [vmem:[#allocation5 + $0xd28] sm:$0xff]
    %v496 = vld [vmem:[#allocation5 + $0xd30] sm:$0xff]
    %v497 = vld [vmem:[#allocation5 + $0xd38] sm:$0xff]
    %v498 = vld [vmem:[#allocation5 + $0xd40] sm:$0xff]
    %v499 = vld [vmem:[#allocation5 + $0xd48] sm:$0xff]
    %v500 = vld [vmem:[#allocation5 + $0xd50] sm:$0xff]
    %v501 = vld [vmem:[#allocation5 + $0xd58] sm:$0xff]
    %v502 = vld [vmem:[#allocation5 + $0xd60] sm:$0xff]
    %v503 = vld [vmem:[#allocation5 + $0xd68] sm:$0xff]
    %v504 = vld [vmem:[#allocation5 + $0xd70] sm:$0xff]
    %v505 = vld [vmem:[#allocation5 + $0xd78] sm:$0xff]
    %v506 = vld [vmem:[#allocation5 + $0xd80] sm:$0xff]
    %v507 = vld [vmem:[#allocation5 + $0xd88] sm:$0xff]
    %v508 = vld [vmem:[#allocation5 + $0xd90] sm:$0xff]
    %v509 = vld [vmem:[#allocation5 + $0xd98] sm:$0xff]
    %v510 = vld [vmem:[#allocation5 + $0xda0] sm:$0xff]
    %v511 = vld [vmem:[#allocation5 + $0xda8] sm:$0xff]
    %v512 = vld [vmem:[#allocation5 + $0xdb0] sm:$0xff]
    %v513 = vld [vmem:[#allocation5 + $0xdb8] sm:$0xff]
    %v514 = vld [vmem:[#allocation5 + $0xdc0] sm:$0xff]
    %v515 = vld [vmem:[#allocation5 + $0xdc8] sm:$0xff]
    %v516 = vld [vmem:[#allocation5 + $0xdd0] sm:$0xff]
    %v517 = vld [vmem:[#allocation5 + $0xdd8] sm:$0xff]
    %v518 = vld [vmem:[#allocation5 + $0xde0] sm:$0xff]
    %v519 = vld [vmem:[#allocation5 + $0xde8] sm:$0xff]
    %v520 = vld [vmem:[#allocation5 + $0xdf0] sm:$0xff]
    %v521 = vld [vmem:[#allocation5 + $0xdf8] sm:$0xff]
    %v522 = vld [vmem:[#allocation5 + $0xe00] sm:$0xff]
    %v523 = vld [vmem:[#allocation5 + $0xe08] sm:$0xff]
    %v524 = vld [vmem:[#allocation5 + $0xe10] sm:$0xff]
    %v525 = vld [vmem:[#allocation5 + $0xe18] sm:$0xff]
    %v526 = vld [vmem:[#allocation5 + $0xe20] sm:$0xff]
    %v527 = vld [vmem:[#allocation5 + $0xe28] sm:$0xff]
    %v528 = vld [vmem:[#allocation5 + $0xe30] sm:$0xff]
    %v529 = vld [vmem:[#allocation5 + $0xe38] sm:$0xff]
    %v530 = vld [vmem:[#allocation5 + $0xe40] sm:$0xff]
    %v531 = vld [vmem:[#allocation5 + $0xe48] sm:$0xff]
    %v532 = vld [vmem:[#allocation5 + $0xe50] sm:$0xff]
    %v533 = vld [vmem:[#allocation5 + $0xe58] sm:$0xff]
    %v534 = vld [vmem:[#allocation5 + $0xe60] sm:$0xff]
    %v535 = vld [vmem:[#allocation5 + $0xe68] sm:$0xff]
    %v536 = vld [vmem:[#allocation5 + $0xe70] sm:$0xff]
    %v537 = vld [vmem:[#allocation5 + $0xe78] sm:$0xff]
    %v538 = vld [vmem:[#allocation5 + $0xe80] sm:$0xff]
    %v539 = vld [vmem:[#allocation5 + $0xe88] sm:$0xff]
    %v540 = vld [vmem:[#allocation5 + $0xe90] sm:$0xff]
    %v541 = vld [vmem:[#allocation5 + $0xe98] sm:$0xff]
    %v542 = vld [vmem:[#allocation5 + $0xea0] sm:$0xff]
    %v543 = vld [vmem:[#allocation5 + $0xea8] sm:$0xff]
    %v544 = vld [vmem:[#allocation5 + $0xeb0] sm:$0xff]
    %v545 = vld [vmem:[#allocation5 + $0xeb8] sm:$0xff]
    %v546 = vld [vmem:[#allocation5 + $0xec0] sm:$0xff]
    %v547 = vld [vmem:[#allocation5 + $0xec8] sm:$0xff]
    %v548 = vld [vmem:[#allocation5 + $0xed0] sm:$0xff]
    %v549 = vld [vmem:[#allocation5 + $0xed8] sm:$0xff]
    %v550 = vld [vmem:[#allocation5 + $0xee0] sm:$0xff]
    %v551 = vld [vmem:[#allocation5 + $0xee8] sm:$0xff]
    %v552 = vld [vmem:[#allocation5 + $0xef0] sm:$0xff]
    %v553 = vld [vmem:[#allocation5 + $0xef8] sm:$0xff]
    %v554 = vld [vmem:[#allocation5 + $0xf00] sm:$0xff]
    %v555 = vld [vmem:[#allocation5 + $0xf08] sm:$0xff]
    %v556 = vld [vmem:[#allocation5 + $0xf10] sm:$0xff]
    %v557 = vld [vmem:[#allocation5 + $0xf18] sm:$0xff]
    %v558 = vld [vmem:[#allocation5 + $0xf20] sm:$0xff]
    %v559 = vld [vmem:[#allocation5 + $0xf28] sm:$0xff]
    %v560 = vld [vmem:[#allocation5 + $0xf30] sm:$0xff]
    %v561 = vld [vmem:[#allocation5 + $0xf38] sm:$0xff]
    %v562 = vld [vmem:[#allocation5 + $0xf40] sm:$0xff]
    %v563 = vld [vmem:[#allocation5 + $0xf48] sm:$0xff]
    %v564 = vld [vmem:[#allocation5 + $0xf50] sm:$0xff]
    %v565 = vld [vmem:[#allocation5 + $0xf58] sm:$0xff]
    %v566 = vld [vmem:[#allocation5 + $0xf60] sm:$0xff]
    %v567 = vld [vmem:[#allocation5 + $0xf68] sm:$0xff]
    %v568 = vld [vmem:[#allocation5 + $0xf70] sm:$0xff]
    %v569 = vld [vmem:[#allocation5 + $0xf78] sm:$0xff]
    %v570 = vld [vmem:[#allocation5 + $0xf80] sm:$0xff]
    %v571 = vld [vmem:[#allocation5 + $0xf88] sm:$0xff]
    %v572 = vld [vmem:[#allocation5 + $0xf90] sm:$0xff]
    %v573 = vld [vmem:[#allocation5 + $0xf98] sm:$0xff]
    %v574 = vld [vmem:[#allocation5 + $0xfa0] sm:$0xff]
    %v575 = vld [vmem:[#allocation5 + $0xfa8] sm:$0xff]
    %v576 = vld [vmem:[#allocation5 + $0xfb0] sm:$0xff]
    %v577 = vld [vmem:[#allocation5 + $0xfb8] sm:$0xff]
    %v578 = vld [vmem:[#allocation5 + $0xfc0] sm:$0xff]
    %v579 = vld [vmem:[#allocation5 + $0xfc8] sm:$0xff]
    %v580 = vld [vmem:[#allocation5 + $0xfd0] sm:$0xff]
    %v581 = vld [vmem:[#allocation5 + $0xfd8] sm:$0xff]
    %v582 = vld [vmem:[#allocation5 + $0xfe0] sm:$0xff]
    %v583 = vld [vmem:[#allocation5 + $0xfe8] sm:$0xff]
    %v584 = vld [vmem:[#allocation5 + $0xff0] sm:$0xff]
    %v585 = vld [vmem:[#allocation5 + $0xff8] sm:$0xff]
    %v1098 = vunpack.c.l.b16 %v74
    %v1099 = vunpack.c.h.b16 %v74
    %v1100 = vunpack.c.l.b16 %v75
    %v1101 = vunpack.c.h.b16 %v75
    %v1102 = vunpack.c.l.b16 %v76
    %v1103 = vunpack.c.h.b16 %v76
    %v1104 = vunpack.c.l.b16 %v77
    %v1105 = vunpack.c.h.b16 %v77
    %v1106 = vunpack.c.l.b16 %v78
    %v1107 = vunpack.c.h.b16 %v78
    %v1108 = vunpack.c.l.b16 %v79
    %v1109 = vunpack.c.h.b16 %v79
    %v1110 = vunpack.c.l.b16 %v80
    %v1111 = vunpack.c.h.b16 %v80
    %v1112 = vunpack.c.l.b16 %v81
    %v1113 = vunpack.c.h.b16 %v81
    %v1114 = vunpack.c.l.b16 %v82
    %v1115 = vunpack.c.h.b16 %v82
    %v1116 = vunpack.c.l.b16 %v83
    %v1117 = vunpack.c.h.b16 %v83
    %v1118 = vunpack.c.l.b16 %v84
    %v1119 = vunpack.c.h.b16 %v84
    %v1120 = vunpack.c.l.b16 %v85
    %v1121 = vunpack.c.h.b16 %v85
    %v1122 = vunpack.c.l.b16 %v86
    %v1123 = vunpack.c.h.b16 %v86
    %v1124 = vunpack.c.l.b16 %v87
    %v1125 = vunpack.c.h.b16 %v87
    %v1126 = vunpack.c.l.b16 %v88
    %v1127 = vunpack.c.h.b16 %v88
    %v1128 = vunpack.c.l.b16 %v89
    %v1129 = vunpack.c.h.b16 %v89
    %v1130 = vunpack.c.l.b16 %v90
    %v1131 = vunpack.c.h.b16 %v90
    %v1132 = vunpack.c.l.b16 %v91
    %v1133 = vunpack.c.h.b16 %v91
    %v1134 = vunpack.c.l.b16 %v92
    %v1135 = vunpack.c.h.b16 %v92
    %v1136 = vunpack.c.l.b16 %v93
    %v1137 = vunpack.c.h.b16 %v93
    %v1138 = vunpack.c.l.b16 %v94
    %v1139 = vunpack.c.h.b16 %v94
    %v1140 = vunpack.c.l.b16 %v95
    %v1141 = vunpack.c.h.b16 %v95
    %v1142 = vunpack.c.l.b16 %v96
    %v1143 = vunpack.c.h.b16 %v96
    %v1144 = vunpack.c.l.b16 %v97
    %v1145 = vunpack.c.h.b16 %v97
    %v1146 = vunpack.c.l.b16 %v98
    %v1147 = vunpack.c.h.b16 %v98
    %v1148 = vunpack.c.l.b16 %v99
    %v1149 = vunpack.c.h.b16 %v99
    %v1150 = vunpack.c.l.b16 %v100
    %v1151 = vunpack.c.h.b16 %v100
    %v1152 = vunpack.c.l.b16 %v101
    %v1153 = vunpack.c.h.b16 %v101
    %v1154 = vunpack.c.l.b16 %v102
    %v1155 = vunpack.c.h.b16 %v102
    %v1156 = vunpack.c.l.b16 %v103
    %v1157 = vunpack.c.h.b16 %v103
    %v1158 = vunpack.c.l.b16 %v104
    %v1159 = vunpack.c.h.b16 %v104
    %v1160 = vunpack.c.l.b16 %v105
    %v1161 = vunpack.c.h.b16 %v105
    %v1162 = vunpack.c.l.b16 %v106
    %v1163 = vunpack.c.h.b16 %v106
    %v1164 = vunpack.c.l.b16 %v107
    %v1165 = vunpack.c.h.b16 %v107
    %v1166 = vunpack.c.l.b16 %v108
    %v1167 = vunpack.c.h.b16 %v108
    %v1168 = vunpack.c.l.b16 %v109
    %v1169 = vunpack.c.h.b16 %v109
    %v1170 = vunpack.c.l.b16 %v110
    %v1171 = vunpack.c.h.b16 %v110
    %v1172 = vunpack.c.l.b16 %v111
    %v1173 = vunpack.c.h.b16 %v111
    %v1174 = vunpack.c.l.b16 %v112
    %v1175 = vunpack.c.h.b16 %v112
    %v1176 = vunpack.c.l.b16 %v113
    %v1177 = vunpack.c.h.b16 %v113
    %v1178 = vunpack.c.l.b16 %v114
    %v1179 = vunpack.c.h.b16 %v114
    %v1180 = vunpack.c.l.b16 %v115
    %v1181 = vunpack.c.h.b16 %v115
    %v1182 = vunpack.c.l.b16 %v116
    %v1183 = vunpack.c.h.b16 %v116
    %v1184 = vunpack.c.l.b16 %v117
    %v1185 = vunpack.c.h.b16 %v117
    %v1186 = vunpack.c.l.b16 %v118
    %v1187 = vunpack.c.h.b16 %v118
    %v1188 = vunpack.c.l.b16 %v119
    %v1189 = vunpack.c.h.b16 %v119
    %v1190 = vunpack.c.l.b16 %v120
    %v1191 = vunpack.c.h.b16 %v120
    %v1192 = vunpack.c.l.b16 %v121
    %v1193 = vunpack.c.h.b16 %v121
    %v1194 = vunpack.c.l.b16 %v122
    %v1195 = vunpack.c.h.b16 %v122
    %v1196 = vunpack.c.l.b16 %v123
    %v1197 = vunpack.c.h.b16 %v123
    %v1198 = vunpack.c.l.b16 %v124
    %v1199 = vunpack.c.h.b16 %v124
    %v1200 = vunpack.c.l.b16 %v125
    %v1201 = vunpack.c.h.b16 %v125
    %v1202 = vunpack.c.l.b16 %v126
    %v1203 = vunpack.c.h.b16 %v126
    %v1204 = vunpack.c.l.b16 %v127
    %v1205 = vunpack.c.h.b16 %v127
    %v1206 = vunpack.c.l.b16 %v128
    %v1207 = vunpack.c.h.b16 %v128
    %v1208 = vunpack.c.l.b16 %v129
    %v1209 = vunpack.c.h.b16 %v129
    %v1210 = vunpack.c.l.b16 %v130
    %v1211 = vunpack.c.h.b16 %v130
    %v1212 = vunpack.c.l.b16 %v131
    %v1213 = vunpack.c.h.b16 %v131
    %v1214 = vunpack.c.l.b16 %v132
    %v1215 = vunpack.c.h.b16 %v132
    %v1216 = vunpack.c.l.b16 %v133
    %v1217 = vunpack.c.h.b16 %v133
    %v1218 = vunpack.c.l.b16 %v134
    %v1219 = vunpack.c.h.b16 %v134
    %v1220 = vunpack.c.l.b16 %v135
    %v1221 = vunpack.c.h.b16 %v135
    %v1222 = vunpack.c.l.b16 %v136
    %v1223 = vunpack.c.h.b16 %v136
    %v1224 = vunpack.c.l.b16 %v137
    %v1225 = vunpack.c.h.b16 %v137
    %v1226 = vunpack.c.l.b16 %v138
    %v1227 = vunpack.c.h.b16 %v138
    %v1228 = vunpack.c.l.b16 %v139
    %v1229 = vunpack.c.h.b16 %v139
    %v1230 = vunpack.c.l.b16 %v140
    %v1231 = vunpack.c.h.b16 %v140
    %v1232 = vunpack.c.l.b16 %v141
    %v1233 = vunpack.c.h.b16 %v141
    %v1234 = vunpack.c.l.b16 %v142
    %v1235 = vunpack.c.h.b16 %v142
    %v1236 = vunpack.c.l.b16 %v143
    %v1237 = vunpack.c.h.b16 %v143
    %v1238 = vunpack.c.l.b16 %v144
    %v1239 = vunpack.c.h.b16 %v144
    %v1240 = vunpack.c.l.b16 %v145
    %v1241 = vunpack.c.h.b16 %v145
    %v1242 = vunpack.c.l.b16 %v146
    %v1243 = vunpack.c.h.b16 %v146
    %v1244 = vunpack.c.l.b16 %v147
    %v1245 = vunpack.c.h.b16 %v147
    %v1246 = vunpack.c.l.b16 %v148
    %v1247 = vunpack.c.h.b16 %v148
    %v1248 = vunpack.c.l.b16 %v149
    %v1249 = vunpack.c.h.b16 %v149
    %v1250 = vunpack.c.l.b16 %v150
    %v1251 = vunpack.c.h.b16 %v150
    %v1252 = vunpack.c.l.b16 %v151
    %v1253 = vunpack.c.h.b16 %v151
    %v1254 = vunpack.c.l.b16 %v152
    %v1255 = vunpack.c.h.b16 %v152
    %v1256 = vunpack.c.l.b16 %v153
    %v1257 = vunpack.c.h.b16 %v153
    %v1258 = vunpack.c.l.b16 %v154
    %v1259 = vunpack.c.h.b16 %v154
    %v1260 = vunpack.c.l.b16 %v155
    %v1261 = vunpack.c.h.b16 %v155
    %v1262 = vunpack.c.l.b16 %v156
    %v1263 = vunpack.c.h.b16 %v156
    %v1264 = vunpack.c.l.b16 %v157
    %v1265 = vunpack.c.h.b16 %v157
    %v1266 = vunpack.c.l.b16 %v158
    %v1267 = vunpack.c.h.b16 %v158
    %v1268 = vunpack.c.l.b16 %v159
    %v1269 = vunpack.c.h.b16 %v159
    %v1270 = vunpack.c.l.b16 %v160
    %v1271 = vunpack.c.h.b16 %v160
    %v1272 = vunpack.c.l.b16 %v161
    %v1273 = vunpack.c.h.b16 %v161
    %v1274 = vunpack.c.l.b16 %v162
    %v1275 = vunpack.c.h.b16 %v162
    %v1276 = vunpack.c.l.b16 %v163
    %v1277 = vunpack.c.h.b16 %v163
    %v1278 = vunpack.c.l.b16 %v164
    %v1279 = vunpack.c.h.b16 %v164
    %v1280 = vunpack.c.l.b16 %v165
    %v1281 = vunpack.c.h.b16 %v165
    %v1282 = vunpack.c.l.b16 %v166
    %v1283 = vunpack.c.h.b16 %v166
    %v1284 = vunpack.c.l.b16 %v167
    %v1285 = vunpack.c.h.b16 %v167
    %v1286 = vunpack.c.l.b16 %v168
    %v1287 = vunpack.c.h.b16 %v168
    %v1288 = vunpack.c.l.b16 %v169
    %v1289 = vunpack.c.h.b16 %v169
    %v1290 = vunpack.c.l.b16 %v170
    %v1291 = vunpack.c.h.b16 %v170
    %v1292 = vunpack.c.l.b16 %v171
    %v1293 = vunpack.c.h.b16 %v171
    %v1294 = vunpack.c.l.b16 %v172
    %v1295 = vunpack.c.h.b16 %v172
    %v1296 = vunpack.c.l.b16 %v173
    %v1297 = vunpack.c.h.b16 %v173
    %v1298 = vunpack.c.l.b16 %v174
    %v1299 = vunpack.c.h.b16 %v174
    %v1300 = vunpack.c.l.b16 %v175
    %v1301 = vunpack.c.h.b16 %v175
    %v1302 = vunpack.c.l.b16 %v176
    %v1303 = vunpack.c.h.b16 %v176
    %v1304 = vunpack.c.l.b16 %v177
    %v1305 = vunpack.c.h.b16 %v177
    %v1306 = vunpack.c.l.b16 %v178
    %v1307 = vunpack.c.h.b16 %v178
    %v1308 = vunpack.c.l.b16 %v179
    %v1309 = vunpack.c.h.b16 %v179
    %v1310 = vunpack.c.l.b16 %v180
    %v1311 = vunpack.c.h.b16 %v180
    %v1312 = vunpack.c.l.b16 %v181
    %v1313 = vunpack.c.h.b16 %v181
    %v1314 = vunpack.c.l.b16 %v182
    %v1315 = vunpack.c.h.b16 %v182
    %v1316 = vunpack.c.l.b16 %v183
    %v1317 = vunpack.c.h.b16 %v183
    %v1318 = vunpack.c.l.b16 %v184
    %v1319 = vunpack.c.h.b16 %v184
    %v1320 = vunpack.c.l.b16 %v185
    %v1321 = vunpack.c.h.b16 %v185
    %v1322 = vunpack.c.l.b16 %v186
    %v1323 = vunpack.c.h.b16 %v186
    %v1324 = vunpack.c.l.b16 %v187
    %v1325 = vunpack.c.h.b16 %v187
    %v1326 = vunpack.c.l.b16 %v188
    %v1327 = vunpack.c.h.b16 %v188
    %v1328 = vunpack.c.l.b16 %v189
    %v1329 = vunpack.c.h.b16 %v189
    %v1330 = vunpack.c.l.b16 %v190
    %v1331 = vunpack.c.h.b16 %v190
    %v1332 = vunpack.c.l.b16 %v191
    %v1333 = vunpack.c.h.b16 %v191
    %v1334 = vunpack.c.l.b16 %v192
    %v1335 = vunpack.c.h.b16 %v192
    %v1336 = vunpack.c.l.b16 %v193
    %v1337 = vunpack.c.h.b16 %v193
    %v1338 = vunpack.c.l.b16 %v194
    %v1339 = vunpack.c.h.b16 %v194
    %v1340 = vunpack.c.l.b16 %v195
    %v1341 = vunpack.c.h.b16 %v195
    %v1342 = vunpack.c.l.b16 %v196
    %v1343 = vunpack.c.h.b16 %v196
    %v1344 = vunpack.c.l.b16 %v197
    %v1345 = vunpack.c.h.b16 %v197
    %v1346 = vunpack.c.l.b16 %v198
    %v1347 = vunpack.c.h.b16 %v198
    %v1348 = vunpack.c.l.b16 %v199
    %v1349 = vunpack.c.h.b16 %v199
    %v1350 = vunpack.c.l.b16 %v200
    %v1351 = vunpack.c.h.b16 %v200
    %v1352 = vunpack.c.l.b16 %v201
    %v1353 = vunpack.c.h.b16 %v201
    %v1354 = vunpack.c.l.b16 %v202
    %v1355 = vunpack.c.h.b16 %v202
    %v1356 = vunpack.c.l.b16 %v203
    %v1357 = vunpack.c.h.b16 %v203
    %v1358 = vunpack.c.l.b16 %v204
    %v1359 = vunpack.c.h.b16 %v204
    %v1360 = vunpack.c.l.b16 %v205
    %v1361 = vunpack.c.h.b16 %v205
    %v1362 = vunpack.c.l.b16 %v206
    %v1363 = vunpack.c.h.b16 %v206
    %v1364 = vunpack.c.l.b16 %v207
    %v1365 = vunpack.c.h.b16 %v207
    %v1366 = vunpack.c.l.b16 %v208
    %v1367 = vunpack.c.h.b16 %v208
    %v1368 = vunpack.c.l.b16 %v209
    %v1369 = vunpack.c.h.b16 %v209
    %v1370 = vunpack.c.l.b16 %v210
    %v1371 = vunpack.c.h.b16 %v210
    %v1372 = vunpack.c.l.b16 %v211
    %v1373 = vunpack.c.h.b16 %v211
    %v1374 = vunpack.c.l.b16 %v212
    %v1375 = vunpack.c.h.b16 %v212
    %v1376 = vunpack.c.l.b16 %v213
    %v1377 = vunpack.c.h.b16 %v213
    %v1378 = vunpack.c.l.b16 %v214
    %v1379 = vunpack.c.h.b16 %v214
    %v1380 = vunpack.c.l.b16 %v215
    %v1381 = vunpack.c.h.b16 %v215
    %v1382 = vunpack.c.l.b16 %v216
    %v1383 = vunpack.c.h.b16 %v216
    %v1384 = vunpack.c.l.b16 %v217
    %v1385 = vunpack.c.h.b16 %v217
    %v1386 = vunpack.c.l.b16 %v218
    %v1387 = vunpack.c.h.b16 %v218
    %v1388 = vunpack.c.l.b16 %v219
    %v1389 = vunpack.c.h.b16 %v219
    %v1390 = vunpack.c.l.b16 %v220
    %v1391 = vunpack.c.h.b16 %v220
    %v1392 = vunpack.c.l.b16 %v221
    %v1393 = vunpack.c.h.b16 %v221
    %v1394 = vunpack.c.l.b16 %v222
    %v1395 = vunpack.c.h.b16 %v222
    %v1396 = vunpack.c.l.b16 %v223
    %v1397 = vunpack.c.h.b16 %v223
    %v1398 = vunpack.c.l.b16 %v224
    %v1399 = vunpack.c.h.b16 %v224
    %v1400 = vunpack.c.l.b16 %v225
    %v1401 = vunpack.c.h.b16 %v225
    %v1402 = vunpack.c.l.b16 %v226
    %v1403 = vunpack.c.h.b16 %v226
    %v1404 = vunpack.c.l.b16 %v227
    %v1405 = vunpack.c.h.b16 %v227
    %v1406 = vunpack.c.l.b16 %v228
    %v1407 = vunpack.c.h.b16 %v228
    %v1408 = vunpack.c.l.b16 %v229
    %v1409 = vunpack.c.h.b16 %v229
    %v1410 = vunpack.c.l.b16 %v230
    %v1411 = vunpack.c.h.b16 %v230
    %v1412 = vunpack.c.l.b16 %v231
    %v1413 = vunpack.c.h.b16 %v231
    %v1414 = vunpack.c.l.b16 %v232
    %v1415 = vunpack.c.h.b16 %v232
    %v1416 = vunpack.c.l.b16 %v233
    %v1417 = vunpack.c.h.b16 %v233
    %v1418 = vunpack.c.l.b16 %v234
    %v1419 = vunpack.c.h.b16 %v234
    %v1420 = vunpack.c.l.b16 %v235
    %v1421 = vunpack.c.h.b16 %v235
    %v1422 = vunpack.c.l.b16 %v236
    %v1423 = vunpack.c.h.b16 %v236
    %v1424 = vunpack.c.l.b16 %v237
    %v1425 = vunpack.c.h.b16 %v237
    %v1426 = vunpack.c.l.b16 %v238
    %v1427 = vunpack.c.h.b16 %v238
    %v1428 = vunpack.c.l.b16 %v239
    %v1429 = vunpack.c.h.b16 %v239
    %v1430 = vunpack.c.l.b16 %v240
    %v1431 = vunpack.c.h.b16 %v240
    %v1432 = vunpack.c.l.b16 %v241
    %v1433 = vunpack.c.h.b16 %v241
    %v1434 = vunpack.c.l.b16 %v242
    %v1435 = vunpack.c.h.b16 %v242
    %v1436 = vunpack.c.l.b16 %v243
    %v1437 = vunpack.c.h.b16 %v243
    %v1438 = vunpack.c.l.b16 %v244
    %v1439 = vunpack.c.h.b16 %v244
    %v1440 = vunpack.c.l.b16 %v245
    %v1441 = vunpack.c.h.b16 %v245
    %v1442 = vunpack.c.l.b16 %v246
    %v1443 = vunpack.c.h.b16 %v246
    %v1444 = vunpack.c.l.b16 %v247
    %v1445 = vunpack.c.h.b16 %v247
    %v1446 = vunpack.c.l.b16 %v248
    %v1447 = vunpack.c.h.b16 %v248
    %v1448 = vunpack.c.l.b16 %v249
    %v1449 = vunpack.c.h.b16 %v249
    %v1450 = vunpack.c.l.b16 %v250
    %v1451 = vunpack.c.h.b16 %v250
    %v1452 = vunpack.c.l.b16 %v251
    %v1453 = vunpack.c.h.b16 %v251
    %v1454 = vunpack.c.l.b16 %v252
    %v1455 = vunpack.c.h.b16 %v252
    %v1456 = vunpack.c.l.b16 %v253
    %v1457 = vunpack.c.h.b16 %v253
    %v1458 = vunpack.c.l.b16 %v254
    %v1459 = vunpack.c.h.b16 %v254
    %v1460 = vunpack.c.l.b16 %v255
    %v1461 = vunpack.c.h.b16 %v255
    %v1462 = vunpack.c.l.b16 %v256
    %v1463 = vunpack.c.h.b16 %v256
    %v1464 = vunpack.c.l.b16 %v257
    %v1465 = vunpack.c.h.b16 %v257
    %v1466 = vunpack.c.l.b16 %v258
    %v1467 = vunpack.c.h.b16 %v258
    %v1468 = vunpack.c.l.b16 %v259
    %v1469 = vunpack.c.h.b16 %v259
    %v1470 = vunpack.c.l.b16 %v260
    %v1471 = vunpack.c.h.b16 %v260
    %v1472 = vunpack.c.l.b16 %v261
    %v1473 = vunpack.c.h.b16 %v261
    %v1474 = vunpack.c.l.b16 %v262
    %v1475 = vunpack.c.h.b16 %v262
    %v1476 = vunpack.c.l.b16 %v263
    %v1477 = vunpack.c.h.b16 %v263
    %v1478 = vunpack.c.l.b16 %v264
    %v1479 = vunpack.c.h.b16 %v264
    %v1480 = vunpack.c.l.b16 %v265
    %v1481 = vunpack.c.h.b16 %v265
    %v1482 = vunpack.c.l.b16 %v266
    %v1483 = vunpack.c.h.b16 %v266
    %v1484 = vunpack.c.l.b16 %v267
    %v1485 = vunpack.c.h.b16 %v267
    %v1486 = vunpack.c.l.b16 %v268
    %v1487 = vunpack.c.h.b16 %v268
    %v1488 = vunpack.c.l.b16 %v269
    %v1489 = vunpack.c.h.b16 %v269
    %v1490 = vunpack.c.l.b16 %v270
    %v1491 = vunpack.c.h.b16 %v270
    %v1492 = vunpack.c.l.b16 %v271
    %v1493 = vunpack.c.h.b16 %v271
    %v1494 = vunpack.c.l.b16 %v272
    %v1495 = vunpack.c.h.b16 %v272
    %v1496 = vunpack.c.l.b16 %v273
    %v1497 = vunpack.c.h.b16 %v273
    %v1498 = vunpack.c.l.b16 %v274
    %v1499 = vunpack.c.h.b16 %v274
    %v1500 = vunpack.c.l.b16 %v275
    %v1501 = vunpack.c.h.b16 %v275
    %v1502 = vunpack.c.l.b16 %v276
    %v1503 = vunpack.c.h.b16 %v276
    %v1504 = vunpack.c.l.b16 %v277
    %v1505 = vunpack.c.h.b16 %v277
    %v1506 = vunpack.c.l.b16 %v278
    %v1507 = vunpack.c.h.b16 %v278
    %v1508 = vunpack.c.l.b16 %v279
    %v1509 = vunpack.c.h.b16 %v279
    %v1510 = vunpack.c.l.b16 %v280
    %v1511 = vunpack.c.h.b16 %v280
    %v1512 = vunpack.c.l.b16 %v281
    %v1513 = vunpack.c.h.b16 %v281
    %v1514 = vunpack.c.l.b16 %v282
    %v1515 = vunpack.c.h.b16 %v282
    %v1516 = vunpack.c.l.b16 %v283
    %v1517 = vunpack.c.h.b16 %v283
    %v1518 = vunpack.c.l.b16 %v284
    %v1519 = vunpack.c.h.b16 %v284
    %v1520 = vunpack.c.l.b16 %v285
    %v1521 = vunpack.c.h.b16 %v285
    %v1522 = vunpack.c.l.b16 %v286
    %v1523 = vunpack.c.h.b16 %v286
    %v1524 = vunpack.c.l.b16 %v287
    %v1525 = vunpack.c.h.b16 %v287
    %v1526 = vunpack.c.l.b16 %v288
    %v1527 = vunpack.c.h.b16 %v288
    %v1528 = vunpack.c.l.b16 %v289
    %v1529 = vunpack.c.h.b16 %v289
    %v1530 = vunpack.c.l.b16 %v290
    %v1531 = vunpack.c.h.b16 %v290
    %v1532 = vunpack.c.l.b16 %v291
    %v1533 = vunpack.c.h.b16 %v291
    %v1534 = vunpack.c.l.b16 %v292
    %v1535 = vunpack.c.h.b16 %v292
    %v1536 = vunpack.c.l.b16 %v293
    %v1537 = vunpack.c.h.b16 %v293
    %v1538 = vunpack.c.l.b16 %v294
    %v1539 = vunpack.c.h.b16 %v294
    %v1540 = vunpack.c.l.b16 %v295
    %v1541 = vunpack.c.h.b16 %v295
    %v1542 = vunpack.c.l.b16 %v296
    %v1543 = vunpack.c.h.b16 %v296
    %v1544 = vunpack.c.l.b16 %v297
    %v1545 = vunpack.c.h.b16 %v297
    %v1546 = vunpack.c.l.b16 %v298
    %v1547 = vunpack.c.h.b16 %v298
    %v1548 = vunpack.c.l.b16 %v299
    %v1549 = vunpack.c.h.b16 %v299
    %v1550 = vunpack.c.l.b16 %v300
    %v1551 = vunpack.c.h.b16 %v300
    %v1552 = vunpack.c.l.b16 %v301
    %v1553 = vunpack.c.h.b16 %v301
    %v1554 = vunpack.c.l.b16 %v302
    %v1555 = vunpack.c.h.b16 %v302
    %v1556 = vunpack.c.l.b16 %v303
    %v1557 = vunpack.c.h.b16 %v303
    %v1558 = vunpack.c.l.b16 %v304
    %v1559 = vunpack.c.h.b16 %v304
    %v1560 = vunpack.c.l.b16 %v305
    %v1561 = vunpack.c.h.b16 %v305
    %v1562 = vunpack.c.l.b16 %v306
    %v1563 = vunpack.c.h.b16 %v306
    %v1564 = vunpack.c.l.b16 %v307
    %v1565 = vunpack.c.h.b16 %v307
    %v1566 = vunpack.c.l.b16 %v308
    %v1567 = vunpack.c.h.b16 %v308
    %v1568 = vunpack.c.l.b16 %v309
    %v1569 = vunpack.c.h.b16 %v309
    %v1570 = vunpack.c.l.b16 %v310
    %v1571 = vunpack.c.h.b16 %v310
    %v1572 = vunpack.c.l.b16 %v311
    %v1573 = vunpack.c.h.b16 %v311
    %v1574 = vunpack.c.l.b16 %v312
    %v1575 = vunpack.c.h.b16 %v312
    %v1576 = vunpack.c.l.b16 %v313
    %v1577 = vunpack.c.h.b16 %v313
    %v1578 = vunpack.c.l.b16 %v314
    %v1579 = vunpack.c.h.b16 %v314
    %v1580 = vunpack.c.l.b16 %v315
    %v1581 = vunpack.c.h.b16 %v315
    %v1582 = vunpack.c.l.b16 %v316
    %v1583 = vunpack.c.h.b16 %v316
    %v1584 = vunpack.c.l.b16 %v317
    %v1585 = vunpack.c.h.b16 %v317
    %v1586 = vunpack.c.l.b16 %v318
    %v1587 = vunpack.c.h.b16 %v318
    %v1588 = vunpack.c.l.b16 %v319
    %v1589 = vunpack.c.h.b16 %v319
    %v1590 = vunpack.c.l.b16 %v320
    %v1591 = vunpack.c.h.b16 %v320
    %v1592 = vunpack.c.l.b16 %v321
    %v1593 = vunpack.c.h.b16 %v321
    %v1594 = vunpack.c.l.b16 %v322
    %v1595 = vunpack.c.h.b16 %v322
    %v1596 = vunpack.c.l.b16 %v323
    %v1597 = vunpack.c.h.b16 %v323
    %v1598 = vunpack.c.l.b16 %v324
    %v1599 = vunpack.c.h.b16 %v324
    %v1600 = vunpack.c.l.b16 %v325
    %v1601 = vunpack.c.h.b16 %v325
    %v1602 = vunpack.c.l.b16 %v326
    %v1603 = vunpack.c.h.b16 %v326
    %v1604 = vunpack.c.l.b16 %v327
    %v1605 = vunpack.c.h.b16 %v327
    %v1606 = vunpack.c.l.b16 %v328
    %v1607 = vunpack.c.h.b16 %v328
    %v1608 = vunpack.c.l.b16 %v329
    %v1609 = vunpack.c.h.b16 %v329
    %v1610 = vunpack.c.l.b16 %v330
    %v1611 = vunpack.c.h.b16 %v330
    %v1612 = vunpack.c.l.b16 %v331
    %v1613 = vunpack.c.h.b16 %v331
    %v1614 = vunpack.c.l.b16 %v332
    %v1615 = vunpack.c.h.b16 %v332
    %v1616 = vunpack.c.l.b16 %v333
    %v1617 = vunpack.c.h.b16 %v333
    %v1618 = vunpack.c.l.b16 %v334
    %v1619 = vunpack.c.h.b16 %v334
    %v1620 = vunpack.c.l.b16 %v335
    %v1621 = vunpack.c.h.b16 %v335
    %v1622 = vunpack.c.l.b16 %v336
    %v1623 = vunpack.c.h.b16 %v336
    %v1624 = vunpack.c.l.b16 %v337
    %v1625 = vunpack.c.h.b16 %v337
    %v1626 = vunpack.c.l.b16 %v338
    %v1627 = vunpack.c.h.b16 %v338
    %v1628 = vunpack.c.l.b16 %v339
    %v1629 = vunpack.c.h.b16 %v339
    %v1630 = vunpack.c.l.b16 %v340
    %v1631 = vunpack.c.h.b16 %v340
    %v1632 = vunpack.c.l.b16 %v341
    %v1633 = vunpack.c.h.b16 %v341
    %v1634 = vunpack.c.l.b16 %v342
    %v1635 = vunpack.c.h.b16 %v342
    %v1636 = vunpack.c.l.b16 %v343
    %v1637 = vunpack.c.h.b16 %v343
    %v1638 = vunpack.c.l.b16 %v344
    %v1639 = vunpack.c.h.b16 %v344
    %v1640 = vunpack.c.l.b16 %v345
    %v1641 = vunpack.c.h.b16 %v345
    %v1642 = vunpack.c.l.b16 %v346
    %v1643 = vunpack.c.h.b16 %v346
    %v1644 = vunpack.c.l.b16 %v347
    %v1645 = vunpack.c.h.b16 %v347
    %v1646 = vunpack.c.l.b16 %v348
    %v1647 = vunpack.c.h.b16 %v348
    %v1648 = vunpack.c.l.b16 %v349
    %v1649 = vunpack.c.h.b16 %v349
    %v1650 = vunpack.c.l.b16 %v350
    %v1651 = vunpack.c.h.b16 %v350
    %v1652 = vunpack.c.l.b16 %v351
    %v1653 = vunpack.c.h.b16 %v351
    %v1654 = vunpack.c.l.b16 %v352
    %v1655 = vunpack.c.h.b16 %v352
    %v1656 = vunpack.c.l.b16 %v353
    %v1657 = vunpack.c.h.b16 %v353
    %v1658 = vunpack.c.l.b16 %v354
    %v1659 = vunpack.c.h.b16 %v354
    %v1660 = vunpack.c.l.b16 %v355
    %v1661 = vunpack.c.h.b16 %v355
    %v1662 = vunpack.c.l.b16 %v356
    %v1663 = vunpack.c.h.b16 %v356
    %v1664 = vunpack.c.l.b16 %v357
    %v1665 = vunpack.c.h.b16 %v357
    %v1666 = vunpack.c.l.b16 %v358
    %v1667 = vunpack.c.h.b16 %v358
    %v1668 = vunpack.c.l.b16 %v359
    %v1669 = vunpack.c.h.b16 %v359
    %v1670 = vunpack.c.l.b16 %v360
    %v1671 = vunpack.c.h.b16 %v360
    %v1672 = vunpack.c.l.b16 %v361
    %v1673 = vunpack.c.h.b16 %v361
    %v1674 = vunpack.c.l.b16 %v362
    %v1675 = vunpack.c.h.b16 %v362
    %v1676 = vunpack.c.l.b16 %v363
    %v1677 = vunpack.c.h.b16 %v363
    %v1678 = vunpack.c.l.b16 %v364
    %v1679 = vunpack.c.h.b16 %v364
    %v1680 = vunpack.c.l.b16 %v365
    %v1681 = vunpack.c.h.b16 %v365
    %v1682 = vunpack.c.l.b16 %v366
    %v1683 = vunpack.c.h.b16 %v366
    %v1684 = vunpack.c.l.b16 %v367
    %v1685 = vunpack.c.h.b16 %v367
    %v1686 = vunpack.c.l.b16 %v368
    %v1687 = vunpack.c.h.b16 %v368
    %v1688 = vunpack.c.l.b16 %v369
    %v1689 = vunpack.c.h.b16 %v369
    %v1690 = vunpack.c.l.b16 %v370
    %v1691 = vunpack.c.h.b16 %v370
    %v1692 = vunpack.c.l.b16 %v371
    %v1693 = vunpack.c.h.b16 %v371
    %v1694 = vunpack.c.l.b16 %v372
    %v1695 = vunpack.c.h.b16 %v372
    %v1696 = vunpack.c.l.b16 %v373
    %v1697 = vunpack.c.h.b16 %v373
    %v1698 = vunpack.c.l.b16 %v374
    %v1699 = vunpack.c.h.b16 %v374
    %v1700 = vunpack.c.l.b16 %v375
    %v1701 = vunpack.c.h.b16 %v375
    %v1702 = vunpack.c.l.b16 %v376
    %v1703 = vunpack.c.h.b16 %v376
    %v1704 = vunpack.c.l.b16 %v377
    %v1705 = vunpack.c.h.b16 %v377
    %v1706 = vunpack.c.l.b16 %v378
    %v1707 = vunpack.c.h.b16 %v378
    %v1708 = vunpack.c.l.b16 %v379
    %v1709 = vunpack.c.h.b16 %v379
    %v1710 = vunpack.c.l.b16 %v380
    %v1711 = vunpack.c.h.b16 %v380
    %v1712 = vunpack.c.l.b16 %v381
    %v1713 = vunpack.c.h.b16 %v381
    %v1714 = vunpack.c.l.b16 %v382
    %v1715 = vunpack.c.h.b16 %v382
    %v1716 = vunpack.c.l.b16 %v383
    %v1717 = vunpack.c.h.b16 %v383
    %v1718 = vunpack.c.l.b16 %v384
    %v1719 = vunpack.c.h.b16 %v384
    %v1720 = vunpack.c.l.b16 %v385
    %v1721 = vunpack.c.h.b16 %v385
    %v1722 = vunpack.c.l.b16 %v386
    %v1723 = vunpack.c.h.b16 %v386
    %v1724 = vunpack.c.l.b16 %v387
    %v1725 = vunpack.c.h.b16 %v387
    %v1726 = vunpack.c.l.b16 %v388
    %v1727 = vunpack.c.h.b16 %v388
    %v1728 = vunpack.c.l.b16 %v389
    %v1729 = vunpack.c.h.b16 %v389
    %v1730 = vunpack.c.l.b16 %v390
    %v1731 = vunpack.c.h.b16 %v390
    %v1732 = vunpack.c.l.b16 %v391
    %v1733 = vunpack.c.h.b16 %v391
    %v1734 = vunpack.c.l.b16 %v392
    %v1735 = vunpack.c.h.b16 %v392
    %v1736 = vunpack.c.l.b16 %v393
    %v1737 = vunpack.c.h.b16 %v393
    %v1738 = vunpack.c.l.b16 %v394
    %v1739 = vunpack.c.h.b16 %v394
    %v1740 = vunpack.c.l.b16 %v395
    %v1741 = vunpack.c.h.b16 %v395
    %v1742 = vunpack.c.l.b16 %v396
    %v1743 = vunpack.c.h.b16 %v396
    %v1744 = vunpack.c.l.b16 %v397
    %v1745 = vunpack.c.h.b16 %v397
    %v1746 = vunpack.c.l.b16 %v398
    %v1747 = vunpack.c.h.b16 %v398
    %v1748 = vunpack.c.l.b16 %v399
    %v1749 = vunpack.c.h.b16 %v399
    %v1750 = vunpack.c.l.b16 %v400
    %v1751 = vunpack.c.h.b16 %v400
    %v1752 = vunpack.c.l.b16 %v401
    %v1753 = vunpack.c.h.b16 %v401
    %v1754 = vunpack.c.l.b16 %v402
    %v1755 = vunpack.c.h.b16 %v402
    %v1756 = vunpack.c.l.b16 %v403
    %v1757 = vunpack.c.h.b16 %v403
    %v1758 = vunpack.c.l.b16 %v404
    %v1759 = vunpack.c.h.b16 %v404
    %v1760 = vunpack.c.l.b16 %v405
    %v1761 = vunpack.c.h.b16 %v405
    %v1762 = vunpack.c.l.b16 %v406
    %v1763 = vunpack.c.h.b16 %v406
    %v1764 = vunpack.c.l.b16 %v407
    %v1765 = vunpack.c.h.b16 %v407
    %v1766 = vunpack.c.l.b16 %v408
    %v1767 = vunpack.c.h.b16 %v408
    %v1768 = vunpack.c.l.b16 %v409
    %v1769 = vunpack.c.h.b16 %v409
    %v1770 = vunpack.c.l.b16 %v410
    %v1771 = vunpack.c.h.b16 %v410
    %v1772 = vunpack.c.l.b16 %v411
    %v1773 = vunpack.c.h.b16 %v411
    %v1774 = vunpack.c.l.b16 %v412
    %v1775 = vunpack.c.h.b16 %v412
    %v1776 = vunpack.c.l.b16 %v413
    %v1777 = vunpack.c.h.b16 %v413
    %v1778 = vunpack.c.l.b16 %v414
    %v1779 = vunpack.c.h.b16 %v414
    %v1780 = vunpack.c.l.b16 %v415
    %v1781 = vunpack.c.h.b16 %v415
    %v1782 = vunpack.c.l.b16 %v416
    %v1783 = vunpack.c.h.b16 %v416
    %v1784 = vunpack.c.l.b16 %v417
    %v1785 = vunpack.c.h.b16 %v417
    %v1786 = vunpack.c.l.b16 %v418
    %v1787 = vunpack.c.h.b16 %v418
    %v1788 = vunpack.c.l.b16 %v419
    %v1789 = vunpack.c.h.b16 %v419
    %v1790 = vunpack.c.l.b16 %v420
    %v1791 = vunpack.c.h.b16 %v420
    %v1792 = vunpack.c.l.b16 %v421
    %v1793 = vunpack.c.h.b16 %v421
    %v1794 = vunpack.c.l.b16 %v422
    %v1795 = vunpack.c.h.b16 %v422
    %v1796 = vunpack.c.l.b16 %v423
    %v1797 = vunpack.c.h.b16 %v423
    %v1798 = vunpack.c.l.b16 %v424
    %v1799 = vunpack.c.h.b16 %v424
    %v1800 = vunpack.c.l.b16 %v425
    %v1801 = vunpack.c.h.b16 %v425
    %v1802 = vunpack.c.l.b16 %v426
    %v1803 = vunpack.c.h.b16 %v426
    %v1804 = vunpack.c.l.b16 %v427
    %v1805 = vunpack.c.h.b16 %v427
    %v1806 = vunpack.c.l.b16 %v428
    %v1807 = vunpack.c.h.b16 %v428
    %v1808 = vunpack.c.l.b16 %v429
    %v1809 = vunpack.c.h.b16 %v429
    %v1810 = vunpack.c.l.b16 %v430
    %v1811 = vunpack.c.h.b16 %v430
    %v1812 = vunpack.c.l.b16 %v431
    %v1813 = vunpack.c.h.b16 %v431
    %v1814 = vunpack.c.l.b16 %v432
    %v1815 = vunpack.c.h.b16 %v432
    %v1816 = vunpack.c.l.b16 %v433
    %v1817 = vunpack.c.h.b16 %v433
    %v1818 = vunpack.c.l.b16 %v434
    %v1819 = vunpack.c.h.b16 %v434
    %v1820 = vunpack.c.l.b16 %v435
    %v1821 = vunpack.c.h.b16 %v435
    %v1822 = vunpack.c.l.b16 %v436
    %v1823 = vunpack.c.h.b16 %v436
    %v1824 = vunpack.c.l.b16 %v437
    %v1825 = vunpack.c.h.b16 %v437
    %v1826 = vunpack.c.l.b16 %v438
    %v1827 = vunpack.c.h.b16 %v438
    %v1828 = vunpack.c.l.b16 %v439
    %v1829 = vunpack.c.h.b16 %v439
    %v1830 = vunpack.c.l.b16 %v440
    %v1831 = vunpack.c.h.b16 %v440
    %v1832 = vunpack.c.l.b16 %v441
    %v1833 = vunpack.c.h.b16 %v441
    %v1834 = vunpack.c.l.b16 %v442
    %v1835 = vunpack.c.h.b16 %v442
    %v1836 = vunpack.c.l.b16 %v443
    %v1837 = vunpack.c.h.b16 %v443
    %v1838 = vunpack.c.l.b16 %v444
    %v1839 = vunpack.c.h.b16 %v444
    %v1840 = vunpack.c.l.b16 %v445
    %v1841 = vunpack.c.h.b16 %v445
    %v1842 = vunpack.c.l.b16 %v446
    %v1843 = vunpack.c.h.b16 %v446
    %v1844 = vunpack.c.l.b16 %v447
    %v1845 = vunpack.c.h.b16 %v447
    %v1846 = vunpack.c.l.b16 %v448
    %v1847 = vunpack.c.h.b16 %v448
    %v1848 = vunpack.c.l.b16 %v449
    %v1849 = vunpack.c.h.b16 %v449
    %v1850 = vunpack.c.l.b16 %v450
    %v1851 = vunpack.c.h.b16 %v450
    %v1852 = vunpack.c.l.b16 %v451
    %v1853 = vunpack.c.h.b16 %v451
    %v1854 = vunpack.c.l.b16 %v452
    %v1855 = vunpack.c.h.b16 %v452
    %v1856 = vunpack.c.l.b16 %v453
    %v1857 = vunpack.c.h.b16 %v453
    %v1858 = vunpack.c.l.b16 %v454
    %v1859 = vunpack.c.h.b16 %v454
    %v1860 = vunpack.c.l.b16 %v455
    %v1861 = vunpack.c.h.b16 %v455
    %v1862 = vunpack.c.l.b16 %v456
    %v1863 = vunpack.c.h.b16 %v456
    %v1864 = vunpack.c.l.b16 %v457
    %v1865 = vunpack.c.h.b16 %v457
    %v1866 = vunpack.c.l.b16 %v458
    %v1867 = vunpack.c.h.b16 %v458
    %v1868 = vunpack.c.l.b16 %v459
    %v1869 = vunpack.c.h.b16 %v459
    %v1870 = vunpack.c.l.b16 %v460
    %v1871 = vunpack.c.h.b16 %v460
    %v1872 = vunpack.c.l.b16 %v461
    %v1873 = vunpack.c.h.b16 %v461
    %v1874 = vunpack.c.l.b16 %v462
    %v1875 = vunpack.c.h.b16 %v462
    %v1876 = vunpack.c.l.b16 %v463
    %v1877 = vunpack.c.h.b16 %v463
    %v1878 = vunpack.c.l.b16 %v464
    %v1879 = vunpack.c.h.b16 %v464
    %v1880 = vunpack.c.l.b16 %v465
    %v1881 = vunpack.c.h.b16 %v465
    %v1882 = vunpack.c.l.b16 %v466
    %v1883 = vunpack.c.h.b16 %v466
    %v1884 = vunpack.c.l.b16 %v467
    %v1885 = vunpack.c.h.b16 %v467
    %v1886 = vunpack.c.l.b16 %v468
    %v1887 = vunpack.c.h.b16 %v468
    %v1888 = vunpack.c.l.b16 %v469
    %v1889 = vunpack.c.h.b16 %v469
    %v1890 = vunpack.c.l.b16 %v470
    %v1891 = vunpack.c.h.b16 %v470
    %v1892 = vunpack.c.l.b16 %v471
    %v1893 = vunpack.c.h.b16 %v471
    %v1894 = vunpack.c.l.b16 %v472
    %v1895 = vunpack.c.h.b16 %v472
    %v1896 = vunpack.c.l.b16 %v473
    %v1897 = vunpack.c.h.b16 %v473
    %v1898 = vunpack.c.l.b16 %v474
    %v1899 = vunpack.c.h.b16 %v474
    %v1900 = vunpack.c.l.b16 %v475
    %v1901 = vunpack.c.h.b16 %v475
    %v1902 = vunpack.c.l.b16 %v476
    %v1903 = vunpack.c.h.b16 %v476
    %v1904 = vunpack.c.l.b16 %v477
    %v1905 = vunpack.c.h.b16 %v477
    %v1906 = vunpack.c.l.b16 %v478
    %v1907 = vunpack.c.h.b16 %v478
    %v1908 = vunpack.c.l.b16 %v479
    %v1909 = vunpack.c.h.b16 %v479
    %v1910 = vunpack.c.l.b16 %v480
    %v1911 = vunpack.c.h.b16 %v480
    %v1912 = vunpack.c.l.b16 %v481
    %v1913 = vunpack.c.h.b16 %v481
    %v1914 = vunpack.c.l.b16 %v482
    %v1915 = vunpack.c.h.b16 %v482
    %v1916 = vunpack.c.l.b16 %v483
    %v1917 = vunpack.c.h.b16 %v483
    %v1918 = vunpack.c.l.b16 %v484
    %v1919 = vunpack.c.h.b16 %v484
    %v1920 = vunpack.c.l.b16 %v485
    %v1921 = vunpack.c.h.b16 %v485
    %v1922 = vunpack.c.l.b16 %v486
    %v1923 = vunpack.c.h.b16 %v486
    %v1924 = vunpack.c.l.b16 %v487
    %v1925 = vunpack.c.h.b16 %v487
    %v1926 = vunpack.c.l.b16 %v488
    %v1927 = vunpack.c.h.b16 %v488
    %v1928 = vunpack.c.l.b16 %v489
    %v1929 = vunpack.c.h.b16 %v489
    %v1930 = vunpack.c.l.b16 %v490
    %v1931 = vunpack.c.h.b16 %v490
    %v1932 = vunpack.c.l.b16 %v491
    %v1933 = vunpack.c.h.b16 %v491
    %v1934 = vunpack.c.l.b16 %v492
    %v1935 = vunpack.c.h.b16 %v492
    %v1936 = vunpack.c.l.b16 %v493
    %v1937 = vunpack.c.h.b16 %v493
    %v1938 = vunpack.c.l.b16 %v494
    %v1939 = vunpack.c.h.b16 %v494
    %v1940 = vunpack.c.l.b16 %v495
    %v1941 = vunpack.c.h.b16 %v495
    %v1942 = vunpack.c.l.b16 %v496
    %v1943 = vunpack.c.h.b16 %v496
    %v1944 = vunpack.c.l.b16 %v497
    %v1945 = vunpack.c.h.b16 %v497
    %v1946 = vunpack.c.l.b16 %v498
    %v1947 = vunpack.c.h.b16 %v498
    %v1948 = vunpack.c.l.b16 %v499
    %v1949 = vunpack.c.h.b16 %v499
    %v1950 = vunpack.c.l.b16 %v500
    %v1951 = vunpack.c.h.b16 %v500
    %v1952 = vunpack.c.l.b16 %v501
    %v1953 = vunpack.c.h.b16 %v501
    %v1954 = vunpack.c.l.b16 %v502
    %v1955 = vunpack.c.h.b16 %v502
    %v1956 = vunpack.c.l.b16 %v503
    %v1957 = vunpack.c.h.b16 %v503
    %v1958 = vunpack.c.l.b16 %v504
    %v1959 = vunpack.c.h.b16 %v504
    %v1960 = vunpack.c.l.b16 %v505
    %v1961 = vunpack.c.h.b16 %v505
    %v1962 = vunpack.c.l.b16 %v506
    %v1963 = vunpack.c.h.b16 %v506
    %v1964 = vunpack.c.l.b16 %v507
    %v1965 = vunpack.c.h.b16 %v507
    %v1966 = vunpack.c.l.b16 %v508
    %v1967 = vunpack.c.h.b16 %v508
    %v1968 = vunpack.c.l.b16 %v509
    %v1969 = vunpack.c.h.b16 %v509
    %v1970 = vunpack.c.l.b16 %v510
    %v1971 = vunpack.c.h.b16 %v510
    %v1972 = vunpack.c.l.b16 %v511
    %v1973 = vunpack.c.h.b16 %v511
    %v1974 = vunpack.c.l.b16 %v512
    %v1975 = vunpack.c.h.b16 %v512
    %v1976 = vunpack.c.l.b16 %v513
    %v1977 = vunpack.c.h.b16 %v513
    %v1978 = vunpack.c.l.b16 %v514
    %v1979 = vunpack.c.h.b16 %v514
    %v1980 = vunpack.c.l.b16 %v515
    %v1981 = vunpack.c.h.b16 %v515
    %v1982 = vunpack.c.l.b16 %v516
    %v1983 = vunpack.c.h.b16 %v516
    %v1984 = vunpack.c.l.b16 %v517
    %v1985 = vunpack.c.h.b16 %v517
    %v1986 = vunpack.c.l.b16 %v518
    %v1987 = vunpack.c.h.b16 %v518
    %v1988 = vunpack.c.l.b16 %v519
    %v1989 = vunpack.c.h.b16 %v519
    %v1990 = vunpack.c.l.b16 %v520
    %v1991 = vunpack.c.h.b16 %v520
    %v1992 = vunpack.c.l.b16 %v521
    %v1993 = vunpack.c.h.b16 %v521
    %v1994 = vunpack.c.l.b16 %v522
    %v1995 = vunpack.c.h.b16 %v522
    %v1996 = vunpack.c.l.b16 %v523
    %v1997 = vunpack.c.h.b16 %v523
    %v1998 = vunpack.c.l.b16 %v524
    %v1999 = vunpack.c.h.b16 %v524
    %v2000 = vunpack.c.l.b16 %v525
    %v2001 = vunpack.c.h.b16 %v525
    %v2002 = vunpack.c.l.b16 %v526
    %v2003 = vunpack.c.h.b16 %v526
    %v2004 = vunpack.c.l.b16 %v527
    %v2005 = vunpack.c.h.b16 %v527
    %v2006 = vunpack.c.l.b16 %v528
    %v2007 = vunpack.c.h.b16 %v528
    %v2008 = vunpack.c.l.b16 %v529
    %v2009 = vunpack.c.h.b16 %v529
    %v2010 = vunpack.c.l.b16 %v530
    %v2011 = vunpack.c.h.b16 %v530
    %v2012 = vunpack.c.l.b16 %v531
    %v2013 = vunpack.c.h.b16 %v531
    %v2014 = vunpack.c.l.b16 %v532
    %v2015 = vunpack.c.h.b16 %v532
    %v2016 = vunpack.c.l.b16 %v533
    %v2017 = vunpack.c.h.b16 %v533
    %v2018 = vunpack.c.l.b16 %v534
    %v2019 = vunpack.c.h.b16 %v534
    %v2020 = vunpack.c.l.b16 %v535
    %v2021 = vunpack.c.h.b16 %v535
    %v2022 = vunpack.c.l.b16 %v536
    %v2023 = vunpack.c.h.b16 %v536
    %v2024 = vunpack.c.l.b16 %v537
    %v2025 = vunpack.c.h.b16 %v537
    %v2026 = vunpack.c.l.b16 %v538
    %v2027 = vunpack.c.h.b16 %v538
    %v2028 = vunpack.c.l.b16 %v539
    %v2029 = vunpack.c.h.b16 %v539
    %v2030 = vunpack.c.l.b16 %v540
    %v2031 = vunpack.c.h.b16 %v540
    %v2032 = vunpack.c.l.b16 %v541
    %v2033 = vunpack.c.h.b16 %v541
    %v2034 = vunpack.c.l.b16 %v542
    %v2035 = vunpack.c.h.b16 %v542
    %v2036 = vunpack.c.l.b16 %v543
    %v2037 = vunpack.c.h.b16 %v543
    %v2038 = vunpack.c.l.b16 %v544
    %v2039 = vunpack.c.h.b16 %v544
    %v2040 = vunpack.c.l.b16 %v545
    %v2041 = vunpack.c.h.b16 %v545
    %v2042 = vunpack.c.l.b16 %v546
    %v2043 = vunpack.c.h.b16 %v546
    %v2044 = vunpack.c.l.b16 %v547
    %v2045 = vunpack.c.h.b16 %v547
    %v2046 = vunpack.c.l.b16 %v548
    %v2047 = vunpack.c.h.b16 %v548
    %v2048 = vunpack.c.l.b16 %v549
    %v2049 = vunpack.c.h.b16 %v549
    %v2050 = vunpack.c.l.b16 %v550
    %v2051 = vunpack.c.h.b16 %v550
    %v2052 = vunpack.c.l.b16 %v551
    %v2053 = vunpack.c.h.b16 %v551
    %v2054 = vunpack.c.l.b16 %v552
    %v2055 = vunpack.c.h.b16 %v552
    %v2056 = vunpack.c.l.b16 %v553
    %v2057 = vunpack.c.h.b16 %v553
    %v2058 = vunpack.c.l.b16 %v554
    %v2059 = vunpack.c.h.b16 %v554
    %v2060 = vunpack.c.l.b16 %v555
    %v2061 = vunpack.c.h.b16 %v555
    %v2062 = vunpack.c.l.b16 %v556
    %v2063 = vunpack.c.h.b16 %v556
    %v2064 = vunpack.c.l.b16 %v557
    %v2065 = vunpack.c.h.b16 %v557
    %v2066 = vunpack.c.l.b16 %v558
    %v2067 = vunpack.c.h.b16 %v558
    %v2068 = vunpack.c.l.b16 %v559
    %v2069 = vunpack.c.h.b16 %v559
    %v2070 = vunpack.c.l.b16 %v560
    %v2071 = vunpack.c.h.b16 %v560
    %v2072 = vunpack.c.l.b16 %v561
    %v2073 = vunpack.c.h.b16 %v561
    %v2074 = vunpack.c.l.b16 %v562
    %v2075 = vunpack.c.h.b16 %v562
    %v2076 = vunpack.c.l.b16 %v563
    %v2077 = vunpack.c.h.b16 %v563
    %v2078 = vunpack.c.l.b16 %v564
    %v2079 = vunpack.c.h.b16 %v564
    %v2080 = vunpack.c.l.b16 %v565
    %v2081 = vunpack.c.h.b16 %v565
    %v2082 = vunpack.c.l.b16 %v566
    %v2083 = vunpack.c.h.b16 %v566
    %v2084 = vunpack.c.l.b16 %v567
    %v2085 = vunpack.c.h.b16 %v567
    %v2086 = vunpack.c.l.b16 %v568
    %v2087 = vunpack.c.h.b16 %v568
    %v2088 = vunpack.c.l.b16 %v569
    %v2089 = vunpack.c.h.b16 %v569
    %v2090 = vunpack.c.l.b16 %v570
    %v2091 = vunpack.c.h.b16 %v570
    %v2092 = vunpack.c.l.b16 %v571
    %v2093 = vunpack.c.h.b16 %v571
    %v2094 = vunpack.c.l.b16 %v572
    %v2095 = vunpack.c.h.b16 %v572
    %v2096 = vunpack.c.l.b16 %v573
    %v2097 = vunpack.c.h.b16 %v573
    %v2098 = vunpack.c.l.b16 %v574
    %v2099 = vunpack.c.h.b16 %v574
    %v2100 = vunpack.c.l.b16 %v575
    %v2101 = vunpack.c.h.b16 %v575
    %v2102 = vunpack.c.l.b16 %v576
    %v2103 = vunpack.c.h.b16 %v576
    %v2104 = vunpack.c.l.b16 %v577
    %v2105 = vunpack.c.h.b16 %v577
    %v2106 = vunpack.c.l.b16 %v578
    %v2107 = vunpack.c.h.b16 %v578
    %v2108 = vunpack.c.l.b16 %v579
    %v2109 = vunpack.c.h.b16 %v579
    %v2110 = vunpack.c.l.b16 %v580
    %v2111 = vunpack.c.h.b16 %v580
    %v2112 = vunpack.c.l.b16 %v581
    %v2113 = vunpack.c.h.b16 %v581
    %v2114 = vunpack.c.l.b16 %v582
    %v2115 = vunpack.c.h.b16 %v582
    %v2116 = vunpack.c.l.b16 %v583
    %v2117 = vunpack.c.h.b16 %v583
    %v2118 = vunpack.c.l.b16 %v584
    %v2119 = vunpack.c.h.b16 %v584
    %v2120 = vunpack.c.l.b16 %v585
    %v2121 = vunpack.c.h.b16 %v585
    %v2122 = vpack.c.b16 %v1114, %v1098
    %v2123 = vpack.c.b16 %v1115, %v1099
    %v2124 = vpack.c.b16 %v1116, %v1100
    %v2125 = vpack.c.b16 %v1117, %v1101
    %v2126 = vpack.c.b16 %v1118, %v1102
    %v2127 = vpack.c.b16 %v1119, %v1103
    %v2128 = vpack.c.b16 %v1120, %v1104
    %v2129 = vpack.c.b16 %v1121, %v1105
    %v2130 = vpack.c.b16 %v1122, %v1106
    %v2131 = vpack.c.b16 %v1123, %v1107
    %v2132 = vpack.c.b16 %v1124, %v1108
    %v2133 = vpack.c.b16 %v1125, %v1109
    %v2134 = vpack.c.b16 %v1126, %v1110
    %v2135 = vpack.c.b16 %v1127, %v1111
    %v2136 = vpack.c.b16 %v1128, %v1112
    %v2137 = vpack.c.b16 %v1129, %v1113
    %v2138 = vpack.c.b16 %v1146, %v1130
    %v2139 = vpack.c.b16 %v1147, %v1131
    %v2140 = vpack.c.b16 %v1148, %v1132
    %v2141 = vpack.c.b16 %v1149, %v1133
    %v2142 = vpack.c.b16 %v1150, %v1134
    %v2143 = vpack.c.b16 %v1151, %v1135
    %v2144 = vpack.c.b16 %v1152, %v1136
    %v2145 = vpack.c.b16 %v1153, %v1137
    %v2146 = vpack.c.b16 %v1154, %v1138
    %v2147 = vpack.c.b16 %v1155, %v1139
    %v2148 = vpack.c.b16 %v1156, %v1140
    %v2149 = vpack.c.b16 %v1157, %v1141
    %v2150 = vpack.c.b16 %v1158, %v1142
    %v2151 = vpack.c.b16 %v1159, %v1143
    %v2152 = vpack.c.b16 %v1160, %v1144
    %v2153 = vpack.c.b16 %v1161, %v1145
    %v2154 = vpack.c.b16 %v1178, %v1162
    %v2155 = vpack.c.b16 %v1179, %v1163
    %v2156 = vpack.c.b16 %v1180, %v1164
    %v2157 = vpack.c.b16 %v1181, %v1165
    %v2158 = vpack.c.b16 %v1182, %v1166
    %v2159 = vpack.c.b16 %v1183, %v1167
    %v2160 = vpack.c.b16 %v1184, %v1168
    %v2161 = vpack.c.b16 %v1185, %v1169
    %v2162 = vpack.c.b16 %v1186, %v1170
    %v2163 = vpack.c.b16 %v1187, %v1171
    %v2164 = vpack.c.b16 %v1188, %v1172
    %v2165 = vpack.c.b16 %v1189, %v1173
    %v2166 = vpack.c.b16 %v1190, %v1174
    %v2167 = vpack.c.b16 %v1191, %v1175
    %v2168 = vpack.c.b16 %v1192, %v1176
    %v2169 = vpack.c.b16 %v1193, %v1177
    %v2170 = vpack.c.b16 %v1210, %v1194
    %v2171 = vpack.c.b16 %v1211, %v1195
    %v2172 = vpack.c.b16 %v1212, %v1196
    %v2173 = vpack.c.b16 %v1213, %v1197
    %v2174 = vpack.c.b16 %v1214, %v1198
    %v2175 = vpack.c.b16 %v1215, %v1199
    %v2176 = vpack.c.b16 %v1216, %v1200
    %v2177 = vpack.c.b16 %v1217, %v1201
    %v2178 = vpack.c.b16 %v1218, %v1202
    %v2179 = vpack.c.b16 %v1219, %v1203
    %v2180 = vpack.c.b16 %v1220, %v1204
    %v2181 = vpack.c.b16 %v1221, %v1205
    %v2182 = vpack.c.b16 %v1222, %v1206
    %v2183 = vpack.c.b16 %v1223, %v1207
    %v2184 = vpack.c.b16 %v1224, %v1208
    %v2185 = vpack.c.b16 %v1225, %v1209
    %v2186 = vpack.c.b16 %v1242, %v1226
    %v2187 = vpack.c.b16 %v1243, %v1227
    %v2188 = vpack.c.b16 %v1244, %v1228
    %v2189 = vpack.c.b16 %v1245, %v1229
    %v2190 = vpack.c.b16 %v1246, %v1230
    %v2191 = vpack.c.b16 %v1247, %v1231
    %v2192 = vpack.c.b16 %v1248, %v1232
    %v2193 = vpack.c.b16 %v1249, %v1233
    %v2194 = vpack.c.b16 %v1250, %v1234
    %v2195 = vpack.c.b16 %v1251, %v1235
    %v2196 = vpack.c.b16 %v1252, %v1236
    %v2197 = vpack.c.b16 %v1253, %v1237
    %v2198 = vpack.c.b16 %v1254, %v1238
    %v2199 = vpack.c.b16 %v1255, %v1239
    %v2200 = vpack.c.b16 %v1256, %v1240
    %v2201 = vpack.c.b16 %v1257, %v1241
    %v2202 = vpack.c.b16 %v1274, %v1258
    %v2203 = vpack.c.b16 %v1275, %v1259
    %v2204 = vpack.c.b16 %v1276, %v1260
    %v2205 = vpack.c.b16 %v1277, %v1261
    %v2206 = vpack.c.b16 %v1278, %v1262
    %v2207 = vpack.c.b16 %v1279, %v1263
    %v2208 = vpack.c.b16 %v1280, %v1264
    %v2209 = vpack.c.b16 %v1281, %v1265
    %v2210 = vpack.c.b16 %v1282, %v1266
    %v2211 = vpack.c.b16 %v1283, %v1267
    %v2212 = vpack.c.b16 %v1284, %v1268
    %v2213 = vpack.c.b16 %v1285, %v1269
    %v2214 = vpack.c.b16 %v1286, %v1270
    %v2215 = vpack.c.b16 %v1287, %v1271
    %v2216 = vpack.c.b16 %v1288, %v1272
    %v2217 = vpack.c.b16 %v1289, %v1273
    %v2218 = vpack.c.b16 %v1306, %v1290
    %v2219 = vpack.c.b16 %v1307, %v1291
    %v2220 = vpack.c.b16 %v1308, %v1292
    %v2221 = vpack.c.b16 %v1309, %v1293
    %v2222 = vpack.c.b16 %v1310, %v1294
    %v2223 = vpack.c.b16 %v1311, %v1295
    %v2224 = vpack.c.b16 %v1312, %v1296
    %v2225 = vpack.c.b16 %v1313, %v1297
    %v2226 = vpack.c.b16 %v1314, %v1298
    %v2227 = vpack.c.b16 %v1315, %v1299
    %v2228 = vpack.c.b16 %v1316, %v1300
    %v2229 = vpack.c.b16 %v1317, %v1301
    %v2230 = vpack.c.b16 %v1318, %v1302
    %v2231 = vpack.c.b16 %v1319, %v1303
    %v2232 = vpack.c.b16 %v1320, %v1304
    %v2233 = vpack.c.b16 %v1321, %v1305
    %v2234 = vpack.c.b16 %v1338, %v1322
    %v2235 = vpack.c.b16 %v1339, %v1323
    %v2236 = vpack.c.b16 %v1340, %v1324
    %v2237 = vpack.c.b16 %v1341, %v1325
    %v2238 = vpack.c.b16 %v1342, %v1326
    %v2239 = vpack.c.b16 %v1343, %v1327
    %v2240 = vpack.c.b16 %v1344, %v1328
    %v2241 = vpack.c.b16 %v1345, %v1329
    %v2242 = vpack.c.b16 %v1346, %v1330
    %v2243 = vpack.c.b16 %v1347, %v1331
    %v2244 = vpack.c.b16 %v1348, %v1332
    %v2245 = vpack.c.b16 %v1349, %v1333
    %v2246 = vpack.c.b16 %v1350, %v1334
    %v2247 = vpack.c.b16 %v1351, %v1335
    %v2248 = vpack.c.b16 %v1352, %v1336
    %v2249 = vpack.c.b16 %v1353, %v1337
    %v2250 = vpack.c.b16 %v1370, %v1354
    %v2251 = vpack.c.b16 %v1371, %v1355
    %v2252 = vpack.c.b16 %v1372, %v1356
    %v2253 = vpack.c.b16 %v1373, %v1357
    %v2254 = vpack.c.b16 %v1374, %v1358
    %v2255 = vpack.c.b16 %v1375, %v1359
    %v2256 = vpack.c.b16 %v1376, %v1360
    %v2257 = vpack.c.b16 %v1377, %v1361
    %v2258 = vpack.c.b16 %v1378, %v1362
    %v2259 = vpack.c.b16 %v1379, %v1363
    %v2260 = vpack.c.b16 %v1380, %v1364
    %v2261 = vpack.c.b16 %v1381, %v1365
    %v2262 = vpack.c.b16 %v1382, %v1366
    %v2263 = vpack.c.b16 %v1383, %v1367
    %v2264 = vpack.c.b16 %v1384, %v1368
    %v2265 = vpack.c.b16 %v1385, %v1369
    %v2266 = vpack.c.b16 %v1402, %v1386
    %v2267 = vpack.c.b16 %v1403, %v1387
    %v2268 = vpack.c.b16 %v1404, %v1388
    %v2269 = vpack.c.b16 %v1405, %v1389
    %v2270 = vpack.c.b16 %v1406, %v1390
    %v2271 = vpack.c.b16 %v1407, %v1391
    %v2272 = vpack.c.b16 %v1408, %v1392
    %v2273 = vpack.c.b16 %v1409, %v1393
    %v2274 = vpack.c.b16 %v1410, %v1394
    %v2275 = vpack.c.b16 %v1411, %v1395
    %v2276 = vpack.c.b16 %v1412, %v1396
    %v2277 = vpack.c.b16 %v1413, %v1397
    %v2278 = vpack.c.b16 %v1414, %v1398
    %v2279 = vpack.c.b16 %v1415, %v1399
    %v2280 = vpack.c.b16 %v1416, %v1400
    %v2281 = vpack.c.b16 %v1417, %v1401
    %v2282 = vpack.c.b16 %v1434, %v1418
    %v2283 = vpack.c.b16 %v1435, %v1419
    %v2284 = vpack.c.b16 %v1436, %v1420
    %v2285 = vpack.c.b16 %v1437, %v1421
    %v2286 = vpack.c.b16 %v1438, %v1422
    %v2287 = vpack.c.b16 %v1439, %v1423
    %v2288 = vpack.c.b16 %v1440, %v1424
    %v2289 = vpack.c.b16 %v1441, %v1425
    %v2290 = vpack.c.b16 %v1442, %v1426
    %v2291 = vpack.c.b16 %v1443, %v1427
    %v2292 = vpack.c.b16 %v1444, %v1428
    %v2293 = vpack.c.b16 %v1445, %v1429
    %v2294 = vpack.c.b16 %v1446, %v1430
    %v2295 = vpack.c.b16 %v1447, %v1431
    %v2296 = vpack.c.b16 %v1448, %v1432
    %v2297 = vpack.c.b16 %v1449, %v1433
    %v2298 = vpack.c.b16 %v1466, %v1450
    %v2299 = vpack.c.b16 %v1467, %v1451
    %v2300 = vpack.c.b16 %v1468, %v1452
    %v2301 = vpack.c.b16 %v1469, %v1453
    %v2302 = vpack.c.b16 %v1470, %v1454
    %v2303 = vpack.c.b16 %v1471, %v1455
    %v2304 = vpack.c.b16 %v1472, %v1456
    %v2305 = vpack.c.b16 %v1473, %v1457
    %v2306 = vpack.c.b16 %v1474, %v1458
    %v2307 = vpack.c.b16 %v1475, %v1459
    %v2308 = vpack.c.b16 %v1476, %v1460
    %v2309 = vpack.c.b16 %v1477, %v1461
    %v2310 = vpack.c.b16 %v1478, %v1462
    %v2311 = vpack.c.b16 %v1479, %v1463
    %v2312 = vpack.c.b16 %v1480, %v1464
    %v2313 = vpack.c.b16 %v1481, %v1465
    %v2314 = vpack.c.b16 %v1498, %v1482
    %v2315 = vpack.c.b16 %v1499, %v1483
    %v2316 = vpack.c.b16 %v1500, %v1484
    %v2317 = vpack.c.b16 %v1501, %v1485
    %v2318 = vpack.c.b16 %v1502, %v1486
    %v2319 = vpack.c.b16 %v1503, %v1487
    %v2320 = vpack.c.b16 %v1504, %v1488
    %v2321 = vpack.c.b16 %v1505, %v1489
    %v2322 = vpack.c.b16 %v1506, %v1490
    %v2323 = vpack.c.b16 %v1507, %v1491
    %v2324 = vpack.c.b16 %v1508, %v1492
    %v2325 = vpack.c.b16 %v1509, %v1493
    %v2326 = vpack.c.b16 %v1510, %v1494
    %v2327 = vpack.c.b16 %v1511, %v1495
    %v2328 = vpack.c.b16 %v1512, %v1496
    %v2329 = vpack.c.b16 %v1513, %v1497
    %v2330 = vpack.c.b16 %v1530, %v1514
    %v2331 = vpack.c.b16 %v1531, %v1515
    %v2332 = vpack.c.b16 %v1532, %v1516
    %v2333 = vpack.c.b16 %v1533, %v1517
    %v2334 = vpack.c.b16 %v1534, %v1518
    %v2335 = vpack.c.b16 %v1535, %v1519
    %v2336 = vpack.c.b16 %v1536, %v1520
    %v2337 = vpack.c.b16 %v1537, %v1521
    %v2338 = vpack.c.b16 %v1538, %v1522
    %v2339 = vpack.c.b16 %v1539, %v1523
    %v2340 = vpack.c.b16 %v1540, %v1524
    %v2341 = vpack.c.b16 %v1541, %v1525
    %v2342 = vpack.c.b16 %v1542, %v1526
    %v2343 = vpack.c.b16 %v1543, %v1527
    %v2344 = vpack.c.b16 %v1544, %v1528
    %v2345 = vpack.c.b16 %v1545, %v1529
    %v2346 = vpack.c.b16 %v1562, %v1546
    %v2347 = vpack.c.b16 %v1563, %v1547
    %v2348 = vpack.c.b16 %v1564, %v1548
    %v2349 = vpack.c.b16 %v1565, %v1549
    %v2350 = vpack.c.b16 %v1566, %v1550
    %v2351 = vpack.c.b16 %v1567, %v1551
    %v2352 = vpack.c.b16 %v1568, %v1552
    %v2353 = vpack.c.b16 %v1569, %v1553
    %v2354 = vpack.c.b16 %v1570, %v1554
    %v2355 = vpack.c.b16 %v1571, %v1555
    %v2356 = vpack.c.b16 %v1572, %v1556
    %v2357 = vpack.c.b16 %v1573, %v1557
    %v2358 = vpack.c.b16 %v1574, %v1558
    %v2359 = vpack.c.b16 %v1575, %v1559
    %v2360 = vpack.c.b16 %v1576, %v1560
    %v2361 = vpack.c.b16 %v1577, %v1561
    %v2362 = vpack.c.b16 %v1594, %v1578
    %v2363 = vpack.c.b16 %v1595, %v1579
    %v2364 = vpack.c.b16 %v1596, %v1580
    %v2365 = vpack.c.b16 %v1597, %v1581
    %v2366 = vpack.c.b16 %v1598, %v1582
    %v2367 = vpack.c.b16 %v1599, %v1583
    %v2368 = vpack.c.b16 %v1600, %v1584
    %v2369 = vpack.c.b16 %v1601, %v1585
    %v2370 = vpack.c.b16 %v1602, %v1586
    %v2371 = vpack.c.b16 %v1603, %v1587
    %v2372 = vpack.c.b16 %v1604, %v1588
    %v2373 = vpack.c.b16 %v1605, %v1589
    %v2374 = vpack.c.b16 %v1606, %v1590
    %v2375 = vpack.c.b16 %v1607, %v1591
    %v2376 = vpack.c.b16 %v1608, %v1592
    %v2377 = vpack.c.b16 %v1609, %v1593
    %v2378 = vpack.c.b16 %v1626, %v1610
    %v2379 = vpack.c.b16 %v1627, %v1611
    %v2380 = vpack.c.b16 %v1628, %v1612
    %v2381 = vpack.c.b16 %v1629, %v1613
    %v2382 = vpack.c.b16 %v1630, %v1614
    %v2383 = vpack.c.b16 %v1631, %v1615
    %v2384 = vpack.c.b16 %v1632, %v1616
    %v2385 = vpack.c.b16 %v1633, %v1617
    %v2386 = vpack.c.b16 %v1634, %v1618
    %v2387 = vpack.c.b16 %v1635, %v1619
    %v2388 = vpack.c.b16 %v1636, %v1620
    %v2389 = vpack.c.b16 %v1637, %v1621
    %v2390 = vpack.c.b16 %v1638, %v1622
    %v2391 = vpack.c.b16 %v1639, %v1623
    %v2392 = vpack.c.b16 %v1640, %v1624
    %v2393 = vpack.c.b16 %v1641, %v1625
    %v2394 = vpack.c.b16 %v1658, %v1642
    %v2395 = vpack.c.b16 %v1659, %v1643
    %v2396 = vpack.c.b16 %v1660, %v1644
    %v2397 = vpack.c.b16 %v1661, %v1645
    %v2398 = vpack.c.b16 %v1662, %v1646
    %v2399 = vpack.c.b16 %v1663, %v1647
    %v2400 = vpack.c.b16 %v1664, %v1648
    %v2401 = vpack.c.b16 %v1665, %v1649
    %v2402 = vpack.c.b16 %v1666, %v1650
    %v2403 = vpack.c.b16 %v1667, %v1651
    %v2404 = vpack.c.b16 %v1668, %v1652
    %v2405 = vpack.c.b16 %v1669, %v1653
    %v2406 = vpack.c.b16 %v1670, %v1654
    %v2407 = vpack.c.b16 %v1671, %v1655
    %v2408 = vpack.c.b16 %v1672, %v1656
    %v2409 = vpack.c.b16 %v1673, %v1657
    %v2410 = vpack.c.b16 %v1690, %v1674
    %v2411 = vpack.c.b16 %v1691, %v1675
    %v2412 = vpack.c.b16 %v1692, %v1676
    %v2413 = vpack.c.b16 %v1693, %v1677
    %v2414 = vpack.c.b16 %v1694, %v1678
    %v2415 = vpack.c.b16 %v1695, %v1679
    %v2416 = vpack.c.b16 %v1696, %v1680
    %v2417 = vpack.c.b16 %v1697, %v1681
    %v2418 = vpack.c.b16 %v1698, %v1682
    %v2419 = vpack.c.b16 %v1699, %v1683
    %v2420 = vpack.c.b16 %v1700, %v1684
    %v2421 = vpack.c.b16 %v1701, %v1685
    %v2422 = vpack.c.b16 %v1702, %v1686
    %v2423 = vpack.c.b16 %v1703, %v1687
    %v2424 = vpack.c.b16 %v1704, %v1688
    %v2425 = vpack.c.b16 %v1705, %v1689
    %v2426 = vpack.c.b16 %v1722, %v1706
    %v2427 = vpack.c.b16 %v1723, %v1707
    %v2428 = vpack.c.b16 %v1724, %v1708
    %v2429 = vpack.c.b16 %v1725, %v1709
    %v2430 = vpack.c.b16 %v1726, %v1710
    %v2431 = vpack.c.b16 %v1727, %v1711
    %v2432 = vpack.c.b16 %v1728, %v1712
    %v2433 = vpack.c.b16 %v1729, %v1713
    %v2434 = vpack.c.b16 %v1730, %v1714
    %v2435 = vpack.c.b16 %v1731, %v1715
    %v2436 = vpack.c.b16 %v1732, %v1716
    %v2437 = vpack.c.b16 %v1733, %v1717
    %v2438 = vpack.c.b16 %v1734, %v1718
    %v2439 = vpack.c.b16 %v1735, %v1719
    %v2440 = vpack.c.b16 %v1736, %v1720
    %v2441 = vpack.c.b16 %v1737, %v1721
    %v2442 = vpack.c.b16 %v1754, %v1738
    %v2443 = vpack.c.b16 %v1755, %v1739
    %v2444 = vpack.c.b16 %v1756, %v1740
    %v2445 = vpack.c.b16 %v1757, %v1741
    %v2446 = vpack.c.b16 %v1758, %v1742
    %v2447 = vpack.c.b16 %v1759, %v1743
    %v2448 = vpack.c.b16 %v1760, %v1744
    %v2449 = vpack.c.b16 %v1761, %v1745
    %v2450 = vpack.c.b16 %v1762, %v1746
    %v2451 = vpack.c.b16 %v1763, %v1747
    %v2452 = vpack.c.b16 %v1764, %v1748
    %v2453 = vpack.c.b16 %v1765, %v1749
    %v2454 = vpack.c.b16 %v1766, %v1750
    %v2455 = vpack.c.b16 %v1767, %v1751
    %v2456 = vpack.c.b16 %v1768, %v1752
    %v2457 = vpack.c.b16 %v1769, %v1753
    %v2458 = vpack.c.b16 %v1786, %v1770
    %v2459 = vpack.c.b16 %v1787, %v1771
    %v2460 = vpack.c.b16 %v1788, %v1772
    %v2461 = vpack.c.b16 %v1789, %v1773
    %v2462 = vpack.c.b16 %v1790, %v1774
    %v2463 = vpack.c.b16 %v1791, %v1775
    %v2464 = vpack.c.b16 %v1792, %v1776
    %v2465 = vpack.c.b16 %v1793, %v1777
    %v2466 = vpack.c.b16 %v1794, %v1778
    %v2467 = vpack.c.b16 %v1795, %v1779
    %v2468 = vpack.c.b16 %v1796, %v1780
    %v2469 = vpack.c.b16 %v1797, %v1781
    %v2470 = vpack.c.b16 %v1798, %v1782
    %v2471 = vpack.c.b16 %v1799, %v1783
    %v2472 = vpack.c.b16 %v1800, %v1784
    %v2473 = vpack.c.b16 %v1801, %v1785
    %v2474 = vpack.c.b16 %v1818, %v1802
    %v2475 = vpack.c.b16 %v1819, %v1803
    %v2476 = vpack.c.b16 %v1820, %v1804
    %v2477 = vpack.c.b16 %v1821, %v1805
    %v2478 = vpack.c.b16 %v1822, %v1806
    %v2479 = vpack.c.b16 %v1823, %v1807
    %v2480 = vpack.c.b16 %v1824, %v1808
    %v2481 = vpack.c.b16 %v1825, %v1809
    %v2482 = vpack.c.b16 %v1826, %v1810
    %v2483 = vpack.c.b16 %v1827, %v1811
    %v2484 = vpack.c.b16 %v1828, %v1812
    %v2485 = vpack.c.b16 %v1829, %v1813
    %v2486 = vpack.c.b16 %v1830, %v1814
    %v2487 = vpack.c.b16 %v1831, %v1815
    %v2488 = vpack.c.b16 %v1832, %v1816
    %v2489 = vpack.c.b16 %v1833, %v1817
    %v2490 = vpack.c.b16 %v1850, %v1834
    %v2491 = vpack.c.b16 %v1851, %v1835
    %v2492 = vpack.c.b16 %v1852, %v1836
    %v2493 = vpack.c.b16 %v1853, %v1837
    %v2494 = vpack.c.b16 %v1854, %v1838
    %v2495 = vpack.c.b16 %v1855, %v1839
    %v2496 = vpack.c.b16 %v1856, %v1840
    %v2497 = vpack.c.b16 %v1857, %v1841
    %v2498 = vpack.c.b16 %v1858, %v1842
    %v2499 = vpack.c.b16 %v1859, %v1843
    %v2500 = vpack.c.b16 %v1860, %v1844
    %v2501 = vpack.c.b16 %v1861, %v1845
    %v2502 = vpack.c.b16 %v1862, %v1846
    %v2503 = vpack.c.b16 %v1863, %v1847
    %v2504 = vpack.c.b16 %v1864, %v1848
    %v2505 = vpack.c.b16 %v1865, %v1849
    %v2506 = vpack.c.b16 %v1882, %v1866
    %v2507 = vpack.c.b16 %v1883, %v1867
    %v2508 = vpack.c.b16 %v1884, %v1868
    %v2509 = vpack.c.b16 %v1885, %v1869
    %v2510 = vpack.c.b16 %v1886, %v1870
    %v2511 = vpack.c.b16 %v1887, %v1871
    %v2512 = vpack.c.b16 %v1888, %v1872
    %v2513 = vpack.c.b16 %v1889, %v1873
    %v2514 = vpack.c.b16 %v1890, %v1874
    %v2515 = vpack.c.b16 %v1891, %v1875
    %v2516 = vpack.c.b16 %v1892, %v1876
    %v2517 = vpack.c.b16 %v1893, %v1877
    %v2518 = vpack.c.b16 %v1894, %v1878
    %v2519 = vpack.c.b16 %v1895, %v1879
    %v2520 = vpack.c.b16 %v1896, %v1880
    %v2521 = vpack.c.b16 %v1897, %v1881
    %v2522 = vpack.c.b16 %v1914, %v1898
    %v2523 = vpack.c.b16 %v1915, %v1899
    %v2524 = vpack.c.b16 %v1916, %v1900
    %v2525 = vpack.c.b16 %v1917, %v1901
    %v2526 = vpack.c.b16 %v1918, %v1902
    %v2527 = vpack.c.b16 %v1919, %v1903
    %v2528 = vpack.c.b16 %v1920, %v1904
    %v2529 = vpack.c.b16 %v1921, %v1905
    %v2530 = vpack.c.b16 %v1922, %v1906
    %v2531 = vpack.c.b16 %v1923, %v1907
    %v2532 = vpack.c.b16 %v1924, %v1908
    %v2533 = vpack.c.b16 %v1925, %v1909
    %v2534 = vpack.c.b16 %v1926, %v1910
    %v2535 = vpack.c.b16 %v1927, %v1911
    %v2536 = vpack.c.b16 %v1928, %v1912
    %v2537 = vpack.c.b16 %v1929, %v1913
    %v2538 = vpack.c.b16 %v1946, %v1930
    %v2539 = vpack.c.b16 %v1947, %v1931
    %v2540 = vpack.c.b16 %v1948, %v1932
    %v2541 = vpack.c.b16 %v1949, %v1933
    %v2542 = vpack.c.b16 %v1950, %v1934
    %v2543 = vpack.c.b16 %v1951, %v1935
    %v2544 = vpack.c.b16 %v1952, %v1936
    %v2545 = vpack.c.b16 %v1953, %v1937
    %v2546 = vpack.c.b16 %v1954, %v1938
    %v2547 = vpack.c.b16 %v1955, %v1939
    %v2548 = vpack.c.b16 %v1956, %v1940
    %v2549 = vpack.c.b16 %v1957, %v1941
    %v2550 = vpack.c.b16 %v1958, %v1942
    %v2551 = vpack.c.b16 %v1959, %v1943
    %v2552 = vpack.c.b16 %v1960, %v1944
    %v2553 = vpack.c.b16 %v1961, %v1945
    %v2554 = vpack.c.b16 %v1978, %v1962
    %v2555 = vpack.c.b16 %v1979, %v1963
    %v2556 = vpack.c.b16 %v1980, %v1964
    %v2557 = vpack.c.b16 %v1981, %v1965
    %v2558 = vpack.c.b16 %v1982, %v1966
    %v2559 = vpack.c.b16 %v1983, %v1967
    %v2560 = vpack.c.b16 %v1984, %v1968
    %v2561 = vpack.c.b16 %v1985, %v1969
    %v2562 = vpack.c.b16 %v1986, %v1970
    %v2563 = vpack.c.b16 %v1987, %v1971
    %v2564 = vpack.c.b16 %v1988, %v1972
    %v2565 = vpack.c.b16 %v1989, %v1973
    %v2566 = vpack.c.b16 %v1990, %v1974
    %v2567 = vpack.c.b16 %v1991, %v1975
    %v2568 = vpack.c.b16 %v1992, %v1976
    %v2569 = vpack.c.b16 %v1993, %v1977
    %v2570 = vpack.c.b16 %v2010, %v1994
    %v2571 = vpack.c.b16 %v2011, %v1995
    %v2572 = vpack.c.b16 %v2012, %v1996
    %v2573 = vpack.c.b16 %v2013, %v1997
    %v2574 = vpack.c.b16 %v2014, %v1998
    %v2575 = vpack.c.b16 %v2015, %v1999
    %v2576 = vpack.c.b16 %v2016, %v2000
    %v2577 = vpack.c.b16 %v2017, %v2001
    %v2578 = vpack.c.b16 %v2018, %v2002
    %v2579 = vpack.c.b16 %v2019, %v2003
    %v2580 = vpack.c.b16 %v2020, %v2004
    %v2581 = vpack.c.b16 %v2021, %v2005
    %v2582 = vpack.c.b16 %v2022, %v2006
    %v2583 = vpack.c.b16 %v2023, %v2007
    %v2584 = vpack.c.b16 %v2024, %v2008
    %v2585 = vpack.c.b16 %v2025, %v2009
    %v2586 = vpack.c.b16 %v2042, %v2026
    %v2587 = vpack.c.b16 %v2043, %v2027
    %v2588 = vpack.c.b16 %v2044, %v2028
    %v2589 = vpack.c.b16 %v2045, %v2029
    %v2590 = vpack.c.b16 %v2046, %v2030
    %v2591 = vpack.c.b16 %v2047, %v2031
    %v2592 = vpack.c.b16 %v2048, %v2032
    %v2593 = vpack.c.b16 %v2049, %v2033
    %v2594 = vpack.c.b16 %v2050, %v2034
    %v2595 = vpack.c.b16 %v2051, %v2035
    %v2596 = vpack.c.b16 %v2052, %v2036
    %v2597 = vpack.c.b16 %v2053, %v2037
    %v2598 = vpack.c.b16 %v2054, %v2038
    %v2599 = vpack.c.b16 %v2055, %v2039
    %v2600 = vpack.c.b16 %v2056, %v2040
    %v2601 = vpack.c.b16 %v2057, %v2041
    %v2602 = vpack.c.b16 %v2074, %v2058
    %v2603 = vpack.c.b16 %v2075, %v2059
    %v2604 = vpack.c.b16 %v2076, %v2060
    %v2605 = vpack.c.b16 %v2077, %v2061
    %v2606 = vpack.c.b16 %v2078, %v2062
    %v2607 = vpack.c.b16 %v2079, %v2063
    %v2608 = vpack.c.b16 %v2080, %v2064
    %v2609 = vpack.c.b16 %v2081, %v2065
    %v2610 = vpack.c.b16 %v2082, %v2066
    %v2611 = vpack.c.b16 %v2083, %v2067
    %v2612 = vpack.c.b16 %v2084, %v2068
    %v2613 = vpack.c.b16 %v2085, %v2069
    %v2614 = vpack.c.b16 %v2086, %v2070
    %v2615 = vpack.c.b16 %v2087, %v2071
    %v2616 = vpack.c.b16 %v2088, %v2072
    %v2617 = vpack.c.b16 %v2089, %v2073
    %v2618 = vpack.c.b16 %v2106, %v2090
    %v2619 = vpack.c.b16 %v2107, %v2091
    %v2620 = vpack.c.b16 %v2108, %v2092
    %v2621 = vpack.c.b16 %v2109, %v2093
    %v2622 = vpack.c.b16 %v2110, %v2094
    %v2623 = vpack.c.b16 %v2111, %v2095
    %v2624 = vpack.c.b16 %v2112, %v2096
    %v2625 = vpack.c.b16 %v2113, %v2097
    %v2626 = vpack.c.b16 %v2114, %v2098
    %v2627 = vpack.c.b16 %v2115, %v2099
    %v2628 = vpack.c.b16 %v2116, %v2100
    %v2629 = vpack.c.b16 %v2117, %v2101
    %v2630 = vpack.c.b16 %v2118, %v2102
    %v2631 = vpack.c.b16 %v2119, %v2103
    %v2632 = vpack.c.b16 %v2120, %v2104
    %v2633 = vpack.c.b16 %v2121, %v2105
    %3146 = vmatpush.bf16.msra.mxu0 %v2234
    %3147 = vmatpush.bf16.msra.mxu0 %v2218
    %3148 = vmatpush.bf16.msra.mxu0 %v2202
    %3149 = vmatpush.bf16.msra.mxu0 %v2186
    %3150 = vmatpush.bf16.msra.mxu0 %v2170
    %3151 = vmatpush.bf16.msra.mxu0 %v2154
    %3152 = vmatpush.bf16.msra.mxu0 %v2138
    %3153 = vmatpush.bf16.msra.mxu0 %v2122
    %3154 = vmatmul.bf16.gmra.mxu0 %v70
    %v3155 = vpop.f32.mrf.mxu0
    %v3156 = vadd.f32 0.0, %v3155
    %v3157 = vpop.f32.mrf.mxu0
    %v3158 = vadd.f32 0.0, %v3157
    %3159 = vdwg.mxu0
    %3160 = vmatpush.bf16.msra.mxu0 %v2362
    %3161 = vmatpush.bf16.msra.mxu0 %v2346
    %3162 = vmatpush.bf16.msra.mxu0 %v2330
    %3163 = vmatpush.bf16.msra.mxu0 %v2314
    %3164 = vmatpush.bf16.msra.mxu0 %v2298
    %3165 = vmatpush.bf16.msra.mxu0 %v2282
    %3166 = vmatpush.bf16.msra.mxu0 %v2266
    %3167 = vmatpush.bf16.msra.mxu0 %v2250
    %3168 = vmatmul.bf16.gmra.mxu0 %v71
    %v3169 = vpop.f32.mrf.mxu0
    %v3170 = vadd.f32 %v3156, %v3169
    %v3171 = vpop.f32.mrf.mxu0
    %v3172 = vadd.f32 %v3158, %v3171
    %3173 = vdwg.mxu0
    %3174 = vmatpush.bf16.msra.mxu0 %v2490
    %3175 = vmatpush.bf16.msra.mxu0 %v2474
    %3176 = vmatpush.bf16.msra.mxu0 %v2458
    %3177 = vmatpush.bf16.msra.mxu0 %v2442
    %3178 = vmatpush.bf16.msra.mxu0 %v2426
    %3179 = vmatpush.bf16.msra.mxu0 %v2410
    %3180 = vmatpush.bf16.msra.mxu0 %v2394
    %3181 = vmatpush.bf16.msra.mxu0 %v2378
    %3182 = vmatmul.bf16.gmra.mxu0 %v72
    %v3183 = vpop.f32.mrf.mxu0
    %v3184 = vadd.f32 %v3170, %v3183
    %v3185 = vpop.f32.mrf.mxu0
    %v3186 = vadd.f32 %v3172, %v3185
    %3187 = vdwg.mxu0
    %3188 = vmatpush.bf16.msra.mxu0 %v2618
    %3189 = vmatpush.bf16.msra.mxu0 %v2602
    %3190 = vmatpush.bf16.msra.mxu0 %v2586
    %3191 = vmatpush.bf16.msra.mxu0 %v2570
    %3192 = vmatpush.bf16.msra.mxu0 %v2554
    %3193 = vmatpush.bf16.msra.mxu0 %v2538
    %3194 = vmatpush.bf16.msra.mxu0 %v2522
    %3195 = vmatpush.bf16.msra.mxu0 %v2506
    %3196 = vmatmul.bf16.gmra.mxu0 %v73
    %v3197 = vpop.f32.mrf.mxu0
    %v3198 = vadd.f32 %v3184, %v3197
    %v3199 = vpop.f32.mrf.mxu0
    %v3200 = vadd.f32 %v3186, %v3199
    %3201 = vdwg.mxu0
    %3202 = vmatpush.bf16.msra.mxu0 %v2235
    %3203 = vmatpush.bf16.msra.mxu0 %v2219
    %3204 = vmatpush.bf16.msra.mxu0 %v2203
    %3205 = vmatpush.bf16.msra.mxu0 %v2187
    %3206 = vmatpush.bf16.msra.mxu0 %v2171
    %3207 = vmatpush.bf16.msra.mxu0 %v2155
    %3208 = vmatpush.bf16.msra.mxu0 %v2139
    %3209 = vmatpush.bf16.msra.mxu0 %v2123
    %3210 = vmatmul.bf16.gmra.mxu0 %v70
    %v3211 = vpop.f32.mrf.mxu0
    %v3212 = vadd.f32 0.0, %v3211
    %v3213 = vpop.f32.mrf.mxu0
    %v3214 = vadd.f32 0.0, %v3213
    %3215 = vdwg.mxu0
    %3216 = vmatpush.bf16.msra.mxu0 %v2363
    %3217 = vmatpush.bf16.msra.mxu0 %v2347
    %3218 = vmatpush.bf16.msra.mxu0 %v2331
    %3219 = vmatpush.bf16.msra.mxu0 %v2315
    %3220 = vmatpush.bf16.msra.mxu0 %v2299
    %3221 = vmatpush.bf16.msra.mxu0 %v2283
    %3222 = vmatpush.bf16.msra.mxu0 %v2267
    %3223 = vmatpush.bf16.msra.mxu0 %v2251
    %3224 = vmatmul.bf16.gmra.mxu0 %v71
    %v3225 = vpop.f32.mrf.mxu0
    %v3226 = vadd.f32 %v3212, %v3225
    %v3227 = vpop.f32.mrf.mxu0
    %v3228 = vadd.f32 %v3214, %v3227
    %3229 = vdwg.mxu0
    %3230 = vmatpush.bf16.msra.mxu0 %v2491
    %3231 = vmatpush.bf16.msra.mxu0 %v2475
    %3232 = vmatpush.bf16.msra.mxu0 %v2459
    %3233 = vmatpush.bf16.msra.mxu0 %v2443
    %3234 = vmatpush.bf16.msra.mxu0 %v2427
    %3235 = vmatpush.bf16.msra.mxu0 %v2411
    %3236 = vmatpush.bf16.msra.mxu0 %v2395
    %3237 = vmatpush.bf16.msra.mxu0 %v2379
    %3238 = vmatmul.bf16.gmra.mxu0 %v72
    %v3239 = vpop.f32.mrf.mxu0
    %v3240 = vadd.f32 %v3226, %v3239
    %v3241 = vpop.f32.mrf.mxu0
    %v3242 = vadd.f32 %v3228, %v3241
    %3243 = vdwg.mxu0
    %3244 = vmatpush.bf16.msra.mxu0 %v2619
    %3245 = vmatpush.bf16.msra.mxu0 %v2603
    %3246 = vmatpush.bf16.msra.mxu0 %v2587
    %3247 = vmatpush.bf16.msra.mxu0 %v2571
    %3248 = vmatpush.bf16.msra.mxu0 %v2555
    %3249 = vmatpush.bf16.msra.mxu0 %v2539
    %3250 = vmatpush.bf16.msra.mxu0 %v2523
    %3251 = vmatpush.bf16.msra.mxu0 %v2507
    %3252 = vmatmul.bf16.gmra.mxu0 %v73
    %v3253 = vpop.f32.mrf.mxu0
    %v3254 = vadd.f32 %v3240, %v3253
    %v3255 = vpop.f32.mrf.mxu0
    %v3256 = vadd.f32 %v3242, %v3255
    %3257 = vdwg.mxu0
    %3258 = vmatpush.bf16.msra.mxu0 %v2236
    %3259 = vmatpush.bf16.msra.mxu0 %v2220
    %3260 = vmatpush.bf16.msra.mxu0 %v2204
    %3261 = vmatpush.bf16.msra.mxu0 %v2188
    %3262 = vmatpush.bf16.msra.mxu0 %v2172
    %3263 = vmatpush.bf16.msra.mxu0 %v2156
    %3264 = vmatpush.bf16.msra.mxu0 %v2140
    %3265 = vmatpush.bf16.msra.mxu0 %v2124
    %3266 = vmatmul.bf16.gmra.mxu0 %v70
    %v3267 = vpop.f32.mrf.mxu0
    %v3268 = vadd.f32 0.0, %v3267
    %v3269 = vpop.f32.mrf.mxu0
    %v3270 = vadd.f32 0.0, %v3269
    %3271 = vdwg.mxu0
    %3272 = vmatpush.bf16.msra.mxu0 %v2364
    %3273 = vmatpush.bf16.msra.mxu0 %v2348
    %3274 = vmatpush.bf16.msra.mxu0 %v2332
    %3275 = vmatpush.bf16.msra.mxu0 %v2316
    %3276 = vmatpush.bf16.msra.mxu0 %v2300
    %3277 = vmatpush.bf16.msra.mxu0 %v2284
    %3278 = vmatpush.bf16.msra.mxu0 %v2268
    %3279 = vmatpush.bf16.msra.mxu0 %v2252
    %3280 = vmatmul.bf16.gmra.mxu0 %v71
    %v3281 = vpop.f32.mrf.mxu0
    %v3282 = vadd.f32 %v3268, %v3281
    %v3283 = vpop.f32.mrf.mxu0
    %v3284 = vadd.f32 %v3270, %v3283
    %3285 = vdwg.mxu0
    %3286 = vmatpush.bf16.msra.mxu0 %v2492
    %3287 = vmatpush.bf16.msra.mxu0 %v2476
    %3288 = vmatpush.bf16.msra.mxu0 %v2460
    %3289 = vmatpush.bf16.msra.mxu0 %v2444
    %3290 = vmatpush.bf16.msra.mxu0 %v2428
    %3291 = vmatpush.bf16.msra.mxu0 %v2412
    %3292 = vmatpush.bf16.msra.mxu0 %v2396
    %3293 = vmatpush.bf16.msra.mxu0 %v2380
    %3294 = vmatmul.bf16.gmra.mxu0 %v72
    %v3295 = vpop.f32.mrf.mxu0
    %v3296 = vadd.f32 %v3282, %v3295
    %v3297 = vpop.f32.mrf.mxu0
    %v3298 = vadd.f32 %v3284, %v3297
    %3299 = vdwg.mxu0
    %3300 = vmatpush.bf16.msra.mxu0 %v2620
    %3301 = vmatpush.bf16.msra.mxu0 %v2604
    %3302 = vmatpush.bf16.msra.mxu0 %v2588
    %3303 = vmatpush.bf16.msra.mxu0 %v2572
    %3304 = vmatpush.bf16.msra.mxu0 %v2556
    %3305 = vmatpush.bf16.msra.mxu0 %v2540
    %3306 = vmatpush.bf16.msra.mxu0 %v2524
    %3307 = vmatpush.bf16.msra.mxu0 %v2508
    %3308 = vmatmul.bf16.gmra.mxu0 %v73
    %v3309 = vpop.f32.mrf.mxu0
    %v3310 = vadd.f32 %v3296, %v3309
    %v3311 = vpop.f32.mrf.mxu0
    %v3312 = vadd.f32 %v3298, %v3311
    %3313 = vdwg.mxu0
    %3314 = vmatpush.bf16.msra.mxu0 %v2237
    %3315 = vmatpush.bf16.msra.mxu0 %v2221
    %3316 = vmatpush.bf16.msra.mxu0 %v2205
    %3317 = vmatpush.bf16.msra.mxu0 %v2189
    %3318 = vmatpush.bf16.msra.mxu0 %v2173
    %3319 = vmatpush.bf16.msra.mxu0 %v2157
    %3320 = vmatpush.bf16.msra.mxu0 %v2141
    %3321 = vmatpush.bf16.msra.mxu0 %v2125
    %3322 = vmatmul.bf16.gmra.mxu0 %v70
    %v3323 = vpop.f32.mrf.mxu0
    %v3324 = vadd.f32 0.0, %v3323
    %v3325 = vpop.f32.mrf.mxu0
    %v3326 = vadd.f32 0.0, %v3325
    %3327 = vdwg.mxu0
    %3328 = vmatpush.bf16.msra.mxu0 %v2365
    %3329 = vmatpush.bf16.msra.mxu0 %v2349
    %3330 = vmatpush.bf16.msra.mxu0 %v2333
    %3331 = vmatpush.bf16.msra.mxu0 %v2317
    %3332 = vmatpush.bf16.msra.mxu0 %v2301
    %3333 = vmatpush.bf16.msra.mxu0 %v2285
    %3334 = vmatpush.bf16.msra.mxu0 %v2269
    %3335 = vmatpush.bf16.msra.mxu0 %v2253
    %3336 = vmatmul.bf16.gmra.mxu0 %v71
    %v3337 = vpop.f32.mrf.mxu0
    %v3338 = vadd.f32 %v3324, %v3337
    %v3339 = vpop.f32.mrf.mxu0
    %v3340 = vadd.f32 %v3326, %v3339
    %3341 = vdwg.mxu0
    %3342 = vmatpush.bf16.msra.mxu0 %v2493
    %3343 = vmatpush.bf16.msra.mxu0 %v2477
    %3344 = vmatpush.bf16.msra.mxu0 %v2461
    %3345 = vmatpush.bf16.msra.mxu0 %v2445
    %3346 = vmatpush.bf16.msra.mxu0 %v2429
    %3347 = vmatpush.bf16.msra.mxu0 %v2413
    %3348 = vmatpush.bf16.msra.mxu0 %v2397
    %3349 = vmatpush.bf16.msra.mxu0 %v2381
    %3350 = vmatmul.bf16.gmra.mxu0 %v72
    %v3351 = vpop.f32.mrf.mxu0
    %v3352 = vadd.f32 %v3338, %v3351
    %v3353 = vpop.f32.mrf.mxu0
    %v3354 = vadd.f32 %v3340, %v3353
    %3355 = vdwg.mxu0
    %3356 = vmatpush.bf16.msra.mxu0 %v2621
    %3357 = vmatpush.bf16.msra.mxu0 %v2605
    %3358 = vmatpush.bf16.msra.mxu0 %v2589
    %3359 = vmatpush.bf16.msra.mxu0 %v2573
    %3360 = vmatpush.bf16.msra.mxu0 %v2557
    %3361 = vmatpush.bf16.msra.mxu0 %v2541
    %3362 = vmatpush.bf16.msra.mxu0 %v2525
    %3363 = vmatpush.bf16.msra.mxu0 %v2509
    %3364 = vmatmul.bf16.gmra.mxu0 %v73
    %v3365 = vpop.f32.mrf.mxu0
    %v3366 = vadd.f32 %v3352, %v3365
    %v3367 = vpop.f32.mrf.mxu0
    %v3368 = vadd.f32 %v3354, %v3367
    %3369 = vdwg.mxu0
    %3370 = vmatpush.bf16.msra.mxu0 %v2238
    %3371 = vmatpush.bf16.msra.mxu0 %v2222
    %3372 = vmatpush.bf16.msra.mxu0 %v2206
    %3373 = vmatpush.bf16.msra.mxu0 %v2190
    %3374 = vmatpush.bf16.msra.mxu0 %v2174
    %3375 = vmatpush.bf16.msra.mxu0 %v2158
    %3376 = vmatpush.bf16.msra.mxu0 %v2142
    %3377 = vmatpush.bf16.msra.mxu0 %v2126
    %3378 = vmatmul.bf16.gmra.mxu0 %v70
    %v3379 = vpop.f32.mrf.mxu0
    %v3380 = vadd.f32 0.0, %v3379
    %v3381 = vpop.f32.mrf.mxu0
    %v3382 = vadd.f32 0.0, %v3381
    %3383 = vdwg.mxu0
    %3384 = vmatpush.bf16.msra.mxu0 %v2366
    %3385 = vmatpush.bf16.msra.mxu0 %v2350
    %3386 = vmatpush.bf16.msra.mxu0 %v2334
    %3387 = vmatpush.bf16.msra.mxu0 %v2318
    %3388 = vmatpush.bf16.msra.mxu0 %v2302
    %3389 = vmatpush.bf16.msra.mxu0 %v2286
    %3390 = vmatpush.bf16.msra.mxu0 %v2270
    %3391 = vmatpush.bf16.msra.mxu0 %v2254
    %3392 = vmatmul.bf16.gmra.mxu0 %v71
    %v3393 = vpop.f32.mrf.mxu0
    %v3394 = vadd.f32 %v3380, %v3393
    %v3395 = vpop.f32.mrf.mxu0
    %v3396 = vadd.f32 %v3382, %v3395
    %3397 = vdwg.mxu0
    %3398 = vmatpush.bf16.msra.mxu0 %v2494
    %3399 = vmatpush.bf16.msra.mxu0 %v2478
    %3400 = vmatpush.bf16.msra.mxu0 %v2462
    %3401 = vmatpush.bf16.msra.mxu0 %v2446
    %3402 = vmatpush.bf16.msra.mxu0 %v2430
    %3403 = vmatpush.bf16.msra.mxu0 %v2414
    %3404 = vmatpush.bf16.msra.mxu0 %v2398
    %3405 = vmatpush.bf16.msra.mxu0 %v2382
    %3406 = vmatmul.bf16.gmra.mxu0 %v72
    %v3407 = vpop.f32.mrf.mxu0
    %v3408 = vadd.f32 %v3394, %v3407
    %v3409 = vpop.f32.mrf.mxu0
    %v3410 = vadd.f32 %v3396, %v3409
    %3411 = vdwg.mxu0
    %3412 = vmatpush.bf16.msra.mxu0 %v2622
    %3413 = vmatpush.bf16.msra.mxu0 %v2606
    %3414 = vmatpush.bf16.msra.mxu0 %v2590
    %3415 = vmatpush.bf16.msra.mxu0 %v2574
    %3416 = vmatpush.bf16.msra.mxu0 %v2558
    %3417 = vmatpush.bf16.msra.mxu0 %v2542
    %3418 = vmatpush.bf16.msra.mxu0 %v2526
    %3419 = vmatpush.bf16.msra.mxu0 %v2510
    %3420 = vmatmul.bf16.gmra.mxu0 %v73
    %v3421 = vpop.f32.mrf.mxu0
    %v3422 = vadd.f32 %v3408, %v3421
    %v3423 = vpop.f32.mrf.mxu0
    %v3424 = vadd.f32 %v3410, %v3423
    %3425 = vdwg.mxu0
    %3426 = vmatpush.bf16.msra.mxu0 %v2239
    %3427 = vmatpush.bf16.msra.mxu0 %v2223
    %3428 = vmatpush.bf16.msra.mxu0 %v2207
    %3429 = vmatpush.bf16.msra.mxu0 %v2191
    %3430 = vmatpush.bf16.msra.mxu0 %v2175
    %3431 = vmatpush.bf16.msra.mxu0 %v2159
    %3432 = vmatpush.bf16.msra.mxu0 %v2143
    %3433 = vmatpush.bf16.msra.mxu0 %v2127
    %3434 = vmatmul.bf16.gmra.mxu0 %v70
    %v3435 = vpop.f32.mrf.mxu0
    %v3436 = vadd.f32 0.0, %v3435
    %v3437 = vpop.f32.mrf.mxu0
    %v3438 = vadd.f32 0.0, %v3437
    %3439 = vdwg.mxu0
    %3440 = vmatpush.bf16.msra.mxu0 %v2367
    %3441 = vmatpush.bf16.msra.mxu0 %v2351
    %3442 = vmatpush.bf16.msra.mxu0 %v2335
    %3443 = vmatpush.bf16.msra.mxu0 %v2319
    %3444 = vmatpush.bf16.msra.mxu0 %v2303
    %3445 = vmatpush.bf16.msra.mxu0 %v2287
    %3446 = vmatpush.bf16.msra.mxu0 %v2271
    %3447 = vmatpush.bf16.msra.mxu0 %v2255
    %3448 = vmatmul.bf16.gmra.mxu0 %v71
    %v3449 = vpop.f32.mrf.mxu0
    %v3450 = vadd.f32 %v3436, %v3449
    %v3451 = vpop.f32.mrf.mxu0
    %v3452 = vadd.f32 %v3438, %v3451
    %3453 = vdwg.mxu0
    %3454 = vmatpush.bf16.msra.mxu0 %v2495
    %3455 = vmatpush.bf16.msra.mxu0 %v2479
    %3456 = vmatpush.bf16.msra.mxu0 %v2463
    %3457 = vmatpush.bf16.msra.mxu0 %v2447
    %3458 = vmatpush.bf16.msra.mxu0 %v2431
    %3459 = vmatpush.bf16.msra.mxu0 %v2415
    %3460 = vmatpush.bf16.msra.mxu0 %v2399
    %3461 = vmatpush.bf16.msra.mxu0 %v2383
    %3462 = vmatmul.bf16.gmra.mxu0 %v72
    %v3463 = vpop.f32.mrf.mxu0
    %v3464 = vadd.f32 %v3450, %v3463
    %v3465 = vpop.f32.mrf.mxu0
    %v3466 = vadd.f32 %v3452, %v3465
    %3467 = vdwg.mxu0
    %3468 = vmatpush.bf16.msra.mxu0 %v2623
    %3469 = vmatpush.bf16.msra.mxu0 %v2607
    %3470 = vmatpush.bf16.msra.mxu0 %v2591
    %3471 = vmatpush.bf16.msra.mxu0 %v2575
    %3472 = vmatpush.bf16.msra.mxu0 %v2559
    %3473 = vmatpush.bf16.msra.mxu0 %v2543
    %3474 = vmatpush.bf16.msra.mxu0 %v2527
    %3475 = vmatpush.bf16.msra.mxu0 %v2511
    %3476 = vmatmul.bf16.gmra.mxu0 %v73
    %v3477 = vpop.f32.mrf.mxu0
    %v3478 = vadd.f32 %v3464, %v3477
    %v3479 = vpop.f32.mrf.mxu0
    %v3480 = vadd.f32 %v3466, %v3479
    %3481 = vdwg.mxu0
    %3482 = vmatpush.bf16.msra.mxu0 %v2240
    %3483 = vmatpush.bf16.msra.mxu0 %v2224
    %3484 = vmatpush.bf16.msra.mxu0 %v2208
    %3485 = vmatpush.bf16.msra.mxu0 %v2192
    %3486 = vmatpush.bf16.msra.mxu0 %v2176
    %3487 = vmatpush.bf16.msra.mxu0 %v2160
    %3488 = vmatpush.bf16.msra.mxu0 %v2144
    %3489 = vmatpush.bf16.msra.mxu0 %v2128
    %3490 = vmatmul.bf16.gmra.mxu0 %v70
    %v3491 = vpop.f32.mrf.mxu0
    %v3492 = vadd.f32 0.0, %v3491
    %v3493 = vpop.f32.mrf.mxu0
    %v3494 = vadd.f32 0.0, %v3493
    %3495 = vdwg.mxu0
    %3496 = vmatpush.bf16.msra.mxu0 %v2368
    %3497 = vmatpush.bf16.msra.mxu0 %v2352
    %3498 = vmatpush.bf16.msra.mxu0 %v2336
    %3499 = vmatpush.bf16.msra.mxu0 %v2320
    %3500 = vmatpush.bf16.msra.mxu0 %v2304
    %3501 = vmatpush.bf16.msra.mxu0 %v2288
    %3502 = vmatpush.bf16.msra.mxu0 %v2272
    %3503 = vmatpush.bf16.msra.mxu0 %v2256
    %3504 = vmatmul.bf16.gmra.mxu0 %v71
    %v3505 = vpop.f32.mrf.mxu0
    %v3506 = vadd.f32 %v3492, %v3505
    %v3507 = vpop.f32.mrf.mxu0
    %v3508 = vadd.f32 %v3494, %v3507
    %3509 = vdwg.mxu0
    %3510 = vmatpush.bf16.msra.mxu0 %v2496
    %3511 = vmatpush.bf16.msra.mxu0 %v2480
    %3512 = vmatpush.bf16.msra.mxu0 %v2464
    %3513 = vmatpush.bf16.msra.mxu0 %v2448
    %3514 = vmatpush.bf16.msra.mxu0 %v2432
    %3515 = vmatpush.bf16.msra.mxu0 %v2416
    %3516 = vmatpush.bf16.msra.mxu0 %v2400
    %3517 = vmatpush.bf16.msra.mxu0 %v2384
    %3518 = vmatmul.bf16.gmra.mxu0 %v72
    %v3519 = vpop.f32.mrf.mxu0
    %v3520 = vadd.f32 %v3506, %v3519
    %v3521 = vpop.f32.mrf.mxu0
    %v3522 = vadd.f32 %v3508, %v3521
    %3523 = vdwg.mxu0
    %3524 = vmatpush.bf16.msra.mxu0 %v2624
    %3525 = vmatpush.bf16.msra.mxu0 %v2608
    %3526 = vmatpush.bf16.msra.mxu0 %v2592
    %3527 = vmatpush.bf16.msra.mxu0 %v2576
    %3528 = vmatpush.bf16.msra.mxu0 %v2560
    %3529 = vmatpush.bf16.msra.mxu0 %v2544
    %3530 = vmatpush.bf16.msra.mxu0 %v2528
    %3531 = vmatpush.bf16.msra.mxu0 %v2512
    %3532 = vmatmul.bf16.gmra.mxu0 %v73
    %v3533 = vpop.f32.mrf.mxu0
    %v3534 = vadd.f32 %v3520, %v3533
    %v3535 = vpop.f32.mrf.mxu0
    %v3536 = vadd.f32 %v3522, %v3535
    %3537 = vdwg.mxu0
    %3538 = vmatpush.bf16.msra.mxu0 %v2241
    %3539 = vmatpush.bf16.msra.mxu0 %v2225
    %3540 = vmatpush.bf16.msra.mxu0 %v2209
    %3541 = vmatpush.bf16.msra.mxu0 %v2193
    %3542 = vmatpush.bf16.msra.mxu0 %v2177
    %3543 = vmatpush.bf16.msra.mxu0 %v2161
    %3544 = vmatpush.bf16.msra.mxu0 %v2145
    %3545 = vmatpush.bf16.msra.mxu0 %v2129
    %3546 = vmatmul.bf16.gmra.mxu0 %v70
    %v3547 = vpop.f32.mrf.mxu0
    %v3548 = vadd.f32 0.0, %v3547
    %v3549 = vpop.f32.mrf.mxu0
    %v3550 = vadd.f32 0.0, %v3549
    %3551 = vdwg.mxu0
    %3552 = vmatpush.bf16.msra.mxu0 %v2369
    %3553 = vmatpush.bf16.msra.mxu0 %v2353
    %3554 = vmatpush.bf16.msra.mxu0 %v2337
    %3555 = vmatpush.bf16.msra.mxu0 %v2321
    %3556 = vmatpush.bf16.msra.mxu0 %v2305
    %3557 = vmatpush.bf16.msra.mxu0 %v2289
    %3558 = vmatpush.bf16.msra.mxu0 %v2273
    %3559 = vmatpush.bf16.msra.mxu0 %v2257
    %3560 = vmatmul.bf16.gmra.mxu0 %v71
    %v3561 = vpop.f32.mrf.mxu0
    %v3562 = vadd.f32 %v3548, %v3561
    %v3563 = vpop.f32.mrf.mxu0
    %v3564 = vadd.f32 %v3550, %v3563
    %3565 = vdwg.mxu0
    %3566 = vmatpush.bf16.msra.mxu0 %v2497
    %3567 = vmatpush.bf16.msra.mxu0 %v2481
    %3568 = vmatpush.bf16.msra.mxu0 %v2465
    %3569 = vmatpush.bf16.msra.mxu0 %v2449
    %3570 = vmatpush.bf16.msra.mxu0 %v2433
    %3571 = vmatpush.bf16.msra.mxu0 %v2417
    %3572 = vmatpush.bf16.msra.mxu0 %v2401
    %3573 = vmatpush.bf16.msra.mxu0 %v2385
    %3574 = vmatmul.bf16.gmra.mxu0 %v72
    %v3575 = vpop.f32.mrf.mxu0
    %v3576 = vadd.f32 %v3562, %v3575
    %v3577 = vpop.f32.mrf.mxu0
    %v3578 = vadd.f32 %v3564, %v3577
    %3579 = vdwg.mxu0
    %3580 = vmatpush.bf16.msra.mxu0 %v2625
    %3581 = vmatpush.bf16.msra.mxu0 %v2609
    %3582 = vmatpush.bf16.msra.mxu0 %v2593
    %3583 = vmatpush.bf16.msra.mxu0 %v2577
    %3584 = vmatpush.bf16.msra.mxu0 %v2561
    %3585 = vmatpush.bf16.msra.mxu0 %v2545
    %3586 = vmatpush.bf16.msra.mxu0 %v2529
    %3587 = vmatpush.bf16.msra.mxu0 %v2513
    %3588 = vmatmul.bf16.gmra.mxu0 %v73
    %v3589 = vpop.f32.mrf.mxu0
    %v3590 = vadd.f32 %v3576, %v3589
    %v3591 = vpop.f32.mrf.mxu0
    %v3592 = vadd.f32 %v3578, %v3591
    %3593 = vdwg.mxu0
    %3594 = vmatpush.bf16.msra.mxu0 %v2242
    %3595 = vmatpush.bf16.msra.mxu0 %v2226
    %3596 = vmatpush.bf16.msra.mxu0 %v2210
    %3597 = vmatpush.bf16.msra.mxu0 %v2194
    %3598 = vmatpush.bf16.msra.mxu0 %v2178
    %3599 = vmatpush.bf16.msra.mxu0 %v2162
    %3600 = vmatpush.bf16.msra.mxu0 %v2146
    %3601 = vmatpush.bf16.msra.mxu0 %v2130
    %3602 = vmatmul.bf16.gmra.mxu0 %v70
    %v3603 = vpop.f32.mrf.mxu0
    %v3604 = vadd.f32 0.0, %v3603
    %v3605 = vpop.f32.mrf.mxu0
    %v3606 = vadd.f32 0.0, %v3605
    %3607 = vdwg.mxu0
    %3608 = vmatpush.bf16.msra.mxu0 %v2370
    %3609 = vmatpush.bf16.msra.mxu0 %v2354
    %3610 = vmatpush.bf16.msra.mxu0 %v2338
    %3611 = vmatpush.bf16.msra.mxu0 %v2322
    %3612 = vmatpush.bf16.msra.mxu0 %v2306
    %3613 = vmatpush.bf16.msra.mxu0 %v2290
    %3614 = vmatpush.bf16.msra.mxu0 %v2274
    %3615 = vmatpush.bf16.msra.mxu0 %v2258
    %3616 = vmatmul.bf16.gmra.mxu0 %v71
    %v3617 = vpop.f32.mrf.mxu0
    %v3618 = vadd.f32 %v3604, %v3617
    %v3619 = vpop.f32.mrf.mxu0
    %v3620 = vadd.f32 %v3606, %v3619
    %3621 = vdwg.mxu0
    %3622 = vmatpush.bf16.msra.mxu0 %v2498
    %3623 = vmatpush.bf16.msra.mxu0 %v2482
    %3624 = vmatpush.bf16.msra.mxu0 %v2466
    %3625 = vmatpush.bf16.msra.mxu0 %v2450
    %3626 = vmatpush.bf16.msra.mxu0 %v2434
    %3627 = vmatpush.bf16.msra.mxu0 %v2418
    %3628 = vmatpush.bf16.msra.mxu0 %v2402
    %3629 = vmatpush.bf16.msra.mxu0 %v2386
    %3630 = vmatmul.bf16.gmra.mxu0 %v72
    %v3631 = vpop.f32.mrf.mxu0
    %v3632 = vadd.f32 %v3618, %v3631
    %v3633 = vpop.f32.mrf.mxu0
    %v3634 = vadd.f32 %v3620, %v3633
    %3635 = vdwg.mxu0
    %3636 = vmatpush.bf16.msra.mxu0 %v2626
    %3637 = vmatpush.bf16.msra.mxu0 %v2610
    %3638 = vmatpush.bf16.msra.mxu0 %v2594
    %3639 = vmatpush.bf16.msra.mxu0 %v2578
    %3640 = vmatpush.bf16.msra.mxu0 %v2562
    %3641 = vmatpush.bf16.msra.mxu0 %v2546
    %3642 = vmatpush.bf16.msra.mxu0 %v2530
    %3643 = vmatpush.bf16.msra.mxu0 %v2514
    %3644 = vmatmul.bf16.gmra.mxu0 %v73
    %v3645 = vpop.f32.mrf.mxu0
    %v3646 = vadd.f32 %v3632, %v3645
    %v3647 = vpop.f32.mrf.mxu0
    %v3648 = vadd.f32 %v3634, %v3647
    %3649 = vdwg.mxu0
    %3650 = vmatpush.bf16.msra.mxu0 %v2243
    %3651 = vmatpush.bf16.msra.mxu0 %v2227
    %3652 = vmatpush.bf16.msra.mxu0 %v2211
    %3653 = vmatpush.bf16.msra.mxu0 %v2195
    %3654 = vmatpush.bf16.msra.mxu0 %v2179
    %3655 = vmatpush.bf16.msra.mxu0 %v2163
    %3656 = vmatpush.bf16.msra.mxu0 %v2147
    %3657 = vmatpush.bf16.msra.mxu0 %v2131
    %3658 = vmatmul.bf16.gmra.mxu0 %v70
    %v3659 = vpop.f32.mrf.mxu0
    %v3660 = vadd.f32 0.0, %v3659
    %v3661 = vpop.f32.mrf.mxu0
    %v3662 = vadd.f32 0.0, %v3661
    %3663 = vdwg.mxu0
    %3664 = vmatpush.bf16.msra.mxu0 %v2371
    %3665 = vmatpush.bf16.msra.mxu0 %v2355
    %3666 = vmatpush.bf16.msra.mxu0 %v2339
    %3667 = vmatpush.bf16.msra.mxu0 %v2323
    %3668 = vmatpush.bf16.msra.mxu0 %v2307
    %3669 = vmatpush.bf16.msra.mxu0 %v2291
    %3670 = vmatpush.bf16.msra.mxu0 %v2275
    %3671 = vmatpush.bf16.msra.mxu0 %v2259
    %3672 = vmatmul.bf16.gmra.mxu0 %v71
    %v3673 = vpop.f32.mrf.mxu0
    %v3674 = vadd.f32 %v3660, %v3673
    %v3675 = vpop.f32.mrf.mxu0
    %v3676 = vadd.f32 %v3662, %v3675
    %3677 = vdwg.mxu0
    %3678 = vmatpush.bf16.msra.mxu0 %v2499
    %3679 = vmatpush.bf16.msra.mxu0 %v2483
    %3680 = vmatpush.bf16.msra.mxu0 %v2467
    %3681 = vmatpush.bf16.msra.mxu0 %v2451
    %3682 = vmatpush.bf16.msra.mxu0 %v2435
    %3683 = vmatpush.bf16.msra.mxu0 %v2419
    %3684 = vmatpush.bf16.msra.mxu0 %v2403
    %3685 = vmatpush.bf16.msra.mxu0 %v2387
    %3686 = vmatmul.bf16.gmra.mxu0 %v72
    %v3687 = vpop.f32.mrf.mxu0
    %v3688 = vadd.f32 %v3674, %v3687
    %v3689 = vpop.f32.mrf.mxu0
    %v3690 = vadd.f32 %v3676, %v3689
    %3691 = vdwg.mxu0
    %3692 = vmatpush.bf16.msra.mxu0 %v2627
    %3693 = vmatpush.bf16.msra.mxu0 %v2611
    %3694 = vmatpush.bf16.msra.mxu0 %v2595
    %3695 = vmatpush.bf16.msra.mxu0 %v2579
    %3696 = vmatpush.bf16.msra.mxu0 %v2563
    %3697 = vmatpush.bf16.msra.mxu0 %v2547
    %3698 = vmatpush.bf16.msra.mxu0 %v2531
    %3699 = vmatpush.bf16.msra.mxu0 %v2515
    %3700 = vmatmul.bf16.gmra.mxu0 %v73
    %v3701 = vpop.f32.mrf.mxu0
    %v3702 = vadd.f32 %v3688, %v3701
    %v3703 = vpop.f32.mrf.mxu0
    %v3704 = vadd.f32 %v3690, %v3703
    %3705 = vdwg.mxu0
    %3706 = vmatpush.bf16.msra.mxu0 %v2244
    %3707 = vmatpush.bf16.msra.mxu0 %v2228
    %3708 = vmatpush.bf16.msra.mxu0 %v2212
    %3709 = vmatpush.bf16.msra.mxu0 %v2196
    %3710 = vmatpush.bf16.msra.mxu0 %v2180
    %3711 = vmatpush.bf16.msra.mxu0 %v2164
    %3712 = vmatpush.bf16.msra.mxu0 %v2148
    %3713 = vmatpush.bf16.msra.mxu0 %v2132
    %3714 = vmatmul.bf16.gmra.mxu0 %v70
    %v3715 = vpop.f32.mrf.mxu0
    %v3716 = vadd.f32 0.0, %v3715
    %v3717 = vpop.f32.mrf.mxu0
    %v3718 = vadd.f32 0.0, %v3717
    %3719 = vdwg.mxu0
    %3720 = vmatpush.bf16.msra.mxu0 %v2372
    %3721 = vmatpush.bf16.msra.mxu0 %v2356
    %3722 = vmatpush.bf16.msra.mxu0 %v2340
    %3723 = vmatpush.bf16.msra.mxu0 %v2324
    %3724 = vmatpush.bf16.msra.mxu0 %v2308
    %3725 = vmatpush.bf16.msra.mxu0 %v2292
    %3726 = vmatpush.bf16.msra.mxu0 %v2276
    %3727 = vmatpush.bf16.msra.mxu0 %v2260
    %3728 = vmatmul.bf16.gmra.mxu0 %v71
    %v3729 = vpop.f32.mrf.mxu0
    %v3730 = vadd.f32 %v3716, %v3729
    %v3731 = vpop.f32.mrf.mxu0
    %v3732 = vadd.f32 %v3718, %v3731
    %3733 = vdwg.mxu0
    %3734 = vmatpush.bf16.msra.mxu0 %v2500
    %3735 = vmatpush.bf16.msra.mxu0 %v2484
    %3736 = vmatpush.bf16.msra.mxu0 %v2468
    %3737 = vmatpush.bf16.msra.mxu0 %v2452
    %3738 = vmatpush.bf16.msra.mxu0 %v2436
    %3739 = vmatpush.bf16.msra.mxu0 %v2420
    %3740 = vmatpush.bf16.msra.mxu0 %v2404
    %3741 = vmatpush.bf16.msra.mxu0 %v2388
    %3742 = vmatmul.bf16.gmra.mxu0 %v72
    %v3743 = vpop.f32.mrf.mxu0
    %v3744 = vadd.f32 %v3730, %v3743
    %v3745 = vpop.f32.mrf.mxu0
    %v3746 = vadd.f32 %v3732, %v3745
    %3747 = vdwg.mxu0
    %3748 = vmatpush.bf16.msra.mxu0 %v2628
    %3749 = vmatpush.bf16.msra.mxu0 %v2612
    %3750 = vmatpush.bf16.msra.mxu0 %v2596
    %3751 = vmatpush.bf16.msra.mxu0 %v2580
    %3752 = vmatpush.bf16.msra.mxu0 %v2564
    %3753 = vmatpush.bf16.msra.mxu0 %v2548
    %3754 = vmatpush.bf16.msra.mxu0 %v2532
    %3755 = vmatpush.bf16.msra.mxu0 %v2516
    %3756 = vmatmul.bf16.gmra.mxu0 %v73
    %v3757 = vpop.f32.mrf.mxu0
    %v3758 = vadd.f32 %v3744, %v3757
    %v3759 = vpop.f32.mrf.mxu0
    %v3760 = vadd.f32 %v3746, %v3759
    %3761 = vdwg.mxu0
    %3762 = vmatpush.bf16.msra.mxu0 %v2245
    %3763 = vmatpush.bf16.msra.mxu0 %v2229
    %3764 = vmatpush.bf16.msra.mxu0 %v2213
    %3765 = vmatpush.bf16.msra.mxu0 %v2197
    %3766 = vmatpush.bf16.msra.mxu0 %v2181
    %3767 = vmatpush.bf16.msra.mxu0 %v2165
    %3768 = vmatpush.bf16.msra.mxu0 %v2149
    %3769 = vmatpush.bf16.msra.mxu0 %v2133
    %3770 = vmatmul.bf16.gmra.mxu0 %v70
    %v3771 = vpop.f32.mrf.mxu0
    %v3772 = vadd.f32 0.0, %v3771
    %v3773 = vpop.f32.mrf.mxu0
    %v3774 = vadd.f32 0.0, %v3773
    %3775 = vdwg.mxu0
    %3776 = vmatpush.bf16.msra.mxu0 %v2373
    %3777 = vmatpush.bf16.msra.mxu0 %v2357
    %3778 = vmatpush.bf16.msra.mxu0 %v2341
    %3779 = vmatpush.bf16.msra.mxu0 %v2325
    %3780 = vmatpush.bf16.msra.mxu0 %v2309
    %3781 = vmatpush.bf16.msra.mxu0 %v2293
    %3782 = vmatpush.bf16.msra.mxu0 %v2277
    %3783 = vmatpush.bf16.msra.mxu0 %v2261
    %3784 = vmatmul.bf16.gmra.mxu0 %v71
    %v3785 = vpop.f32.mrf.mxu0
    %v3786 = vadd.f32 %v3772, %v3785
    %v3787 = vpop.f32.mrf.mxu0
    %v3788 = vadd.f32 %v3774, %v3787
    %3789 = vdwg.mxu0
    %3790 = vmatpush.bf16.msra.mxu0 %v2501
    %3791 = vmatpush.bf16.msra.mxu0 %v2485
    %3792 = vmatpush.bf16.msra.mxu0 %v2469
    %3793 = vmatpush.bf16.msra.mxu0 %v2453
    %3794 = vmatpush.bf16.msra.mxu0 %v2437
    %3795 = vmatpush.bf16.msra.mxu0 %v2421
    %3796 = vmatpush.bf16.msra.mxu0 %v2405
    %3797 = vmatpush.bf16.msra.mxu0 %v2389
    %3798 = vmatmul.bf16.gmra.mxu0 %v72
    %v3799 = vpop.f32.mrf.mxu0
    %v3800 = vadd.f32 %v3786, %v3799
    %v3801 = vpop.f32.mrf.mxu0
    %v3802 = vadd.f32 %v3788, %v3801
    %3803 = vdwg.mxu0
    %3804 = vmatpush.bf16.msra.mxu0 %v2629
    %3805 = vmatpush.bf16.msra.mxu0 %v2613
    %3806 = vmatpush.bf16.msra.mxu0 %v2597
    %3807 = vmatpush.bf16.msra.mxu0 %v2581
    %3808 = vmatpush.bf16.msra.mxu0 %v2565
    %3809 = vmatpush.bf16.msra.mxu0 %v2549
    %3810 = vmatpush.bf16.msra.mxu0 %v2533
    %3811 = vmatpush.bf16.msra.mxu0 %v2517
    %3812 = vmatmul.bf16.gmra.mxu0 %v73
    %v3813 = vpop.f32.mrf.mxu0
    %v3814 = vadd.f32 %v3800, %v3813
    %v3815 = vpop.f32.mrf.mxu0
    %v3816 = vadd.f32 %v3802, %v3815
    %3817 = vdwg.mxu0
    %3818 = vmatpush.bf16.msra.mxu0 %v2246
    %3819 = vmatpush.bf16.msra.mxu0 %v2230
    %3820 = vmatpush.bf16.msra.mxu0 %v2214
    %3821 = vmatpush.bf16.msra.mxu0 %v2198
    %3822 = vmatpush.bf16.msra.mxu0 %v2182
    %3823 = vmatpush.bf16.msra.mxu0 %v2166
    %3824 = vmatpush.bf16.msra.mxu0 %v2150
    %3825 = vmatpush.bf16.msra.mxu0 %v2134
    %3826 = vmatmul.bf16.gmra.mxu0 %v70
    %v3827 = vpop.f32.mrf.mxu0
    %v3828 = vadd.f32 0.0, %v3827
    %v3829 = vpop.f32.mrf.mxu0
    %v3830 = vadd.f32 0.0, %v3829
    %3831 = vdwg.mxu0
    %3832 = vmatpush.bf16.msra.mxu0 %v2374
    %3833 = vmatpush.bf16.msra.mxu0 %v2358
    %3834 = vmatpush.bf16.msra.mxu0 %v2342
    %3835 = vmatpush.bf16.msra.mxu0 %v2326
    %3836 = vmatpush.bf16.msra.mxu0 %v2310
    %3837 = vmatpush.bf16.msra.mxu0 %v2294
    %3838 = vmatpush.bf16.msra.mxu0 %v2278
    %3839 = vmatpush.bf16.msra.mxu0 %v2262
    %3840 = vmatmul.bf16.gmra.mxu0 %v71
    %v3841 = vpop.f32.mrf.mxu0
    %v3842 = vadd.f32 %v3828, %v3841
    %v3843 = vpop.f32.mrf.mxu0
    %v3844 = vadd.f32 %v3830, %v3843
    %3845 = vdwg.mxu0
    %3846 = vmatpush.bf16.msra.mxu0 %v2502
    %3847 = vmatpush.bf16.msra.mxu0 %v2486
    %3848 = vmatpush.bf16.msra.mxu0 %v2470
    %3849 = vmatpush.bf16.msra.mxu0 %v2454
    %3850 = vmatpush.bf16.msra.mxu0 %v2438
    %3851 = vmatpush.bf16.msra.mxu0 %v2422
    %3852 = vmatpush.bf16.msra.mxu0 %v2406
    %3853 = vmatpush.bf16.msra.mxu0 %v2390
    %3854 = vmatmul.bf16.gmra.mxu0 %v72
    %v3855 = vpop.f32.mrf.mxu0
    %v3856 = vadd.f32 %v3842, %v3855
    %v3857 = vpop.f32.mrf.mxu0
    %v3858 = vadd.f32 %v3844, %v3857
    %3859 = vdwg.mxu0
    %3860 = vmatpush.bf16.msra.mxu0 %v2630
    %3861 = vmatpush.bf16.msra.mxu0 %v2614
    %3862 = vmatpush.bf16.msra.mxu0 %v2598
    %3863 = vmatpush.bf16.msra.mxu0 %v2582
    %3864 = vmatpush.bf16.msra.mxu0 %v2566
    %3865 = vmatpush.bf16.msra.mxu0 %v2550
    %3866 = vmatpush.bf16.msra.mxu0 %v2534
    %3867 = vmatpush.bf16.msra.mxu0 %v2518
    %3868 = vmatmul.bf16.gmra.mxu0 %v73
    %v3869 = vpop.f32.mrf.mxu0
    %v3870 = vadd.f32 %v3856, %v3869
    %v3871 = vpop.f32.mrf.mxu0
    %v3872 = vadd.f32 %v3858, %v3871
    %3873 = vdwg.mxu0
    %3874 = vmatpush.bf16.msra.mxu0 %v2247
    %3875 = vmatpush.bf16.msra.mxu0 %v2231
    %3876 = vmatpush.bf16.msra.mxu0 %v2215
    %3877 = vmatpush.bf16.msra.mxu0 %v2199
    %3878 = vmatpush.bf16.msra.mxu0 %v2183
    %3879 = vmatpush.bf16.msra.mxu0 %v2167
    %3880 = vmatpush.bf16.msra.mxu0 %v2151
    %3881 = vmatpush.bf16.msra.mxu0 %v2135
    %3882 = vmatmul.bf16.gmra.mxu0 %v70
    %v3883 = vpop.f32.mrf.mxu0
    %v3884 = vadd.f32 0.0, %v3883
    %v3885 = vpop.f32.mrf.mxu0
    %v3886 = vadd.f32 0.0, %v3885
    %3887 = vdwg.mxu0
    %3888 = vmatpush.bf16.msra.mxu0 %v2375
    %3889 = vmatpush.bf16.msra.mxu0 %v2359
    %3890 = vmatpush.bf16.msra.mxu0 %v2343
    %3891 = vmatpush.bf16.msra.mxu0 %v2327
    %3892 = vmatpush.bf16.msra.mxu0 %v2311
    %3893 = vmatpush.bf16.msra.mxu0 %v2295
    %3894 = vmatpush.bf16.msra.mxu0 %v2279
    %3895 = vmatpush.bf16.msra.mxu0 %v2263
    %3896 = vmatmul.bf16.gmra.mxu0 %v71
    %v3897 = vpop.f32.mrf.mxu0
    %v3898 = vadd.f32 %v3884, %v3897
    %v3899 = vpop.f32.mrf.mxu0
    %v3900 = vadd.f32 %v3886, %v3899
    %3901 = vdwg.mxu0
    %3902 = vmatpush.bf16.msra.mxu0 %v2503
    %3903 = vmatpush.bf16.msra.mxu0 %v2487
    %3904 = vmatpush.bf16.msra.mxu0 %v2471
    %3905 = vmatpush.bf16.msra.mxu0 %v2455
    %3906 = vmatpush.bf16.msra.mxu0 %v2439
    %3907 = vmatpush.bf16.msra.mxu0 %v2423
    %3908 = vmatpush.bf16.msra.mxu0 %v2407
    %3909 = vmatpush.bf16.msra.mxu0 %v2391
    %3910 = vmatmul.bf16.gmra.mxu0 %v72
    %v3911 = vpop.f32.mrf.mxu0
    %v3912 = vadd.f32 %v3898, %v3911
    %v3913 = vpop.f32.mrf.mxu0
    %v3914 = vadd.f32 %v3900, %v3913
    %3915 = vdwg.mxu0
    %3916 = vmatpush.bf16.msra.mxu0 %v2631
    %3917 = vmatpush.bf16.msra.mxu0 %v2615
    %3918 = vmatpush.bf16.msra.mxu0 %v2599
    %3919 = vmatpush.bf16.msra.mxu0 %v2583
    %3920 = vmatpush.bf16.msra.mxu0 %v2567
    %3921 = vmatpush.bf16.msra.mxu0 %v2551
    %3922 = vmatpush.bf16.msra.mxu0 %v2535
    %3923 = vmatpush.bf16.msra.mxu0 %v2519
    %3924 = vmatmul.bf16.gmra.mxu0 %v73
    %v3925 = vpop.f32.mrf.mxu0
    %v3926 = vadd.f32 %v3912, %v3925
    %v3927 = vpop.f32.mrf.mxu0
    %v3928 = vadd.f32 %v3914, %v3927
    %3929 = vdwg.mxu0
    %3930 = vmatpush.bf16.msra.mxu0 %v2248
    %3931 = vmatpush.bf16.msra.mxu0 %v2232
    %3932 = vmatpush.bf16.msra.mxu0 %v2216
    %3933 = vmatpush.bf16.msra.mxu0 %v2200
    %3934 = vmatpush.bf16.msra.mxu0 %v2184
    %3935 = vmatpush.bf16.msra.mxu0 %v2168
    %3936 = vmatpush.bf16.msra.mxu0 %v2152
    %3937 = vmatpush.bf16.msra.mxu0 %v2136
    %3938 = vmatmul.bf16.gmra.mxu0 %v70
    %v3939 = vpop.f32.mrf.mxu0
    %v3940 = vadd.f32 0.0, %v3939
    %v3941 = vpop.f32.mrf.mxu0
    %v3942 = vadd.f32 0.0, %v3941
    %3943 = vdwg.mxu0
    %3944 = vmatpush.bf16.msra.mxu0 %v2376
    %3945 = vmatpush.bf16.msra.mxu0 %v2360
    %3946 = vmatpush.bf16.msra.mxu0 %v2344
    %3947 = vmatpush.bf16.msra.mxu0 %v2328
    %3948 = vmatpush.bf16.msra.mxu0 %v2312
    %3949 = vmatpush.bf16.msra.mxu0 %v2296
    %3950 = vmatpush.bf16.msra.mxu0 %v2280
    %3951 = vmatpush.bf16.msra.mxu0 %v2264
    %3952 = vmatmul.bf16.gmra.mxu0 %v71
    %v3953 = vpop.f32.mrf.mxu0
    %v3954 = vadd.f32 %v3940, %v3953
    %v3955 = vpop.f32.mrf.mxu0
    %v3956 = vadd.f32 %v3942, %v3955
    %3957 = vdwg.mxu0
    %3958 = vmatpush.bf16.msra.mxu0 %v2504
    %3959 = vmatpush.bf16.msra.mxu0 %v2488
    %3960 = vmatpush.bf16.msra.mxu0 %v2472
    %3961 = vmatpush.bf16.msra.mxu0 %v2456
    %3962 = vmatpush.bf16.msra.mxu0 %v2440
    %3963 = vmatpush.bf16.msra.mxu0 %v2424
    %3964 = vmatpush.bf16.msra.mxu0 %v2408
    %3965 = vmatpush.bf16.msra.mxu0 %v2392
    %3966 = vmatmul.bf16.gmra.mxu0 %v72
    %v3967 = vpop.f32.mrf.mxu0
    %v3968 = vadd.f32 %v3954, %v3967
    %v3969 = vpop.f32.mrf.mxu0
    %v3970 = vadd.f32 %v3956, %v3969
    %3971 = vdwg.mxu0
    %3972 = vmatpush.bf16.msra.mxu0 %v2632
    %3973 = vmatpush.bf16.msra.mxu0 %v2616
    %3974 = vmatpush.bf16.msra.mxu0 %v2600
    %3975 = vmatpush.bf16.msra.mxu0 %v2584
    %3976 = vmatpush.bf16.msra.mxu0 %v2568
    %3977 = vmatpush.bf16.msra.mxu0 %v2552
    %3978 = vmatpush.bf16.msra.mxu0 %v2536
    %3979 = vmatpush.bf16.msra.mxu0 %v2520
    %3980 = vmatmul.bf16.gmra.mxu0 %v73
    %v3981 = vpop.f32.mrf.mxu0
    %v3982 = vadd.f32 %v3968, %v3981
    %v3983 = vpop.f32.mrf.mxu0
    %v3984 = vadd.f32 %v3970, %v3983
    %3985 = vdwg.mxu0
    %3986 = vmatpush.bf16.msra.mxu0 %v2249
    %3987 = vmatpush.bf16.msra.mxu0 %v2233
    %3988 = vmatpush.bf16.msra.mxu0 %v2217
    %3989 = vmatpush.bf16.msra.mxu0 %v2201
    %3990 = vmatpush.bf16.msra.mxu0 %v2185
    %3991 = vmatpush.bf16.msra.mxu0 %v2169
    %3992 = vmatpush.bf16.msra.mxu0 %v2153
    %3993 = vmatpush.bf16.msra.mxu0 %v2137
    %3994 = vmatmul.bf16.gmra.mxu0 %v70
    %v3995 = vpop.f32.mrf.mxu0
    %v3996 = vadd.f32 0.0, %v3995
    %v3997 = vpop.f32.mrf.mxu0
    %v3998 = vadd.f32 0.0, %v3997
    %3999 = vdwg.mxu0
    %4000 = vmatpush.bf16.msra.mxu0 %v2377
    %4001 = vmatpush.bf16.msra.mxu0 %v2361
    %4002 = vmatpush.bf16.msra.mxu0 %v2345
    %4003 = vmatpush.bf16.msra.mxu0 %v2329
    %4004 = vmatpush.bf16.msra.mxu0 %v2313
    %4005 = vmatpush.bf16.msra.mxu0 %v2297
    %4006 = vmatpush.bf16.msra.mxu0 %v2281
    %4007 = vmatpush.bf16.msra.mxu0 %v2265
    %4008 = vmatmul.bf16.gmra.mxu0 %v71
    %v4009 = vpop.f32.mrf.mxu0
    %v4010 = vadd.f32 %v3996, %v4009
    %v4011 = vpop.f32.mrf.mxu0
    %v4012 = vadd.f32 %v3998, %v4011
    %4013 = vdwg.mxu0
    %4014 = vmatpush.bf16.msra.mxu0 %v2505
    %4015 = vmatpush.bf16.msra.mxu0 %v2489
    %4016 = vmatpush.bf16.msra.mxu0 %v2473
    %4017 = vmatpush.bf16.msra.mxu0 %v2457
    %4018 = vmatpush.bf16.msra.mxu0 %v2441
    %4019 = vmatpush.bf16.msra.mxu0 %v2425
    %4020 = vmatpush.bf16.msra.mxu0 %v2409
    %4021 = vmatpush.bf16.msra.mxu0 %v2393
    %4022 = vmatmul.bf16.gmra.mxu0 %v72
    %v4023 = vpop.f32.mrf.mxu0
    %v4024 = vadd.f32 %v4010, %v4023
    %v4025 = vpop.f32.mrf.mxu0
    %v4026 = vadd.f32 %v4012, %v4025
    %4027 = vdwg.mxu0
    %4028 = vmatpush.bf16.msra.mxu0 %v2633
    %4029 = vmatpush.bf16.msra.mxu0 %v2617
    %4030 = vmatpush.bf16.msra.mxu0 %v2601
    %4031 = vmatpush.bf16.msra.mxu0 %v2585
    %4032 = vmatpush.bf16.msra.mxu0 %v2569
    %4033 = vmatpush.bf16.msra.mxu0 %v2553
    %4034 = vmatpush.bf16.msra.mxu0 %v2537
    %4035 = vmatpush.bf16.msra.mxu0 %v2521
    %4036 = vmatmul.bf16.gmra.mxu0 %v73
    %v4037 = vpop.f32.mrf.mxu0
    %v4038 = vadd.f32 %v4024, %v4037
    %v4039 = vpop.f32.mrf.mxu0
    %v4040 = vadd.f32 %v4026, %v4039
    %4041 = vdwg.mxu0
    %v4042 = vpack.c.bf16 %v3254, %v3198
    %v4043 = vpack.c.bf16 %v3366, %v3310
    %v4044 = vpack.c.bf16 %v3478, %v3422
    %v4045 = vpack.c.bf16 %v3590, %v3534
    %v4046 = vpack.c.bf16 %v3702, %v3646
    %v4047 = vpack.c.bf16 %v3814, %v3758
    %v4048 = vpack.c.bf16 %v3926, %v3870
    %v4049 = vpack.c.bf16 %v4038, %v3982
    %v4050 = vpack.c.bf16 %v3256, %v3200
    %v4051 = vpack.c.bf16 %v3368, %v3312
    %v4052 = vpack.c.bf16 %v3480, %v3424
    %v4053 = vpack.c.bf16 %v3592, %v3536
    %v4054 = vpack.c.bf16 %v3704, %v3648
    %v4055 = vpack.c.bf16 %v3816, %v3760
    %v4056 = vpack.c.bf16 %v3928, %v3872
    %v4057 = vpack.c.bf16 %v4040, %v3984
    %v4058 = vunpack.c.l.bf16 %v4042
    %v4059 = vunpack.c.h.bf16 %v4042
    %v4060 = vunpack.c.l.bf16 %v4043
    %v4061 = vunpack.c.h.bf16 %v4043
    %v4062 = vunpack.c.l.bf16 %v4044
    %v4063 = vunpack.c.h.bf16 %v4044
    %v4064 = vunpack.c.l.bf16 %v4045
    %v4065 = vunpack.c.h.bf16 %v4045
    %v4066 = vunpack.c.l.bf16 %v4046
    %v4067 = vunpack.c.h.bf16 %v4046
    %v4068 = vunpack.c.l.bf16 %v4047
    %v4069 = vunpack.c.h.bf16 %v4047
    %v4070 = vunpack.c.l.bf16 %v4048
    %v4071 = vunpack.c.h.bf16 %v4048
    %v4072 = vunpack.c.l.bf16 %v4049
    %v4073 = vunpack.c.h.bf16 %v4049
    %v4074 = vunpack.c.l.bf16 %v4050
    %v4075 = vunpack.c.h.bf16 %v4050
    %v4076 = vunpack.c.l.bf16 %v4051
    %v4077 = vunpack.c.h.bf16 %v4051
    %v4078 = vunpack.c.l.bf16 %v4052
    %v4079 = vunpack.c.h.bf16 %v4052
    %v4080 = vunpack.c.l.bf16 %v4053
    %v4081 = vunpack.c.h.bf16 %v4053
    %v4082 = vunpack.c.l.bf16 %v4054
    %v4083 = vunpack.c.h.bf16 %v4054
    %v4084 = vunpack.c.l.bf16 %v4055
    %v4085 = vunpack.c.h.bf16 %v4055
    %v4086 = vunpack.c.l.bf16 %v4056
    %v4087 = vunpack.c.h.bf16 %v4056
    %v4088 = vunpack.c.l.bf16 %v4057
    %v4089 = vunpack.c.h.bf16 %v4057
    %v4090 = vmax.f32 %v4058, 0.0
    %v4091 = vmax.f32 %v4059, 0.0
    %v4092 = vmax.f32 %v4060, 0.0
    %v4093 = vmax.f32 %v4061, 0.0
    %v4094 = vmax.f32 %v4062, 0.0
    %v4095 = vmax.f32 %v4063, 0.0
    %v4096 = vmax.f32 %v4064, 0.0
    %v4097 = vmax.f32 %v4065, 0.0
    %v4098 = vmax.f32 %v4066, 0.0
    %v4099 = vmax.f32 %v4067, 0.0
    %v4100 = vmax.f32 %v4068, 0.0
    %v4101 = vmax.f32 %v4069, 0.0
    %v4102 = vmax.f32 %v4070, 0.0
    %v4103 = vmax.f32 %v4071, 0.0
    %v4104 = vmax.f32 %v4072, 0.0
    %v4105 = vmax.f32 %v4073, 0.0
    %v4106 = vmax.f32 %v4074, 0.0
    %v4107 = vmax.f32 %v4075, 0.0
    %v4108 = vmax.f32 %v4076, 0.0
    %v4109 = vmax.f32 %v4077, 0.0
    %v4110 = vmax.f32 %v4078, 0.0
    %v4111 = vmax.f32 %v4079, 0.0
    %v4112 = vmax.f32 %v4080, 0.0
    %v4113 = vmax.f32 %v4081, 0.0
    %v4114 = vmax.f32 %v4082, 0.0
    %v4115 = vmax.f32 %v4083, 0.0
    %v4116 = vmax.f32 %v4084, 0.0
    %v4117 = vmax.f32 %v4085, 0.0
    %v4118 = vmax.f32 %v4086, 0.0
    %v4119 = vmax.f32 %v4087, 0.0
    %v4120 = vmax.f32 %v4088, 0.0
    %v4121 = vmax.f32 %v4089, 0.0
    %v4122 = vpack.c.bf16 %v4106, %v4090
    %v4123 = vpack.c.bf16 %v4107, %v4091
    %v4124 = vpack.c.bf16 %v4108, %v4092
    %v4125 = vpack.c.bf16 %v4109, %v4093
    %v4126 = vpack.c.bf16 %v4110, %v4094
    %v4127 = vpack.c.bf16 %v4111, %v4095
    %v4128 = vpack.c.bf16 %v4112, %v4096
    %v4129 = vpack.c.bf16 %v4113, %v4097
    %v4130 = vpack.c.bf16 %v4114, %v4098
    %v4131 = vpack.c.bf16 %v4115, %v4099
    %v4132 = vpack.c.bf16 %v4116, %v4100
    %v4133 = vpack.c.bf16 %v4117, %v4101
    %v4134 = vpack.c.bf16 %v4118, %v4102
    %v4135 = vpack.c.bf16 %v4119, %v4103
    %v4136 = vpack.c.bf16 %v4120, %v4104
    %v4137 = vpack.c.bf16 %v4121, %v4105
    %v4138 = vld [vmem:[#allocation7] sm:$0xff]
    %v4139 = vld [vmem:[#allocation7 + $0x8] sm:$0xff]
    %v4140 = vld [vmem:[#allocation7 + $0x10] sm:$0xff]
    %v4141 = vld [vmem:[#allocation7 + $0x18] sm:$0xff]
    %v4142 = vld [vmem:[#allocation7 + $0x20] sm:$0xff]
    %v4143 = vld [vmem:[#allocation7 + $0x28] sm:$0xff]
    %v4144 = vld [vmem:[#allocation7 + $0x30] sm:$0xff]
    %v4145 = vld [vmem:[#allocation7 + $0x38] sm:$0xff]
    %v4146 = vld [vmem:[#allocation7 + $0x40] sm:$0xff]
    %v4147 = vld [vmem:[#allocation7 + $0x48] sm:$0xff]
    %v4148 = vld [vmem:[#allocation7 + $0x50] sm:$0xff]
    %v4149 = vld [vmem:[#allocation7 + $0x58] sm:$0xff]
    %v4150 = vld [vmem:[#allocation7 + $0x60] sm:$0xff]
    %v4151 = vld [vmem:[#allocation7 + $0x68] sm:$0xff]
    %v4152 = vld [vmem:[#allocation7 + $0x70] sm:$0xff]
    %v4153 = vld [vmem:[#allocation7 + $0x78] sm:$0xff]
    %v4154 = vld [vmem:[#allocation7 + $0x80] sm:$0xff]
    %v4155 = vld [vmem:[#allocation7 + $0x88] sm:$0xff]
    %v4156 = vld [vmem:[#allocation7 + $0x90] sm:$0xff]
    %v4157 = vld [vmem:[#allocation7 + $0x98] sm:$0xff]
    %v4158 = vld [vmem:[#allocation7 + $0xa0] sm:$0xff]
    %v4159 = vld [vmem:[#allocation7 + $0xa8] sm:$0xff]
    %v4160 = vld [vmem:[#allocation7 + $0xb0] sm:$0xff]
    %v4161 = vld [vmem:[#allocation7 + $0xb8] sm:$0xff]
    %v4162 = vld [vmem:[#allocation7 + $0xc0] sm:$0xff]
    %v4163 = vld [vmem:[#allocation7 + $0xc8] sm:$0xff]
    %v4164 = vld [vmem:[#allocation7 + $0xd0] sm:$0xff]
    %v4165 = vld [vmem:[#allocation7 + $0xd8] sm:$0xff]
    %v4166 = vld [vmem:[#allocation7 + $0xe0] sm:$0xff]
    %v4167 = vld [vmem:[#allocation7 + $0xe8] sm:$0xff]
    %v4168 = vld [vmem:[#allocation7 + $0xf0] sm:$0xff]
    %v4169 = vld [vmem:[#allocation7 + $0xf8] sm:$0xff]
    %v4170 = vld [vmem:[#allocation7 + $0x100] sm:$0xff]
    %v4171 = vld [vmem:[#allocation7 + $0x108] sm:$0xff]
    %v4172 = vld [vmem:[#allocation7 + $0x110] sm:$0xff]
    %v4173 = vld [vmem:[#allocation7 + $0x118] sm:$0xff]
    %v4174 = vld [vmem:[#allocation7 + $0x120] sm:$0xff]
    %v4175 = vld [vmem:[#allocation7 + $0x128] sm:$0xff]
    %v4176 = vld [vmem:[#allocation7 + $0x130] sm:$0xff]
    %v4177 = vld [vmem:[#allocation7 + $0x138] sm:$0xff]
    %v4178 = vld [vmem:[#allocation7 + $0x140] sm:$0xff]
    %v4179 = vld [vmem:[#allocation7 + $0x148] sm:$0xff]
    %v4180 = vld [vmem:[#allocation7 + $0x150] sm:$0xff]
    %v4181 = vld [vmem:[#allocation7 + $0x158] sm:$0xff]
    %v4182 = vld [vmem:[#allocation7 + $0x160] sm:$0xff]
    %v4183 = vld [vmem:[#allocation7 + $0x168] sm:$0xff]
    %v4184 = vld [vmem:[#allocation7 + $0x170] sm:$0xff]
    %v4185 = vld [vmem:[#allocation7 + $0x178] sm:$0xff]
    %v4186 = vld [vmem:[#allocation7 + $0x180] sm:$0xff]
    %v4187 = vld [vmem:[#allocation7 + $0x188] sm:$0xff]
    %v4188 = vld [vmem:[#allocation7 + $0x190] sm:$0xff]
    %v4189 = vld [vmem:[#allocation7 + $0x198] sm:$0xff]
    %v4190 = vld [vmem:[#allocation7 + $0x1a0] sm:$0xff]
    %v4191 = vld [vmem:[#allocation7 + $0x1a8] sm:$0xff]
    %v4192 = vld [vmem:[#allocation7 + $0x1b0] sm:$0xff]
    %v4193 = vld [vmem:[#allocation7 + $0x1b8] sm:$0xff]
    %v4194 = vld [vmem:[#allocation7 + $0x1c0] sm:$0xff]
    %v4195 = vld [vmem:[#allocation7 + $0x1c8] sm:$0xff]
    %v4196 = vld [vmem:[#allocation7 + $0x1d0] sm:$0xff]
    %v4197 = vld [vmem:[#allocation7 + $0x1d8] sm:$0xff]
    %v4198 = vld [vmem:[#allocation7 + $0x1e0] sm:$0xff]
    %v4199 = vld [vmem:[#allocation7 + $0x1e8] sm:$0xff]
    %v4200 = vld [vmem:[#allocation7 + $0x1f0] sm:$0xff]
    %v4201 = vld [vmem:[#allocation7 + $0x1f8] sm:$0xff]
    %v4202 = vld [vmem:[#allocation7 + $0x200] sm:$0xff]
    %v4203 = vld [vmem:[#allocation7 + $0x208] sm:$0xff]
    %v4204 = vld [vmem:[#allocation7 + $0x210] sm:$0xff]
    %v4205 = vld [vmem:[#allocation7 + $0x218] sm:$0xff]
    %v4206 = vld [vmem:[#allocation7 + $0x220] sm:$0xff]
    %v4207 = vld [vmem:[#allocation7 + $0x228] sm:$0xff]
    %v4208 = vld [vmem:[#allocation7 + $0x230] sm:$0xff]
    %v4209 = vld [vmem:[#allocation7 + $0x238] sm:$0xff]
    %v4210 = vld [vmem:[#allocation7 + $0x240] sm:$0xff]
    %v4211 = vld [vmem:[#allocation7 + $0x248] sm:$0xff]
    %v4212 = vld [vmem:[#allocation7 + $0x250] sm:$0xff]
    %v4213 = vld [vmem:[#allocation7 + $0x258] sm:$0xff]
    %v4214 = vld [vmem:[#allocation7 + $0x260] sm:$0xff]
    %v4215 = vld [vmem:[#allocation7 + $0x268] sm:$0xff]
    %v4216 = vld [vmem:[#allocation7 + $0x270] sm:$0xff]
    %v4217 = vld [vmem:[#allocation7 + $0x278] sm:$0xff]
    %v4218 = vld [vmem:[#allocation7 + $0x280] sm:$0xff]
    %v4219 = vld [vmem:[#allocation7 + $0x288] sm:$0xff]
    %v4220 = vld [vmem:[#allocation7 + $0x290] sm:$0xff]
    %v4221 = vld [vmem:[#allocation7 + $0x298] sm:$0xff]
    %v4222 = vld [vmem:[#allocation7 + $0x2a0] sm:$0xff]
    %v4223 = vld [vmem:[#allocation7 + $0x2a8] sm:$0xff]
    %v4224 = vld [vmem:[#allocation7 + $0x2b0] sm:$0xff]
    %v4225 = vld [vmem:[#allocation7 + $0x2b8] sm:$0xff]
    %v4226 = vld [vmem:[#allocation7 + $0x2c0] sm:$0xff]
    %v4227 = vld [vmem:[#allocation7 + $0x2c8] sm:$0xff]
    %v4228 = vld [vmem:[#allocation7 + $0x2d0] sm:$0xff]
    %v4229 = vld [vmem:[#allocation7 + $0x2d8] sm:$0xff]
    %v4230 = vld [vmem:[#allocation7 + $0x2e0] sm:$0xff]
    %v4231 = vld [vmem:[#allocation7 + $0x2e8] sm:$0xff]
    %v4232 = vld [vmem:[#allocation7 + $0x2f0] sm:$0xff]
    %v4233 = vld [vmem:[#allocation7 + $0x2f8] sm:$0xff]
    %v4234 = vld [vmem:[#allocation7 + $0x300] sm:$0xff]
    %v4235 = vld [vmem:[#allocation7 + $0x308] sm:$0xff]
    %v4236 = vld [vmem:[#allocation7 + $0x310] sm:$0xff]
    %v4237 = vld [vmem:[#allocation7 + $0x318] sm:$0xff]
    %v4238 = vld [vmem:[#allocation7 + $0x320] sm:$0xff]
    %v4239 = vld [vmem:[#allocation7 + $0x328] sm:$0xff]
    %v4240 = vld [vmem:[#allocation7 + $0x330] sm:$0xff]
    %v4241 = vld [vmem:[#allocation7 + $0x338] sm:$0xff]
    %v4242 = vld [vmem:[#allocation7 + $0x340] sm:$0xff]
    %v4243 = vld [vmem:[#allocation7 + $0x348] sm:$0xff]
    %v4244 = vld [vmem:[#allocation7 + $0x350] sm:$0xff]
    %v4245 = vld [vmem:[#allocation7 + $0x358] sm:$0xff]
    %v4246 = vld [vmem:[#allocation7 + $0x360] sm:$0xff]
    %v4247 = vld [vmem:[#allocation7 + $0x368] sm:$0xff]
    %v4248 = vld [vmem:[#allocation7 + $0x370] sm:$0xff]
    %v4249 = vld [vmem:[#allocation7 + $0x378] sm:$0xff]
    %v4250 = vld [vmem:[#allocation7 + $0x380] sm:$0xff]
    %v4251 = vld [vmem:[#allocation7 + $0x388] sm:$0xff]
    %v4252 = vld [vmem:[#allocation7 + $0x390] sm:$0xff]
    %v4253 = vld [vmem:[#allocation7 + $0x398] sm:$0xff]
    %v4254 = vld [vmem:[#allocation7 + $0x3a0] sm:$0xff]
    %v4255 = vld [vmem:[#allocation7 + $0x3a8] sm:$0xff]
    %v4256 = vld [vmem:[#allocation7 + $0x3b0] sm:$0xff]
    %v4257 = vld [vmem:[#allocation7 + $0x3b8] sm:$0xff]
    %v4258 = vld [vmem:[#allocation7 + $0x3c0] sm:$0xff]
    %v4259 = vld [vmem:[#allocation7 + $0x3c8] sm:$0xff]
    %v4260 = vld [vmem:[#allocation7 + $0x3d0] sm:$0xff]
    %v4261 = vld [vmem:[#allocation7 + $0x3d8] sm:$0xff]
    %v4262 = vld [vmem:[#allocation7 + $0x3e0] sm:$0xff]
    %v4263 = vld [vmem:[#allocation7 + $0x3e8] sm:$0xff]
    %v4264 = vld [vmem:[#allocation7 + $0x3f0] sm:$0xff]
    %v4265 = vld [vmem:[#allocation7 + $0x3f8] sm:$0xff]
    %v4266 = vld [vmem:[#allocation7 + $0x400] sm:$0xff]
    %v4267 = vld [vmem:[#allocation7 + $0x408] sm:$0xff]
    %v4268 = vld [vmem:[#allocation7 + $0x410] sm:$0xff]
    %v4269 = vld [vmem:[#allocation7 + $0x418] sm:$0xff]
    %v4270 = vld [vmem:[#allocation7 + $0x420] sm:$0xff]
    %v4271 = vld [vmem:[#allocation7 + $0x428] sm:$0xff]
    %v4272 = vld [vmem:[#allocation7 + $0x430] sm:$0xff]
    %v4273 = vld [vmem:[#allocation7 + $0x438] sm:$0xff]
    %v4274 = vld [vmem:[#allocation7 + $0x440] sm:$0xff]
    %v4275 = vld [vmem:[#allocation7 + $0x448] sm:$0xff]
    %v4276 = vld [vmem:[#allocation7 + $0x450] sm:$0xff]
    %v4277 = vld [vmem:[#allocation7 + $0x458] sm:$0xff]
    %v4278 = vld [vmem:[#allocation7 + $0x460] sm:$0xff]
    %v4279 = vld [vmem:[#allocation7 + $0x468] sm:$0xff]
    %v4280 = vld [vmem:[#allocation7 + $0x470] sm:$0xff]
    %v4281 = vld [vmem:[#allocation7 + $0x478] sm:$0xff]
    %v4282 = vld [vmem:[#allocation7 + $0x480] sm:$0xff]
    %v4283 = vld [vmem:[#allocation7 + $0x488] sm:$0xff]
    %v4284 = vld [vmem:[#allocation7 + $0x490] sm:$0xff]
    %v4285 = vld [vmem:[#allocation7 + $0x498] sm:$0xff]
    %v4286 = vld [vmem:[#allocation7 + $0x4a0] sm:$0xff]
    %v4287 = vld [vmem:[#allocation7 + $0x4a8] sm:$0xff]
    %v4288 = vld [vmem:[#allocation7 + $0x4b0] sm:$0xff]
    %v4289 = vld [vmem:[#allocation7 + $0x4b8] sm:$0xff]
    %v4290 = vld [vmem:[#allocation7 + $0x4c0] sm:$0xff]
    %v4291 = vld [vmem:[#allocation7 + $0x4c8] sm:$0xff]
    %v4292 = vld [vmem:[#allocation7 + $0x4d0] sm:$0xff]
    %v4293 = vld [vmem:[#allocation7 + $0x4d8] sm:$0xff]
    %v4294 = vld [vmem:[#allocation7 + $0x4e0] sm:$0xff]
    %v4295 = vld [vmem:[#allocation7 + $0x4e8] sm:$0xff]
    %v4296 = vld [vmem:[#allocation7 + $0x4f0] sm:$0xff]
    %v4297 = vld [vmem:[#allocation7 + $0x4f8] sm:$0xff]
    %v4298 = vld [vmem:[#allocation7 + $0x500] sm:$0xff]
    %v4299 = vld [vmem:[#allocation7 + $0x508] sm:$0xff]
    %v4300 = vld [vmem:[#allocation7 + $0x510] sm:$0xff]
    %v4301 = vld [vmem:[#allocation7 + $0x518] sm:$0xff]
    %v4302 = vld [vmem:[#allocation7 + $0x520] sm:$0xff]
    %v4303 = vld [vmem:[#allocation7 + $0x528] sm:$0xff]
    %v4304 = vld [vmem:[#allocation7 + $0x530] sm:$0xff]
    %v4305 = vld [vmem:[#allocation7 + $0x538] sm:$0xff]
    %v4306 = vld [vmem:[#allocation7 + $0x540] sm:$0xff]
    %v4307 = vld [vmem:[#allocation7 + $0x548] sm:$0xff]
    %v4308 = vld [vmem:[#allocation7 + $0x550] sm:$0xff]
    %v4309 = vld [vmem:[#allocation7 + $0x558] sm:$0xff]
    %v4310 = vld [vmem:[#allocation7 + $0x560] sm:$0xff]
    %v4311 = vld [vmem:[#allocation7 + $0x568] sm:$0xff]
    %v4312 = vld [vmem:[#allocation7 + $0x570] sm:$0xff]
    %v4313 = vld [vmem:[#allocation7 + $0x578] sm:$0xff]
    %v4314 = vld [vmem:[#allocation7 + $0x580] sm:$0xff]
    %v4315 = vld [vmem:[#allocation7 + $0x588] sm:$0xff]
    %v4316 = vld [vmem:[#allocation7 + $0x590] sm:$0xff]
    %v4317 = vld [vmem:[#allocation7 + $0x598] sm:$0xff]
    %v4318 = vld [vmem:[#allocation7 + $0x5a0] sm:$0xff]
    %v4319 = vld [vmem:[#allocation7 + $0x5a8] sm:$0xff]
    %v4320 = vld [vmem:[#allocation7 + $0x5b0] sm:$0xff]
    %v4321 = vld [vmem:[#allocation7 + $0x5b8] sm:$0xff]
    %v4322 = vld [vmem:[#allocation7 + $0x5c0] sm:$0xff]
    %v4323 = vld [vmem:[#allocation7 + $0x5c8] sm:$0xff]
    %v4324 = vld [vmem:[#allocation7 + $0x5d0] sm:$0xff]
    %v4325 = vld [vmem:[#allocation7 + $0x5d8] sm:$0xff]
    %v4326 = vld [vmem:[#allocation7 + $0x5e0] sm:$0xff]
    %v4327 = vld [vmem:[#allocation7 + $0x5e8] sm:$0xff]
    %v4328 = vld [vmem:[#allocation7 + $0x5f0] sm:$0xff]
    %v4329 = vld [vmem:[#allocation7 + $0x5f8] sm:$0xff]
    %v4330 = vld [vmem:[#allocation7 + $0x600] sm:$0xff]
    %v4331 = vld [vmem:[#allocation7 + $0x608] sm:$0xff]
    %v4332 = vld [vmem:[#allocation7 + $0x610] sm:$0xff]
    %v4333 = vld [vmem:[#allocation7 + $0x618] sm:$0xff]
    %v4334 = vld [vmem:[#allocation7 + $0x620] sm:$0xff]
    %v4335 = vld [vmem:[#allocation7 + $0x628] sm:$0xff]
    %v4336 = vld [vmem:[#allocation7 + $0x630] sm:$0xff]
    %v4337 = vld [vmem:[#allocation7 + $0x638] sm:$0xff]
    %v4338 = vld [vmem:[#allocation7 + $0x640] sm:$0xff]
    %v4339 = vld [vmem:[#allocation7 + $0x648] sm:$0xff]
    %v4340 = vld [vmem:[#allocation7 + $0x650] sm:$0xff]
    %v4341 = vld [vmem:[#allocation7 + $0x658] sm:$0xff]
    %v4342 = vld [vmem:[#allocation7 + $0x660] sm:$0xff]
    %v4343 = vld [vmem:[#allocation7 + $0x668] sm:$0xff]
    %v4344 = vld [vmem:[#allocation7 + $0x670] sm:$0xff]
    %v4345 = vld [vmem:[#allocation7 + $0x678] sm:$0xff]
    %v4346 = vld [vmem:[#allocation7 + $0x680] sm:$0xff]
    %v4347 = vld [vmem:[#allocation7 + $0x688] sm:$0xff]
    %v4348 = vld [vmem:[#allocation7 + $0x690] sm:$0xff]
    %v4349 = vld [vmem:[#allocation7 + $0x698] sm:$0xff]
    %v4350 = vld [vmem:[#allocation7 + $0x6a0] sm:$0xff]
    %v4351 = vld [vmem:[#allocation7 + $0x6a8] sm:$0xff]
    %v4352 = vld [vmem:[#allocation7 + $0x6b0] sm:$0xff]
    %v4353 = vld [vmem:[#allocation7 + $0x6b8] sm:$0xff]
    %v4354 = vld [vmem:[#allocation7 + $0x6c0] sm:$0xff]
    %v4355 = vld [vmem:[#allocation7 + $0x6c8] sm:$0xff]
    %v4356 = vld [vmem:[#allocation7 + $0x6d0] sm:$0xff]
    %v4357 = vld [vmem:[#allocation7 + $0x6d8] sm:$0xff]
    %v4358 = vld [vmem:[#allocation7 + $0x6e0] sm:$0xff]
    %v4359 = vld [vmem:[#allocation7 + $0x6e8] sm:$0xff]
    %v4360 = vld [vmem:[#allocation7 + $0x6f0] sm:$0xff]
    %v4361 = vld [vmem:[#allocation7 + $0x6f8] sm:$0xff]
    %v4362 = vld [vmem:[#allocation7 + $0x700] sm:$0xff]
    %v4363 = vld [vmem:[#allocation7 + $0x708] sm:$0xff]
    %v4364 = vld [vmem:[#allocation7 + $0x710] sm:$0xff]
    %v4365 = vld [vmem:[#allocation7 + $0x718] sm:$0xff]
    %v4366 = vld [vmem:[#allocation7 + $0x720] sm:$0xff]
    %v4367 = vld [vmem:[#allocation7 + $0x728] sm:$0xff]
    %v4368 = vld [vmem:[#allocation7 + $0x730] sm:$0xff]
    %v4369 = vld [vmem:[#allocation7 + $0x738] sm:$0xff]
    %v4370 = vld [vmem:[#allocation7 + $0x740] sm:$0xff]
    %v4371 = vld [vmem:[#allocation7 + $0x748] sm:$0xff]
    %v4372 = vld [vmem:[#allocation7 + $0x750] sm:$0xff]
    %v4373 = vld [vmem:[#allocation7 + $0x758] sm:$0xff]
    %v4374 = vld [vmem:[#allocation7 + $0x760] sm:$0xff]
    %v4375 = vld [vmem:[#allocation7 + $0x768] sm:$0xff]
    %v4376 = vld [vmem:[#allocation7 + $0x770] sm:$0xff]
    %v4377 = vld [vmem:[#allocation7 + $0x778] sm:$0xff]
    %v4378 = vld [vmem:[#allocation7 + $0x780] sm:$0xff]
    %v4379 = vld [vmem:[#allocation7 + $0x788] sm:$0xff]
    %v4380 = vld [vmem:[#allocation7 + $0x790] sm:$0xff]
    %v4381 = vld [vmem:[#allocation7 + $0x798] sm:$0xff]
    %v4382 = vld [vmem:[#allocation7 + $0x7a0] sm:$0xff]
    %v4383 = vld [vmem:[#allocation7 + $0x7a8] sm:$0xff]
    %v4384 = vld [vmem:[#allocation7 + $0x7b0] sm:$0xff]
    %v4385 = vld [vmem:[#allocation7 + $0x7b8] sm:$0xff]
    %v4386 = vld [vmem:[#allocation7 + $0x7c0] sm:$0xff]
    %v4387 = vld [vmem:[#allocation7 + $0x7c8] sm:$0xff]
    %v4388 = vld [vmem:[#allocation7 + $0x7d0] sm:$0xff]
    %v4389 = vld [vmem:[#allocation7 + $0x7d8] sm:$0xff]
    %v4390 = vld [vmem:[#allocation7 + $0x7e0] sm:$0xff]
    %v4391 = vld [vmem:[#allocation7 + $0x7e8] sm:$0xff]
    %v4392 = vld [vmem:[#allocation7 + $0x7f0] sm:$0xff]
    %v4393 = vld [vmem:[#allocation7 + $0x7f8] sm:$0xff]
    %v4394 = vld [vmem:[#allocation7 + $0x800] sm:$0xff]
    %v4395 = vld [vmem:[#allocation7 + $0x808] sm:$0xff]
    %v4396 = vld [vmem:[#allocation7 + $0x810] sm:$0xff]
    %v4397 = vld [vmem:[#allocation7 + $0x818] sm:$0xff]
    %v4398 = vld [vmem:[#allocation7 + $0x820] sm:$0xff]
    %v4399 = vld [vmem:[#allocation7 + $0x828] sm:$0xff]
    %v4400 = vld [vmem:[#allocation7 + $0x830] sm:$0xff]
    %v4401 = vld [vmem:[#allocation7 + $0x838] sm:$0xff]
    %v4402 = vld [vmem:[#allocation7 + $0x840] sm:$0xff]
    %v4403 = vld [vmem:[#allocation7 + $0x848] sm:$0xff]
    %v4404 = vld [vmem:[#allocation7 + $0x850] sm:$0xff]
    %v4405 = vld [vmem:[#allocation7 + $0x858] sm:$0xff]
    %v4406 = vld [vmem:[#allocation7 + $0x860] sm:$0xff]
    %v4407 = vld [vmem:[#allocation7 + $0x868] sm:$0xff]
    %v4408 = vld [vmem:[#allocation7 + $0x870] sm:$0xff]
    %v4409 = vld [vmem:[#allocation7 + $0x878] sm:$0xff]
    %v4410 = vld [vmem:[#allocation7 + $0x880] sm:$0xff]
    %v4411 = vld [vmem:[#allocation7 + $0x888] sm:$0xff]
    %v4412 = vld [vmem:[#allocation7 + $0x890] sm:$0xff]
    %v4413 = vld [vmem:[#allocation7 + $0x898] sm:$0xff]
    %v4414 = vld [vmem:[#allocation7 + $0x8a0] sm:$0xff]
    %v4415 = vld [vmem:[#allocation7 + $0x8a8] sm:$0xff]
    %v4416 = vld [vmem:[#allocation7 + $0x8b0] sm:$0xff]
    %v4417 = vld [vmem:[#allocation7 + $0x8b8] sm:$0xff]
    %v4418 = vld [vmem:[#allocation7 + $0x8c0] sm:$0xff]
    %v4419 = vld [vmem:[#allocation7 + $0x8c8] sm:$0xff]
    %v4420 = vld [vmem:[#allocation7 + $0x8d0] sm:$0xff]
    %v4421 = vld [vmem:[#allocation7 + $0x8d8] sm:$0xff]
    %v4422 = vld [vmem:[#allocation7 + $0x8e0] sm:$0xff]
    %v4423 = vld [vmem:[#allocation7 + $0x8e8] sm:$0xff]
    %v4424 = vld [vmem:[#allocation7 + $0x8f0] sm:$0xff]
    %v4425 = vld [vmem:[#allocation7 + $0x8f8] sm:$0xff]
    %v4426 = vld [vmem:[#allocation7 + $0x900] sm:$0xff]
    %v4427 = vld [vmem:[#allocation7 + $0x908] sm:$0xff]
    %v4428 = vld [vmem:[#allocation7 + $0x910] sm:$0xff]
    %v4429 = vld [vmem:[#allocation7 + $0x918] sm:$0xff]
    %v4430 = vld [vmem:[#allocation7 + $0x920] sm:$0xff]
    %v4431 = vld [vmem:[#allocation7 + $0x928] sm:$0xff]
    %v4432 = vld [vmem:[#allocation7 + $0x930] sm:$0xff]
    %v4433 = vld [vmem:[#allocation7 + $0x938] sm:$0xff]
    %v4434 = vld [vmem:[#allocation7 + $0x940] sm:$0xff]
    %v4435 = vld [vmem:[#allocation7 + $0x948] sm:$0xff]
    %v4436 = vld [vmem:[#allocation7 + $0x950] sm:$0xff]
    %v4437 = vld [vmem:[#allocation7 + $0x958] sm:$0xff]
    %v4438 = vld [vmem:[#allocation7 + $0x960] sm:$0xff]
    %v4439 = vld [vmem:[#allocation7 + $0x968] sm:$0xff]
    %v4440 = vld [vmem:[#allocation7 + $0x970] sm:$0xff]
    %v4441 = vld [vmem:[#allocation7 + $0x978] sm:$0xff]
    %v4442 = vld [vmem:[#allocation7 + $0x980] sm:$0xff]
    %v4443 = vld [vmem:[#allocation7 + $0x988] sm:$0xff]
    %v4444 = vld [vmem:[#allocation7 + $0x990] sm:$0xff]
    %v4445 = vld [vmem:[#allocation7 + $0x998] sm:$0xff]
    %v4446 = vld [vmem:[#allocation7 + $0x9a0] sm:$0xff]
    %v4447 = vld [vmem:[#allocation7 + $0x9a8] sm:$0xff]
    %v4448 = vld [vmem:[#allocation7 + $0x9b0] sm:$0xff]
    %v4449 = vld [vmem:[#allocation7 + $0x9b8] sm:$0xff]
    %v4450 = vld [vmem:[#allocation7 + $0x9c0] sm:$0xff]
    %v4451 = vld [vmem:[#allocation7 + $0x9c8] sm:$0xff]
    %v4452 = vld [vmem:[#allocation7 + $0x9d0] sm:$0xff]
    %v4453 = vld [vmem:[#allocation7 + $0x9d8] sm:$0xff]
    %v4454 = vld [vmem:[#allocation7 + $0x9e0] sm:$0xff]
    %v4455 = vld [vmem:[#allocation7 + $0x9e8] sm:$0xff]
    %v4456 = vld [vmem:[#allocation7 + $0x9f0] sm:$0xff]
    %v4457 = vld [vmem:[#allocation7 + $0x9f8] sm:$0xff]
    %v4458 = vld [vmem:[#allocation7 + $0xa00] sm:$0xff]
    %v4459 = vld [vmem:[#allocation7 + $0xa08] sm:$0xff]
    %v4460 = vld [vmem:[#allocation7 + $0xa10] sm:$0xff]
    %v4461 = vld [vmem:[#allocation7 + $0xa18] sm:$0xff]
    %v4462 = vld [vmem:[#allocation7 + $0xa20] sm:$0xff]
    %v4463 = vld [vmem:[#allocation7 + $0xa28] sm:$0xff]
    %v4464 = vld [vmem:[#allocation7 + $0xa30] sm:$0xff]
    %v4465 = vld [vmem:[#allocation7 + $0xa38] sm:$0xff]
    %v4466 = vld [vmem:[#allocation7 + $0xa40] sm:$0xff]
    %v4467 = vld [vmem:[#allocation7 + $0xa48] sm:$0xff]
    %v4468 = vld [vmem:[#allocation7 + $0xa50] sm:$0xff]
    %v4469 = vld [vmem:[#allocation7 + $0xa58] sm:$0xff]
    %v4470 = vld [vmem:[#allocation7 + $0xa60] sm:$0xff]
    %v4471 = vld [vmem:[#allocation7 + $0xa68] sm:$0xff]
    %v4472 = vld [vmem:[#allocation7 + $0xa70] sm:$0xff]
    %v4473 = vld [vmem:[#allocation7 + $0xa78] sm:$0xff]
    %v4474 = vld [vmem:[#allocation7 + $0xa80] sm:$0xff]
    %v4475 = vld [vmem:[#allocation7 + $0xa88] sm:$0xff]
    %v4476 = vld [vmem:[#allocation7 + $0xa90] sm:$0xff]
    %v4477 = vld [vmem:[#allocation7 + $0xa98] sm:$0xff]
    %v4478 = vld [vmem:[#allocation7 + $0xaa0] sm:$0xff]
    %v4479 = vld [vmem:[#allocation7 + $0xaa8] sm:$0xff]
    %v4480 = vld [vmem:[#allocation7 + $0xab0] sm:$0xff]
    %v4481 = vld [vmem:[#allocation7 + $0xab8] sm:$0xff]
    %v4482 = vld [vmem:[#allocation7 + $0xac0] sm:$0xff]
    %v4483 = vld [vmem:[#allocation7 + $0xac8] sm:$0xff]
    %v4484 = vld [vmem:[#allocation7 + $0xad0] sm:$0xff]
    %v4485 = vld [vmem:[#allocation7 + $0xad8] sm:$0xff]
    %v4486 = vld [vmem:[#allocation7 + $0xae0] sm:$0xff]
    %v4487 = vld [vmem:[#allocation7 + $0xae8] sm:$0xff]
    %v4488 = vld [vmem:[#allocation7 + $0xaf0] sm:$0xff]
    %v4489 = vld [vmem:[#allocation7 + $0xaf8] sm:$0xff]
    %v4490 = vld [vmem:[#allocation7 + $0xb00] sm:$0xff]
    %v4491 = vld [vmem:[#allocation7 + $0xb08] sm:$0xff]
    %v4492 = vld [vmem:[#allocation7 + $0xb10] sm:$0xff]
    %v4493 = vld [vmem:[#allocation7 + $0xb18] sm:$0xff]
    %v4494 = vld [vmem:[#allocation7 + $0xb20] sm:$0xff]
    %v4495 = vld [vmem:[#allocation7 + $0xb28] sm:$0xff]
    %v4496 = vld [vmem:[#allocation7 + $0xb30] sm:$0xff]
    %v4497 = vld [vmem:[#allocation7 + $0xb38] sm:$0xff]
    %v4498 = vld [vmem:[#allocation7 + $0xb40] sm:$0xff]
    %v4499 = vld [vmem:[#allocation7 + $0xb48] sm:$0xff]
    %v4500 = vld [vmem:[#allocation7 + $0xb50] sm:$0xff]
    %v4501 = vld [vmem:[#allocation7 + $0xb58] sm:$0xff]
    %v4502 = vld [vmem:[#allocation7 + $0xb60] sm:$0xff]
    %v4503 = vld [vmem:[#allocation7 + $0xb68] sm:$0xff]
    %v4504 = vld [vmem:[#allocation7 + $0xb70] sm:$0xff]
    %v4505 = vld [vmem:[#allocation7 + $0xb78] sm:$0xff]
    %v4506 = vld [vmem:[#allocation7 + $0xb80] sm:$0xff]
    %v4507 = vld [vmem:[#allocation7 + $0xb88] sm:$0xff]
    %v4508 = vld [vmem:[#allocation7 + $0xb90] sm:$0xff]
    %v4509 = vld [vmem:[#allocation7 + $0xb98] sm:$0xff]
    %v4510 = vld [vmem:[#allocation7 + $0xba0] sm:$0xff]
    %v4511 = vld [vmem:[#allocation7 + $0xba8] sm:$0xff]
    %v4512 = vld [vmem:[#allocation7 + $0xbb0] sm:$0xff]
    %v4513 = vld [vmem:[#allocation7 + $0xbb8] sm:$0xff]
    %v4514 = vld [vmem:[#allocation7 + $0xbc0] sm:$0xff]
    %v4515 = vld [vmem:[#allocation7 + $0xbc8] sm:$0xff]
    %v4516 = vld [vmem:[#allocation7 + $0xbd0] sm:$0xff]
    %v4517 = vld [vmem:[#allocation7 + $0xbd8] sm:$0xff]
    %v4518 = vld [vmem:[#allocation7 + $0xbe0] sm:$0xff]
    %v4519 = vld [vmem:[#allocation7 + $0xbe8] sm:$0xff]
    %v4520 = vld [vmem:[#allocation7 + $0xbf0] sm:$0xff]
    %v4521 = vld [vmem:[#allocation7 + $0xbf8] sm:$0xff]
    %v4522 = vld [vmem:[#allocation7 + $0xc00] sm:$0xff]
    %v4523 = vld [vmem:[#allocation7 + $0xc08] sm:$0xff]
    %v4524 = vld [vmem:[#allocation7 + $0xc10] sm:$0xff]
    %v4525 = vld [vmem:[#allocation7 + $0xc18] sm:$0xff]
    %v4526 = vld [vmem:[#allocation7 + $0xc20] sm:$0xff]
    %v4527 = vld [vmem:[#allocation7 + $0xc28] sm:$0xff]
    %v4528 = vld [vmem:[#allocation7 + $0xc30] sm:$0xff]
    %v4529 = vld [vmem:[#allocation7 + $0xc38] sm:$0xff]
    %v4530 = vld [vmem:[#allocation7 + $0xc40] sm:$0xff]
    %v4531 = vld [vmem:[#allocation7 + $0xc48] sm:$0xff]
    %v4532 = vld [vmem:[#allocation7 + $0xc50] sm:$0xff]
    %v4533 = vld [vmem:[#allocation7 + $0xc58] sm:$0xff]
    %v4534 = vld [vmem:[#allocation7 + $0xc60] sm:$0xff]
    %v4535 = vld [vmem:[#allocation7 + $0xc68] sm:$0xff]
    %v4536 = vld [vmem:[#allocation7 + $0xc70] sm:$0xff]
    %v4537 = vld [vmem:[#allocation7 + $0xc78] sm:$0xff]
    %v4538 = vld [vmem:[#allocation7 + $0xc80] sm:$0xff]
    %v4539 = vld [vmem:[#allocation7 + $0xc88] sm:$0xff]
    %v4540 = vld [vmem:[#allocation7 + $0xc90] sm:$0xff]
    %v4541 = vld [vmem:[#allocation7 + $0xc98] sm:$0xff]
    %v4542 = vld [vmem:[#allocation7 + $0xca0] sm:$0xff]
    %v4543 = vld [vmem:[#allocation7 + $0xca8] sm:$0xff]
    %v4544 = vld [vmem:[#allocation7 + $0xcb0] sm:$0xff]
    %v4545 = vld [vmem:[#allocation7 + $0xcb8] sm:$0xff]
    %v4546 = vld [vmem:[#allocation7 + $0xcc0] sm:$0xff]
    %v4547 = vld [vmem:[#allocation7 + $0xcc8] sm:$0xff]
    %v4548 = vld [vmem:[#allocation7 + $0xcd0] sm:$0xff]
    %v4549 = vld [vmem:[#allocation7 + $0xcd8] sm:$0xff]
    %v4550 = vld [vmem:[#allocation7 + $0xce0] sm:$0xff]
    %v4551 = vld [vmem:[#allocation7 + $0xce8] sm:$0xff]
    %v4552 = vld [vmem:[#allocation7 + $0xcf0] sm:$0xff]
    %v4553 = vld [vmem:[#allocation7 + $0xcf8] sm:$0xff]
    %v4554 = vld [vmem:[#allocation7 + $0xd00] sm:$0xff]
    %v4555 = vld [vmem:[#allocation7 + $0xd08] sm:$0xff]
    %v4556 = vld [vmem:[#allocation7 + $0xd10] sm:$0xff]
    %v4557 = vld [vmem:[#allocation7 + $0xd18] sm:$0xff]
    %v4558 = vld [vmem:[#allocation7 + $0xd20] sm:$0xff]
    %v4559 = vld [vmem:[#allocation7 + $0xd28] sm:$0xff]
    %v4560 = vld [vmem:[#allocation7 + $0xd30] sm:$0xff]
    %v4561 = vld [vmem:[#allocation7 + $0xd38] sm:$0xff]
    %v4562 = vld [vmem:[#allocation7 + $0xd40] sm:$0xff]
    %v4563 = vld [vmem:[#allocation7 + $0xd48] sm:$0xff]
    %v4564 = vld [vmem:[#allocation7 + $0xd50] sm:$0xff]
    %v4565 = vld [vmem:[#allocation7 + $0xd58] sm:$0xff]
    %v4566 = vld [vmem:[#allocation7 + $0xd60] sm:$0xff]
    %v4567 = vld [vmem:[#allocation7 + $0xd68] sm:$0xff]
    %v4568 = vld [vmem:[#allocation7 + $0xd70] sm:$0xff]
    %v4569 = vld [vmem:[#allocation7 + $0xd78] sm:$0xff]
    %v4570 = vld [vmem:[#allocation7 + $0xd80] sm:$0xff]
    %v4571 = vld [vmem:[#allocation7 + $0xd88] sm:$0xff]
    %v4572 = vld [vmem:[#allocation7 + $0xd90] sm:$0xff]
    %v4573 = vld [vmem:[#allocation7 + $0xd98] sm:$0xff]
    %v4574 = vld [vmem:[#allocation7 + $0xda0] sm:$0xff]
    %v4575 = vld [vmem:[#allocation7 + $0xda8] sm:$0xff]
    %v4576 = vld [vmem:[#allocation7 + $0xdb0] sm:$0xff]
    %v4577 = vld [vmem:[#allocation7 + $0xdb8] sm:$0xff]
    %v4578 = vld [vmem:[#allocation7 + $0xdc0] sm:$0xff]
    %v4579 = vld [vmem:[#allocation7 + $0xdc8] sm:$0xff]
    %v4580 = vld [vmem:[#allocation7 + $0xdd0] sm:$0xff]
    %v4581 = vld [vmem:[#allocation7 + $0xdd8] sm:$0xff]
    %v4582 = vld [vmem:[#allocation7 + $0xde0] sm:$0xff]
    %v4583 = vld [vmem:[#allocation7 + $0xde8] sm:$0xff]
    %v4584 = vld [vmem:[#allocation7 + $0xdf0] sm:$0xff]
    %v4585 = vld [vmem:[#allocation7 + $0xdf8] sm:$0xff]
    %v4586 = vld [vmem:[#allocation7 + $0xe00] sm:$0xff]
    %v4587 = vld [vmem:[#allocation7 + $0xe08] sm:$0xff]
    %v4588 = vld [vmem:[#allocation7 + $0xe10] sm:$0xff]
    %v4589 = vld [vmem:[#allocation7 + $0xe18] sm:$0xff]
    %v4590 = vld [vmem:[#allocation7 + $0xe20] sm:$0xff]
    %v4591 = vld [vmem:[#allocation7 + $0xe28] sm:$0xff]
    %v4592 = vld [vmem:[#allocation7 + $0xe30] sm:$0xff]
    %v4593 = vld [vmem:[#allocation7 + $0xe38] sm:$0xff]
    %v4594 = vld [vmem:[#allocation7 + $0xe40] sm:$0xff]
    %v4595 = vld [vmem:[#allocation7 + $0xe48] sm:$0xff]
    %v4596 = vld [vmem:[#allocation7 + $0xe50] sm:$0xff]
    %v4597 = vld [vmem:[#allocation7 + $0xe58] sm:$0xff]
    %v4598 = vld [vmem:[#allocation7 + $0xe60] sm:$0xff]
    %v4599 = vld [vmem:[#allocation7 + $0xe68] sm:$0xff]
    %v4600 = vld [vmem:[#allocation7 + $0xe70] sm:$0xff]
    %v4601 = vld [vmem:[#allocation7 + $0xe78] sm:$0xff]
    %v4602 = vld [vmem:[#allocation7 + $0xe80] sm:$0xff]
    %v4603 = vld [vmem:[#allocation7 + $0xe88] sm:$0xff]
    %v4604 = vld [vmem:[#allocation7 + $0xe90] sm:$0xff]
    %v4605 = vld [vmem:[#allocation7 + $0xe98] sm:$0xff]
    %v4606 = vld [vmem:[#allocation7 + $0xea0] sm:$0xff]
    %v4607 = vld [vmem:[#allocation7 + $0xea8] sm:$0xff]
    %v4608 = vld [vmem:[#allocation7 + $0xeb0] sm:$0xff]
    %v4609 = vld [vmem:[#allocation7 + $0xeb8] sm:$0xff]
    %v4610 = vld [vmem:[#allocation7 + $0xec0] sm:$0xff]
    %v4611 = vld [vmem:[#allocation7 + $0xec8] sm:$0xff]
    %v4612 = vld [vmem:[#allocation7 + $0xed0] sm:$0xff]
    %v4613 = vld [vmem:[#allocation7 + $0xed8] sm:$0xff]
    %v4614 = vld [vmem:[#allocation7 + $0xee0] sm:$0xff]
    %v4615 = vld [vmem:[#allocation7 + $0xee8] sm:$0xff]
    %v4616 = vld [vmem:[#allocation7 + $0xef0] sm:$0xff]
    %v4617 = vld [vmem:[#allocation7 + $0xef8] sm:$0xff]
    %v4618 = vld [vmem:[#allocation7 + $0xf00] sm:$0xff]
    %v4619 = vld [vmem:[#allocation7 + $0xf08] sm:$0xff]
    %v4620 = vld [vmem:[#allocation7 + $0xf10] sm:$0xff]
    %v4621 = vld [vmem:[#allocation7 + $0xf18] sm:$0xff]
    %v4622 = vld [vmem:[#allocation7 + $0xf20] sm:$0xff]
    %v4623 = vld [vmem:[#allocation7 + $0xf28] sm:$0xff]
    %v4624 = vld [vmem:[#allocation7 + $0xf30] sm:$0xff]
    %v4625 = vld [vmem:[#allocation7 + $0xf38] sm:$0xff]
    %v4626 = vld [vmem:[#allocation7 + $0xf40] sm:$0xff]
    %v4627 = vld [vmem:[#allocation7 + $0xf48] sm:$0xff]
    %v4628 = vld [vmem:[#allocation7 + $0xf50] sm:$0xff]
    %v4629 = vld [vmem:[#allocation7 + $0xf58] sm:$0xff]
    %v4630 = vld [vmem:[#allocation7 + $0xf60] sm:$0xff]
    %v4631 = vld [vmem:[#allocation7 + $0xf68] sm:$0xff]
    %v4632 = vld [vmem:[#allocation7 + $0xf70] sm:$0xff]
    %v4633 = vld [vmem:[#allocation7 + $0xf78] sm:$0xff]
    %v4634 = vld [vmem:[#allocation7 + $0xf80] sm:$0xff]
    %v4635 = vld [vmem:[#allocation7 + $0xf88] sm:$0xff]
    %v4636 = vld [vmem:[#allocation7 + $0xf90] sm:$0xff]
    %v4637 = vld [vmem:[#allocation7 + $0xf98] sm:$0xff]
    %v4638 = vld [vmem:[#allocation7 + $0xfa0] sm:$0xff]
    %v4639 = vld [vmem:[#allocation7 + $0xfa8] sm:$0xff]
    %v4640 = vld [vmem:[#allocation7 + $0xfb0] sm:$0xff]
    %v4641 = vld [vmem:[#allocation7 + $0xfb8] sm:$0xff]
    %v4642 = vld [vmem:[#allocation7 + $0xfc0] sm:$0xff]
    %v4643 = vld [vmem:[#allocation7 + $0xfc8] sm:$0xff]
    %v4644 = vld [vmem:[#allocation7 + $0xfd0] sm:$0xff]
    %v4645 = vld [vmem:[#allocation7 + $0xfd8] sm:$0xff]
    %v4646 = vld [vmem:[#allocation7 + $0xfe0] sm:$0xff]
    %v4647 = vld [vmem:[#allocation7 + $0xfe8] sm:$0xff]
    %v4648 = vld [vmem:[#allocation7 + $0xff0] sm:$0xff]
    %v4649 = vld [vmem:[#allocation7 + $0xff8] sm:$0xff]
    %v5162 = vunpack.c.l.b16 %v4138
    %v5163 = vunpack.c.h.b16 %v4138
    %v5164 = vunpack.c.l.b16 %v4139
    %v5165 = vunpack.c.h.b16 %v4139
    %v5166 = vunpack.c.l.b16 %v4140
    %v5167 = vunpack.c.h.b16 %v4140
    %v5168 = vunpack.c.l.b16 %v4141
    %v5169 = vunpack.c.h.b16 %v4141
    %v5170 = vunpack.c.l.b16 %v4142
    %v5171 = vunpack.c.h.b16 %v4142
    %v5172 = vunpack.c.l.b16 %v4143
    %v5173 = vunpack.c.h.b16 %v4143
    %v5174 = vunpack.c.l.b16 %v4144
    %v5175 = vunpack.c.h.b16 %v4144
    %v5176 = vunpack.c.l.b16 %v4145
    %v5177 = vunpack.c.h.b16 %v4145
    %v5178 = vunpack.c.l.b16 %v4146
    %v5179 = vunpack.c.h.b16 %v4146
    %v5180 = vunpack.c.l.b16 %v4147
    %v5181 = vunpack.c.h.b16 %v4147
    %v5182 = vunpack.c.l.b16 %v4148
    %v5183 = vunpack.c.h.b16 %v4148
    %v5184 = vunpack.c.l.b16 %v4149
    %v5185 = vunpack.c.h.b16 %v4149
    %v5186 = vunpack.c.l.b16 %v4150
    %v5187 = vunpack.c.h.b16 %v4150
    %v5188 = vunpack.c.l.b16 %v4151
    %v5189 = vunpack.c.h.b16 %v4151
    %v5190 = vunpack.c.l.b16 %v4152
    %v5191 = vunpack.c.h.b16 %v4152
    %v5192 = vunpack.c.l.b16 %v4153
    %v5193 = vunpack.c.h.b16 %v4153
    %v5194 = vunpack.c.l.b16 %v4154
    %v5195 = vunpack.c.h.b16 %v4154
    %v5196 = vunpack.c.l.b16 %v4155
    %v5197 = vunpack.c.h.b16 %v4155
    %v5198 = vunpack.c.l.b16 %v4156
    %v5199 = vunpack.c.h.b16 %v4156
    %v5200 = vunpack.c.l.b16 %v4157
    %v5201 = vunpack.c.h.b16 %v4157
    %v5202 = vunpack.c.l.b16 %v4158
    %v5203 = vunpack.c.h.b16 %v4158
    %v5204 = vunpack.c.l.b16 %v4159
    %v5205 = vunpack.c.h.b16 %v4159
    %v5206 = vunpack.c.l.b16 %v4160
    %v5207 = vunpack.c.h.b16 %v4160
    %v5208 = vunpack.c.l.b16 %v4161
    %v5209 = vunpack.c.h.b16 %v4161
    %v5210 = vunpack.c.l.b16 %v4162
    %v5211 = vunpack.c.h.b16 %v4162
    %v5212 = vunpack.c.l.b16 %v4163
    %v5213 = vunpack.c.h.b16 %v4163
    %v5214 = vunpack.c.l.b16 %v4164
    %v5215 = vunpack.c.h.b16 %v4164
    %v5216 = vunpack.c.l.b16 %v4165
    %v5217 = vunpack.c.h.b16 %v4165
    %v5218 = vunpack.c.l.b16 %v4166
    %v5219 = vunpack.c.h.b16 %v4166
    %v5220 = vunpack.c.l.b16 %v4167
    %v5221 = vunpack.c.h.b16 %v4167
    %v5222 = vunpack.c.l.b16 %v4168
    %v5223 = vunpack.c.h.b16 %v4168
    %v5224 = vunpack.c.l.b16 %v4169
    %v5225 = vunpack.c.h.b16 %v4169
    %v5226 = vunpack.c.l.b16 %v4170
    %v5227 = vunpack.c.h.b16 %v4170
    %v5228 = vunpack.c.l.b16 %v4171
    %v5229 = vunpack.c.h.b16 %v4171
    %v5230 = vunpack.c.l.b16 %v4172
    %v5231 = vunpack.c.h.b16 %v4172
    %v5232 = vunpack.c.l.b16 %v4173
    %v5233 = vunpack.c.h.b16 %v4173
    %v5234 = vunpack.c.l.b16 %v4174
    %v5235 = vunpack.c.h.b16 %v4174
    %v5236 = vunpack.c.l.b16 %v4175
    %v5237 = vunpack.c.h.b16 %v4175
    %v5238 = vunpack.c.l.b16 %v4176
    %v5239 = vunpack.c.h.b16 %v4176
    %v5240 = vunpack.c.l.b16 %v4177
    %v5241 = vunpack.c.h.b16 %v4177
    %v5242 = vunpack.c.l.b16 %v4178
    %v5243 = vunpack.c.h.b16 %v4178
    %v5244 = vunpack.c.l.b16 %v4179
    %v5245 = vunpack.c.h.b16 %v4179
    %v5246 = vunpack.c.l.b16 %v4180
    %v5247 = vunpack.c.h.b16 %v4180
    %v5248 = vunpack.c.l.b16 %v4181
    %v5249 = vunpack.c.h.b16 %v4181
    %v5250 = vunpack.c.l.b16 %v4182
    %v5251 = vunpack.c.h.b16 %v4182
    %v5252 = vunpack.c.l.b16 %v4183
    %v5253 = vunpack.c.h.b16 %v4183
    %v5254 = vunpack.c.l.b16 %v4184
    %v5255 = vunpack.c.h.b16 %v4184
    %v5256 = vunpack.c.l.b16 %v4185
    %v5257 = vunpack.c.h.b16 %v4185
    %v5258 = vunpack.c.l.b16 %v4186
    %v5259 = vunpack.c.h.b16 %v4186
    %v5260 = vunpack.c.l.b16 %v4187
    %v5261 = vunpack.c.h.b16 %v4187
    %v5262 = vunpack.c.l.b16 %v4188
    %v5263 = vunpack.c.h.b16 %v4188
    %v5264 = vunpack.c.l.b16 %v4189
    %v5265 = vunpack.c.h.b16 %v4189
    %v5266 = vunpack.c.l.b16 %v4190
    %v5267 = vunpack.c.h.b16 %v4190
    %v5268 = vunpack.c.l.b16 %v4191
    %v5269 = vunpack.c.h.b16 %v4191
    %v5270 = vunpack.c.l.b16 %v4192
    %v5271 = vunpack.c.h.b16 %v4192
    %v5272 = vunpack.c.l.b16 %v4193
    %v5273 = vunpack.c.h.b16 %v4193
    %v5274 = vunpack.c.l.b16 %v4194
    %v5275 = vunpack.c.h.b16 %v4194
    %v5276 = vunpack.c.l.b16 %v4195
    %v5277 = vunpack.c.h.b16 %v4195
    %v5278 = vunpack.c.l.b16 %v4196
    %v5279 = vunpack.c.h.b16 %v4196
    %v5280 = vunpack.c.l.b16 %v4197
    %v5281 = vunpack.c.h.b16 %v4197
    %v5282 = vunpack.c.l.b16 %v4198
    %v5283 = vunpack.c.h.b16 %v4198
    %v5284 = vunpack.c.l.b16 %v4199
    %v5285 = vunpack.c.h.b16 %v4199
    %v5286 = vunpack.c.l.b16 %v4200
    %v5287 = vunpack.c.h.b16 %v4200
    %v5288 = vunpack.c.l.b16 %v4201
    %v5289 = vunpack.c.h.b16 %v4201
    %v5290 = vunpack.c.l.b16 %v4202
    %v5291 = vunpack.c.h.b16 %v4202
    %v5292 = vunpack.c.l.b16 %v4203
    %v5293 = vunpack.c.h.b16 %v4203
    %v5294 = vunpack.c.l.b16 %v4204
    %v5295 = vunpack.c.h.b16 %v4204
    %v5296 = vunpack.c.l.b16 %v4205
    %v5297 = vunpack.c.h.b16 %v4205
    %v5298 = vunpack.c.l.b16 %v4206
    %v5299 = vunpack.c.h.b16 %v4206
    %v5300 = vunpack.c.l.b16 %v4207
    %v5301 = vunpack.c.h.b16 %v4207
    %v5302 = vunpack.c.l.b16 %v4208
    %v5303 = vunpack.c.h.b16 %v4208
    %v5304 = vunpack.c.l.b16 %v4209
    %v5305 = vunpack.c.h.b16 %v4209
    %v5306 = vunpack.c.l.b16 %v4210
    %v5307 = vunpack.c.h.b16 %v4210
    %v5308 = vunpack.c.l.b16 %v4211
    %v5309 = vunpack.c.h.b16 %v4211
    %v5310 = vunpack.c.l.b16 %v4212
    %v5311 = vunpack.c.h.b16 %v4212
    %v5312 = vunpack.c.l.b16 %v4213
    %v5313 = vunpack.c.h.b16 %v4213
    %v5314 = vunpack.c.l.b16 %v4214
    %v5315 = vunpack.c.h.b16 %v4214
    %v5316 = vunpack.c.l.b16 %v4215
    %v5317 = vunpack.c.h.b16 %v4215
    %v5318 = vunpack.c.l.b16 %v4216
    %v5319 = vunpack.c.h.b16 %v4216
    %v5320 = vunpack.c.l.b16 %v4217
    %v5321 = vunpack.c.h.b16 %v4217
    %v5322 = vunpack.c.l.b16 %v4218
    %v5323 = vunpack.c.h.b16 %v4218
    %v5324 = vunpack.c.l.b16 %v4219
    %v5325 = vunpack.c.h.b16 %v4219
    %v5326 = vunpack.c.l.b16 %v4220
    %v5327 = vunpack.c.h.b16 %v4220
    %v5328 = vunpack.c.l.b16 %v4221
    %v5329 = vunpack.c.h.b16 %v4221
    %v5330 = vunpack.c.l.b16 %v4222
    %v5331 = vunpack.c.h.b16 %v4222
    %v5332 = vunpack.c.l.b16 %v4223
    %v5333 = vunpack.c.h.b16 %v4223
    %v5334 = vunpack.c.l.b16 %v4224
    %v5335 = vunpack.c.h.b16 %v4224
    %v5336 = vunpack.c.l.b16 %v4225
    %v5337 = vunpack.c.h.b16 %v4225
    %v5338 = vunpack.c.l.b16 %v4226
    %v5339 = vunpack.c.h.b16 %v4226
    %v5340 = vunpack.c.l.b16 %v4227
    %v5341 = vunpack.c.h.b16 %v4227
    %v5342 = vunpack.c.l.b16 %v4228
    %v5343 = vunpack.c.h.b16 %v4228
    %v5344 = vunpack.c.l.b16 %v4229
    %v5345 = vunpack.c.h.b16 %v4229
    %v5346 = vunpack.c.l.b16 %v4230
    %v5347 = vunpack.c.h.b16 %v4230
    %v5348 = vunpack.c.l.b16 %v4231
    %v5349 = vunpack.c.h.b16 %v4231
    %v5350 = vunpack.c.l.b16 %v4232
    %v5351 = vunpack.c.h.b16 %v4232
    %v5352 = vunpack.c.l.b16 %v4233
    %v5353 = vunpack.c.h.b16 %v4233
    %v5354 = vunpack.c.l.b16 %v4234
    %v5355 = vunpack.c.h.b16 %v4234
    %v5356 = vunpack.c.l.b16 %v4235
    %v5357 = vunpack.c.h.b16 %v4235
    %v5358 = vunpack.c.l.b16 %v4236
    %v5359 = vunpack.c.h.b16 %v4236
    %v5360 = vunpack.c.l.b16 %v4237
    %v5361 = vunpack.c.h.b16 %v4237
    %v5362 = vunpack.c.l.b16 %v4238
    %v5363 = vunpack.c.h.b16 %v4238
    %v5364 = vunpack.c.l.b16 %v4239
    %v5365 = vunpack.c.h.b16 %v4239
    %v5366 = vunpack.c.l.b16 %v4240
    %v5367 = vunpack.c.h.b16 %v4240
    %v5368 = vunpack.c.l.b16 %v4241
    %v5369 = vunpack.c.h.b16 %v4241
    %v5370 = vunpack.c.l.b16 %v4242
    %v5371 = vunpack.c.h.b16 %v4242
    %v5372 = vunpack.c.l.b16 %v4243
    %v5373 = vunpack.c.h.b16 %v4243
    %v5374 = vunpack.c.l.b16 %v4244
    %v5375 = vunpack.c.h.b16 %v4244
    %v5376 = vunpack.c.l.b16 %v4245
    %v5377 = vunpack.c.h.b16 %v4245
    %v5378 = vunpack.c.l.b16 %v4246
    %v5379 = vunpack.c.h.b16 %v4246
    %v5380 = vunpack.c.l.b16 %v4247
    %v5381 = vunpack.c.h.b16 %v4247
    %v5382 = vunpack.c.l.b16 %v4248
    %v5383 = vunpack.c.h.b16 %v4248
    %v5384 = vunpack.c.l.b16 %v4249
    %v5385 = vunpack.c.h.b16 %v4249
    %v5386 = vunpack.c.l.b16 %v4250
    %v5387 = vunpack.c.h.b16 %v4250
    %v5388 = vunpack.c.l.b16 %v4251
    %v5389 = vunpack.c.h.b16 %v4251
    %v5390 = vunpack.c.l.b16 %v4252
    %v5391 = vunpack.c.h.b16 %v4252
    %v5392 = vunpack.c.l.b16 %v4253
    %v5393 = vunpack.c.h.b16 %v4253
    %v5394 = vunpack.c.l.b16 %v4254
    %v5395 = vunpack.c.h.b16 %v4254
    %v5396 = vunpack.c.l.b16 %v4255
    %v5397 = vunpack.c.h.b16 %v4255
    %v5398 = vunpack.c.l.b16 %v4256
    %v5399 = vunpack.c.h.b16 %v4256
    %v5400 = vunpack.c.l.b16 %v4257
    %v5401 = vunpack.c.h.b16 %v4257
    %v5402 = vunpack.c.l.b16 %v4258
    %v5403 = vunpack.c.h.b16 %v4258
    %v5404 = vunpack.c.l.b16 %v4259
    %v5405 = vunpack.c.h.b16 %v4259
    %v5406 = vunpack.c.l.b16 %v4260
    %v5407 = vunpack.c.h.b16 %v4260
    %v5408 = vunpack.c.l.b16 %v4261
    %v5409 = vunpack.c.h.b16 %v4261
    %v5410 = vunpack.c.l.b16 %v4262
    %v5411 = vunpack.c.h.b16 %v4262
    %v5412 = vunpack.c.l.b16 %v4263
    %v5413 = vunpack.c.h.b16 %v4263
    %v5414 = vunpack.c.l.b16 %v4264
    %v5415 = vunpack.c.h.b16 %v4264
    %v5416 = vunpack.c.l.b16 %v4265
    %v5417 = vunpack.c.h.b16 %v4265
    %v5418 = vunpack.c.l.b16 %v4266
    %v5419 = vunpack.c.h.b16 %v4266
    %v5420 = vunpack.c.l.b16 %v4267
    %v5421 = vunpack.c.h.b16 %v4267
    %v5422 = vunpack.c.l.b16 %v4268
    %v5423 = vunpack.c.h.b16 %v4268
    %v5424 = vunpack.c.l.b16 %v4269
    %v5425 = vunpack.c.h.b16 %v4269
    %v5426 = vunpack.c.l.b16 %v4270
    %v5427 = vunpack.c.h.b16 %v4270
    %v5428 = vunpack.c.l.b16 %v4271
    %v5429 = vunpack.c.h.b16 %v4271
    %v5430 = vunpack.c.l.b16 %v4272
    %v5431 = vunpack.c.h.b16 %v4272
    %v5432 = vunpack.c.l.b16 %v4273
    %v5433 = vunpack.c.h.b16 %v4273
    %v5434 = vunpack.c.l.b16 %v4274
    %v5435 = vunpack.c.h.b16 %v4274
    %v5436 = vunpack.c.l.b16 %v4275
    %v5437 = vunpack.c.h.b16 %v4275
    %v5438 = vunpack.c.l.b16 %v4276
    %v5439 = vunpack.c.h.b16 %v4276
    %v5440 = vunpack.c.l.b16 %v4277
    %v5441 = vunpack.c.h.b16 %v4277
    %v5442 = vunpack.c.l.b16 %v4278
    %v5443 = vunpack.c.h.b16 %v4278
    %v5444 = vunpack.c.l.b16 %v4279
    %v5445 = vunpack.c.h.b16 %v4279
    %v5446 = vunpack.c.l.b16 %v4280
    %v5447 = vunpack.c.h.b16 %v4280
    %v5448 = vunpack.c.l.b16 %v4281
    %v5449 = vunpack.c.h.b16 %v4281
    %v5450 = vunpack.c.l.b16 %v4282
    %v5451 = vunpack.c.h.b16 %v4282
    %v5452 = vunpack.c.l.b16 %v4283
    %v5453 = vunpack.c.h.b16 %v4283
    %v5454 = vunpack.c.l.b16 %v4284
    %v5455 = vunpack.c.h.b16 %v4284
    %v5456 = vunpack.c.l.b16 %v4285
    %v5457 = vunpack.c.h.b16 %v4285
    %v5458 = vunpack.c.l.b16 %v4286
    %v5459 = vunpack.c.h.b16 %v4286
    %v5460 = vunpack.c.l.b16 %v4287
    %v5461 = vunpack.c.h.b16 %v4287
    %v5462 = vunpack.c.l.b16 %v4288
    %v5463 = vunpack.c.h.b16 %v4288
    %v5464 = vunpack.c.l.b16 %v4289
    %v5465 = vunpack.c.h.b16 %v4289
    %v5466 = vunpack.c.l.b16 %v4290
    %v5467 = vunpack.c.h.b16 %v4290
    %v5468 = vunpack.c.l.b16 %v4291
    %v5469 = vunpack.c.h.b16 %v4291
    %v5470 = vunpack.c.l.b16 %v4292
    %v5471 = vunpack.c.h.b16 %v4292
    %v5472 = vunpack.c.l.b16 %v4293
    %v5473 = vunpack.c.h.b16 %v4293
    %v5474 = vunpack.c.l.b16 %v4294
    %v5475 = vunpack.c.h.b16 %v4294
    %v5476 = vunpack.c.l.b16 %v4295
    %v5477 = vunpack.c.h.b16 %v4295
    %v5478 = vunpack.c.l.b16 %v4296
    %v5479 = vunpack.c.h.b16 %v4296
    %v5480 = vunpack.c.l.b16 %v4297
    %v5481 = vunpack.c.h.b16 %v4297
    %v5482 = vunpack.c.l.b16 %v4298
    %v5483 = vunpack.c.h.b16 %v4298
    %v5484 = vunpack.c.l.b16 %v4299
    %v5485 = vunpack.c.h.b16 %v4299
    %v5486 = vunpack.c.l.b16 %v4300
    %v5487 = vunpack.c.h.b16 %v4300
    %v5488 = vunpack.c.l.b16 %v4301
    %v5489 = vunpack.c.h.b16 %v4301
    %v5490 = vunpack.c.l.b16 %v4302
    %v5491 = vunpack.c.h.b16 %v4302
    %v5492 = vunpack.c.l.b16 %v4303
    %v5493 = vunpack.c.h.b16 %v4303
    %v5494 = vunpack.c.l.b16 %v4304
    %v5495 = vunpack.c.h.b16 %v4304
    %v5496 = vunpack.c.l.b16 %v4305
    %v5497 = vunpack.c.h.b16 %v4305
    %v5498 = vunpack.c.l.b16 %v4306
    %v5499 = vunpack.c.h.b16 %v4306
    %v5500 = vunpack.c.l.b16 %v4307
    %v5501 = vunpack.c.h.b16 %v4307
    %v5502 = vunpack.c.l.b16 %v4308
    %v5503 = vunpack.c.h.b16 %v4308
    %v5504 = vunpack.c.l.b16 %v4309
    %v5505 = vunpack.c.h.b16 %v4309
    %v5506 = vunpack.c.l.b16 %v4310
    %v5507 = vunpack.c.h.b16 %v4310
    %v5508 = vunpack.c.l.b16 %v4311
    %v5509 = vunpack.c.h.b16 %v4311
    %v5510 = vunpack.c.l.b16 %v4312
    %v5511 = vunpack.c.h.b16 %v4312
    %v5512 = vunpack.c.l.b16 %v4313
    %v5513 = vunpack.c.h.b16 %v4313
    %v5514 = vunpack.c.l.b16 %v4314
    %v5515 = vunpack.c.h.b16 %v4314
    %v5516 = vunpack.c.l.b16 %v4315
    %v5517 = vunpack.c.h.b16 %v4315
    %v5518 = vunpack.c.l.b16 %v4316
    %v5519 = vunpack.c.h.b16 %v4316
    %v5520 = vunpack.c.l.b16 %v4317
    %v5521 = vunpack.c.h.b16 %v4317
    %v5522 = vunpack.c.l.b16 %v4318
    %v5523 = vunpack.c.h.b16 %v4318
    %v5524 = vunpack.c.l.b16 %v4319
    %v5525 = vunpack.c.h.b16 %v4319
    %v5526 = vunpack.c.l.b16 %v4320
    %v5527 = vunpack.c.h.b16 %v4320
    %v5528 = vunpack.c.l.b16 %v4321
    %v5529 = vunpack.c.h.b16 %v4321
    %v5530 = vunpack.c.l.b16 %v4322
    %v5531 = vunpack.c.h.b16 %v4322
    %v5532 = vunpack.c.l.b16 %v4323
    %v5533 = vunpack.c.h.b16 %v4323
    %v5534 = vunpack.c.l.b16 %v4324
    %v5535 = vunpack.c.h.b16 %v4324
    %v5536 = vunpack.c.l.b16 %v4325
    %v5537 = vunpack.c.h.b16 %v4325
    %v5538 = vunpack.c.l.b16 %v4326
    %v5539 = vunpack.c.h.b16 %v4326
    %v5540 = vunpack.c.l.b16 %v4327
    %v5541 = vunpack.c.h.b16 %v4327
    %v5542 = vunpack.c.l.b16 %v4328
    %v5543 = vunpack.c.h.b16 %v4328
    %v5544 = vunpack.c.l.b16 %v4329
    %v5545 = vunpack.c.h.b16 %v4329
    %v5546 = vunpack.c.l.b16 %v4330
    %v5547 = vunpack.c.h.b16 %v4330
    %v5548 = vunpack.c.l.b16 %v4331
    %v5549 = vunpack.c.h.b16 %v4331
    %v5550 = vunpack.c.l.b16 %v4332
    %v5551 = vunpack.c.h.b16 %v4332
    %v5552 = vunpack.c.l.b16 %v4333
    %v5553 = vunpack.c.h.b16 %v4333
    %v5554 = vunpack.c.l.b16 %v4334
    %v5555 = vunpack.c.h.b16 %v4334
    %v5556 = vunpack.c.l.b16 %v4335
    %v5557 = vunpack.c.h.b16 %v4335
    %v5558 = vunpack.c.l.b16 %v4336
    %v5559 = vunpack.c.h.b16 %v4336
    %v5560 = vunpack.c.l.b16 %v4337
    %v5561 = vunpack.c.h.b16 %v4337
    %v5562 = vunpack.c.l.b16 %v4338
    %v5563 = vunpack.c.h.b16 %v4338
    %v5564 = vunpack.c.l.b16 %v4339
    %v5565 = vunpack.c.h.b16 %v4339
    %v5566 = vunpack.c.l.b16 %v4340
    %v5567 = vunpack.c.h.b16 %v4340
    %v5568 = vunpack.c.l.b16 %v4341
    %v5569 = vunpack.c.h.b16 %v4341
    %v5570 = vunpack.c.l.b16 %v4342
    %v5571 = vunpack.c.h.b16 %v4342
    %v5572 = vunpack.c.l.b16 %v4343
    %v5573 = vunpack.c.h.b16 %v4343
    %v5574 = vunpack.c.l.b16 %v4344
    %v5575 = vunpack.c.h.b16 %v4344
    %v5576 = vunpack.c.l.b16 %v4345
    %v5577 = vunpack.c.h.b16 %v4345
    %v5578 = vunpack.c.l.b16 %v4346
    %v5579 = vunpack.c.h.b16 %v4346
    %v5580 = vunpack.c.l.b16 %v4347
    %v5581 = vunpack.c.h.b16 %v4347
    %v5582 = vunpack.c.l.b16 %v4348
    %v5583 = vunpack.c.h.b16 %v4348
    %v5584 = vunpack.c.l.b16 %v4349
    %v5585 = vunpack.c.h.b16 %v4349
    %v5586 = vunpack.c.l.b16 %v4350
    %v5587 = vunpack.c.h.b16 %v4350
    %v5588 = vunpack.c.l.b16 %v4351
    %v5589 = vunpack.c.h.b16 %v4351
    %v5590 = vunpack.c.l.b16 %v4352
    %v5591 = vunpack.c.h.b16 %v4352
    %v5592 = vunpack.c.l.b16 %v4353
    %v5593 = vunpack.c.h.b16 %v4353
    %v5594 = vunpack.c.l.b16 %v4354
    %v5595 = vunpack.c.h.b16 %v4354
    %v5596 = vunpack.c.l.b16 %v4355
    %v5597 = vunpack.c.h.b16 %v4355
    %v5598 = vunpack.c.l.b16 %v4356
    %v5599 = vunpack.c.h.b16 %v4356
    %v5600 = vunpack.c.l.b16 %v4357
    %v5601 = vunpack.c.h.b16 %v4357
    %v5602 = vunpack.c.l.b16 %v4358
    %v5603 = vunpack.c.h.b16 %v4358
    %v5604 = vunpack.c.l.b16 %v4359
    %v5605 = vunpack.c.h.b16 %v4359
    %v5606 = vunpack.c.l.b16 %v4360
    %v5607 = vunpack.c.h.b16 %v4360
    %v5608 = vunpack.c.l.b16 %v4361
    %v5609 = vunpack.c.h.b16 %v4361
    %v5610 = vunpack.c.l.b16 %v4362
    %v5611 = vunpack.c.h.b16 %v4362
    %v5612 = vunpack.c.l.b16 %v4363
    %v5613 = vunpack.c.h.b16 %v4363
    %v5614 = vunpack.c.l.b16 %v4364
    %v5615 = vunpack.c.h.b16 %v4364
    %v5616 = vunpack.c.l.b16 %v4365
    %v5617 = vunpack.c.h.b16 %v4365
    %v5618 = vunpack.c.l.b16 %v4366
    %v5619 = vunpack.c.h.b16 %v4366
    %v5620 = vunpack.c.l.b16 %v4367
    %v5621 = vunpack.c.h.b16 %v4367
    %v5622 = vunpack.c.l.b16 %v4368
    %v5623 = vunpack.c.h.b16 %v4368
    %v5624 = vunpack.c.l.b16 %v4369
    %v5625 = vunpack.c.h.b16 %v4369
    %v5626 = vunpack.c.l.b16 %v4370
    %v5627 = vunpack.c.h.b16 %v4370
    %v5628 = vunpack.c.l.b16 %v4371
    %v5629 = vunpack.c.h.b16 %v4371
    %v5630 = vunpack.c.l.b16 %v4372
    %v5631 = vunpack.c.h.b16 %v4372
    %v5632 = vunpack.c.l.b16 %v4373
    %v5633 = vunpack.c.h.b16 %v4373
    %v5634 = vunpack.c.l.b16 %v4374
    %v5635 = vunpack.c.h.b16 %v4374
    %v5636 = vunpack.c.l.b16 %v4375
    %v5637 = vunpack.c.h.b16 %v4375
    %v5638 = vunpack.c.l.b16 %v4376
    %v5639 = vunpack.c.h.b16 %v4376
    %v5640 = vunpack.c.l.b16 %v4377
    %v5641 = vunpack.c.h.b16 %v4377
    %v5642 = vunpack.c.l.b16 %v4378
    %v5643 = vunpack.c.h.b16 %v4378
    %v5644 = vunpack.c.l.b16 %v4379
    %v5645 = vunpack.c.h.b16 %v4379
    %v5646 = vunpack.c.l.b16 %v4380
    %v5647 = vunpack.c.h.b16 %v4380
    %v5648 = vunpack.c.l.b16 %v4381
    %v5649 = vunpack.c.h.b16 %v4381
    %v5650 = vunpack.c.l.b16 %v4382
    %v5651 = vunpack.c.h.b16 %v4382
    %v5652 = vunpack.c.l.b16 %v4383
    %v5653 = vunpack.c.h.b16 %v4383
    %v5654 = vunpack.c.l.b16 %v4384
    %v5655 = vunpack.c.h.b16 %v4384
    %v5656 = vunpack.c.l.b16 %v4385
    %v5657 = vunpack.c.h.b16 %v4385
    %v5658 = vunpack.c.l.b16 %v4386
    %v5659 = vunpack.c.h.b16 %v4386
    %v5660 = vunpack.c.l.b16 %v4387
    %v5661 = vunpack.c.h.b16 %v4387
    %v5662 = vunpack.c.l.b16 %v4388
    %v5663 = vunpack.c.h.b16 %v4388
    %v5664 = vunpack.c.l.b16 %v4389
    %v5665 = vunpack.c.h.b16 %v4389
    %v5666 = vunpack.c.l.b16 %v4390
    %v5667 = vunpack.c.h.b16 %v4390
    %v5668 = vunpack.c.l.b16 %v4391
    %v5669 = vunpack.c.h.b16 %v4391
    %v5670 = vunpack.c.l.b16 %v4392
    %v5671 = vunpack.c.h.b16 %v4392
    %v5672 = vunpack.c.l.b16 %v4393
    %v5673 = vunpack.c.h.b16 %v4393
    %v5674 = vunpack.c.l.b16 %v4394
    %v5675 = vunpack.c.h.b16 %v4394
    %v5676 = vunpack.c.l.b16 %v4395
    %v5677 = vunpack.c.h.b16 %v4395
    %v5678 = vunpack.c.l.b16 %v4396
    %v5679 = vunpack.c.h.b16 %v4396
    %v5680 = vunpack.c.l.b16 %v4397
    %v5681 = vunpack.c.h.b16 %v4397
    %v5682 = vunpack.c.l.b16 %v4398
    %v5683 = vunpack.c.h.b16 %v4398
    %v5684 = vunpack.c.l.b16 %v4399
    %v5685 = vunpack.c.h.b16 %v4399
    %v5686 = vunpack.c.l.b16 %v4400
    %v5687 = vunpack.c.h.b16 %v4400
    %v5688 = vunpack.c.l.b16 %v4401
    %v5689 = vunpack.c.h.b16 %v4401
    %v5690 = vunpack.c.l.b16 %v4402
    %v5691 = vunpack.c.h.b16 %v4402
    %v5692 = vunpack.c.l.b16 %v4403
    %v5693 = vunpack.c.h.b16 %v4403
    %v5694 = vunpack.c.l.b16 %v4404
    %v5695 = vunpack.c.h.b16 %v4404
    %v5696 = vunpack.c.l.b16 %v4405
    %v5697 = vunpack.c.h.b16 %v4405
    %v5698 = vunpack.c.l.b16 %v4406
    %v5699 = vunpack.c.h.b16 %v4406
    %v5700 = vunpack.c.l.b16 %v4407
    %v5701 = vunpack.c.h.b16 %v4407
    %v5702 = vunpack.c.l.b16 %v4408
    %v5703 = vunpack.c.h.b16 %v4408
    %v5704 = vunpack.c.l.b16 %v4409
    %v5705 = vunpack.c.h.b16 %v4409
    %v5706 = vunpack.c.l.b16 %v4410
    %v5707 = vunpack.c.h.b16 %v4410
    %v5708 = vunpack.c.l.b16 %v4411
    %v5709 = vunpack.c.h.b16 %v4411
    %v5710 = vunpack.c.l.b16 %v4412
    %v5711 = vunpack.c.h.b16 %v4412
    %v5712 = vunpack.c.l.b16 %v4413
    %v5713 = vunpack.c.h.b16 %v4413
    %v5714 = vunpack.c.l.b16 %v4414
    %v5715 = vunpack.c.h.b16 %v4414
    %v5716 = vunpack.c.l.b16 %v4415
    %v5717 = vunpack.c.h.b16 %v4415
    %v5718 = vunpack.c.l.b16 %v4416
    %v5719 = vunpack.c.h.b16 %v4416
    %v5720 = vunpack.c.l.b16 %v4417
    %v5721 = vunpack.c.h.b16 %v4417
    %v5722 = vunpack.c.l.b16 %v4418
    %v5723 = vunpack.c.h.b16 %v4418
    %v5724 = vunpack.c.l.b16 %v4419
    %v5725 = vunpack.c.h.b16 %v4419
    %v5726 = vunpack.c.l.b16 %v4420
    %v5727 = vunpack.c.h.b16 %v4420
    %v5728 = vunpack.c.l.b16 %v4421
    %v5729 = vunpack.c.h.b16 %v4421
    %v5730 = vunpack.c.l.b16 %v4422
    %v5731 = vunpack.c.h.b16 %v4422
    %v5732 = vunpack.c.l.b16 %v4423
    %v5733 = vunpack.c.h.b16 %v4423
    %v5734 = vunpack.c.l.b16 %v4424
    %v5735 = vunpack.c.h.b16 %v4424
    %v5736 = vunpack.c.l.b16 %v4425
    %v5737 = vunpack.c.h.b16 %v4425
    %v5738 = vunpack.c.l.b16 %v4426
    %v5739 = vunpack.c.h.b16 %v4426
    %v5740 = vunpack.c.l.b16 %v4427
    %v5741 = vunpack.c.h.b16 %v4427
    %v5742 = vunpack.c.l.b16 %v4428
    %v5743 = vunpack.c.h.b16 %v4428
    %v5744 = vunpack.c.l.b16 %v4429
    %v5745 = vunpack.c.h.b16 %v4429
    %v5746 = vunpack.c.l.b16 %v4430
    %v5747 = vunpack.c.h.b16 %v4430
    %v5748 = vunpack.c.l.b16 %v4431
    %v5749 = vunpack.c.h.b16 %v4431
    %v5750 = vunpack.c.l.b16 %v4432
    %v5751 = vunpack.c.h.b16 %v4432
    %v5752 = vunpack.c.l.b16 %v4433
    %v5753 = vunpack.c.h.b16 %v4433
    %v5754 = vunpack.c.l.b16 %v4434
    %v5755 = vunpack.c.h.b16 %v4434
    %v5756 = vunpack.c.l.b16 %v4435
    %v5757 = vunpack.c.h.b16 %v4435
    %v5758 = vunpack.c.l.b16 %v4436
    %v5759 = vunpack.c.h.b16 %v4436
    %v5760 = vunpack.c.l.b16 %v4437
    %v5761 = vunpack.c.h.b16 %v4437
    %v5762 = vunpack.c.l.b16 %v4438
    %v5763 = vunpack.c.h.b16 %v4438
    %v5764 = vunpack.c.l.b16 %v4439
    %v5765 = vunpack.c.h.b16 %v4439
    %v5766 = vunpack.c.l.b16 %v4440
    %v5767 = vunpack.c.h.b16 %v4440
    %v5768 = vunpack.c.l.b16 %v4441
    %v5769 = vunpack.c.h.b16 %v4441
    %v5770 = vunpack.c.l.b16 %v4442
    %v5771 = vunpack.c.h.b16 %v4442
    %v5772 = vunpack.c.l.b16 %v4443
    %v5773 = vunpack.c.h.b16 %v4443
    %v5774 = vunpack.c.l.b16 %v4444
    %v5775 = vunpack.c.h.b16 %v4444
    %v5776 = vunpack.c.l.b16 %v4445
    %v5777 = vunpack.c.h.b16 %v4445
    %v5778 = vunpack.c.l.b16 %v4446
    %v5779 = vunpack.c.h.b16 %v4446
    %v5780 = vunpack.c.l.b16 %v4447
    %v5781 = vunpack.c.h.b16 %v4447
    %v5782 = vunpack.c.l.b16 %v4448
    %v5783 = vunpack.c.h.b16 %v4448
    %v5784 = vunpack.c.l.b16 %v4449
    %v5785 = vunpack.c.h.b16 %v4449
    %v5786 = vunpack.c.l.b16 %v4450
    %v5787 = vunpack.c.h.b16 %v4450
    %v5788 = vunpack.c.l.b16 %v4451
    %v5789 = vunpack.c.h.b16 %v4451
    %v5790 = vunpack.c.l.b16 %v4452
    %v5791 = vunpack.c.h.b16 %v4452
    %v5792 = vunpack.c.l.b16 %v4453
    %v5793 = vunpack.c.h.b16 %v4453
    %v5794 = vunpack.c.l.b16 %v4454
    %v5795 = vunpack.c.h.b16 %v4454
    %v5796 = vunpack.c.l.b16 %v4455
    %v5797 = vunpack.c.h.b16 %v4455
    %v5798 = vunpack.c.l.b16 %v4456
    %v5799 = vunpack.c.h.b16 %v4456
    %v5800 = vunpack.c.l.b16 %v4457
    %v5801 = vunpack.c.h.b16 %v4457
    %v5802 = vunpack.c.l.b16 %v4458
    %v5803 = vunpack.c.h.b16 %v4458
    %v5804 = vunpack.c.l.b16 %v4459
    %v5805 = vunpack.c.h.b16 %v4459
    %v5806 = vunpack.c.l.b16 %v4460
    %v5807 = vunpack.c.h.b16 %v4460
    %v5808 = vunpack.c.l.b16 %v4461
    %v5809 = vunpack.c.h.b16 %v4461
    %v5810 = vunpack.c.l.b16 %v4462
    %v5811 = vunpack.c.h.b16 %v4462
    %v5812 = vunpack.c.l.b16 %v4463
    %v5813 = vunpack.c.h.b16 %v4463
    %v5814 = vunpack.c.l.b16 %v4464
    %v5815 = vunpack.c.h.b16 %v4464
    %v5816 = vunpack.c.l.b16 %v4465
    %v5817 = vunpack.c.h.b16 %v4465
    %v5818 = vunpack.c.l.b16 %v4466
    %v5819 = vunpack.c.h.b16 %v4466
    %v5820 = vunpack.c.l.b16 %v4467
    %v5821 = vunpack.c.h.b16 %v4467
    %v5822 = vunpack.c.l.b16 %v4468
    %v5823 = vunpack.c.h.b16 %v4468
    %v5824 = vunpack.c.l.b16 %v4469
    %v5825 = vunpack.c.h.b16 %v4469
    %v5826 = vunpack.c.l.b16 %v4470
    %v5827 = vunpack.c.h.b16 %v4470
    %v5828 = vunpack.c.l.b16 %v4471
    %v5829 = vunpack.c.h.b16 %v4471
    %v5830 = vunpack.c.l.b16 %v4472
    %v5831 = vunpack.c.h.b16 %v4472
    %v5832 = vunpack.c.l.b16 %v4473
    %v5833 = vunpack.c.h.b16 %v4473
    %v5834 = vunpack.c.l.b16 %v4474
    %v5835 = vunpack.c.h.b16 %v4474
    %v5836 = vunpack.c.l.b16 %v4475
    %v5837 = vunpack.c.h.b16 %v4475
    %v5838 = vunpack.c.l.b16 %v4476
    %v5839 = vunpack.c.h.b16 %v4476
    %v5840 = vunpack.c.l.b16 %v4477
    %v5841 = vunpack.c.h.b16 %v4477
    %v5842 = vunpack.c.l.b16 %v4478
    %v5843 = vunpack.c.h.b16 %v4478
    %v5844 = vunpack.c.l.b16 %v4479
    %v5845 = vunpack.c.h.b16 %v4479
    %v5846 = vunpack.c.l.b16 %v4480
    %v5847 = vunpack.c.h.b16 %v4480
    %v5848 = vunpack.c.l.b16 %v4481
    %v5849 = vunpack.c.h.b16 %v4481
    %v5850 = vunpack.c.l.b16 %v4482
    %v5851 = vunpack.c.h.b16 %v4482
    %v5852 = vunpack.c.l.b16 %v4483
    %v5853 = vunpack.c.h.b16 %v4483
    %v5854 = vunpack.c.l.b16 %v4484
    %v5855 = vunpack.c.h.b16 %v4484
    %v5856 = vunpack.c.l.b16 %v4485
    %v5857 = vunpack.c.h.b16 %v4485
    %v5858 = vunpack.c.l.b16 %v4486
    %v5859 = vunpack.c.h.b16 %v4486
    %v5860 = vunpack.c.l.b16 %v4487
    %v5861 = vunpack.c.h.b16 %v4487
    %v5862 = vunpack.c.l.b16 %v4488
    %v5863 = vunpack.c.h.b16 %v4488
    %v5864 = vunpack.c.l.b16 %v4489
    %v5865 = vunpack.c.h.b16 %v4489
    %v5866 = vunpack.c.l.b16 %v4490
    %v5867 = vunpack.c.h.b16 %v4490
    %v5868 = vunpack.c.l.b16 %v4491
    %v5869 = vunpack.c.h.b16 %v4491
    %v5870 = vunpack.c.l.b16 %v4492
    %v5871 = vunpack.c.h.b16 %v4492
    %v5872 = vunpack.c.l.b16 %v4493
    %v5873 = vunpack.c.h.b16 %v4493
    %v5874 = vunpack.c.l.b16 %v4494
    %v5875 = vunpack.c.h.b16 %v4494
    %v5876 = vunpack.c.l.b16 %v4495
    %v5877 = vunpack.c.h.b16 %v4495
    %v5878 = vunpack.c.l.b16 %v4496
    %v5879 = vunpack.c.h.b16 %v4496
    %v5880 = vunpack.c.l.b16 %v4497
    %v5881 = vunpack.c.h.b16 %v4497
    %v5882 = vunpack.c.l.b16 %v4498
    %v5883 = vunpack.c.h.b16 %v4498
    %v5884 = vunpack.c.l.b16 %v4499
    %v5885 = vunpack.c.h.b16 %v4499
    %v5886 = vunpack.c.l.b16 %v4500
    %v5887 = vunpack.c.h.b16 %v4500
    %v5888 = vunpack.c.l.b16 %v4501
    %v5889 = vunpack.c.h.b16 %v4501
    %v5890 = vunpack.c.l.b16 %v4502
    %v5891 = vunpack.c.h.b16 %v4502
    %v5892 = vunpack.c.l.b16 %v4503
    %v5893 = vunpack.c.h.b16 %v4503
    %v5894 = vunpack.c.l.b16 %v4504
    %v5895 = vunpack.c.h.b16 %v4504
    %v5896 = vunpack.c.l.b16 %v4505
    %v5897 = vunpack.c.h.b16 %v4505
    %v5898 = vunpack.c.l.b16 %v4506
    %v5899 = vunpack.c.h.b16 %v4506
    %v5900 = vunpack.c.l.b16 %v4507
    %v5901 = vunpack.c.h.b16 %v4507
    %v5902 = vunpack.c.l.b16 %v4508
    %v5903 = vunpack.c.h.b16 %v4508
    %v5904 = vunpack.c.l.b16 %v4509
    %v5905 = vunpack.c.h.b16 %v4509
    %v5906 = vunpack.c.l.b16 %v4510
    %v5907 = vunpack.c.h.b16 %v4510
    %v5908 = vunpack.c.l.b16 %v4511
    %v5909 = vunpack.c.h.b16 %v4511
    %v5910 = vunpack.c.l.b16 %v4512
    %v5911 = vunpack.c.h.b16 %v4512
    %v5912 = vunpack.c.l.b16 %v4513
    %v5913 = vunpack.c.h.b16 %v4513
    %v5914 = vunpack.c.l.b16 %v4514
    %v5915 = vunpack.c.h.b16 %v4514
    %v5916 = vunpack.c.l.b16 %v4515
    %v5917 = vunpack.c.h.b16 %v4515
    %v5918 = vunpack.c.l.b16 %v4516
    %v5919 = vunpack.c.h.b16 %v4516
    %v5920 = vunpack.c.l.b16 %v4517
    %v5921 = vunpack.c.h.b16 %v4517
    %v5922 = vunpack.c.l.b16 %v4518
    %v5923 = vunpack.c.h.b16 %v4518
    %v5924 = vunpack.c.l.b16 %v4519
    %v5925 = vunpack.c.h.b16 %v4519
    %v5926 = vunpack.c.l.b16 %v4520
    %v5927 = vunpack.c.h.b16 %v4520
    %v5928 = vunpack.c.l.b16 %v4521
    %v5929 = vunpack.c.h.b16 %v4521
    %v5930 = vunpack.c.l.b16 %v4522
    %v5931 = vunpack.c.h.b16 %v4522
    %v5932 = vunpack.c.l.b16 %v4523
    %v5933 = vunpack.c.h.b16 %v4523
    %v5934 = vunpack.c.l.b16 %v4524
    %v5935 = vunpack.c.h.b16 %v4524
    %v5936 = vunpack.c.l.b16 %v4525
    %v5937 = vunpack.c.h.b16 %v4525
    %v5938 = vunpack.c.l.b16 %v4526
    %v5939 = vunpack.c.h.b16 %v4526
    %v5940 = vunpack.c.l.b16 %v4527
    %v5941 = vunpack.c.h.b16 %v4527
    %v5942 = vunpack.c.l.b16 %v4528
    %v5943 = vunpack.c.h.b16 %v4528
    %v5944 = vunpack.c.l.b16 %v4529
    %v5945 = vunpack.c.h.b16 %v4529
    %v5946 = vunpack.c.l.b16 %v4530
    %v5947 = vunpack.c.h.b16 %v4530
    %v5948 = vunpack.c.l.b16 %v4531
    %v5949 = vunpack.c.h.b16 %v4531
    %v5950 = vunpack.c.l.b16 %v4532
    %v5951 = vunpack.c.h.b16 %v4532
    %v5952 = vunpack.c.l.b16 %v4533
    %v5953 = vunpack.c.h.b16 %v4533
    %v5954 = vunpack.c.l.b16 %v4534
    %v5955 = vunpack.c.h.b16 %v4534
    %v5956 = vunpack.c.l.b16 %v4535
    %v5957 = vunpack.c.h.b16 %v4535
    %v5958 = vunpack.c.l.b16 %v4536
    %v5959 = vunpack.c.h.b16 %v4536
    %v5960 = vunpack.c.l.b16 %v4537
    %v5961 = vunpack.c.h.b16 %v4537
    %v5962 = vunpack.c.l.b16 %v4538
    %v5963 = vunpack.c.h.b16 %v4538
    %v5964 = vunpack.c.l.b16 %v4539
    %v5965 = vunpack.c.h.b16 %v4539
    %v5966 = vunpack.c.l.b16 %v4540
    %v5967 = vunpack.c.h.b16 %v4540
    %v5968 = vunpack.c.l.b16 %v4541
    %v5969 = vunpack.c.h.b16 %v4541
    %v5970 = vunpack.c.l.b16 %v4542
    %v5971 = vunpack.c.h.b16 %v4542
    %v5972 = vunpack.c.l.b16 %v4543
    %v5973 = vunpack.c.h.b16 %v4543
    %v5974 = vunpack.c.l.b16 %v4544
    %v5975 = vunpack.c.h.b16 %v4544
    %v5976 = vunpack.c.l.b16 %v4545
    %v5977 = vunpack.c.h.b16 %v4545
    %v5978 = vunpack.c.l.b16 %v4546
    %v5979 = vunpack.c.h.b16 %v4546
    %v5980 = vunpack.c.l.b16 %v4547
    %v5981 = vunpack.c.h.b16 %v4547
    %v5982 = vunpack.c.l.b16 %v4548
    %v5983 = vunpack.c.h.b16 %v4548
    %v5984 = vunpack.c.l.b16 %v4549
    %v5985 = vunpack.c.h.b16 %v4549
    %v5986 = vunpack.c.l.b16 %v4550
    %v5987 = vunpack.c.h.b16 %v4550
    %v5988 = vunpack.c.l.b16 %v4551
    %v5989 = vunpack.c.h.b16 %v4551
    %v5990 = vunpack.c.l.b16 %v4552
    %v5991 = vunpack.c.h.b16 %v4552
    %v5992 = vunpack.c.l.b16 %v4553
    %v5993 = vunpack.c.h.b16 %v4553
    %v5994 = vunpack.c.l.b16 %v4554
    %v5995 = vunpack.c.h.b16 %v4554
    %v5996 = vunpack.c.l.b16 %v4555
    %v5997 = vunpack.c.h.b16 %v4555
    %v5998 = vunpack.c.l.b16 %v4556
    %v5999 = vunpack.c.h.b16 %v4556
    %v6000 = vunpack.c.l.b16 %v4557
    %v6001 = vunpack.c.h.b16 %v4557
    %v6002 = vunpack.c.l.b16 %v4558
    %v6003 = vunpack.c.h.b16 %v4558
    %v6004 = vunpack.c.l.b16 %v4559
    %v6005 = vunpack.c.h.b16 %v4559
    %v6006 = vunpack.c.l.b16 %v4560
    %v6007 = vunpack.c.h.b16 %v4560
    %v6008 = vunpack.c.l.b16 %v4561
    %v6009 = vunpack.c.h.b16 %v4561
    %v6010 = vunpack.c.l.b16 %v4562
    %v6011 = vunpack.c.h.b16 %v4562
    %v6012 = vunpack.c.l.b16 %v4563
    %v6013 = vunpack.c.h.b16 %v4563
    %v6014 = vunpack.c.l.b16 %v4564
    %v6015 = vunpack.c.h.b16 %v4564
    %v6016 = vunpack.c.l.b16 %v4565
    %v6017 = vunpack.c.h.b16 %v4565
    %v6018 = vunpack.c.l.b16 %v4566
    %v6019 = vunpack.c.h.b16 %v4566
    %v6020 = vunpack.c.l.b16 %v4567
    %v6021 = vunpack.c.h.b16 %v4567
    %v6022 = vunpack.c.l.b16 %v4568
    %v6023 = vunpack.c.h.b16 %v4568
    %v6024 = vunpack.c.l.b16 %v4569
    %v6025 = vunpack.c.h.b16 %v4569
    %v6026 = vunpack.c.l.b16 %v4570
    %v6027 = vunpack.c.h.b16 %v4570
    %v6028 = vunpack.c.l.b16 %v4571
    %v6029 = vunpack.c.h.b16 %v4571
    %v6030 = vunpack.c.l.b16 %v4572
    %v6031 = vunpack.c.h.b16 %v4572
    %v6032 = vunpack.c.l.b16 %v4573
    %v6033 = vunpack.c.h.b16 %v4573
    %v6034 = vunpack.c.l.b16 %v4574
    %v6035 = vunpack.c.h.b16 %v4574
    %v6036 = vunpack.c.l.b16 %v4575
    %v6037 = vunpack.c.h.b16 %v4575
    %v6038 = vunpack.c.l.b16 %v4576
    %v6039 = vunpack.c.h.b16 %v4576
    %v6040 = vunpack.c.l.b16 %v4577
    %v6041 = vunpack.c.h.b16 %v4577
    %v6042 = vunpack.c.l.b16 %v4578
    %v6043 = vunpack.c.h.b16 %v4578
    %v6044 = vunpack.c.l.b16 %v4579
    %v6045 = vunpack.c.h.b16 %v4579
    %v6046 = vunpack.c.l.b16 %v4580
    %v6047 = vunpack.c.h.b16 %v4580
    %v6048 = vunpack.c.l.b16 %v4581
    %v6049 = vunpack.c.h.b16 %v4581
    %v6050 = vunpack.c.l.b16 %v4582
    %v6051 = vunpack.c.h.b16 %v4582
    %v6052 = vunpack.c.l.b16 %v4583
    %v6053 = vunpack.c.h.b16 %v4583
    %v6054 = vunpack.c.l.b16 %v4584
    %v6055 = vunpack.c.h.b16 %v4584
    %v6056 = vunpack.c.l.b16 %v4585
    %v6057 = vunpack.c.h.b16 %v4585
    %v6058 = vunpack.c.l.b16 %v4586
    %v6059 = vunpack.c.h.b16 %v4586
    %v6060 = vunpack.c.l.b16 %v4587
    %v6061 = vunpack.c.h.b16 %v4587
    %v6062 = vunpack.c.l.b16 %v4588
    %v6063 = vunpack.c.h.b16 %v4588
    %v6064 = vunpack.c.l.b16 %v4589
    %v6065 = vunpack.c.h.b16 %v4589
    %v6066 = vunpack.c.l.b16 %v4590
    %v6067 = vunpack.c.h.b16 %v4590
    %v6068 = vunpack.c.l.b16 %v4591
    %v6069 = vunpack.c.h.b16 %v4591
    %v6070 = vunpack.c.l.b16 %v4592
    %v6071 = vunpack.c.h.b16 %v4592
    %v6072 = vunpack.c.l.b16 %v4593
    %v6073 = vunpack.c.h.b16 %v4593
    %v6074 = vunpack.c.l.b16 %v4594
    %v6075 = vunpack.c.h.b16 %v4594
    %v6076 = vunpack.c.l.b16 %v4595
    %v6077 = vunpack.c.h.b16 %v4595
    %v6078 = vunpack.c.l.b16 %v4596
    %v6079 = vunpack.c.h.b16 %v4596
    %v6080 = vunpack.c.l.b16 %v4597
    %v6081 = vunpack.c.h.b16 %v4597
    %v6082 = vunpack.c.l.b16 %v4598
    %v6083 = vunpack.c.h.b16 %v4598
    %v6084 = vunpack.c.l.b16 %v4599
    %v6085 = vunpack.c.h.b16 %v4599
    %v6086 = vunpack.c.l.b16 %v4600
    %v6087 = vunpack.c.h.b16 %v4600
    %v6088 = vunpack.c.l.b16 %v4601
    %v6089 = vunpack.c.h.b16 %v4601
    %v6090 = vunpack.c.l.b16 %v4602
    %v6091 = vunpack.c.h.b16 %v4602
    %v6092 = vunpack.c.l.b16 %v4603
    %v6093 = vunpack.c.h.b16 %v4603
    %v6094 = vunpack.c.l.b16 %v4604
    %v6095 = vunpack.c.h.b16 %v4604
    %v6096 = vunpack.c.l.b16 %v4605
    %v6097 = vunpack.c.h.b16 %v4605
    %v6098 = vunpack.c.l.b16 %v4606
    %v6099 = vunpack.c.h.b16 %v4606
    %v6100 = vunpack.c.l.b16 %v4607
    %v6101 = vunpack.c.h.b16 %v4607
    %v6102 = vunpack.c.l.b16 %v4608
    %v6103 = vunpack.c.h.b16 %v4608
    %v6104 = vunpack.c.l.b16 %v4609
    %v6105 = vunpack.c.h.b16 %v4609
    %v6106 = vunpack.c.l.b16 %v4610
    %v6107 = vunpack.c.h.b16 %v4610
    %v6108 = vunpack.c.l.b16 %v4611
    %v6109 = vunpack.c.h.b16 %v4611
    %v6110 = vunpack.c.l.b16 %v4612
    %v6111 = vunpack.c.h.b16 %v4612
    %v6112 = vunpack.c.l.b16 %v4613
    %v6113 = vunpack.c.h.b16 %v4613
    %v6114 = vunpack.c.l.b16 %v4614
    %v6115 = vunpack.c.h.b16 %v4614
    %v6116 = vunpack.c.l.b16 %v4615
    %v6117 = vunpack.c.h.b16 %v4615
    %v6118 = vunpack.c.l.b16 %v4616
    %v6119 = vunpack.c.h.b16 %v4616
    %v6120 = vunpack.c.l.b16 %v4617
    %v6121 = vunpack.c.h.b16 %v4617
    %v6122 = vunpack.c.l.b16 %v4618
    %v6123 = vunpack.c.h.b16 %v4618
    %v6124 = vunpack.c.l.b16 %v4619
    %v6125 = vunpack.c.h.b16 %v4619
    %v6126 = vunpack.c.l.b16 %v4620
    %v6127 = vunpack.c.h.b16 %v4620
    %v6128 = vunpack.c.l.b16 %v4621
    %v6129 = vunpack.c.h.b16 %v4621
    %v6130 = vunpack.c.l.b16 %v4622
    %v6131 = vunpack.c.h.b16 %v4622
    %v6132 = vunpack.c.l.b16 %v4623
    %v6133 = vunpack.c.h.b16 %v4623
    %v6134 = vunpack.c.l.b16 %v4624
    %v6135 = vunpack.c.h.b16 %v4624
    %v6136 = vunpack.c.l.b16 %v4625
    %v6137 = vunpack.c.h.b16 %v4625
    %v6138 = vunpack.c.l.b16 %v4626
    %v6139 = vunpack.c.h.b16 %v4626
    %v6140 = vunpack.c.l.b16 %v4627
    %v6141 = vunpack.c.h.b16 %v4627
    %v6142 = vunpack.c.l.b16 %v4628
    %v6143 = vunpack.c.h.b16 %v4628
    %v6144 = vunpack.c.l.b16 %v4629
    %v6145 = vunpack.c.h.b16 %v4629
    %v6146 = vunpack.c.l.b16 %v4630
    %v6147 = vunpack.c.h.b16 %v4630
    %v6148 = vunpack.c.l.b16 %v4631
    %v6149 = vunpack.c.h.b16 %v4631
    %v6150 = vunpack.c.l.b16 %v4632
    %v6151 = vunpack.c.h.b16 %v4632
    %v6152 = vunpack.c.l.b16 %v4633
    %v6153 = vunpack.c.h.b16 %v4633
    %v6154 = vunpack.c.l.b16 %v4634
    %v6155 = vunpack.c.h.b16 %v4634
    %v6156 = vunpack.c.l.b16 %v4635
    %v6157 = vunpack.c.h.b16 %v4635
    %v6158 = vunpack.c.l.b16 %v4636
    %v6159 = vunpack.c.h.b16 %v4636
    %v6160 = vunpack.c.l.b16 %v4637
    %v6161 = vunpack.c.h.b16 %v4637
    %v6162 = vunpack.c.l.b16 %v4638
    %v6163 = vunpack.c.h.b16 %v4638
    %v6164 = vunpack.c.l.b16 %v4639
    %v6165 = vunpack.c.h.b16 %v4639
    %v6166 = vunpack.c.l.b16 %v4640
    %v6167 = vunpack.c.h.b16 %v4640
    %v6168 = vunpack.c.l.b16 %v4641
    %v6169 = vunpack.c.h.b16 %v4641
    %v6170 = vunpack.c.l.b16 %v4642
    %v6171 = vunpack.c.h.b16 %v4642
    %v6172 = vunpack.c.l.b16 %v4643
    %v6173 = vunpack.c.h.b16 %v4643
    %v6174 = vunpack.c.l.b16 %v4644
    %v6175 = vunpack.c.h.b16 %v4644
    %v6176 = vunpack.c.l.b16 %v4645
    %v6177 = vunpack.c.h.b16 %v4645
    %v6178 = vunpack.c.l.b16 %v4646
    %v6179 = vunpack.c.h.b16 %v4646
    %v6180 = vunpack.c.l.b16 %v4647
    %v6181 = vunpack.c.h.b16 %v4647
    %v6182 = vunpack.c.l.b16 %v4648
    %v6183 = vunpack.c.h.b16 %v4648
    %v6184 = vunpack.c.l.b16 %v4649
    %v6185 = vunpack.c.h.b16 %v4649
    %v6186 = vpack.c.b16 %v5166, %v5162
    %v6187 = vpack.c.b16 %v5167, %v5163
    %v6188 = vpack.c.b16 %v5168, %v5164
    %v6189 = vpack.c.b16 %v5169, %v5165
    %v6190 = vpack.c.b16 %v5174, %v5170
    %v6191 = vpack.c.b16 %v5175, %v5171
    %v6192 = vpack.c.b16 %v5176, %v5172
    %v6193 = vpack.c.b16 %v5177, %v5173
    %v6194 = vpack.c.b16 %v5182, %v5178
    %v6195 = vpack.c.b16 %v5183, %v5179
    %v6196 = vpack.c.b16 %v5184, %v5180
    %v6197 = vpack.c.b16 %v5185, %v5181
    %v6198 = vpack.c.b16 %v5190, %v5186
    %v6199 = vpack.c.b16 %v5191, %v5187
    %v6200 = vpack.c.b16 %v5192, %v5188
    %v6201 = vpack.c.b16 %v5193, %v5189
    %v6202 = vpack.c.b16 %v5198, %v5194
    %v6203 = vpack.c.b16 %v5199, %v5195
    %v6204 = vpack.c.b16 %v5200, %v5196
    %v6205 = vpack.c.b16 %v5201, %v5197
    %v6206 = vpack.c.b16 %v5206, %v5202
    %v6207 = vpack.c.b16 %v5207, %v5203
    %v6208 = vpack.c.b16 %v5208, %v5204
    %v6209 = vpack.c.b16 %v5209, %v5205
    %v6210 = vpack.c.b16 %v5214, %v5210
    %v6211 = vpack.c.b16 %v5215, %v5211
    %v6212 = vpack.c.b16 %v5216, %v5212
    %v6213 = vpack.c.b16 %v5217, %v5213
    %v6214 = vpack.c.b16 %v5222, %v5218
    %v6215 = vpack.c.b16 %v5223, %v5219
    %v6216 = vpack.c.b16 %v5224, %v5220
    %v6217 = vpack.c.b16 %v5225, %v5221
    %v6218 = vpack.c.b16 %v5230, %v5226
    %v6219 = vpack.c.b16 %v5231, %v5227
    %v6220 = vpack.c.b16 %v5232, %v5228
    %v6221 = vpack.c.b16 %v5233, %v5229
    %v6222 = vpack.c.b16 %v5238, %v5234
    %v6223 = vpack.c.b16 %v5239, %v5235
    %v6224 = vpack.c.b16 %v5240, %v5236
    %v6225 = vpack.c.b16 %v5241, %v5237
    %v6226 = vpack.c.b16 %v5246, %v5242
    %v6227 = vpack.c.b16 %v5247, %v5243
    %v6228 = vpack.c.b16 %v5248, %v5244
    %v6229 = vpack.c.b16 %v5249, %v5245
    %v6230 = vpack.c.b16 %v5254, %v5250
    %v6231 = vpack.c.b16 %v5255, %v5251
    %v6232 = vpack.c.b16 %v5256, %v5252
    %v6233 = vpack.c.b16 %v5257, %v5253
    %v6234 = vpack.c.b16 %v5262, %v5258
    %v6235 = vpack.c.b16 %v5263, %v5259
    %v6236 = vpack.c.b16 %v5264, %v5260
    %v6237 = vpack.c.b16 %v5265, %v5261
    %v6238 = vpack.c.b16 %v5270, %v5266
    %v6239 = vpack.c.b16 %v5271, %v5267
    %v6240 = vpack.c.b16 %v5272, %v5268
    %v6241 = vpack.c.b16 %v5273, %v5269
    %v6242 = vpack.c.b16 %v5278, %v5274
    %v6243 = vpack.c.b16 %v5279, %v5275
    %v6244 = vpack.c.b16 %v5280, %v5276
    %v6245 = vpack.c.b16 %v5281, %v5277
    %v6246 = vpack.c.b16 %v5286, %v5282
    %v6247 = vpack.c.b16 %v5287, %v5283
    %v6248 = vpack.c.b16 %v5288, %v5284
    %v6249 = vpack.c.b16 %v5289, %v5285
    %v6250 = vpack.c.b16 %v5294, %v5290
    %v6251 = vpack.c.b16 %v5295, %v5291
    %v6252 = vpack.c.b16 %v5296, %v5292
    %v6253 = vpack.c.b16 %v5297, %v5293
    %v6254 = vpack.c.b16 %v5302, %v5298
    %v6255 = vpack.c.b16 %v5303, %v5299
    %v6256 = vpack.c.b16 %v5304, %v5300
    %v6257 = vpack.c.b16 %v5305, %v5301
    %v6258 = vpack.c.b16 %v5310, %v5306
    %v6259 = vpack.c.b16 %v5311, %v5307
    %v6260 = vpack.c.b16 %v5312, %v5308
    %v6261 = vpack.c.b16 %v5313, %v5309
    %v6262 = vpack.c.b16 %v5318, %v5314
    %v6263 = vpack.c.b16 %v5319, %v5315
    %v6264 = vpack.c.b16 %v5320, %v5316
    %v6265 = vpack.c.b16 %v5321, %v5317
    %v6266 = vpack.c.b16 %v5326, %v5322
    %v6267 = vpack.c.b16 %v5327, %v5323
    %v6268 = vpack.c.b16 %v5328, %v5324
    %v6269 = vpack.c.b16 %v5329, %v5325
    %v6270 = vpack.c.b16 %v5334, %v5330
    %v6271 = vpack.c.b16 %v5335, %v5331
    %v6272 = vpack.c.b16 %v5336, %v5332
    %v6273 = vpack.c.b16 %v5337, %v5333
    %v6274 = vpack.c.b16 %v5342, %v5338
    %v6275 = vpack.c.b16 %v5343, %v5339
    %v6276 = vpack.c.b16 %v5344, %v5340
    %v6277 = vpack.c.b16 %v5345, %v5341
    %v6278 = vpack.c.b16 %v5350, %v5346
    %v6279 = vpack.c.b16 %v5351, %v5347
    %v6280 = vpack.c.b16 %v5352, %v5348
    %v6281 = vpack.c.b16 %v5353, %v5349
    %v6282 = vpack.c.b16 %v5358, %v5354
    %v6283 = vpack.c.b16 %v5359, %v5355
    %v6284 = vpack.c.b16 %v5360, %v5356
    %v6285 = vpack.c.b16 %v5361, %v5357
    %v6286 = vpack.c.b16 %v5366, %v5362
    %v6287 = vpack.c.b16 %v5367, %v5363
    %v6288 = vpack.c.b16 %v5368, %v5364
    %v6289 = vpack.c.b16 %v5369, %v5365
    %v6290 = vpack.c.b16 %v5374, %v5370
    %v6291 = vpack.c.b16 %v5375, %v5371
    %v6292 = vpack.c.b16 %v5376, %v5372
    %v6293 = vpack.c.b16 %v5377, %v5373
    %v6294 = vpack.c.b16 %v5382, %v5378
    %v6295 = vpack.c.b16 %v5383, %v5379
    %v6296 = vpack.c.b16 %v5384, %v5380
    %v6297 = vpack.c.b16 %v5385, %v5381
    %v6298 = vpack.c.b16 %v5390, %v5386
    %v6299 = vpack.c.b16 %v5391, %v5387
    %v6300 = vpack.c.b16 %v5392, %v5388
    %v6301 = vpack.c.b16 %v5393, %v5389
    %v6302 = vpack.c.b16 %v5398, %v5394
    %v6303 = vpack.c.b16 %v5399, %v5395
    %v6304 = vpack.c.b16 %v5400, %v5396
    %v6305 = vpack.c.b16 %v5401, %v5397
    %v6306 = vpack.c.b16 %v5406, %v5402
    %v6307 = vpack.c.b16 %v5407, %v5403
    %v6308 = vpack.c.b16 %v5408, %v5404
    %v6309 = vpack.c.b16 %v5409, %v5405
    %v6310 = vpack.c.b16 %v5414, %v5410
    %v6311 = vpack.c.b16 %v5415, %v5411
    %v6312 = vpack.c.b16 %v5416, %v5412
    %v6313 = vpack.c.b16 %v5417, %v5413
    %v6314 = vpack.c.b16 %v5422, %v5418
    %v6315 = vpack.c.b16 %v5423, %v5419
    %v6316 = vpack.c.b16 %v5424, %v5420
    %v6317 = vpack.c.b16 %v5425, %v5421
    %v6318 = vpack.c.b16 %v5430, %v5426
    %v6319 = vpack.c.b16 %v5431, %v5427
    %v6320 = vpack.c.b16 %v5432, %v5428
    %v6321 = vpack.c.b16 %v5433, %v5429
    %v6322 = vpack.c.b16 %v5438, %v5434
    %v6323 = vpack.c.b16 %v5439, %v5435
    %v6324 = vpack.c.b16 %v5440, %v5436
    %v6325 = vpack.c.b16 %v5441, %v5437
    %v6326 = vpack.c.b16 %v5446, %v5442
    %v6327 = vpack.c.b16 %v5447, %v5443
    %v6328 = vpack.c.b16 %v5448, %v5444
    %v6329 = vpack.c.b16 %v5449, %v5445
    %v6330 = vpack.c.b16 %v5454, %v5450
    %v6331 = vpack.c.b16 %v5455, %v5451
    %v6332 = vpack.c.b16 %v5456, %v5452
    %v6333 = vpack.c.b16 %v5457, %v5453
    %v6334 = vpack.c.b16 %v5462, %v5458
    %v6335 = vpack.c.b16 %v5463, %v5459
    %v6336 = vpack.c.b16 %v5464, %v5460
    %v6337 = vpack.c.b16 %v5465, %v5461
    %v6338 = vpack.c.b16 %v5470, %v5466
    %v6339 = vpack.c.b16 %v5471, %v5467
    %v6340 = vpack.c.b16 %v5472, %v5468
    %v6341 = vpack.c.b16 %v5473, %v5469
    %v6342 = vpack.c.b16 %v5478, %v5474
    %v6343 = vpack.c.b16 %v5479, %v5475
    %v6344 = vpack.c.b16 %v5480, %v5476
    %v6345 = vpack.c.b16 %v5481, %v5477
    %v6346 = vpack.c.b16 %v5486, %v5482
    %v6347 = vpack.c.b16 %v5487, %v5483
    %v6348 = vpack.c.b16 %v5488, %v5484
    %v6349 = vpack.c.b16 %v5489, %v5485
    %v6350 = vpack.c.b16 %v5494, %v5490
    %v6351 = vpack.c.b16 %v5495, %v5491
    %v6352 = vpack.c.b16 %v5496, %v5492
    %v6353 = vpack.c.b16 %v5497, %v5493
    %v6354 = vpack.c.b16 %v5502, %v5498
    %v6355 = vpack.c.b16 %v5503, %v5499
    %v6356 = vpack.c.b16 %v5504, %v5500
    %v6357 = vpack.c.b16 %v5505, %v5501
    %v6358 = vpack.c.b16 %v5510, %v5506
    %v6359 = vpack.c.b16 %v5511, %v5507
    %v6360 = vpack.c.b16 %v5512, %v5508
    %v6361 = vpack.c.b16 %v5513, %v5509
    %v6362 = vpack.c.b16 %v5518, %v5514
    %v6363 = vpack.c.b16 %v5519, %v5515
    %v6364 = vpack.c.b16 %v5520, %v5516
    %v6365 = vpack.c.b16 %v5521, %v5517
    %v6366 = vpack.c.b16 %v5526, %v5522
    %v6367 = vpack.c.b16 %v5527, %v5523
    %v6368 = vpack.c.b16 %v5528, %v5524
    %v6369 = vpack.c.b16 %v5529, %v5525
    %v6370 = vpack.c.b16 %v5534, %v5530
    %v6371 = vpack.c.b16 %v5535, %v5531
    %v6372 = vpack.c.b16 %v5536, %v5532
    %v6373 = vpack.c.b16 %v5537, %v5533
    %v6374 = vpack.c.b16 %v5542, %v5538
    %v6375 = vpack.c.b16 %v5543, %v5539
    %v6376 = vpack.c.b16 %v5544, %v5540
    %v6377 = vpack.c.b16 %v5545, %v5541
    %v6378 = vpack.c.b16 %v5550, %v5546
    %v6379 = vpack.c.b16 %v5551, %v5547
    %v6380 = vpack.c.b16 %v5552, %v5548
    %v6381 = vpack.c.b16 %v5553, %v5549
    %v6382 = vpack.c.b16 %v5558, %v5554
    %v6383 = vpack.c.b16 %v5559, %v5555
    %v6384 = vpack.c.b16 %v5560, %v5556
    %v6385 = vpack.c.b16 %v5561, %v5557
    %v6386 = vpack.c.b16 %v5566, %v5562
    %v6387 = vpack.c.b16 %v5567, %v5563
    %v6388 = vpack.c.b16 %v5568, %v5564
    %v6389 = vpack.c.b16 %v5569, %v5565
    %v6390 = vpack.c.b16 %v5574, %v5570
    %v6391 = vpack.c.b16 %v5575, %v5571
    %v6392 = vpack.c.b16 %v5576, %v5572
    %v6393 = vpack.c.b16 %v5577, %v5573
    %v6394 = vpack.c.b16 %v5582, %v5578
    %v6395 = vpack.c.b16 %v5583, %v5579
    %v6396 = vpack.c.b16 %v5584, %v5580
    %v6397 = vpack.c.b16 %v5585, %v5581
    %v6398 = vpack.c.b16 %v5590, %v5586
    %v6399 = vpack.c.b16 %v5591, %v5587
    %v6400 = vpack.c.b16 %v5592, %v5588
    %v6401 = vpack.c.b16 %v5593, %v5589
    %v6402 = vpack.c.b16 %v5598, %v5594
    %v6403 = vpack.c.b16 %v5599, %v5595
    %v6404 = vpack.c.b16 %v5600, %v5596
    %v6405 = vpack.c.b16 %v5601, %v5597
    %v6406 = vpack.c.b16 %v5606, %v5602
    %v6407 = vpack.c.b16 %v5607, %v5603
    %v6408 = vpack.c.b16 %v5608, %v5604
    %v6409 = vpack.c.b16 %v5609, %v5605
    %v6410 = vpack.c.b16 %v5614, %v5610
    %v6411 = vpack.c.b16 %v5615, %v5611
    %v6412 = vpack.c.b16 %v5616, %v5612
    %v6413 = vpack.c.b16 %v5617, %v5613
    %v6414 = vpack.c.b16 %v5622, %v5618
    %v6415 = vpack.c.b16 %v5623, %v5619
    %v6416 = vpack.c.b16 %v5624, %v5620
    %v6417 = vpack.c.b16 %v5625, %v5621
    %v6418 = vpack.c.b16 %v5630, %v5626
    %v6419 = vpack.c.b16 %v5631, %v5627
    %v6420 = vpack.c.b16 %v5632, %v5628
    %v6421 = vpack.c.b16 %v5633, %v5629
    %v6422 = vpack.c.b16 %v5638, %v5634
    %v6423 = vpack.c.b16 %v5639, %v5635
    %v6424 = vpack.c.b16 %v5640, %v5636
    %v6425 = vpack.c.b16 %v5641, %v5637
    %v6426 = vpack.c.b16 %v5646, %v5642
    %v6427 = vpack.c.b16 %v5647, %v5643
    %v6428 = vpack.c.b16 %v5648, %v5644
    %v6429 = vpack.c.b16 %v5649, %v5645
    %v6430 = vpack.c.b16 %v5654, %v5650
    %v6431 = vpack.c.b16 %v5655, %v5651
    %v6432 = vpack.c.b16 %v5656, %v5652
    %v6433 = vpack.c.b16 %v5657, %v5653
    %v6434 = vpack.c.b16 %v5662, %v5658
    %v6435 = vpack.c.b16 %v5663, %v5659
    %v6436 = vpack.c.b16 %v5664, %v5660
    %v6437 = vpack.c.b16 %v5665, %v5661
    %v6438 = vpack.c.b16 %v5670, %v5666
    %v6439 = vpack.c.b16 %v5671, %v5667
    %v6440 = vpack.c.b16 %v5672, %v5668
    %v6441 = vpack.c.b16 %v5673, %v5669
    %v6442 = vpack.c.b16 %v5678, %v5674
    %v6443 = vpack.c.b16 %v5679, %v5675
    %v6444 = vpack.c.b16 %v5680, %v5676
    %v6445 = vpack.c.b16 %v5681, %v5677
    %v6446 = vpack.c.b16 %v5686, %v5682
    %v6447 = vpack.c.b16 %v5687, %v5683
    %v6448 = vpack.c.b16 %v5688, %v5684
    %v6449 = vpack.c.b16 %v5689, %v5685
    %v6450 = vpack.c.b16 %v5694, %v5690
    %v6451 = vpack.c.b16 %v5695, %v5691
    %v6452 = vpack.c.b16 %v5696, %v5692
    %v6453 = vpack.c.b16 %v5697, %v5693
    %v6454 = vpack.c.b16 %v5702, %v5698
    %v6455 = vpack.c.b16 %v5703, %v5699
    %v6456 = vpack.c.b16 %v5704, %v5700
    %v6457 = vpack.c.b16 %v5705, %v5701
    %v6458 = vpack.c.b16 %v5710, %v5706
    %v6459 = vpack.c.b16 %v5711, %v5707
    %v6460 = vpack.c.b16 %v5712, %v5708
    %v6461 = vpack.c.b16 %v5713, %v5709
    %v6462 = vpack.c.b16 %v5718, %v5714
    %v6463 = vpack.c.b16 %v5719, %v5715
    %v6464 = vpack.c.b16 %v5720, %v5716
    %v6465 = vpack.c.b16 %v5721, %v5717
    %v6466 = vpack.c.b16 %v5726, %v5722
    %v6467 = vpack.c.b16 %v5727, %v5723
    %v6468 = vpack.c.b16 %v5728, %v5724
    %v6469 = vpack.c.b16 %v5729, %v5725
    %v6470 = vpack.c.b16 %v5734, %v5730
    %v6471 = vpack.c.b16 %v5735, %v5731
    %v6472 = vpack.c.b16 %v5736, %v5732
    %v6473 = vpack.c.b16 %v5737, %v5733
    %v6474 = vpack.c.b16 %v5742, %v5738
    %v6475 = vpack.c.b16 %v5743, %v5739
    %v6476 = vpack.c.b16 %v5744, %v5740
    %v6477 = vpack.c.b16 %v5745, %v5741
    %v6478 = vpack.c.b16 %v5750, %v5746
    %v6479 = vpack.c.b16 %v5751, %v5747
    %v6480 = vpack.c.b16 %v5752, %v5748
    %v6481 = vpack.c.b16 %v5753, %v5749
    %v6482 = vpack.c.b16 %v5758, %v5754
    %v6483 = vpack.c.b16 %v5759, %v5755
    %v6484 = vpack.c.b16 %v5760, %v5756
    %v6485 = vpack.c.b16 %v5761, %v5757
    %v6486 = vpack.c.b16 %v5766, %v5762
    %v6487 = vpack.c.b16 %v5767, %v5763
    %v6488 = vpack.c.b16 %v5768, %v5764
    %v6489 = vpack.c.b16 %v5769, %v5765
    %v6490 = vpack.c.b16 %v5774, %v5770
    %v6491 = vpack.c.b16 %v5775, %v5771
    %v6492 = vpack.c.b16 %v5776, %v5772
    %v6493 = vpack.c.b16 %v5777, %v5773
    %v6494 = vpack.c.b16 %v5782, %v5778
    %v6495 = vpack.c.b16 %v5783, %v5779
    %v6496 = vpack.c.b16 %v5784, %v5780
    %v6497 = vpack.c.b16 %v5785, %v5781
    %v6498 = vpack.c.b16 %v5790, %v5786
    %v6499 = vpack.c.b16 %v5791, %v5787
    %v6500 = vpack.c.b16 %v5792, %v5788
    %v6501 = vpack.c.b16 %v5793, %v5789
    %v6502 = vpack.c.b16 %v5798, %v5794
    %v6503 = vpack.c.b16 %v5799, %v5795
    %v6504 = vpack.c.b16 %v5800, %v5796
    %v6505 = vpack.c.b16 %v5801, %v5797
    %v6506 = vpack.c.b16 %v5806, %v5802
    %v6507 = vpack.c.b16 %v5807, %v5803
    %v6508 = vpack.c.b16 %v5808, %v5804
    %v6509 = vpack.c.b16 %v5809, %v5805
    %v6510 = vpack.c.b16 %v5814, %v5810
    %v6511 = vpack.c.b16 %v5815, %v5811
    %v6512 = vpack.c.b16 %v5816, %v5812
    %v6513 = vpack.c.b16 %v5817, %v5813
    %v6514 = vpack.c.b16 %v5822, %v5818
    %v6515 = vpack.c.b16 %v5823, %v5819
    %v6516 = vpack.c.b16 %v5824, %v5820
    %v6517 = vpack.c.b16 %v5825, %v5821
    %v6518 = vpack.c.b16 %v5830, %v5826
    %v6519 = vpack.c.b16 %v5831, %v5827
    %v6520 = vpack.c.b16 %v5832, %v5828
    %v6521 = vpack.c.b16 %v5833, %v5829
    %v6522 = vpack.c.b16 %v5838, %v5834
    %v6523 = vpack.c.b16 %v5839, %v5835
    %v6524 = vpack.c.b16 %v5840, %v5836
    %v6525 = vpack.c.b16 %v5841, %v5837
    %v6526 = vpack.c.b16 %v5846, %v5842
    %v6527 = vpack.c.b16 %v5847, %v5843
    %v6528 = vpack.c.b16 %v5848, %v5844
    %v6529 = vpack.c.b16 %v5849, %v5845
    %v6530 = vpack.c.b16 %v5854, %v5850
    %v6531 = vpack.c.b16 %v5855, %v5851
    %v6532 = vpack.c.b16 %v5856, %v5852
    %v6533 = vpack.c.b16 %v5857, %v5853
    %v6534 = vpack.c.b16 %v5862, %v5858
    %v6535 = vpack.c.b16 %v5863, %v5859
    %v6536 = vpack.c.b16 %v5864, %v5860
    %v6537 = vpack.c.b16 %v5865, %v5861
    %v6538 = vpack.c.b16 %v5870, %v5866
    %v6539 = vpack.c.b16 %v5871, %v5867
    %v6540 = vpack.c.b16 %v5872, %v5868
    %v6541 = vpack.c.b16 %v5873, %v5869
    %v6542 = vpack.c.b16 %v5878, %v5874
    %v6543 = vpack.c.b16 %v5879, %v5875
    %v6544 = vpack.c.b16 %v5880, %v5876
    %v6545 = vpack.c.b16 %v5881, %v5877
    %v6546 = vpack.c.b16 %v5886, %v5882
    %v6547 = vpack.c.b16 %v5887, %v5883
    %v6548 = vpack.c.b16 %v5888, %v5884
    %v6549 = vpack.c.b16 %v5889, %v5885
    %v6550 = vpack.c.b16 %v5894, %v5890
    %v6551 = vpack.c.b16 %v5895, %v5891
    %v6552 = vpack.c.b16 %v5896, %v5892
    %v6553 = vpack.c.b16 %v5897, %v5893
    %v6554 = vpack.c.b16 %v5902, %v5898
    %v6555 = vpack.c.b16 %v5903, %v5899
    %v6556 = vpack.c.b16 %v5904, %v5900
    %v6557 = vpack.c.b16 %v5905, %v5901
    %v6558 = vpack.c.b16 %v5910, %v5906
    %v6559 = vpack.c.b16 %v5911, %v5907
    %v6560 = vpack.c.b16 %v5912, %v5908
    %v6561 = vpack.c.b16 %v5913, %v5909
    %v6562 = vpack.c.b16 %v5918, %v5914
    %v6563 = vpack.c.b16 %v5919, %v5915
    %v6564 = vpack.c.b16 %v5920, %v5916
    %v6565 = vpack.c.b16 %v5921, %v5917
    %v6566 = vpack.c.b16 %v5926, %v5922
    %v6567 = vpack.c.b16 %v5927, %v5923
    %v6568 = vpack.c.b16 %v5928, %v5924
    %v6569 = vpack.c.b16 %v5929, %v5925
    %v6570 = vpack.c.b16 %v5934, %v5930
    %v6571 = vpack.c.b16 %v5935, %v5931
    %v6572 = vpack.c.b16 %v5936, %v5932
    %v6573 = vpack.c.b16 %v5937, %v5933
    %v6574 = vpack.c.b16 %v5942, %v5938
    %v6575 = vpack.c.b16 %v5943, %v5939
    %v6576 = vpack.c.b16 %v5944, %v5940
    %v6577 = vpack.c.b16 %v5945, %v5941
    %v6578 = vpack.c.b16 %v5950, %v5946
    %v6579 = vpack.c.b16 %v5951, %v5947
    %v6580 = vpack.c.b16 %v5952, %v5948
    %v6581 = vpack.c.b16 %v5953, %v5949
    %v6582 = vpack.c.b16 %v5958, %v5954
    %v6583 = vpack.c.b16 %v5959, %v5955
    %v6584 = vpack.c.b16 %v5960, %v5956
    %v6585 = vpack.c.b16 %v5961, %v5957
    %v6586 = vpack.c.b16 %v5966, %v5962
    %v6587 = vpack.c.b16 %v5967, %v5963
    %v6588 = vpack.c.b16 %v5968, %v5964
    %v6589 = vpack.c.b16 %v5969, %v5965
    %v6590 = vpack.c.b16 %v5974, %v5970
    %v6591 = vpack.c.b16 %v5975, %v5971
    %v6592 = vpack.c.b16 %v5976, %v5972
    %v6593 = vpack.c.b16 %v5977, %v5973
    %v6594 = vpack.c.b16 %v5982, %v5978
    %v6595 = vpack.c.b16 %v5983, %v5979
    %v6596 = vpack.c.b16 %v5984, %v5980
    %v6597 = vpack.c.b16 %v5985, %v5981
    %v6598 = vpack.c.b16 %v5990, %v5986
    %v6599 = vpack.c.b16 %v5991, %v5987
    %v6600 = vpack.c.b16 %v5992, %v5988
    %v6601 = vpack.c.b16 %v5993, %v5989
    %v6602 = vpack.c.b16 %v5998, %v5994
    %v6603 = vpack.c.b16 %v5999, %v5995
    %v6604 = vpack.c.b16 %v6000, %v5996
    %v6605 = vpack.c.b16 %v6001, %v5997
    %v6606 = vpack.c.b16 %v6006, %v6002
    %v6607 = vpack.c.b16 %v6007, %v6003
    %v6608 = vpack.c.b16 %v6008, %v6004
    %v6609 = vpack.c.b16 %v6009, %v6005
    %v6610 = vpack.c.b16 %v6014, %v6010
    %v6611 = vpack.c.b16 %v6015, %v6011
    %v6612 = vpack.c.b16 %v6016, %v6012
    %v6613 = vpack.c.b16 %v6017, %v6013
    %v6614 = vpack.c.b16 %v6022, %v6018
    %v6615 = vpack.c.b16 %v6023, %v6019
    %v6616 = vpack.c.b16 %v6024, %v6020
    %v6617 = vpack.c.b16 %v6025, %v6021
    %v6618 = vpack.c.b16 %v6030, %v6026
    %v6619 = vpack.c.b16 %v6031, %v6027
    %v6620 = vpack.c.b16 %v6032, %v6028
    %v6621 = vpack.c.b16 %v6033, %v6029
    %v6622 = vpack.c.b16 %v6038, %v6034
    %v6623 = vpack.c.b16 %v6039, %v6035
    %v6624 = vpack.c.b16 %v6040, %v6036
    %v6625 = vpack.c.b16 %v6041, %v6037
    %v6626 = vpack.c.b16 %v6046, %v6042
    %v6627 = vpack.c.b16 %v6047, %v6043
    %v6628 = vpack.c.b16 %v6048, %v6044
    %v6629 = vpack.c.b16 %v6049, %v6045
    %v6630 = vpack.c.b16 %v6054, %v6050
    %v6631 = vpack.c.b16 %v6055, %v6051
    %v6632 = vpack.c.b16 %v6056, %v6052
    %v6633 = vpack.c.b16 %v6057, %v6053
    %v6634 = vpack.c.b16 %v6062, %v6058
    %v6635 = vpack.c.b16 %v6063, %v6059
    %v6636 = vpack.c.b16 %v6064, %v6060
    %v6637 = vpack.c.b16 %v6065, %v6061
    %v6638 = vpack.c.b16 %v6070, %v6066
    %v6639 = vpack.c.b16 %v6071, %v6067
    %v6640 = vpack.c.b16 %v6072, %v6068
    %v6641 = vpack.c.b16 %v6073, %v6069
    %v6642 = vpack.c.b16 %v6078, %v6074
    %v6643 = vpack.c.b16 %v6079, %v6075
    %v6644 = vpack.c.b16 %v6080, %v6076
    %v6645 = vpack.c.b16 %v6081, %v6077
    %v6646 = vpack.c.b16 %v6086, %v6082
    %v6647 = vpack.c.b16 %v6087, %v6083
    %v6648 = vpack.c.b16 %v6088, %v6084
    %v6649 = vpack.c.b16 %v6089, %v6085
    %v6650 = vpack.c.b16 %v6094, %v6090
    %v6651 = vpack.c.b16 %v6095, %v6091
    %v6652 = vpack.c.b16 %v6096, %v6092
    %v6653 = vpack.c.b16 %v6097, %v6093
    %v6654 = vpack.c.b16 %v6102, %v6098
    %v6655 = vpack.c.b16 %v6103, %v6099
    %v6656 = vpack.c.b16 %v6104, %v6100
    %v6657 = vpack.c.b16 %v6105, %v6101
    %v6658 = vpack.c.b16 %v6110, %v6106
    %v6659 = vpack.c.b16 %v6111, %v6107
    %v6660 = vpack.c.b16 %v6112, %v6108
    %v6661 = vpack.c.b16 %v6113, %v6109
    %v6662 = vpack.c.b16 %v6118, %v6114
    %v6663 = vpack.c.b16 %v6119, %v6115
    %v6664 = vpack.c.b16 %v6120, %v6116
    %v6665 = vpack.c.b16 %v6121, %v6117
    %v6666 = vpack.c.b16 %v6126, %v6122
    %v6667 = vpack.c.b16 %v6127, %v6123
    %v6668 = vpack.c.b16 %v6128, %v6124
    %v6669 = vpack.c.b16 %v6129, %v6125
    %v6670 = vpack.c.b16 %v6134, %v6130
    %v6671 = vpack.c.b16 %v6135, %v6131
    %v6672 = vpack.c.b16 %v6136, %v6132
    %v6673 = vpack.c.b16 %v6137, %v6133
    %v6674 = vpack.c.b16 %v6142, %v6138
    %v6675 = vpack.c.b16 %v6143, %v6139
    %v6676 = vpack.c.b16 %v6144, %v6140
    %v6677 = vpack.c.b16 %v6145, %v6141
    %v6678 = vpack.c.b16 %v6150, %v6146
    %v6679 = vpack.c.b16 %v6151, %v6147
    %v6680 = vpack.c.b16 %v6152, %v6148
    %v6681 = vpack.c.b16 %v6153, %v6149
    %v6682 = vpack.c.b16 %v6158, %v6154
    %v6683 = vpack.c.b16 %v6159, %v6155
    %v6684 = vpack.c.b16 %v6160, %v6156
    %v6685 = vpack.c.b16 %v6161, %v6157
    %v6686 = vpack.c.b16 %v6166, %v6162
    %v6687 = vpack.c.b16 %v6167, %v6163
    %v6688 = vpack.c.b16 %v6168, %v6164
    %v6689 = vpack.c.b16 %v6169, %v6165
    %v6690 = vpack.c.b16 %v6174, %v6170
    %v6691 = vpack.c.b16 %v6175, %v6171
    %v6692 = vpack.c.b16 %v6176, %v6172
    %v6693 = vpack.c.b16 %v6177, %v6173
    %v6694 = vpack.c.b16 %v6182, %v6178
    %v6695 = vpack.c.b16 %v6183, %v6179
    %v6696 = vpack.c.b16 %v6184, %v6180
    %v6697 = vpack.c.b16 %v6185, %v6181
    %7210 = vmatpush.bf16.msra.mxu0 %v6214
    %7211 = vmatpush.bf16.msra.mxu0 %v6210
    %7212 = vmatpush.bf16.msra.mxu0 %v6206
    %7213 = vmatpush.bf16.msra.mxu0 %v6202
    %7214 = vmatpush.bf16.msra.mxu0 %v6198
    %7215 = vmatpush.bf16.msra.mxu0 %v6194
    %7216 = vmatpush.bf16.msra.mxu0 %v6190
    %7217 = vmatpush.bf16.msra.mxu0 %v6186
    %7218 = vmatmul.bf16.gmra.mxu0 %v4122
    %v7219 = vpop.f32.mrf.mxu0
    %v7220 = vadd.f32 %v62, %v7219
    %v7221 = vpop.f32.mrf.mxu0
    %v7222 = vadd.f32 %v66, %v7221
    %7223 = vdwg.mxu0
    %7224 = vmatpush.bf16.msra.mxu0 %v6246
    %7225 = vmatpush.bf16.msra.mxu0 %v6242
    %7226 = vmatpush.bf16.msra.mxu0 %v6238
    %7227 = vmatpush.bf16.msra.mxu0 %v6234
    %7228 = vmatpush.bf16.msra.mxu0 %v6230
    %7229 = vmatpush.bf16.msra.mxu0 %v6226
    %7230 = vmatpush.bf16.msra.mxu0 %v6222
    %7231 = vmatpush.bf16.msra.mxu0 %v6218
    %7232 = vmatmul.bf16.gmra.mxu0 %v4123
    %v7233 = vpop.f32.mrf.mxu0
    %v7234 = vadd.f32 %v7220, %v7233
    %v7235 = vpop.f32.mrf.mxu0
    %v7236 = vadd.f32 %v7222, %v7235
    %7237 = vdwg.mxu0
    %7238 = vmatpush.bf16.msra.mxu0 %v6278
    %7239 = vmatpush.bf16.msra.mxu0 %v6274
    %7240 = vmatpush.bf16.msra.mxu0 %v6270
    %7241 = vmatpush.bf16.msra.mxu0 %v6266
    %7242 = vmatpush.bf16.msra.mxu0 %v6262
    %7243 = vmatpush.bf16.msra.mxu0 %v6258
    %7244 = vmatpush.bf16.msra.mxu0 %v6254
    %7245 = vmatpush.bf16.msra.mxu0 %v6250
    %7246 = vmatmul.bf16.gmra.mxu0 %v4124
    %v7247 = vpop.f32.mrf.mxu0
    %v7248 = vadd.f32 %v7234, %v7247
    %v7249 = vpop.f32.mrf.mxu0
    %v7250 = vadd.f32 %v7236, %v7249
    %7251 = vdwg.mxu0
    %7252 = vmatpush.bf16.msra.mxu0 %v6310
    %7253 = vmatpush.bf16.msra.mxu0 %v6306
    %7254 = vmatpush.bf16.msra.mxu0 %v6302
    %7255 = vmatpush.bf16.msra.mxu0 %v6298
    %7256 = vmatpush.bf16.msra.mxu0 %v6294
    %7257 = vmatpush.bf16.msra.mxu0 %v6290
    %7258 = vmatpush.bf16.msra.mxu0 %v6286
    %7259 = vmatpush.bf16.msra.mxu0 %v6282
    %7260 = vmatmul.bf16.gmra.mxu0 %v4125
    %v7261 = vpop.f32.mrf.mxu0
    %v7262 = vadd.f32 %v7248, %v7261
    %v7263 = vpop.f32.mrf.mxu0
    %v7264 = vadd.f32 %v7250, %v7263
    %7265 = vdwg.mxu0
    %7266 = vmatpush.bf16.msra.mxu0 %v6342
    %7267 = vmatpush.bf16.msra.mxu0 %v6338
    %7268 = vmatpush.bf16.msra.mxu0 %v6334
    %7269 = vmatpush.bf16.msra.mxu0 %v6330
    %7270 = vmatpush.bf16.msra.mxu0 %v6326
    %7271 = vmatpush.bf16.msra.mxu0 %v6322
    %7272 = vmatpush.bf16.msra.mxu0 %v6318
    %7273 = vmatpush.bf16.msra.mxu0 %v6314
    %7274 = vmatmul.bf16.gmra.mxu0 %v4126
    %v7275 = vpop.f32.mrf.mxu0
    %v7276 = vadd.f32 %v7262, %v7275
    %v7277 = vpop.f32.mrf.mxu0
    %v7278 = vadd.f32 %v7264, %v7277
    %7279 = vdwg.mxu0
    %7280 = vmatpush.bf16.msra.mxu0 %v6374
    %7281 = vmatpush.bf16.msra.mxu0 %v6370
    %7282 = vmatpush.bf16.msra.mxu0 %v6366
    %7283 = vmatpush.bf16.msra.mxu0 %v6362
    %7284 = vmatpush.bf16.msra.mxu0 %v6358
    %7285 = vmatpush.bf16.msra.mxu0 %v6354
    %7286 = vmatpush.bf16.msra.mxu0 %v6350
    %7287 = vmatpush.bf16.msra.mxu0 %v6346
    %7288 = vmatmul.bf16.gmra.mxu0 %v4127
    %v7289 = vpop.f32.mrf.mxu0
    %v7290 = vadd.f32 %v7276, %v7289
    %v7291 = vpop.f32.mrf.mxu0
    %v7292 = vadd.f32 %v7278, %v7291
    %7293 = vdwg.mxu0
    %7294 = vmatpush.bf16.msra.mxu0 %v6406
    %7295 = vmatpush.bf16.msra.mxu0 %v6402
    %7296 = vmatpush.bf16.msra.mxu0 %v6398
    %7297 = vmatpush.bf16.msra.mxu0 %v6394
    %7298 = vmatpush.bf16.msra.mxu0 %v6390
    %7299 = vmatpush.bf16.msra.mxu0 %v6386
    %7300 = vmatpush.bf16.msra.mxu0 %v6382
    %7301 = vmatpush.bf16.msra.mxu0 %v6378
    %7302 = vmatmul.bf16.gmra.mxu0 %v4128
    %v7303 = vpop.f32.mrf.mxu0
    %v7304 = vadd.f32 %v7290, %v7303
    %v7305 = vpop.f32.mrf.mxu0
    %v7306 = vadd.f32 %v7292, %v7305
    %7307 = vdwg.mxu0
    %7308 = vmatpush.bf16.msra.mxu0 %v6438
    %7309 = vmatpush.bf16.msra.mxu0 %v6434
    %7310 = vmatpush.bf16.msra.mxu0 %v6430
    %7311 = vmatpush.bf16.msra.mxu0 %v6426
    %7312 = vmatpush.bf16.msra.mxu0 %v6422
    %7313 = vmatpush.bf16.msra.mxu0 %v6418
    %7314 = vmatpush.bf16.msra.mxu0 %v6414
    %7315 = vmatpush.bf16.msra.mxu0 %v6410
    %7316 = vmatmul.bf16.gmra.mxu0 %v4129
    %v7317 = vpop.f32.mrf.mxu0
    %v7318 = vadd.f32 %v7304, %v7317
    %v7319 = vpop.f32.mrf.mxu0
    %v7320 = vadd.f32 %v7306, %v7319
    %7321 = vdwg.mxu0
    %7322 = vmatpush.bf16.msra.mxu0 %v6470
    %7323 = vmatpush.bf16.msra.mxu0 %v6466
    %7324 = vmatpush.bf16.msra.mxu0 %v6462
    %7325 = vmatpush.bf16.msra.mxu0 %v6458
    %7326 = vmatpush.bf16.msra.mxu0 %v6454
    %7327 = vmatpush.bf16.msra.mxu0 %v6450
    %7328 = vmatpush.bf16.msra.mxu0 %v6446
    %7329 = vmatpush.bf16.msra.mxu0 %v6442
    %7330 = vmatmul.bf16.gmra.mxu0 %v4130
    %v7331 = vpop.f32.mrf.mxu0
    %v7332 = vadd.f32 %v7318, %v7331
    %v7333 = vpop.f32.mrf.mxu0
    %v7334 = vadd.f32 %v7320, %v7333
    %7335 = vdwg.mxu0
    %7336 = vmatpush.bf16.msra.mxu0 %v6502
    %7337 = vmatpush.bf16.msra.mxu0 %v6498
    %7338 = vmatpush.bf16.msra.mxu0 %v6494
    %7339 = vmatpush.bf16.msra.mxu0 %v6490
    %7340 = vmatpush.bf16.msra.mxu0 %v6486
    %7341 = vmatpush.bf16.msra.mxu0 %v6482
    %7342 = vmatpush.bf16.msra.mxu0 %v6478
    %7343 = vmatpush.bf16.msra.mxu0 %v6474
    %7344 = vmatmul.bf16.gmra.mxu0 %v4131
    %v7345 = vpop.f32.mrf.mxu0
    %v7346 = vadd.f32 %v7332, %v7345
    %v7347 = vpop.f32.mrf.mxu0
    %v7348 = vadd.f32 %v7334, %v7347
    %7349 = vdwg.mxu0
    %7350 = vmatpush.bf16.msra.mxu0 %v6534
    %7351 = vmatpush.bf16.msra.mxu0 %v6530
    %7352 = vmatpush.bf16.msra.mxu0 %v6526
    %7353 = vmatpush.bf16.msra.mxu0 %v6522
    %7354 = vmatpush.bf16.msra.mxu0 %v6518
    %7355 = vmatpush.bf16.msra.mxu0 %v6514
    %7356 = vmatpush.bf16.msra.mxu0 %v6510
    %7357 = vmatpush.bf16.msra.mxu0 %v6506
    %7358 = vmatmul.bf16.gmra.mxu0 %v4132
    %v7359 = vpop.f32.mrf.mxu0
    %v7360 = vadd.f32 %v7346, %v7359
    %v7361 = vpop.f32.mrf.mxu0
    %v7362 = vadd.f32 %v7348, %v7361
    %7363 = vdwg.mxu0
    %7364 = vmatpush.bf16.msra.mxu0 %v6566
    %7365 = vmatpush.bf16.msra.mxu0 %v6562
    %7366 = vmatpush.bf16.msra.mxu0 %v6558
    %7367 = vmatpush.bf16.msra.mxu0 %v6554
    %7368 = vmatpush.bf16.msra.mxu0 %v6550
    %7369 = vmatpush.bf16.msra.mxu0 %v6546
    %7370 = vmatpush.bf16.msra.mxu0 %v6542
    %7371 = vmatpush.bf16.msra.mxu0 %v6538
    %7372 = vmatmul.bf16.gmra.mxu0 %v4133
    %v7373 = vpop.f32.mrf.mxu0
    %v7374 = vadd.f32 %v7360, %v7373
    %v7375 = vpop.f32.mrf.mxu0
    %v7376 = vadd.f32 %v7362, %v7375
    %7377 = vdwg.mxu0
    %7378 = vmatpush.bf16.msra.mxu0 %v6598
    %7379 = vmatpush.bf16.msra.mxu0 %v6594
    %7380 = vmatpush.bf16.msra.mxu0 %v6590
    %7381 = vmatpush.bf16.msra.mxu0 %v6586
    %7382 = vmatpush.bf16.msra.mxu0 %v6582
    %7383 = vmatpush.bf16.msra.mxu0 %v6578
    %7384 = vmatpush.bf16.msra.mxu0 %v6574
    %7385 = vmatpush.bf16.msra.mxu0 %v6570
    %7386 = vmatmul.bf16.gmra.mxu0 %v4134
    %v7387 = vpop.f32.mrf.mxu0
    %v7388 = vadd.f32 %v7374, %v7387
    %v7389 = vpop.f32.mrf.mxu0
    %v7390 = vadd.f32 %v7376, %v7389
    %7391 = vdwg.mxu0
    %7392 = vmatpush.bf16.msra.mxu0 %v6630
    %7393 = vmatpush.bf16.msra.mxu0 %v6626
    %7394 = vmatpush.bf16.msra.mxu0 %v6622
    %7395 = vmatpush.bf16.msra.mxu0 %v6618
    %7396 = vmatpush.bf16.msra.mxu0 %v6614
    %7397 = vmatpush.bf16.msra.mxu0 %v6610
    %7398 = vmatpush.bf16.msra.mxu0 %v6606
    %7399 = vmatpush.bf16.msra.mxu0 %v6602
    %7400 = vmatmul.bf16.gmra.mxu0 %v4135
    %v7401 = vpop.f32.mrf.mxu0
    %v7402 = vadd.f32 %v7388, %v7401
    %v7403 = vpop.f32.mrf.mxu0
    %v7404 = vadd.f32 %v7390, %v7403
    %7405 = vdwg.mxu0
    %7406 = vmatpush.bf16.msra.mxu0 %v6662
    %7407 = vmatpush.bf16.msra.mxu0 %v6658
    %7408 = vmatpush.bf16.msra.mxu0 %v6654
    %7409 = vmatpush.bf16.msra.mxu0 %v6650
    %7410 = vmatpush.bf16.msra.mxu0 %v6646
    %7411 = vmatpush.bf16.msra.mxu0 %v6642
    %7412 = vmatpush.bf16.msra.mxu0 %v6638
    %7413 = vmatpush.bf16.msra.mxu0 %v6634
    %7414 = vmatmul.bf16.gmra.mxu0 %v4136
    %v7415 = vpop.f32.mrf.mxu0
    %v7416 = vadd.f32 %v7402, %v7415
    %v7417 = vpop.f32.mrf.mxu0
    %v7418 = vadd.f32 %v7404, %v7417
    %7419 = vdwg.mxu0
    %7420 = vmatpush.bf16.msra.mxu0 %v6694
    %7421 = vmatpush.bf16.msra.mxu0 %v6690
    %7422 = vmatpush.bf16.msra.mxu0 %v6686
    %7423 = vmatpush.bf16.msra.mxu0 %v6682
    %7424 = vmatpush.bf16.msra.mxu0 %v6678
    %7425 = vmatpush.bf16.msra.mxu0 %v6674
    %7426 = vmatpush.bf16.msra.mxu0 %v6670
    %7427 = vmatpush.bf16.msra.mxu0 %v6666
    %7428 = vmatmul.bf16.gmra.mxu0 %v4137
    %v7429 = vpop.f32.mrf.mxu0
    %v7430 = vadd.f32 %v7416, %v7429
    %v7431 = vpop.f32.mrf.mxu0
    %v7432 = vadd.f32 %v7418, %v7431
    %7433 = vdwg.mxu0
    %7434 = vmatpush.bf16.msra.mxu0 %v6215
    %7435 = vmatpush.bf16.msra.mxu0 %v6211
    %7436 = vmatpush.bf16.msra.mxu0 %v6207
    %7437 = vmatpush.bf16.msra.mxu0 %v6203
    %7438 = vmatpush.bf16.msra.mxu0 %v6199
    %7439 = vmatpush.bf16.msra.mxu0 %v6195
    %7440 = vmatpush.bf16.msra.mxu0 %v6191
    %7441 = vmatpush.bf16.msra.mxu0 %v6187
    %7442 = vmatmul.bf16.gmra.mxu0 %v4122
    %v7443 = vpop.f32.mrf.mxu0
    %v7444 = vadd.f32 %v63, %v7443
    %v7445 = vpop.f32.mrf.mxu0
    %v7446 = vadd.f32 %v67, %v7445
    %7447 = vdwg.mxu0
    %7448 = vmatpush.bf16.msra.mxu0 %v6247
    %7449 = vmatpush.bf16.msra.mxu0 %v6243
    %7450 = vmatpush.bf16.msra.mxu0 %v6239
    %7451 = vmatpush.bf16.msra.mxu0 %v6235
    %7452 = vmatpush.bf16.msra.mxu0 %v6231
    %7453 = vmatpush.bf16.msra.mxu0 %v6227
    %7454 = vmatpush.bf16.msra.mxu0 %v6223
    %7455 = vmatpush.bf16.msra.mxu0 %v6219
    %7456 = vmatmul.bf16.gmra.mxu0 %v4123
    %v7457 = vpop.f32.mrf.mxu0
    %v7458 = vadd.f32 %v7444, %v7457
    %v7459 = vpop.f32.mrf.mxu0
    %v7460 = vadd.f32 %v7446, %v7459
    %7461 = vdwg.mxu0
    %7462 = vmatpush.bf16.msra.mxu0 %v6279
    %7463 = vmatpush.bf16.msra.mxu0 %v6275
    %7464 = vmatpush.bf16.msra.mxu0 %v6271
    %7465 = vmatpush.bf16.msra.mxu0 %v6267
    %7466 = vmatpush.bf16.msra.mxu0 %v6263
    %7467 = vmatpush.bf16.msra.mxu0 %v6259
    %7468 = vmatpush.bf16.msra.mxu0 %v6255
    %7469 = vmatpush.bf16.msra.mxu0 %v6251
    %7470 = vmatmul.bf16.gmra.mxu0 %v4124
    %v7471 = vpop.f32.mrf.mxu0
    %v7472 = vadd.f32 %v7458, %v7471
    %v7473 = vpop.f32.mrf.mxu0
    %v7474 = vadd.f32 %v7460, %v7473
    %7475 = vdwg.mxu0
    %7476 = vmatpush.bf16.msra.mxu0 %v6311
    %7477 = vmatpush.bf16.msra.mxu0 %v6307
    %7478 = vmatpush.bf16.msra.mxu0 %v6303
    %7479 = vmatpush.bf16.msra.mxu0 %v6299
    %7480 = vmatpush.bf16.msra.mxu0 %v6295
    %7481 = vmatpush.bf16.msra.mxu0 %v6291
    %7482 = vmatpush.bf16.msra.mxu0 %v6287
    %7483 = vmatpush.bf16.msra.mxu0 %v6283
    %7484 = vmatmul.bf16.gmra.mxu0 %v4125
    %v7485 = vpop.f32.mrf.mxu0
    %v7486 = vadd.f32 %v7472, %v7485
    %v7487 = vpop.f32.mrf.mxu0
    %v7488 = vadd.f32 %v7474, %v7487
    %7489 = vdwg.mxu0
    %7490 = vmatpush.bf16.msra.mxu0 %v6343
    %7491 = vmatpush.bf16.msra.mxu0 %v6339
    %7492 = vmatpush.bf16.msra.mxu0 %v6335
    %7493 = vmatpush.bf16.msra.mxu0 %v6331
    %7494 = vmatpush.bf16.msra.mxu0 %v6327
    %7495 = vmatpush.bf16.msra.mxu0 %v6323
    %7496 = vmatpush.bf16.msra.mxu0 %v6319
    %7497 = vmatpush.bf16.msra.mxu0 %v6315
    %7498 = vmatmul.bf16.gmra.mxu0 %v4126
    %v7499 = vpop.f32.mrf.mxu0
    %v7500 = vadd.f32 %v7486, %v7499
    %v7501 = vpop.f32.mrf.mxu0
    %v7502 = vadd.f32 %v7488, %v7501
    %7503 = vdwg.mxu0
    %7504 = vmatpush.bf16.msra.mxu0 %v6375
    %7505 = vmatpush.bf16.msra.mxu0 %v6371
    %7506 = vmatpush.bf16.msra.mxu0 %v6367
    %7507 = vmatpush.bf16.msra.mxu0 %v6363
    %7508 = vmatpush.bf16.msra.mxu0 %v6359
    %7509 = vmatpush.bf16.msra.mxu0 %v6355
    %7510 = vmatpush.bf16.msra.mxu0 %v6351
    %7511 = vmatpush.bf16.msra.mxu0 %v6347
    %7512 = vmatmul.bf16.gmra.mxu0 %v4127
    %v7513 = vpop.f32.mrf.mxu0
    %v7514 = vadd.f32 %v7500, %v7513
    %v7515 = vpop.f32.mrf.mxu0
    %v7516 = vadd.f32 %v7502, %v7515
    %7517 = vdwg.mxu0
    %7518 = vmatpush.bf16.msra.mxu0 %v6407
    %7519 = vmatpush.bf16.msra.mxu0 %v6403
    %7520 = vmatpush.bf16.msra.mxu0 %v6399
    %7521 = vmatpush.bf16.msra.mxu0 %v6395
    %7522 = vmatpush.bf16.msra.mxu0 %v6391
    %7523 = vmatpush.bf16.msra.mxu0 %v6387
    %7524 = vmatpush.bf16.msra.mxu0 %v6383
    %7525 = vmatpush.bf16.msra.mxu0 %v6379
    %7526 = vmatmul.bf16.gmra.mxu0 %v4128
    %v7527 = vpop.f32.mrf.mxu0
    %v7528 = vadd.f32 %v7514, %v7527
    %v7529 = vpop.f32.mrf.mxu0
    %v7530 = vadd.f32 %v7516, %v7529
    %7531 = vdwg.mxu0
    %7532 = vmatpush.bf16.msra.mxu0 %v6439
    %7533 = vmatpush.bf16.msra.mxu0 %v6435
    %7534 = vmatpush.bf16.msra.mxu0 %v6431
    %7535 = vmatpush.bf16.msra.mxu0 %v6427
    %7536 = vmatpush.bf16.msra.mxu0 %v6423
    %7537 = vmatpush.bf16.msra.mxu0 %v6419
    %7538 = vmatpush.bf16.msra.mxu0 %v6415
    %7539 = vmatpush.bf16.msra.mxu0 %v6411
    %7540 = vmatmul.bf16.gmra.mxu0 %v4129
    %v7541 = vpop.f32.mrf.mxu0
    %v7542 = vadd.f32 %v7528, %v7541
    %v7543 = vpop.f32.mrf.mxu0
    %v7544 = vadd.f32 %v7530, %v7543
    %7545 = vdwg.mxu0
    %7546 = vmatpush.bf16.msra.mxu0 %v6471
    %7547 = vmatpush.bf16.msra.mxu0 %v6467
    %7548 = vmatpush.bf16.msra.mxu0 %v6463
    %7549 = vmatpush.bf16.msra.mxu0 %v6459
    %7550 = vmatpush.bf16.msra.mxu0 %v6455
    %7551 = vmatpush.bf16.msra.mxu0 %v6451
    %7552 = vmatpush.bf16.msra.mxu0 %v6447
    %7553 = vmatpush.bf16.msra.mxu0 %v6443
    %7554 = vmatmul.bf16.gmra.mxu0 %v4130
    %v7555 = vpop.f32.mrf.mxu0
    %v7556 = vadd.f32 %v7542, %v7555
    %v7557 = vpop.f32.mrf.mxu0
    %v7558 = vadd.f32 %v7544, %v7557
    %7559 = vdwg.mxu0
    %7560 = vmatpush.bf16.msra.mxu0 %v6503
    %7561 = vmatpush.bf16.msra.mxu0 %v6499
    %7562 = vmatpush.bf16.msra.mxu0 %v6495
    %7563 = vmatpush.bf16.msra.mxu0 %v6491
    %7564 = vmatpush.bf16.msra.mxu0 %v6487
    %7565 = vmatpush.bf16.msra.mxu0 %v6483
    %7566 = vmatpush.bf16.msra.mxu0 %v6479
    %7567 = vmatpush.bf16.msra.mxu0 %v6475
    %7568 = vmatmul.bf16.gmra.mxu0 %v4131
    %v7569 = vpop.f32.mrf.mxu0
    %v7570 = vadd.f32 %v7556, %v7569
    %v7571 = vpop.f32.mrf.mxu0
    %v7572 = vadd.f32 %v7558, %v7571
    %7573 = vdwg.mxu0
    %7574 = vmatpush.bf16.msra.mxu0 %v6535
    %7575 = vmatpush.bf16.msra.mxu0 %v6531
    %7576 = vmatpush.bf16.msra.mxu0 %v6527
    %7577 = vmatpush.bf16.msra.mxu0 %v6523
    %7578 = vmatpush.bf16.msra.mxu0 %v6519
    %7579 = vmatpush.bf16.msra.mxu0 %v6515
    %7580 = vmatpush.bf16.msra.mxu0 %v6511
    %7581 = vmatpush.bf16.msra.mxu0 %v6507
    %7582 = vmatmul.bf16.gmra.mxu0 %v4132
    %v7583 = vpop.f32.mrf.mxu0
    %v7584 = vadd.f32 %v7570, %v7583
    %v7585 = vpop.f32.mrf.mxu0
    %v7586 = vadd.f32 %v7572, %v7585
    %7587 = vdwg.mxu0
    %7588 = vmatpush.bf16.msra.mxu0 %v6567
    %7589 = vmatpush.bf16.msra.mxu0 %v6563
    %7590 = vmatpush.bf16.msra.mxu0 %v6559
    %7591 = vmatpush.bf16.msra.mxu0 %v6555
    %7592 = vmatpush.bf16.msra.mxu0 %v6551
    %7593 = vmatpush.bf16.msra.mxu0 %v6547
    %7594 = vmatpush.bf16.msra.mxu0 %v6543
    %7595 = vmatpush.bf16.msra.mxu0 %v6539
    %7596 = vmatmul.bf16.gmra.mxu0 %v4133
    %v7597 = vpop.f32.mrf.mxu0
    %v7598 = vadd.f32 %v7584, %v7597
    %v7599 = vpop.f32.mrf.mxu0
    %v7600 = vadd.f32 %v7586, %v7599
    %7601 = vdwg.mxu0
    %7602 = vmatpush.bf16.msra.mxu0 %v6599
    %7603 = vmatpush.bf16.msra.mxu0 %v6595
    %7604 = vmatpush.bf16.msra.mxu0 %v6591
    %7605 = vmatpush.bf16.msra.mxu0 %v6587
    %7606 = vmatpush.bf16.msra.mxu0 %v6583
    %7607 = vmatpush.bf16.msra.mxu0 %v6579
    %7608 = vmatpush.bf16.msra.mxu0 %v6575
    %7609 = vmatpush.bf16.msra.mxu0 %v6571
    %7610 = vmatmul.bf16.gmra.mxu0 %v4134
    %v7611 = vpop.f32.mrf.mxu0
    %v7612 = vadd.f32 %v7598, %v7611
    %v7613 = vpop.f32.mrf.mxu0
    %v7614 = vadd.f32 %v7600, %v7613
    %7615 = vdwg.mxu0
    %7616 = vmatpush.bf16.msra.mxu0 %v6631
    %7617 = vmatpush.bf16.msra.mxu0 %v6627
    %7618 = vmatpush.bf16.msra.mxu0 %v6623
    %7619 = vmatpush.bf16.msra.mxu0 %v6619
    %7620 = vmatpush.bf16.msra.mxu0 %v6615
    %7621 = vmatpush.bf16.msra.mxu0 %v6611
    %7622 = vmatpush.bf16.msra.mxu0 %v6607
    %7623 = vmatpush.bf16.msra.mxu0 %v6603
    %7624 = vmatmul.bf16.gmra.mxu0 %v4135
    %v7625 = vpop.f32.mrf.mxu0
    %v7626 = vadd.f32 %v7612, %v7625
    %v7627 = vpop.f32.mrf.mxu0
    %v7628 = vadd.f32 %v7614, %v7627
    %7629 = vdwg.mxu0
    %7630 = vmatpush.bf16.msra.mxu0 %v6663
    %7631 = vmatpush.bf16.msra.mxu0 %v6659
    %7632 = vmatpush.bf16.msra.mxu0 %v6655
    %7633 = vmatpush.bf16.msra.mxu0 %v6651
    %7634 = vmatpush.bf16.msra.mxu0 %v6647
    %7635 = vmatpush.bf16.msra.mxu0 %v6643
    %7636 = vmatpush.bf16.msra.mxu0 %v6639
    %7637 = vmatpush.bf16.msra.mxu0 %v6635
    %7638 = vmatmul.bf16.gmra.mxu0 %v4136
    %v7639 = vpop.f32.mrf.mxu0
    %v7640 = vadd.f32 %v7626, %v7639
    %v7641 = vpop.f32.mrf.mxu0
    %v7642 = vadd.f32 %v7628, %v7641
    %7643 = vdwg.mxu0
    %7644 = vmatpush.bf16.msra.mxu0 %v6695
    %7645 = vmatpush.bf16.msra.mxu0 %v6691
    %7646 = vmatpush.bf16.msra.mxu0 %v6687
    %7647 = vmatpush.bf16.msra.mxu0 %v6683
    %7648 = vmatpush.bf16.msra.mxu0 %v6679
    %7649 = vmatpush.bf16.msra.mxu0 %v6675
    %7650 = vmatpush.bf16.msra.mxu0 %v6671
    %7651 = vmatpush.bf16.msra.mxu0 %v6667
    %7652 = vmatmul.bf16.gmra.mxu0 %v4137
    %v7653 = vpop.f32.mrf.mxu0
    %v7654 = vadd.f32 %v7640, %v7653
    %v7655 = vpop.f32.mrf.mxu0
    %v7656 = vadd.f32 %v7642, %v7655
    %7657 = vdwg.mxu0
    %7658 = vmatpush.bf16.msra.mxu0 %v6216
    %7659 = vmatpush.bf16.msra.mxu0 %v6212
    %7660 = vmatpush.bf16.msra.mxu0 %v6208
    %7661 = vmatpush.bf16.msra.mxu0 %v6204
    %7662 = vmatpush.bf16.msra.mxu0 %v6200
    %7663 = vmatpush.bf16.msra.mxu0 %v6196
    %7664 = vmatpush.bf16.msra.mxu0 %v6192
    %7665 = vmatpush.bf16.msra.mxu0 %v6188
    %7666 = vmatmul.bf16.gmra.mxu0 %v4122
    %v7667 = vpop.f32.mrf.mxu0
    %v7668 = vadd.f32 %v64, %v7667
    %v7669 = vpop.f32.mrf.mxu0
    %v7670 = vadd.f32 %v68, %v7669
    %7671 = vdwg.mxu0
    %7672 = vmatpush.bf16.msra.mxu0 %v6248
    %7673 = vmatpush.bf16.msra.mxu0 %v6244
    %7674 = vmatpush.bf16.msra.mxu0 %v6240
    %7675 = vmatpush.bf16.msra.mxu0 %v6236
    %7676 = vmatpush.bf16.msra.mxu0 %v6232
    %7677 = vmatpush.bf16.msra.mxu0 %v6228
    %7678 = vmatpush.bf16.msra.mxu0 %v6224
    %7679 = vmatpush.bf16.msra.mxu0 %v6220
    %7680 = vmatmul.bf16.gmra.mxu0 %v4123
    %v7681 = vpop.f32.mrf.mxu0
    %v7682 = vadd.f32 %v7668, %v7681
    %v7683 = vpop.f32.mrf.mxu0
    %v7684 = vadd.f32 %v7670, %v7683
    %7685 = vdwg.mxu0
    %7686 = vmatpush.bf16.msra.mxu0 %v6280
    %7687 = vmatpush.bf16.msra.mxu0 %v6276
    %7688 = vmatpush.bf16.msra.mxu0 %v6272
    %7689 = vmatpush.bf16.msra.mxu0 %v6268
    %7690 = vmatpush.bf16.msra.mxu0 %v6264
    %7691 = vmatpush.bf16.msra.mxu0 %v6260
    %7692 = vmatpush.bf16.msra.mxu0 %v6256
    %7693 = vmatpush.bf16.msra.mxu0 %v6252
    %7694 = vmatmul.bf16.gmra.mxu0 %v4124
    %v7695 = vpop.f32.mrf.mxu0
    %v7696 = vadd.f32 %v7682, %v7695
    %v7697 = vpop.f32.mrf.mxu0
    %v7698 = vadd.f32 %v7684, %v7697
    %7699 = vdwg.mxu0
    %7700 = vmatpush.bf16.msra.mxu0 %v6312
    %7701 = vmatpush.bf16.msra.mxu0 %v6308
    %7702 = vmatpush.bf16.msra.mxu0 %v6304
    %7703 = vmatpush.bf16.msra.mxu0 %v6300
    %7704 = vmatpush.bf16.msra.mxu0 %v6296
    %7705 = vmatpush.bf16.msra.mxu0 %v6292
    %7706 = vmatpush.bf16.msra.mxu0 %v6288
    %7707 = vmatpush.bf16.msra.mxu0 %v6284
    %7708 = vmatmul.bf16.gmra.mxu0 %v4125
    %v7709 = vpop.f32.mrf.mxu0
    %v7710 = vadd.f32 %v7696, %v7709
    %v7711 = vpop.f32.mrf.mxu0
    %v7712 = vadd.f32 %v7698, %v7711
    %7713 = vdwg.mxu0
    %7714 = vmatpush.bf16.msra.mxu0 %v6344
    %7715 = vmatpush.bf16.msra.mxu0 %v6340
    %7716 = vmatpush.bf16.msra.mxu0 %v6336
    %7717 = vmatpush.bf16.msra.mxu0 %v6332
    %7718 = vmatpush.bf16.msra.mxu0 %v6328
    %7719 = vmatpush.bf16.msra.mxu0 %v6324
    %7720 = vmatpush.bf16.msra.mxu0 %v6320
    %7721 = vmatpush.bf16.msra.mxu0 %v6316
    %7722 = vmatmul.bf16.gmra.mxu0 %v4126
    %v7723 = vpop.f32.mrf.mxu0
    %v7724 = vadd.f32 %v7710, %v7723
    %v7725 = vpop.f32.mrf.mxu0
    %v7726 = vadd.f32 %v7712, %v7725
    %7727 = vdwg.mxu0
    %7728 = vmatpush.bf16.msra.mxu0 %v6376
    %7729 = vmatpush.bf16.msra.mxu0 %v6372
    %7730 = vmatpush.bf16.msra.mxu0 %v6368
    %7731 = vmatpush.bf16.msra.mxu0 %v6364
    %7732 = vmatpush.bf16.msra.mxu0 %v6360
    %7733 = vmatpush.bf16.msra.mxu0 %v6356
    %7734 = vmatpush.bf16.msra.mxu0 %v6352
    %7735 = vmatpush.bf16.msra.mxu0 %v6348
    %7736 = vmatmul.bf16.gmra.mxu0 %v4127
    %v7737 = vpop.f32.mrf.mxu0
    %v7738 = vadd.f32 %v7724, %v7737
    %v7739 = vpop.f32.mrf.mxu0
    %v7740 = vadd.f32 %v7726, %v7739
    %7741 = vdwg.mxu0
    %7742 = vmatpush.bf16.msra.mxu0 %v6408
    %7743 = vmatpush.bf16.msra.mxu0 %v6404
    %7744 = vmatpush.bf16.msra.mxu0 %v6400
    %7745 = vmatpush.bf16.msra.mxu0 %v6396
    %7746 = vmatpush.bf16.msra.mxu0 %v6392
    %7747 = vmatpush.bf16.msra.mxu0 %v6388
    %7748 = vmatpush.bf16.msra.mxu0 %v6384
    %7749 = vmatpush.bf16.msra.mxu0 %v6380
    %7750 = vmatmul.bf16.gmra.mxu0 %v4128
    %v7751 = vpop.f32.mrf.mxu0
    %v7752 = vadd.f32 %v7738, %v7751
    %v7753 = vpop.f32.mrf.mxu0
    %v7754 = vadd.f32 %v7740, %v7753
    %7755 = vdwg.mxu0
    %7756 = vmatpush.bf16.msra.mxu0 %v6440
    %7757 = vmatpush.bf16.msra.mxu0 %v6436
    %7758 = vmatpush.bf16.msra.mxu0 %v6432
    %7759 = vmatpush.bf16.msra.mxu0 %v6428
    %7760 = vmatpush.bf16.msra.mxu0 %v6424
    %7761 = vmatpush.bf16.msra.mxu0 %v6420
    %7762 = vmatpush.bf16.msra.mxu0 %v6416
    %7763 = vmatpush.bf16.msra.mxu0 %v6412
    %7764 = vmatmul.bf16.gmra.mxu0 %v4129
    %v7765 = vpop.f32.mrf.mxu0
    %v7766 = vadd.f32 %v7752, %v7765
    %v7767 = vpop.f32.mrf.mxu0
    %v7768 = vadd.f32 %v7754, %v7767
    %7769 = vdwg.mxu0
    %7770 = vmatpush.bf16.msra.mxu0 %v6472
    %7771 = vmatpush.bf16.msra.mxu0 %v6468
    %7772 = vmatpush.bf16.msra.mxu0 %v6464
    %7773 = vmatpush.bf16.msra.mxu0 %v6460
    %7774 = vmatpush.bf16.msra.mxu0 %v6456
    %7775 = vmatpush.bf16.msra.mxu0 %v6452
    %7776 = vmatpush.bf16.msra.mxu0 %v6448
    %7777 = vmatpush.bf16.msra.mxu0 %v6444
    %7778 = vmatmul.bf16.gmra.mxu0 %v4130
    %v7779 = vpop.f32.mrf.mxu0
    %v7780 = vadd.f32 %v7766, %v7779
    %v7781 = vpop.f32.mrf.mxu0
    %v7782 = vadd.f32 %v7768, %v7781
    %7783 = vdwg.mxu0
    %7784 = vmatpush.bf16.msra.mxu0 %v6504
    %7785 = vmatpush.bf16.msra.mxu0 %v6500
    %7786 = vmatpush.bf16.msra.mxu0 %v6496
    %7787 = vmatpush.bf16.msra.mxu0 %v6492
    %7788 = vmatpush.bf16.msra.mxu0 %v6488
    %7789 = vmatpush.bf16.msra.mxu0 %v6484
    %7790 = vmatpush.bf16.msra.mxu0 %v6480
    %7791 = vmatpush.bf16.msra.mxu0 %v6476
    %7792 = vmatmul.bf16.gmra.mxu0 %v4131
    %v7793 = vpop.f32.mrf.mxu0
    %v7794 = vadd.f32 %v7780, %v7793
    %v7795 = vpop.f32.mrf.mxu0
    %v7796 = vadd.f32 %v7782, %v7795
    %7797 = vdwg.mxu0
    %7798 = vmatpush.bf16.msra.mxu0 %v6536
    %7799 = vmatpush.bf16.msra.mxu0 %v6532
    %7800 = vmatpush.bf16.msra.mxu0 %v6528
    %7801 = vmatpush.bf16.msra.mxu0 %v6524
    %7802 = vmatpush.bf16.msra.mxu0 %v6520
    %7803 = vmatpush.bf16.msra.mxu0 %v6516
    %7804 = vmatpush.bf16.msra.mxu0 %v6512
    %7805 = vmatpush.bf16.msra.mxu0 %v6508
    %7806 = vmatmul.bf16.gmra.mxu0 %v4132
    %v7807 = vpop.f32.mrf.mxu0
    %v7808 = vadd.f32 %v7794, %v7807
    %v7809 = vpop.f32.mrf.mxu0
    %v7810 = vadd.f32 %v7796, %v7809
    %7811 = vdwg.mxu0
    %7812 = vmatpush.bf16.msra.mxu0 %v6568
    %7813 = vmatpush.bf16.msra.mxu0 %v6564
    %7814 = vmatpush.bf16.msra.mxu0 %v6560
    %7815 = vmatpush.bf16.msra.mxu0 %v6556
    %7816 = vmatpush.bf16.msra.mxu0 %v6552
    %7817 = vmatpush.bf16.msra.mxu0 %v6548
    %7818 = vmatpush.bf16.msra.mxu0 %v6544
    %7819 = vmatpush.bf16.msra.mxu0 %v6540
    %7820 = vmatmul.bf16.gmra.mxu0 %v4133
    %v7821 = vpop.f32.mrf.mxu0
    %v7822 = vadd.f32 %v7808, %v7821
    %v7823 = vpop.f32.mrf.mxu0
    %v7824 = vadd.f32 %v7810, %v7823
    %7825 = vdwg.mxu0
    %7826 = vmatpush.bf16.msra.mxu0 %v6600
    %7827 = vmatpush.bf16.msra.mxu0 %v6596
    %7828 = vmatpush.bf16.msra.mxu0 %v6592
    %7829 = vmatpush.bf16.msra.mxu0 %v6588
    %7830 = vmatpush.bf16.msra.mxu0 %v6584
    %7831 = vmatpush.bf16.msra.mxu0 %v6580
    %7832 = vmatpush.bf16.msra.mxu0 %v6576
    %7833 = vmatpush.bf16.msra.mxu0 %v6572
    %7834 = vmatmul.bf16.gmra.mxu0 %v4134
    %v7835 = vpop.f32.mrf.mxu0
    %v7836 = vadd.f32 %v7822, %v7835
    %v7837 = vpop.f32.mrf.mxu0
    %v7838 = vadd.f32 %v7824, %v7837
    %7839 = vdwg.mxu0
    %7840 = vmatpush.bf16.msra.mxu0 %v6632
    %7841 = vmatpush.bf16.msra.mxu0 %v6628
    %7842 = vmatpush.bf16.msra.mxu0 %v6624
    %7843 = vmatpush.bf16.msra.mxu0 %v6620
    %7844 = vmatpush.bf16.msra.mxu0 %v6616
    %7845 = vmatpush.bf16.msra.mxu0 %v6612
    %7846 = vmatpush.bf16.msra.mxu0 %v6608
    %7847 = vmatpush.bf16.msra.mxu0 %v6604
    %7848 = vmatmul.bf16.gmra.mxu0 %v4135
    %v7849 = vpop.f32.mrf.mxu0
    %v7850 = vadd.f32 %v7836, %v7849
    %v7851 = vpop.f32.mrf.mxu0
    %v7852 = vadd.f32 %v7838, %v7851
    %7853 = vdwg.mxu0
    %7854 = vmatpush.bf16.msra.mxu0 %v6664
    %7855 = vmatpush.bf16.msra.mxu0 %v6660
    %7856 = vmatpush.bf16.msra.mxu0 %v6656
    %7857 = vmatpush.bf16.msra.mxu0 %v6652
    %7858 = vmatpush.bf16.msra.mxu0 %v6648
    %7859 = vmatpush.bf16.msra.mxu0 %v6644
    %7860 = vmatpush.bf16.msra.mxu0 %v6640
    %7861 = vmatpush.bf16.msra.mxu0 %v6636
    %7862 = vmatmul.bf16.gmra.mxu0 %v4136
    %v7863 = vpop.f32.mrf.mxu0
    %v7864 = vadd.f32 %v7850, %v7863
    %v7865 = vpop.f32.mrf.mxu0
    %v7866 = vadd.f32 %v7852, %v7865
    %7867 = vdwg.mxu0
    %7868 = vmatpush.bf16.msra.mxu0 %v6696
    %7869 = vmatpush.bf16.msra.mxu0 %v6692
    %7870 = vmatpush.bf16.msra.mxu0 %v6688
    %7871 = vmatpush.bf16.msra.mxu0 %v6684
    %7872 = vmatpush.bf16.msra.mxu0 %v6680
    %7873 = vmatpush.bf16.msra.mxu0 %v6676
    %7874 = vmatpush.bf16.msra.mxu0 %v6672
    %7875 = vmatpush.bf16.msra.mxu0 %v6668
    %7876 = vmatmul.bf16.gmra.mxu0 %v4137
    %v7877 = vpop.f32.mrf.mxu0
    %v7878 = vadd.f32 %v7864, %v7877
    %v7879 = vpop.f32.mrf.mxu0
    %v7880 = vadd.f32 %v7866, %v7879
    %7881 = vdwg.mxu0
    %7882 = vmatpush.bf16.msra.mxu0 %v6217
    %7883 = vmatpush.bf16.msra.mxu0 %v6213
    %7884 = vmatpush.bf16.msra.mxu0 %v6209
    %7885 = vmatpush.bf16.msra.mxu0 %v6205
    %7886 = vmatpush.bf16.msra.mxu0 %v6201
    %7887 = vmatpush.bf16.msra.mxu0 %v6197
    %7888 = vmatpush.bf16.msra.mxu0 %v6193
    %7889 = vmatpush.bf16.msra.mxu0 %v6189
    %7890 = vmatmul.bf16.gmra.mxu0 %v4122
    %v7891 = vpop.f32.mrf.mxu0
    %v7892 = vadd.f32 %v65, %v7891
    %v7893 = vpop.f32.mrf.mxu0
    %v7894 = vadd.f32 %v69, %v7893
    %7895 = vdwg.mxu0
    %7896 = vmatpush.bf16.msra.mxu0 %v6249
    %7897 = vmatpush.bf16.msra.mxu0 %v6245
    %7898 = vmatpush.bf16.msra.mxu0 %v6241
    %7899 = vmatpush.bf16.msra.mxu0 %v6237
    %7900 = vmatpush.bf16.msra.mxu0 %v6233
    %7901 = vmatpush.bf16.msra.mxu0 %v6229
    %7902 = vmatpush.bf16.msra.mxu0 %v6225
    %7903 = vmatpush.bf16.msra.mxu0 %v6221
    %7904 = vmatmul.bf16.gmra.mxu0 %v4123
    %v7905 = vpop.f32.mrf.mxu0
    %v7906 = vadd.f32 %v7892, %v7905
    %v7907 = vpop.f32.mrf.mxu0
    %v7908 = vadd.f32 %v7894, %v7907
    %7909 = vdwg.mxu0
    %7910 = vmatpush.bf16.msra.mxu0 %v6281
    %7911 = vmatpush.bf16.msra.mxu0 %v6277
    %7912 = vmatpush.bf16.msra.mxu0 %v6273
    %7913 = vmatpush.bf16.msra.mxu0 %v6269
    %7914 = vmatpush.bf16.msra.mxu0 %v6265
    %7915 = vmatpush.bf16.msra.mxu0 %v6261
    %7916 = vmatpush.bf16.msra.mxu0 %v6257
    %7917 = vmatpush.bf16.msra.mxu0 %v6253
    %7918 = vmatmul.bf16.gmra.mxu0 %v4124
    %v7919 = vpop.f32.mrf.mxu0
    %v7920 = vadd.f32 %v7906, %v7919
    %v7921 = vpop.f32.mrf.mxu0
    %v7922 = vadd.f32 %v7908, %v7921
    %7923 = vdwg.mxu0
    %7924 = vmatpush.bf16.msra.mxu0 %v6313
    %7925 = vmatpush.bf16.msra.mxu0 %v6309
    %7926 = vmatpush.bf16.msra.mxu0 %v6305
    %7927 = vmatpush.bf16.msra.mxu0 %v6301
    %7928 = vmatpush.bf16.msra.mxu0 %v6297
    %7929 = vmatpush.bf16.msra.mxu0 %v6293
    %7930 = vmatpush.bf16.msra.mxu0 %v6289
    %7931 = vmatpush.bf16.msra.mxu0 %v6285
    %7932 = vmatmul.bf16.gmra.mxu0 %v4125
    %v7933 = vpop.f32.mrf.mxu0
    %v7934 = vadd.f32 %v7920, %v7933
    %v7935 = vpop.f32.mrf.mxu0
    %v7936 = vadd.f32 %v7922, %v7935
    %7937 = vdwg.mxu0
    %7938 = vmatpush.bf16.msra.mxu0 %v6345
    %7939 = vmatpush.bf16.msra.mxu0 %v6341
    %7940 = vmatpush.bf16.msra.mxu0 %v6337
    %7941 = vmatpush.bf16.msra.mxu0 %v6333
    %7942 = vmatpush.bf16.msra.mxu0 %v6329
    %7943 = vmatpush.bf16.msra.mxu0 %v6325
    %7944 = vmatpush.bf16.msra.mxu0 %v6321
    %7945 = vmatpush.bf16.msra.mxu0 %v6317
    %7946 = vmatmul.bf16.gmra.mxu0 %v4126
    %v7947 = vpop.f32.mrf.mxu0
    %v7948 = vadd.f32 %v7934, %v7947
    %v7949 = vpop.f32.mrf.mxu0
    %v7950 = vadd.f32 %v7936, %v7949
    %7951 = vdwg.mxu0
    %7952 = vmatpush.bf16.msra.mxu0 %v6377
    %7953 = vmatpush.bf16.msra.mxu0 %v6373
    %7954 = vmatpush.bf16.msra.mxu0 %v6369
    %7955 = vmatpush.bf16.msra.mxu0 %v6365
    %7956 = vmatpush.bf16.msra.mxu0 %v6361
    %7957 = vmatpush.bf16.msra.mxu0 %v6357
    %7958 = vmatpush.bf16.msra.mxu0 %v6353
    %7959 = vmatpush.bf16.msra.mxu0 %v6349
    %7960 = vmatmul.bf16.gmra.mxu0 %v4127
    %v7961 = vpop.f32.mrf.mxu0
    %v7962 = vadd.f32 %v7948, %v7961
    %v7963 = vpop.f32.mrf.mxu0
    %v7964 = vadd.f32 %v7950, %v7963
    %7965 = vdwg.mxu0
    %7966 = vmatpush.bf16.msra.mxu0 %v6409
    %7967 = vmatpush.bf16.msra.mxu0 %v6405
    %7968 = vmatpush.bf16.msra.mxu0 %v6401
    %7969 = vmatpush.bf16.msra.mxu0 %v6397
    %7970 = vmatpush.bf16.msra.mxu0 %v6393
    %7971 = vmatpush.bf16.msra.mxu0 %v6389
    %7972 = vmatpush.bf16.msra.mxu0 %v6385
    %7973 = vmatpush.bf16.msra.mxu0 %v6381
    %7974 = vmatmul.bf16.gmra.mxu0 %v4128
    %v7975 = vpop.f32.mrf.mxu0
    %v7976 = vadd.f32 %v7962, %v7975
    %v7977 = vpop.f32.mrf.mxu0
    %v7978 = vadd.f32 %v7964, %v7977
    %7979 = vdwg.mxu0
    %7980 = vmatpush.bf16.msra.mxu0 %v6441
    %7981 = vmatpush.bf16.msra.mxu0 %v6437
    %7982 = vmatpush.bf16.msra.mxu0 %v6433
    %7983 = vmatpush.bf16.msra.mxu0 %v6429
    %7984 = vmatpush.bf16.msra.mxu0 %v6425
    %7985 = vmatpush.bf16.msra.mxu0 %v6421
    %7986 = vmatpush.bf16.msra.mxu0 %v6417
    %7987 = vmatpush.bf16.msra.mxu0 %v6413
    %7988 = vmatmul.bf16.gmra.mxu0 %v4129
    %v7989 = vpop.f32.mrf.mxu0
    %v7990 = vadd.f32 %v7976, %v7989
    %v7991 = vpop.f32.mrf.mxu0
    %v7992 = vadd.f32 %v7978, %v7991
    %7993 = vdwg.mxu0
    %7994 = vmatpush.bf16.msra.mxu0 %v6473
    %7995 = vmatpush.bf16.msra.mxu0 %v6469
    %7996 = vmatpush.bf16.msra.mxu0 %v6465
    %7997 = vmatpush.bf16.msra.mxu0 %v6461
    %7998 = vmatpush.bf16.msra.mxu0 %v6457
    %7999 = vmatpush.bf16.msra.mxu0 %v6453
    %8000 = vmatpush.bf16.msra.mxu0 %v6449
    %8001 = vmatpush.bf16.msra.mxu0 %v6445
    %8002 = vmatmul.bf16.gmra.mxu0 %v4130
    %v8003 = vpop.f32.mrf.mxu0
    %v8004 = vadd.f32 %v7990, %v8003
    %v8005 = vpop.f32.mrf.mxu0
    %v8006 = vadd.f32 %v7992, %v8005
    %8007 = vdwg.mxu0
    %8008 = vmatpush.bf16.msra.mxu0 %v6505
    %8009 = vmatpush.bf16.msra.mxu0 %v6501
    %8010 = vmatpush.bf16.msra.mxu0 %v6497
    %8011 = vmatpush.bf16.msra.mxu0 %v6493
    %8012 = vmatpush.bf16.msra.mxu0 %v6489
    %8013 = vmatpush.bf16.msra.mxu0 %v6485
    %8014 = vmatpush.bf16.msra.mxu0 %v6481
    %8015 = vmatpush.bf16.msra.mxu0 %v6477
    %8016 = vmatmul.bf16.gmra.mxu0 %v4131
    %v8017 = vpop.f32.mrf.mxu0
    %v8018 = vadd.f32 %v8004, %v8017
    %v8019 = vpop.f32.mrf.mxu0
    %v8020 = vadd.f32 %v8006, %v8019
    %8021 = vdwg.mxu0
    %8022 = vmatpush.bf16.msra.mxu0 %v6537
    %8023 = vmatpush.bf16.msra.mxu0 %v6533
    %8024 = vmatpush.bf16.msra.mxu0 %v6529
    %8025 = vmatpush.bf16.msra.mxu0 %v6525
    %8026 = vmatpush.bf16.msra.mxu0 %v6521
    %8027 = vmatpush.bf16.msra.mxu0 %v6517
    %8028 = vmatpush.bf16.msra.mxu0 %v6513
    %8029 = vmatpush.bf16.msra.mxu0 %v6509
    %8030 = vmatmul.bf16.gmra.mxu0 %v4132
    %v8031 = vpop.f32.mrf.mxu0
    %v8032 = vadd.f32 %v8018, %v8031
    %v8033 = vpop.f32.mrf.mxu0
    %v8034 = vadd.f32 %v8020, %v8033
    %8035 = vdwg.mxu0
    %8036 = vmatpush.bf16.msra.mxu0 %v6569
    %8037 = vmatpush.bf16.msra.mxu0 %v6565
    %8038 = vmatpush.bf16.msra.mxu0 %v6561
    %8039 = vmatpush.bf16.msra.mxu0 %v6557
    %8040 = vmatpush.bf16.msra.mxu0 %v6553
    %8041 = vmatpush.bf16.msra.mxu0 %v6549
    %8042 = vmatpush.bf16.msra.mxu0 %v6545
    %8043 = vmatpush.bf16.msra.mxu0 %v6541
    %8044 = vmatmul.bf16.gmra.mxu0 %v4133
    %v8045 = vpop.f32.mrf.mxu0
    %v8046 = vadd.f32 %v8032, %v8045
    %v8047 = vpop.f32.mrf.mxu0
    %v8048 = vadd.f32 %v8034, %v8047
    %8049 = vdwg.mxu0
    %8050 = vmatpush.bf16.msra.mxu0 %v6601
    %8051 = vmatpush.bf16.msra.mxu0 %v6597
    %8052 = vmatpush.bf16.msra.mxu0 %v6593
    %8053 = vmatpush.bf16.msra.mxu0 %v6589
    %8054 = vmatpush.bf16.msra.mxu0 %v6585
    %8055 = vmatpush.bf16.msra.mxu0 %v6581
    %8056 = vmatpush.bf16.msra.mxu0 %v6577
    %8057 = vmatpush.bf16.msra.mxu0 %v6573
    %8058 = vmatmul.bf16.gmra.mxu0 %v4134
    %v8059 = vpop.f32.mrf.mxu0
    %v8060 = vadd.f32 %v8046, %v8059
    %v8061 = vpop.f32.mrf.mxu0
    %v8062 = vadd.f32 %v8048, %v8061
    %8063 = vdwg.mxu0
    %8064 = vmatpush.bf16.msra.mxu0 %v6633
    %8065 = vmatpush.bf16.msra.mxu0 %v6629
    %8066 = vmatpush.bf16.msra.mxu0 %v6625
    %8067 = vmatpush.bf16.msra.mxu0 %v6621
    %8068 = vmatpush.bf16.msra.mxu0 %v6617
    %8069 = vmatpush.bf16.msra.mxu0 %v6613
    %8070 = vmatpush.bf16.msra.mxu0 %v6609
    %8071 = vmatpush.bf16.msra.mxu0 %v6605
    %8072 = vmatmul.bf16.gmra.mxu0 %v4135
    %v8073 = vpop.f32.mrf.mxu0
    %v8074 = vadd.f32 %v8060, %v8073
    %v8075 = vpop.f32.mrf.mxu0
    %v8076 = vadd.f32 %v8062, %v8075
    %8077 = vdwg.mxu0
    %8078 = vmatpush.bf16.msra.mxu0 %v6665
    %8079 = vmatpush.bf16.msra.mxu0 %v6661
    %8080 = vmatpush.bf16.msra.mxu0 %v6657
    %8081 = vmatpush.bf16.msra.mxu0 %v6653
    %8082 = vmatpush.bf16.msra.mxu0 %v6649
    %8083 = vmatpush.bf16.msra.mxu0 %v6645
    %8084 = vmatpush.bf16.msra.mxu0 %v6641
    %8085 = vmatpush.bf16.msra.mxu0 %v6637
    %8086 = vmatmul.bf16.gmra.mxu0 %v4136
    %v8087 = vpop.f32.mrf.mxu0
    %v8088 = vadd.f32 %v8074, %v8087
    %v8089 = vpop.f32.mrf.mxu0
    %v8090 = vadd.f32 %v8076, %v8089
    %8091 = vdwg.mxu0
    %8092 = vmatpush.bf16.msra.mxu0 %v6697
    %8093 = vmatpush.bf16.msra.mxu0 %v6693
    %8094 = vmatpush.bf16.msra.mxu0 %v6689
    %8095 = vmatpush.bf16.msra.mxu0 %v6685
    %8096 = vmatpush.bf16.msra.mxu0 %v6681
    %8097 = vmatpush.bf16.msra.mxu0 %v6677
    %8098 = vmatpush.bf16.msra.mxu0 %v6673
    %8099 = vmatpush.bf16.msra.mxu0 %v6669
    %8100 = vmatmul.bf16.gmra.mxu0 %v4137
    %v8101 = vpop.f32.mrf.mxu0
    %v8102 = vadd.f32 %v8088, %v8101
    %v8103 = vpop.f32.mrf.mxu0
    %v8104 = vadd.f32 %v8090, %v8103
    %8105 = vdwg.mxu0
    %v8106 = vadd.f32 %v7430, %v7654
    %v8107 = vadd.f32 %v8106, %v7878
    %v8108 = vadd.f32 %v8107, %v8102
    %8109 = vadd.xlane.f32.xlu0 %v8108
    %v8110 = vpop.xlane.xlu0 %8109
    %v8111 = vadd.f32 %v7432, %v7656
    %v8112 = vadd.f32 %v8111, %v7880
    %v8113 = vadd.f32 %v8112, %v8104
    %8114 = vadd.xlane.f32.xlu0 %v8113
    %v8115 = vpop.xlane.xlu0 %8114
    %v8116 = vrcp.pop 512.0
    %v8117 = vmul.f32 512.0, %v8116
    %v8118 = vsub.f32 1.0, %v8117
    %v8119 = vmul.f32 %v8116, %v8118
    %v8120 = vadd.f32 %v8116, %v8119
    %vm8121 = vweird.f32 %v8116
    %v8122 = vsel %vm8121, %v8116, %v8120
    %v8123 = vmul.f32 %v8110, %v8122
    %v8124 = vmul.f32 %v8115, %v8122
    %v8125 = vsub.f32 %v7430, %v8123
    %v8126 = vsub.f32 %v7654, %v8123
    %v8127 = vsub.f32 %v7878, %v8123
    %v8128 = vsub.f32 %v8102, %v8123
    %v8129 = vsub.f32 %v7432, %v8124
    %v8130 = vsub.f32 %v7656, %v8124
    %v8131 = vsub.f32 %v7880, %v8124
    %v8132 = vsub.f32 %v8104, %v8124
    %v8133 = vmul.f32 %v8125, %v8125
    %v8134 = vmul.f32 %v8126, %v8126
    %v8135 = vmul.f32 %v8127, %v8127
    %v8136 = vmul.f32 %v8128, %v8128
    %v8137 = vmul.f32 %v8129, %v8129
    %v8138 = vmul.f32 %v8130, %v8130
    %v8139 = vmul.f32 %v8131, %v8131
    %v8140 = vmul.f32 %v8132, %v8132
    %v8141 = vadd.f32 %v8133, %v8134
    %v8142 = vadd.f32 %v8141, %v8135
    %v8143 = vadd.f32 %v8142, %v8136
    %8144 = vadd.xlane.f32.xlu0 %v8143
    %v8145 = vpop.xlane.xlu0 %8144
    %v8146 = vadd.f32 %v8137, %v8138
    %v8147 = vadd.f32 %v8146, %v8139
    %v8148 = vadd.f32 %v8147, %v8140
    %8149 = vadd.xlane.f32.xlu0 %v8148
    %v8150 = vpop.xlane.xlu0 %8149
    %v8151 = vmul.f32 %v8145, %v8122
    %v8152 = vmul.f32 %v8150, %v8122
    %v8153 = vadd.f32 %v8151, 1e-05
    %v8154 = vadd.f32 %v8152, 1e-05
    %v8155 = vrsqrt.pop %v8153
    %v8156 = vmul.f32 %v8155, %v8153
    %v8157 = vmul.f32 %v8156, %v8155
    %v8158 = vmul.f32 0.5, %v8157
    %v8159 = vsub.f32 1.5, %v8158
    %v8160 = vmul.f32 %v8155, %v8159
    %vm8161 = vweird.f32 %v8153
    %vm8162 = vweird.f32 %v8155
    %vm8163 = vmor %vm8161, %vm8162
    %v8164 = vsel %vm8163, %v8155, %v8160
    %v8165 = vrsqrt.pop %v8154
    %v8166 = vmul.f32 %v8165, %v8154
    %v8167 = vmul.f32 %v8166, %v8165
    %v8168 = vmul.f32 0.5, %v8167
    %v8169 = vsub.f32 1.5, %v8168
    %v8170 = vmul.f32 %v8165, %v8169
    %vm8171 = vweird.f32 %v8154
    %vm8172 = vweird.f32 %v8165
    %vm8173 = vmor %vm8171, %vm8172
    %v8174 = vsel %vm8173, %v8165, %v8170
    %v8175 = vmul.f32 %v8125, %v8164
    %v8176 = vmul.f32 %v8126, %v8164
    %v8177 = vmul.f32 %v8127, %v8164
    %v8178 = vmul.f32 %v8128, %v8164
    %v8179 = vmul.f32 %v8129, %v8174
    %v8180 = vmul.f32 %v8130, %v8174
    %v8181 = vmul.f32 %v8131, %v8174
    %v8182 = vmul.f32 %v8132, %v8174
    %8183 = vst [vmem:[#allocation8] sm:$0xff] %v8175
    %8184 = vst [vmem:[#allocation8 + $0x8] sm:$0xff] %v8176
    %8185 = vst [vmem:[#allocation8 + $0x10] sm:$0xff] %v8177
    %8186 = vst [vmem:[#allocation8 + $0x18] sm:$0xff] %v8178
    %8187 = vst [vmem:[#allocation8 + $0x20] sm:$0xff] %v8179
    %8188 = vst [vmem:[#allocation8 + $0x28] sm:$0xff] %v8180
    %8189 = vst [vmem:[#allocation8 + $0x30] sm:$0xff] %v8181
    %8190 = vst [vmem:[#allocation8 + $0x38] sm:$0xff] %v8182
    // Predicated region
    $region26: #{poswise_ffn.1} parent=1 // pred_check
      _
    $region27: #{poswise_ffn.1} parent=1 // pred_check_branch
      %8192 = sbr.rel (0) target = $region29
    $region28: #{poswise_ffn.1} parent=1 // pred_region
      %8194 = vsyncadd [#allocation4], 0
      %s8195 = sshll.u32 [#allocation8], 4
      %s8196 = int_to_ptr.vmem [resolvable:$true] %s8195
      %s8197 = sshll.u32 %s3, 4
      %s8198 = int_to_ptr.hbm [resolvable:$true] %s8197
      %8203 = dma.vmem_to_hbm [thread:$0]  %s8196, 1024, %s8198, [#allocation4], 512, 512, 32
    $region29: #{poswise_ffn.1} parent=1 // pred_fallthru
      _
    // Predicated region
    $region30: #{poswise_ffn.1} parent=1 // pred_check
      _
    $region31: #{poswise_ffn.1} parent=1 // pred_check_branch
      %8205 = sbr.rel (0) target = $region33
    $region32: #{poswise_ffn.1} parent=1 // pred_region
      %8207 = dma.done [#allocation4], 1024
    $region33: #{poswise_ffn.1} parent=1 // pred_fallthru
      _
    %8208 = vsyncpa [#allocation3], 1
    %8209 = vsyncpa [#allocation6], 1
    %8210 = vsyncpa [#allocation4], 1

</llo_original>
